<compile_context>
chip_gen: v5e
topology: v5e:2x2
jax: 0.10.0
libtpu: 0.0.40
codegen_flags: <defaults>
</compile_context>

<pallas_src>
import functools

import jax
import jax.numpy as jnp
from jax.experimental import pallas as pl
from jax.experimental.pallas import tpu as pltpu

LANE = 128          # all feature dims padded to one 128-lane tile
NEG_INF = -1e30
VMEM_LIMIT = 48 * 1024 * 1024   # safe on v5e/v6e (128 MiB) and v7x (64 MiB)


# ----------------------------------------------------------------------------
# host-side padding helpers (run once at init)
# ----------------------------------------------------------------------------
def _pad_mat(w, rows=LANE, cols=LANE, dtype=jnp.bfloat16):
    r0, c0 = w.shape
    out = jnp.zeros((rows, cols), jnp.float32).at[:r0, :c0].set(w)
    return out.astype(dtype)


def _pad_vec(v, cols=LANE):
    (c0,) = v.shape
    return jnp.zeros((1, cols), jnp.float32).at[0, :c0].set(v)


def _pad_feat(x, cols=LANE):
    n, c0 = x.shape
    return jnp.zeros((n, cols), jnp.float32).at[:, :c0].set(x)


# ----------------------------------------------------------------------------
# in-kernel helpers
# ----------------------------------------------------------------------------
def _mm(x, w):
    """bf16 MXU matmul with f32 accumulation (weights stored bf16)."""
    return jnp.dot(x.astype(jnp.bfloat16), w.astype(jnp.bfloat16),
                   preferred_element_type=jnp.float32)


def _ln(x, g, b, d, eps=1e-5):
    """LayerNorm over the first `d` valid channels of a 128-padded row.

    Padded columns of x are zero and gamma/beta are zero-padded, so padded
    output columns stay exactly zero.  Two-pass variance with a closed-form
    correction for the (LANE-d) zero padded columns (avoids E[x^2]-mu^2
    cancellation flagged in review).
    """
    mu = jnp.sum(x, axis=-1, keepdims=True) / d
    diff = x - mu
    var = (jnp.sum(diff * diff, axis=-1, keepdims=True)
           - (x.shape[-1] - d) * mu * mu) / d
    return diff * jax.lax.rsqrt(var + eps) * g + b


def _softmax_rows(s):
    s = s - jnp.max(s, axis=-1, keepdims=True)
    p = jnp.exp(s)
    return p * pl.reciprocal(jnp.sum(p, axis=-1, keepdims=True), approx=True)


def _attend(q, k, v, mask=None):
    """q:(Lq,128) k,v:(Lk,128) mask:(1,Lk) or None.  1/sqrt(d) pre-folded
    into the query projection weights."""
    s = jax.lax.dot_general(q.astype(jnp.bfloat16), k.astype(jnp.bfloat16),
                            (((1,), (1,)), ((), ())),
                            preferred_element_type=jnp.float32)
    if mask is not None:
        s = jnp.where(mask > 0.5, s, NEG_INF)
    p = _softmax_rows(s)
    return jnp.dot(p.astype(jnp.bfloat16), v.astype(jnp.bfloat16),
                   preferred_element_type=jnp.float32)


# ----------------------------------------------------------------------------
# fused GMP stack kernel: all n_mp layers in one pallas_call
#   grid = (n_mp,), x resident in the output block, one-hots built once
# ----------------------------------------------------------------------------
def _gmp_stack_kernel(x_ref, pos_ref, src_ref, dstc_ref, dstr_ref,
                      we1_ref, be1_ref, we2_ref, be2_ref,
                      wn1_ref, bn1_ref, wn2_ref, bn2_ref,
                      o_ref,
                      gsrc_sc, gdst_sc, soh_sc, dpos_sc):
    l = pl.program_id(0)
    n = x_ref.shape[0]
    e = src_ref.shape[0]

    # Layer 0: load x into the resident output block and build the bf16
    # one-hot gather/scatter matrices + dpos once (reused by every layer).
    # TODO(synk): at realistic N/E replace the O(E*N) one-hot matmuls with an
    #             edge-tiled / SMEM-index-driven gather-scatter (O(E*H)).
    @pl.when(l == 0)
    def _():
        o_ref[...] = x_ref[...]
        edge_iota = jax.lax.broadcasted_iota(jnp.int32, (e, n), 1)
        gsrc_sc[...] = jnp.where(edge_iota == src_ref[...], 1.0, 0.0
                                 ).astype(jnp.bfloat16)
        gdst_sc[...] = jnp.where(edge_iota == dstc_ref[...], 1.0, 0.0
                                 ).astype(jnp.bfloat16)
        node_iota = jax.lax.broadcasted_iota(jnp.int32, (n, e), 0)
        soh_sc[...] = jnp.where(node_iota == dstr_ref[...], 1.0, 0.0
                                ).astype(jnp.bfloat16)
        pos_bf = pos_ref[...].astype(jnp.bfloat16)
        dpos = (jnp.dot(gdst_sc[...], pos_bf,
                        preferred_element_type=jnp.float32)
                - jnp.dot(gsrc_sc[...], pos_bf,
                          preferred_element_type=jnp.float32))
        dpos_sc[...] = dpos.astype(jnp.bfloat16)

    x = o_ref[...]                                    # (N,128) f32, resident
    x_bf = x.astype(jnp.bfloat16)

    # gather endpoint features (one-hot rows select exactly one node each)
    x_src = jnp.dot(gsrc_sc[...], x_bf, preferred_element_type=jnp.float32)
    x_dst = jnp.dot(gdst_sc[...], x_bf, preferred_element_type=jnp.float32)

    # edge MLP: single K=384 contraction over x_src|x_dst|dpos
    e_in = jnp.concatenate([x_src.astype(jnp.bfloat16),
                            x_dst.astype(jnp.bfloat16),
                            dpos_sc[...]], axis=-1)               # (E,384)
    m = (jnp.dot(e_in, we1_ref[0], preferred_element_type=jnp.float32)
         + be1_ref[0])
    m = jnp.maximum(m, 0.0)
    m = _mm(m, we2_ref[0]) + be2_ref[0]

    # scatter-add onto destination nodes (bf16 operands, f32 accumulation)
    agg = jnp.dot(soh_sc[...], m.astype(jnp.bfloat16),
                  preferred_element_type=jnp.float32)             # (N,128)

    # node MLP: single K=256 contraction over x|agg, plus residual
    n_in = jnp.concatenate([x_bf, agg.astype(jnp.bfloat16)], axis=-1)
    h = jnp.maximum(
        jnp.dot(n_in, wn1_ref[0], preferred_element_type=jnp.float32)
        + bn1_ref[0], 0.0)
    o_ref[...] = x + _mm(h, wn2_ref[0]) + bn2_ref[0]


def gmp_stack(x, pos, src_c, dst_c, dst_r, sp):
    """All n_mp GMP layers in one pallas_call (layer axis = grid axis)."""
    # TODO(synk): `lagrangian` selects a GMP variant in the reference; carried
    #             but not switched on in this synthetic stack.
    # TODO(synk): add a "parallel" edge/node partition axis so v7x's second
    #             TensorCore is not idle during the GMP stage.
    N = x.shape[0]
    E = src_c.shape[0]
    n_mp = sp["we1"].shape[0]
    data = (x, pos, src_c, dst_c, dst_r)
    weights = (sp["we1"], sp["be1"], sp["we2"], sp["be2"],
               sp["wn1"], sp["bn1"], sp["wn2"], sp["bn2"])
    in_specs = ([pl.BlockSpec(a.shape, lambda l: (0, 0)) for a in data]
                + [pl.BlockSpec((1,) + w.shape[1:], lambda l: (l, 0, 0))
                   for w in weights])
    return pl.pallas_call(
        _gmp_stack_kernel,
        out_shape=jax.ShapeDtypeStruct((N, LANE), jnp.float32),
        grid=(n_mp,),
        in_specs=in_specs,
        out_specs=pl.BlockSpec((N, LANE), lambda l: (0, 0)),
        scratch_shapes=[pltpu.VMEM((E, N), jnp.bfloat16),    # gather src
                        pltpu.VMEM((E, N), jnp.bfloat16),    # gather dst
                        pltpu.VMEM((N, E), jnp.bfloat16),    # scatter dst
                        pltpu.VMEM((E, LANE), jnp.bfloat16)],  # dpos
        compiler_params=pltpu.CompilerParams(
            dimension_semantics=("arbitrary",),
            vmem_limit_bytes=VMEM_LIMIT),
    )(*data, *weights)


# ----------------------------------------------------------------------------
# fused Perceiver kernel: encoder + n_self self blocks + decoder in one call
#   grid = (B, n_self + 2), latents resident in a VMEM scratch across blocks
# ----------------------------------------------------------------------------
def _perceiver_kernel(x_ref, mask_ref, lat0_ref,
                      # encoder (constant across the block axis)
                      e_lnkv_g, e_lnkv_b, e_lnq_g, e_lnq_b,
                      e_wq, e_bq, e_wkv, e_bkv, e_wo, e_bo,
                      e_lnm_g, e_lnm_b, e_w1, e_b1, e_w2, e_b2,
                      # self blocks (stacked; layer picked by index_map)
                      s_ln1g, s_ln1b, s_wqkv, s_bqkv, s_wo, s_bo,
                      s_ln2g, s_ln2b, s_w1, s_b1, s_w2, s_b2,
                      # decoder (constant)
                      d_lnq_g, d_lnq_b, d_lnkv_g, d_lnkv_b,
                      d_wq, d_bq, d_wkv, d_bkv, d_wo, d_bo, d_wf, d_bf,
                      o_ref, lat_sc, *, d_in, d_lat, n_self):
    k = pl.program_id(1)
    last = pl.num_programs(1) - 1

    # -- block 0: encoder cross-attention + MLP ------------------------------
    @pl.when(k == 0)
    def _():
        x = x_ref[0]                               # (n,128) padded tokens
        msk = mask_ref[0]                          # (1,n)
        lat0 = lat0_ref[...]                       # (nl,128) learned latents
        x_ln = _ln(x, e_lnkv_g[...], e_lnkv_b[...], d_in)
        lat_ln = _ln(lat0, e_lnq_g[...], e_lnq_b[...], d_lat)
        q = _mm(lat_ln, e_wq[...]) + e_bq[...]
        kv = _mm(x_ln, e_wkv[...]) + e_bkv[...]    # fused K|V projection
        a = _attend(q, kv[:, :LANE], kv[:, LANE:], msk)
        lat = lat0 + _mm(a, e_wo[...]) + e_bo[...]
        h = _ln(lat, e_lnm_g[...], e_lnm_b[...], d_lat)
        h = jax.nn.gelu(_mm(h, e_w1[...]) + e_b1[...], approximate=True)
        lat_sc[...] = lat + _mm(h, e_w2[...]) + e_b2[...]

    # -- blocks 1..n_self: latent self-attention ------------------------------
    @pl.when(jnp.logical_and(k >= 1, k <= n_self))
    def _():
        lat0 = lat_sc[...]
        h = _ln(lat0, s_ln1g[0], s_ln1b[0], d_lat)
        qkv = _mm(h, s_wqkv[0]) + s_bqkv[0]        # fused Q|K|V projection
        a = _attend(qkv[:, :LANE], qkv[:, LANE:2 * LANE], qkv[:, 2 * LANE:])
        lat = lat0 + _mm(a, s_wo[0]) + s_bo[0]
        h = _ln(lat, s_ln2g[0], s_ln2b[0], d_lat)
        h = jax.nn.gelu(_mm(h, s_w1[0]) + s_b1[0], approximate=True)
        lat_sc[...] = lat + _mm(h, s_w2[0]) + s_b2[0]

    # -- last block: decoder cross-attention + output projection -------------
    @pl.when(k == last)
    def _():
        x = x_ref[0]                               # padded node queries
        lat = lat_sc[...]
        qh = _ln(x, d_lnq_g[...], d_lnq_b[...], d_in)
        kvh = _ln(lat, d_lnkv_g[...], d_lnkv_b[...], d_lat)
        q = _mm(qh, d_wq[...]) + d_bq[...]
        kv = _mm(kvh, d_wkv[...]) + d_bkv[...]
        a = _attend(q, kv[:, :LANE], kv[:, LANE:])   # all latents valid
        a = _mm(a, d_wo[...]) + d_bo[...]
        o_ref[0] = _mm(a, d_wf[...]) + d_bf[...]


def perceiver_forward(x_pad, attn_mask, p, ld, dl):
    B, n, _ = x_pad.shape
    nl = p["latents"].shape[0]
    n_self = p["self"][0].shape[0]
    n_block = n_self + 2
    mask3 = attn_mask.reshape(B, 1, n)

    self_idx = lambda b, k: (jnp.clip(k - 1, 0, n_self - 1), 0, 0)
    in_specs = (
        [pl.BlockSpec((1, n, LANE), lambda b, k: (b, 0, 0)),
         pl.BlockSpec((1, 1, n), lambda b, k: (b, 0, 0)),
         pl.BlockSpec((nl, LANE), lambda b, k: (0, 0))]
        + [pl.BlockSpec(w.shape, lambda b, k: (0, 0)) for w in p["enc"]]
        + [pl.BlockSpec((1,) + w.shape[1:], self_idx) for w in p["self"]]
        + [pl.BlockSpec(w.shape, lambda b, k: (0, 0)) for w in p["dec"]])

    return pl.pallas_call(
        functools.partial(_perceiver_kernel, d_in=ld, d_lat=dl, n_self=n_self),
        out_shape=jax.ShapeDtypeStruct((B, n, LANE), jnp.float32),
        grid=(B, n_block),
        in_specs=in_specs,
        out_specs=pl.BlockSpec((1, n, LANE), lambda b, k: (b, 0, 0)),
        scratch_shapes=[pltpu.VMEM((nl, LANE), jnp.float32)],   # resident lat
        compiler_params=pltpu.CompilerParams(
            dimension_semantics=("parallel", "arbitrary"),
            vmem_limit_bytes=VMEM_LIMIT),
    )(x_pad, mask3, p["latents"], *p["enc"], *p["self"], *p["dec"])


# ----------------------------------------------------------------------------
# parameter init (deterministic, synthetic) -- weights padded / folded /
# stacked once on the host
# ----------------------------------------------------------------------------
def dense_params(key, din, dout):
    w = jax.random.normal(key, (din, dout), jnp.float32) / jnp.sqrt(float(din))
    b = jnp.zeros((dout,), jnp.float32)
    return w, b


def init_gmp_stack(keys, n_mp, ld, hidden, pos_dim):
    acc = {k: [] for k in
           ("we1", "be1", "we2", "be2", "wn1", "bn1", "wn2", "bn2")}
    for _ in range(n_mp):
        we1, be1 = dense_params(next(keys), 2 * ld + pos_dim, hidden)
        we2, be2 = dense_params(next(keys), hidden, hidden)
        wn1, bn1 = dense_params(next(keys), ld + hidden, hidden)
        wn2, bn2 = dense_params(next(keys), hidden, ld)
        acc["we1"].append(jnp.concatenate(
            [_pad_mat(we1[:ld]), _pad_mat(we1[ld:2 * ld]),
             _pad_mat(we1[2 * ld:])], axis=0))            # (384,128) bf16
        acc["be1"].append(_pad_vec(be1))
        acc["we2"].append(_pad_mat(we2))
        acc["be2"].append(_pad_vec(be2))
        acc["wn1"].append(jnp.concatenate(
            [_pad_mat(wn1[:ld]), _pad_mat(wn1[ld:])], axis=0))  # (256,128)
        acc["bn1"].append(_pad_vec(bn1))
        acc["wn2"].append(_pad_mat(wn2))
        acc["bn2"].append(_pad_vec(bn2))
    return {k: jnp.stack(v) for k, v in acc.items()}      # leading layer axis


def init_perceiver(keys, ld, dl, nl, n_self):
    q_scale = 1.0 / (dl ** 0.5)
    latents = _pad_feat(
        jax.random.normal(next(keys), (nl, dl), jnp.float32) * 0.02)

    # encoder cross-attention + MLP
    wq, bq = dense_params(next(keys), dl, dl)
    wk, bk = dense_params(next(keys), ld, dl)
    wv, bv = dense_params(next(keys), ld, dl)
    wo, bo = dense_params(next(keys), dl, dl)
    w1, b1 = dense_params(next(keys), dl, 2 * dl)
    w2, b2 = dense_params(next(keys), 2 * dl, dl)
    enc = (
        _pad_vec(jnp.ones(ld)), _pad_vec(jnp.zeros(ld)),            # ln_kv(x)
        _pad_vec(jnp.ones(dl)), _pad_vec(jnp.zeros(dl)),            # ln_q(lat)
        _pad_mat(wq * q_scale), _pad_vec(bq * q_scale),
        jnp.concatenate([_pad_mat(wk), _pad_mat(wv)], axis=1),      # (128,256)
        jnp.concatenate([_pad_vec(bk), _pad_vec(bv)], axis=1),
        _pad_mat(wo), _pad_vec(bo),
        _pad_vec(jnp.ones(dl)), _pad_vec(jnp.zeros(dl)),            # ln_mlp
        _pad_mat(w1), _pad_vec(b1), _pad_mat(w2), _pad_vec(b2))

    # self-attention blocks: weights stacked on a leading layer axis
    s_acc = [[] for _ in range(12)]
    for _ in range(n_self):
        wq, bq = dense_params(next(keys), dl, dl)
        wk, bk = dense_params(next(keys), dl, dl)
        wv, bv = dense_params(next(keys), dl, dl)
        wo, bo = dense_params(next(keys), dl, dl)
        w1, b1 = dense_params(next(keys), dl, 2 * dl)
        w2, b2 = dense_params(next(keys), 2 * dl, dl)
        vals = (
            _pad_vec(jnp.ones(dl)), _pad_vec(jnp.zeros(dl)),
            jnp.concatenate([_pad_mat(wq * q_scale), _pad_mat(wk),
                             _pad_mat(wv)], axis=1),                 # (128,384)
            jnp.concatenate([_pad_vec(bq * q_scale), _pad_vec(bk),
                             _pad_vec(bv)], axis=1),
            _pad_mat(wo), _pad_vec(bo),
            _pad_vec(jnp.ones(dl)), _pad_vec(jnp.zeros(dl)),
            _pad_mat(w1), _pad_vec(b1), _pad_mat(w2), _pad_vec(b2))
        for lst, v in zip(s_acc, vals):
            lst.append(v)
    self_w = tuple(jnp.stack(lst) for lst in s_acc)

    # decoder cross-attention + output projection (output_num_channels = ld)
    d_scale = 1.0 / (ld ** 0.5)
    wq, bq = dense_params(next(keys), ld, ld)
    wk, bk = dense_params(next(keys), dl, ld)
    wv, bv = dense_params(next(keys), dl, ld)
    wo, bo = dense_params(next(keys), ld, ld)
    wf, bf = dense_params(next(keys), ld, ld)
    dec = (
        _pad_vec(jnp.ones(ld)), _pad_vec(jnp.zeros(ld)),            # ln_q(x)
        _pad_vec(jnp.ones(dl)), _pad_vec(jnp.zeros(dl)),            # ln_kv(lat)
        _pad_mat(wq * d_scale), _pad_vec(bq * d_scale),
        jnp.concatenate([_pad_mat(wk), _pad_mat(wv)], axis=1),
        jnp.concatenate([_pad_vec(bk), _pad_vec(bv)], axis=1),
        _pad_mat(wo), _pad_vec(bo), _pad_mat(wf), _pad_vec(bf))

    return dict(latents=latents, enc=enc, self=self_w, dec=dec)


# ----------------------------------------------------------------------------
# pad / unpad bookkeeping (mirrors _reshape_batches / _postprocess_output)
# TODO(synk): fold into the perceiver kernel via scalar-prefetched per-graph
#             offsets to remove the extra HBM roundtrips of x_encode/logits.
# ----------------------------------------------------------------------------
def reshape_batches(x_encode, sizes):
    max_len = max(sizes)
    rows, masks = [], []
    off = 0
    for s in sizes:
        xi = x_encode[off:off + s]
        rows.append(jnp.concatenate(
            [xi, jnp.zeros((max_len - s, x_encode.shape[1]), jnp.float32)],
            axis=0))
        masks.append(jnp.concatenate(
            [jnp.ones((s,), jnp.float32),
             jnp.zeros((max_len - s,), jnp.float32)]))
        off += s
    return jnp.stack(rows), jnp.stack(masks)


def postprocess_output(logits, sizes):
    max_len = max(sizes)
    flat = logits.reshape(-1, logits.shape[-1])
    idx = []
    for i, s in enumerate(sizes):
        idx.extend(range(i * max_len, i * max_len + s))
    return flat[jnp.array(idx, jnp.int32)]


def graph_perceiver_process(x128, pos128, src_c, dst_c, dst_r,
                            sizes, ld, dl, params):
    x_encode = gmp_stack(x128, pos128, src_c, dst_c, dst_r, params["gmp_enc"])
    x_pad, attn_mask = reshape_batches(x_encode, sizes)
    logits = perceiver_forward(x_pad, attn_mask, params["perceiver"], ld, dl)
    out = postprocess_output(logits, sizes)
    x_decode = gmp_stack(out + x_encode, pos128, src_c, dst_c, dst_r,
                         params["gmp_dec"])
    return x_decode


# ----------------------------------------------------------------------------
# Main
# ----------------------------------------------------------------------------
if __name__ == "__main__":
    # module hyper-parameters (small)
    ld, hidden_layer, pos_dim, n_mp = 32, 32, 3, 2
    d_latents, num_latents, n_self = 32, 8, 2
    lagrangian = False   # TODO(synk): GMP variant flag carried but unused

    # two graphs of unequal size -> exercises padding + attention mask
    sizes = [12, 16]
    N = sum(sizes)

    key = jax.random.PRNGKey(0)
    kx, kp, kparams = jax.random.split(key, 3)
    x = jax.random.normal(kx, (N, ld), jnp.float32)
    pos = jax.random.normal(kp, (N, pos_dim), jnp.float32)

    # deterministic ring edges (both directions) within each graph
    src_list, dst_list = [], []
    off = 0
    for s in sizes:
        for i in range(s):
            a, b_ = off + i, off + (i + 1) % s
            src_list += [a, b_]
            dst_list += [b_, a]
        off += s
    E = len(src_list)
    src_c = jnp.array(src_list, jnp.int32).reshape(E, 1)   # gather orientation
    dst_c = jnp.array(dst_list, jnp.int32).reshape(E, 1)   # gather orientation
    dst_r = jnp.array(dst_list, jnp.int32).reshape(1, E)   # scatter orientation

    keys = iter(jax.random.split(kparams, 256))
    params = dict(
        gmp_enc=init_gmp_stack(keys, n_mp, ld, hidden_layer, pos_dim),
        gmp_dec=init_gmp_stack(keys, n_mp, ld, hidden_layer, pos_dim),
        perceiver=init_perceiver(keys, ld, d_latents, num_latents, n_self),
    )

    # pad node features / positions once to the 128-lane layout
    x128 = _pad_feat(x)
    pos128 = _pad_feat(pos)

    def fwd(x_, pos_, sc, dc, dr, prm):
        return graph_perceiver_process(x_, pos_, sc, dc, dr,
                                       sizes, ld, d_latents, prm)

    run = jax.jit(fwd)
    out128 = run(x128, pos128, src_c, dst_c, dst_r, params)
    jax.block_until_ready(out128)

    out = out128[:, :ld]
    assert out.shape == (N, ld) and out.dtype == jnp.float32
    assert bool(jnp.isfinite(out).all())
    print("KERNEL_OK")
</pallas_src>

<mosaic_0001>
module attributes {stable_mosaic.version = 11 : i64} {
  func.func @_gmp_stack_kernel(%arg0: i32, %arg1: memref<28x128xf32, #tpu.memory_space<vmem>>, %arg2: memref<28x128xf32, #tpu.memory_space<vmem>>, %arg3: memref<56x1xi32, #tpu.memory_space<vmem>>, %arg4: memref<56x1xi32, #tpu.memory_space<vmem>>, %arg5: memref<1x56xi32, #tpu.memory_space<vmem>>, %arg6: memref<1x384x128xbf16, #tpu.memory_space<vmem>>, %arg7: memref<1x1x128xf32, #tpu.memory_space<vmem>>, %arg8: memref<1x128x128xbf16, #tpu.memory_space<vmem>>, %arg9: memref<1x1x128xf32, #tpu.memory_space<vmem>>, %arg10: memref<1x256x128xbf16, #tpu.memory_space<vmem>>, %arg11: memref<1x1x128xf32, #tpu.memory_space<vmem>>, %arg12: memref<1x128x128xbf16, #tpu.memory_space<vmem>>, %arg13: memref<1x1x128xf32, #tpu.memory_space<vmem>>, %arg14: memref<28x128xf32, #tpu.memory_space<vmem>>, %arg15: memref<56x28xbf16, #tpu.memory_space<vmem>>, %arg16: memref<56x28xbf16, #tpu.memory_space<vmem>>, %arg17: memref<28x56xbf16, #tpu.memory_space<vmem>>, %arg18: memref<56x128xbf16, #tpu.memory_space<vmem>>) attributes {dimension_semantics = [#tpu.dimension_semantics<arbitrary>], iteration_bounds = array<i64: 2>, scalar_prefetch = 0 : i64, scratch_operands = 4 : i64, tpu.core_type = #tpu.core_type<tc>, window_params = [{pipeline_mode = #tpu.pipeline_mode<synchronous>, transform_indices = @transform_0, window_bounds = array<i64: 28, 128>}, {pipeline_mode = #tpu.pipeline_mode<synchronous>, transform_indices = @transform_1, window_bounds = array<i64: 28, 128>}, {pipeline_mode = #tpu.pipeline_mode<synchronous>, transform_indices = @transform_2, window_bounds = array<i64: 56, 1>}, {pipeline_mode = #tpu.pipeline_mode<synchronous>, transform_indices = @transform_3, window_bounds = array<i64: 56, 1>}, {pipeline_mode = #tpu.pipeline_mode<synchronous>, transform_indices = @transform_4, window_bounds = array<i64: 1, 56>}, {transform_indices = @transform_5, window_bounds = array<i64: 1, 384, 128>}, {transform_indices = @transform_6, window_bounds = array<i64: 1, 1, 128>}, {transform_indices = @transform_7, window_bounds = array<i64: 1, 128, 128>}, {transform_indices = @transform_8, window_bounds = array<i64: 1, 1, 128>}, {transform_indices = @transform_9, window_bounds = array<i64: 1, 256, 128>}, {transform_indices = @transform_10, window_bounds = array<i64: 1, 1, 128>}, {transform_indices = @transform_11, window_bounds = array<i64: 1, 128, 128>}, {transform_indices = @transform_12, window_bounds = array<i64: 1, 1, 128>}, {pipeline_mode = #tpu.pipeline_mode<synchronous>, transform_indices = @transform_13, window_bounds = array<i64: 28, 128>}]} {
    %c0_i32 = arith.constant 0 : i32
    %0 = arith.cmpi eq, %arg0, %c0_i32 : i32
    %1 = arith.extui %0 : i1 to i32
    %c0_i32_0 = arith.constant 0 : i32
    %2 = arith.cmpi ne, %1, %c0_i32_0 : i32
    scf.if %2 {
      %c0_44 = arith.constant 0 : index
      %c0_45 = arith.constant 0 : index
      %54 = vector.load %arg1[%c0_44, %c0_45] : memref<28x128xf32, #tpu.memory_space<vmem>>, vector<28x128xf32>
      %c0_46 = arith.constant 0 : index
      %c0_47 = arith.constant 0 : index
      %55 = vector.load %arg14[%c0_46, %c0_47] : memref<28x128xf32, #tpu.memory_space<vmem>>, vector<28x128xf32>
      tpu.vector_store %arg14[%c0_46, %c0_47], %54 {strides = array<i32>} : memref<28x128xf32, #tpu.memory_space<vmem>>, vector<28x128xf32>,
      %56 = tpu.iota {dimensions = array<i32: 1>} : vector<56x28xi32>
      %c0_48 = arith.constant 0 : index
      %c0_49 = arith.constant 0 : index
      %57 = vector.load %arg3[%c0_48, %c0_49] : memref<56x1xi32, #tpu.memory_space<vmem>>, vector<56x1xi32>
      %58 = vector.broadcast %57 : vector<56x1xi32> to vector<56x28xi32>
      %59 = arith.cmpi eq, %56, %58 : vector<56x28xi32>
      %cst_50 = arith.constant 1.000000e+00 : f32
      %cst_51 = arith.constant 0.000000e+00 : f32
      %60 = vector.broadcast %cst_50 : f32 to vector<56x28xf32>
      %61 = vector.broadcast %cst_51 : f32 to vector<56x28xf32>
      %62 = arith.select %59, %60, %61 : vector<56x28xi1>, vector<56x28xf32>
      %63 = arith.truncf %62 : vector<56x28xf32> to vector<56x28xbf16>
      %c0_52 = arith.constant 0 : index
      %c0_53 = arith.constant 0 : index
      %64 = vector.load %arg15[%c0_52, %c0_53] : memref<56x28xbf16, #tpu.memory_space<vmem>>, vector<56x28xbf16>
      tpu.vector_store %arg15[%c0_52, %c0_53], %63 {strides = array<i32>} : memref<56x28xbf16, #tpu.memory_space<vmem>>, vector<56x28xbf16>,
      %c0_54 = arith.constant 0 : index
      %c0_55 = arith.constant 0 : index
      %65 = vector.load %arg4[%c0_54, %c0_55] : memref<56x1xi32, #tpu.memory_space<vmem>>, vector<56x1xi32>
      %66 = vector.broadcast %65 : vector<56x1xi32> to vector<56x28xi32>
      %67 = arith.cmpi eq, %56, %66 : vector<56x28xi32>
      %cst_56 = arith.constant 1.000000e+00 : f32
      %cst_57 = arith.constant 0.000000e+00 : f32
      %68 = vector.broadcast %cst_56 : f32 to vector<56x28xf32>
      %69 = vector.broadcast %cst_57 : f32 to vector<56x28xf32>
      %70 = arith.select %67, %68, %69 : vector<56x28xi1>, vector<56x28xf32>
      %71 = arith.truncf %70 : vector<56x28xf32> to vector<56x28xbf16>
      %c0_58 = arith.constant 0 : index
      %c0_59 = arith.constant 0 : index
      %72 = vector.load %arg16[%c0_58, %c0_59] : memref<56x28xbf16, #tpu.memory_space<vmem>>, vector<56x28xbf16>
      tpu.vector_store %arg16[%c0_58, %c0_59], %71 {strides = array<i32>} : memref<56x28xbf16, #tpu.memory_space<vmem>>, vector<56x28xbf16>,
      %73 = tpu.iota {dimensions = array<i32: 0>} : vector<28x56xi32>
      %c0_60 = arith.constant 0 : index
      %c0_61 = arith.constant 0 : index
      %74 = vector.load %arg5[%c0_60, %c0_61] : memref<1x56xi32, #tpu.memory_space<vmem>>, vector<1x56xi32>
      %75 = vector.broadcast %74 : vector<1x56xi32> to vector<28x56xi32>
      %76 = arith.cmpi eq, %73, %75 : vector<28x56xi32>
      %cst_62 = arith.constant 1.000000e+00 : f32
      %cst_63 = arith.constant 0.000000e+00 : f32
      %77 = vector.broadcast %cst_62 : f32 to vector<28x56xf32>
      %78 = vector.broadcast %cst_63 : f32 to vector<28x56xf32>
      %79 = arith.select %76, %77, %78 : vector<28x56xi1>, vector<28x56xf32>
      %80 = arith.truncf %79 : vector<28x56xf32> to vector<28x56xbf16>
      %c0_64 = arith.constant 0 : index
      %c0_65 = arith.constant 0 : index
      %81 = vector.load %arg17[%c0_64, %c0_65] : memref<28x56xbf16, #tpu.memory_space<vmem>>, vector<28x56xbf16>
      tpu.vector_store %arg17[%c0_64, %c0_65], %80 {strides = array<i32>} : memref<28x56xbf16, #tpu.memory_space<vmem>>, vector<28x56xbf16>,
      %c0_66 = arith.constant 0 : index
      %c0_67 = arith.constant 0 : index
      %82 = vector.load %arg2[%c0_66, %c0_67] : memref<28x128xf32, #tpu.memory_space<vmem>>, vector<28x128xf32>
      %83 = arith.truncf %82 : vector<28x128xf32> to vector<28x128xbf16>
      %c0_68 = arith.constant 0 : index
      %c0_69 = arith.constant 0 : index
      %84 = vector.load %arg16[%c0_68, %c0_69] : memref<56x28xbf16, #tpu.memory_space<vmem>>, vector<56x28xbf16>
      %cst_70 = arith.constant dense<0.000000e+00> : vector<56x128xf32>
      %85 = tpu.matmul %84, %83, %cst_70 {dimension_numbers = #tpu.dot_dimension_numbers<[1], [0], [0], [1], [0, 0, 1, 1], [], []>} : vector<56x28xbf16>, vector<28x128xbf16>, vector<56x128xf32> -> vector<56x128xf32>
      %c0_71 = arith.constant 0 : index
      %c0_72 = arith.constant 0 : index
      %86 = vector.load %arg15[%c0_71, %c0_72] : memref<56x28xbf16, #tpu.memory_space<vmem>>, vector<56x28xbf16>
      %cst_73 = arith.constant dense<0.000000e+00> : vector<56x128xf32>
      %87 = tpu.matmul %86, %83, %cst_73 {dimension_numbers = #tpu.dot_dimension_numbers<[1], [0], [0], [1], [0, 0, 1, 1], [], []>} : vector<56x28xbf16>, vector<28x128xbf16>, vector<56x128xf32> -> vector<56x128xf32>
      %88 = arith.subf %85, %87 : vector<56x128xf32>
      %89 = arith.truncf %88 : vector<56x128xf32> to vector<56x128xbf16>
      %c0_74 = arith.constant 0 : index
      %c0_75 = arith.constant 0 : index
      %90 = vector.load %arg18[%c0_74, %c0_75] : memref<56x128xbf16, #tpu.memory_space<vmem>>, vector<56x128xbf16>
      tpu.vector_store %arg18[%c0_74, %c0_75], %89 {strides = array<i32>} : memref<56x128xbf16, #tpu.memory_space<vmem>>, vector<56x128xbf16>,
    } else {
    }
    %c0 = arith.constant 0 : index
    %c0_1 = arith.constant 0 : index
    %3 = vector.load %arg14[%c0, %c0_1] : memref<28x128xf32, #tpu.memory_space<vmem>>, vector<28x128xf32>
    %4 = arith.truncf %3 : vector<28x128xf32> to vector<28x128xbf16>
    %c0_2 = arith.constant 0 : index
    %c0_3 = arith.constant 0 : index
    %5 = vector.load %arg15[%c0_2, %c0_3] : memref<56x28xbf16, #tpu.memory_space<vmem>>, vector<56x28xbf16>
    %cst = arith.constant dense<0.000000e+00> : vector<56x128xf32>
    %6 = tpu.matmul %5, %4, %cst {dimension_numbers = #tpu.dot_dimension_numbers<[1], [0], [0], [1], [0, 0, 1, 1], [], []>} : vector<56x28xbf16>, vector<28x128xbf16>, vector<56x128xf32> -> vector<56x128xf32>
    %c0_4 = arith.constant 0 : index
    %c0_5 = arith.constant 0 : index
    %7 = vector.load %arg16[%c0_4, %c0_5] : memref<56x28xbf16, #tpu.memory_space<vmem>>, vector<56x28xbf16>
    %cst_6 = arith.constant dense<0.000000e+00> : vector<56x128xf32>
    %8 = tpu.matmul %7, %4, %cst_6 {dimension_numbers = #tpu.dot_dimension_numbers<[1], [0], [0], [1], [0, 0, 1, 1], [], []>} : vector<56x28xbf16>, vector<28x128xbf16>, vector<56x128xf32> -> vector<56x128xf32>
    %9 = arith.truncf %6 : vector<56x128xf32> to vector<56x128xbf16>
    %10 = arith.truncf %8 : vector<56x128xf32> to vector<56x128xbf16>
    %c0_7 = arith.constant 0 : index
    %c0_8 = arith.constant 0 : index
    %11 = vector.load %arg18[%c0_7, %c0_8] : memref<56x128xbf16, #tpu.memory_space<vmem>>, vector<56x128xbf16>
    %12 = tpu.concatenate %9, %10, %11 in 1 : vector<56x128xbf16>, vector<56x128xbf16>, vector<56x128xbf16> -> vector<56x384xbf16>
    %c0_9 = arith.constant 0 : index
    %c0_10 = arith.constant 0 : index
    %c0_11 = arith.constant 0 : index
    %13 = vector.load %arg6[%c0_9, %c0_10, %c0_11] : memref<1x384x128xbf16, #tpu.memory_space<vmem>>, vector<1x384x128xbf16>
    %14 = vector.shape_cast %13 : vector<1x384x128xbf16> to vector<384x128xbf16>
    %cst_12 = arith.constant dense<0.000000e+00> : vector<56x128xf32>
    %15 = tpu.matmul %12, %14, %cst_12 {dimension_numbers = #tpu.dot_dimension_numbers<[1], [0], [0], [1], [0, 0, 1, 1], [], []>} : vector<56x384xbf16>, vector<384x128xbf16>, vector<56x128xf32> -> vector<56x128xf32>
    %c0_13 = arith.constant 0 : index
    %c0_14 = arith.constant 0 : index
    %c0_15 = arith.constant 0 : index
    %16 = vector.load %arg7[%c0_13, %c0_14, %c0_15] : memref<1x1x128xf32, #tpu.memory_space<vmem>>, vector<1x1x128xf32>
    %17 = vector.shape_cast %16 : vector<1x1x128xf32> to vector<1x128xf32>
    %18 = vector.broadcast %17 : vector<1x128xf32> to vector<56x128xf32>
    %19 = arith.addf %15, %18 : vector<56x128xf32>
    %cst_16 = arith.constant 0.000000e+00 : f32
    %20 = vector.broadcast %cst_16 : f32 to vector<56x128xf32>
    %21 = arith.maximumf %19, %20 : vector<56x128xf32>
    %c0_17 = arith.constant 0 : index
    %c0_18 = arith.constant 0 : index
    %c0_19 = arith.constant 0 : index
    %22 = vector.load %arg8[%c0_17, %c0_18, %c0_19] : memref<1x128x128xbf16, #tpu.memory_space<vmem>>, vector<1x128x128xbf16>
    %23 = vector.shape_cast %22 : vector<1x128x128xbf16> to vector<128x128xbf16>
    %24 = arith.truncf %21 : vector<56x128xf32> to vector<56x128xbf16>
    %cst_20 = arith.constant dense<0.000000e+00> : vector<56x128xf32>
    %25 = tpu.matmul %24, %23, %cst_20 {dimension_numbers = #tpu.dot_dimension_numbers<[1], [0], [0], [1], [0, 0, 1, 1], [], []>} : vector<56x128xbf16>, vector<128x128xbf16>, vector<56x128xf32> -> vector<56x128xf32>
    %c0_21 = arith.constant 0 : index
    %c0_22 = arith.constant 0 : index
    %c0_23 = arith.constant 0 : index
    %26 = vector.load %arg9[%c0_21, %c0_22, %c0_23] : memref<1x1x128xf32, #tpu.memory_space<vmem>>, vector<1x1x128xf32>
    %27 = vector.shape_cast %26 : vector<1x1x128xf32> to vector<1x128xf32>
    %28 = vector.broadcast %27 : vector<1x128xf32> to vector<56x128xf32>
    %29 = arith.addf %25, %28 : vector<56x128xf32>
    %c0_24 = arith.constant 0 : index
    %c0_25 = arith.constant 0 : index
    %30 = vector.load %arg17[%c0_24, %c0_25] : memref<28x56xbf16, #tpu.memory_space<vmem>>, vector<28x56xbf16>
    %31 = arith.truncf %29 : vector<56x128xf32> to vector<56x128xbf16>
    %cst_26 = arith.constant dense<0.000000e+00> : vector<28x128xf32>
    %32 = tpu.matmul %30, %31, %cst_26 {dimension_numbers = #tpu.dot_dimension_numbers<[1], [0], [0], [1], [0, 0, 1, 1], [], []>} : vector<28x56xbf16>, vector<56x128xbf16>, vector<28x128xf32> -> vector<28x128xf32>
    %33 = arith.truncf %32 : vector<28x128xf32> to vector<28x128xbf16>
    %34 = tpu.concatenate %4, %33 in 1 : vector<28x128xbf16>, vector<28x128xbf16> -> vector<28x256xbf16>
    %c0_27 = arith.constant 0 : index
    %c0_28 = arith.constant 0 : index
    %c0_29 = arith.constant 0 : index
    %35 = vector.load %arg10[%c0_27, %c0_28, %c0_29] : memref<1x256x128xbf16, #tpu.memory_space<vmem>>, vector<1x256x128xbf16>
    %36 = vector.shape_cast %35 : vector<1x256x128xbf16> to vector<256x128xbf16>
    %cst_30 = arith.constant dense<0.000000e+00> : vector<28x128xf32>
    %37 = tpu.matmul %34, %36, %cst_30 {dimension_numbers = #tpu.dot_dimension_numbers<[1], [0], [0], [1], [0, 0, 1, 1], [], []>} : vector<28x256xbf16>, vector<256x128xbf16>, vector<28x128xf32> -> vector<28x128xf32>
    %c0_31 = arith.constant 0 : index
    %c0_32 = arith.constant 0 : index
    %c0_33 = arith.constant 0 : index
    %38 = vector.load %arg11[%c0_31, %c0_32, %c0_33] : memref<1x1x128xf32, #tpu.memory_space<vmem>>, vector<1x1x128xf32>
    %39 = vector.shape_cast %38 : vector<1x1x128xf32> to vector<1x128xf32>
    %40 = vector.broadcast %39 : vector<1x128xf32> to vector<28x128xf32>
    %41 = arith.addf %37, %40 : vector<28x128xf32>
    %cst_34 = arith.constant 0.000000e+00 : f32
    %42 = vector.broadcast %cst_34 : f32 to vector<28x128xf32>
    %43 = arith.maximumf %41, %42 : vector<28x128xf32>
    %c0_35 = arith.constant 0 : index
    %c0_36 = arith.constant 0 : index
    %c0_37 = arith.constant 0 : index
    %44 = vector.load %arg12[%c0_35, %c0_36, %c0_37] : memref<1x128x128xbf16, #tpu.memory_space<vmem>>, vector<1x128x128xbf16>
    %45 = vector.shape_cast %44 : vector<1x128x128xbf16> to vector<128x128xbf16>
    %46 = arith.truncf %43 : vector<28x128xf32> to vector<28x128xbf16>
    %cst_38 = arith.constant dense<0.000000e+00> : vector<28x128xf32>
    %47 = tpu.matmul %46, %45, %cst_38 {dimension_numbers = #tpu.dot_dimension_numbers<[1], [0], [0], [1], [0, 0, 1, 1], [], []>} : vector<28x128xbf16>, vector<128x128xbf16>, vector<28x128xf32> -> vector<28x128xf32>
    %48 = arith.addf %3, %47 : vector<28x128xf32>
    %c0_39 = arith.constant 0 : index
    %c0_40 = arith.constant 0 : index
    %c0_41 = arith.constant 0 : index
    %49 = vector.load %arg13[%c0_39, %c0_40, %c0_41] : memref<1x1x128xf32, #tpu.memory_space<vmem>>, vector<1x1x128xf32>
    %50 = vector.shape_cast %49 : vector<1x1x128xf32> to vector<1x128xf32>
    %51 = vector.broadcast %50 : vector<1x128xf32> to vector<28x128xf32>
    %52 = arith.addf %48, %51 : vector<28x128xf32>
    %c0_42 = arith.constant 0 : index
    %c0_43 = arith.constant 0 : index
    %53 = vector.load %arg14[%c0_42, %c0_43] : memref<28x128xf32, #tpu.memory_space<vmem>>, vector<28x128xf32>
    tpu.vector_store %arg14[%c0_42, %c0_43], %52 {strides = array<i32>} : memref<28x128xf32, #tpu.memory_space<vmem>>, vector<28x128xf32>,
    return
  }
  func.func @transform_0(%arg0: i32) -> (i32, i32) {
    %c0_i32 = arith.constant 0 : i32
    %c0_i32_0 = arith.constant 0 : i32
    %c0_i32_1 = arith.constant 0 : i32
    return %c0_i32, %c0_i32_0 : i32, i32
  }
  func.func @transform_1(%arg0: i32) -> (i32, i32) {
    %c0_i32 = arith.constant 0 : i32
    %c0_i32_0 = arith.constant 0 : i32
    %c0_i32_1 = arith.constant 0 : i32
    return %c0_i32, %c0_i32_0 : i32, i32
  }
  func.func @transform_2(%arg0: i32) -> (i32, i32) {
    %c0_i32 = arith.constant 0 : i32
    %c0_i32_0 = arith.constant 0 : i32
    %c0_i32_1 = arith.constant 0 : i32
    return %c0_i32, %c0_i32_0 : i32, i32
  }
  func.func @transform_3(%arg0: i32) -> (i32, i32) {
    %c0_i32 = arith.constant 0 : i32
    %c0_i32_0 = arith.constant 0 : i32
    %c0_i32_1 = arith.constant 0 : i32
    return %c0_i32, %c0_i32_0 : i32, i32
  }
  func.func @transform_4(%arg0: i32) -> (i32, i32) {
    %c0_i32 = arith.constant 0 : i32
    %c0_i32_0 = arith.constant 0 : i32
    %c0_i32_1 = arith.constant 0 : i32
    return %c0_i32, %c0_i32_0 : i32, i32
  }
  func.func @transform_5(%arg0: i32) -> (i32, i32, i32) {
    %c0_i32 = arith.constant 0 : i32
    %c0_i32_0 = arith.constant 0 : i32
    %c0_i32_1 = arith.constant 0 : i32
    return %arg0, %c0_i32, %c0_i32_0 : i32, i32, i32
  }
  func.func @transform_6(%arg0: i32) -> (i32, i32, i32) {
    %c0_i32 = arith.constant 0 : i32
    %c0_i32_0 = arith.constant 0 : i32
    %c0_i32_1 = arith.constant 0 : i32
    return %arg0, %c0_i32, %c0_i32_0 : i32, i32, i32
  }
  func.func @transform_7(%arg0: i32) -> (i32, i32, i32) {
    %c0_i32 = arith.constant 0 : i32
    %c0_i32_0 = arith.constant 0 : i32
    %c0_i32_1 = arith.constant 0 : i32
    return %arg0, %c0_i32, %c0_i32_0 : i32, i32, i32
  }
  func.func @transform_8(%arg0: i32) -> (i32, i32, i32) {
    %c0_i32 = arith.constant 0 : i32
    %c0_i32_0 = arith.constant 0 : i32
    %c0_i32_1 = arith.constant 0 : i32
    return %arg0, %c0_i32, %c0_i32_0 : i32, i32, i32
  }
  func.func @transform_9(%arg0: i32) -> (i32, i32, i32) {
    %c0_i32 = arith.constant 0 : i32
    %c0_i32_0 = arith.constant 0 : i32
    %c0_i32_1 = arith.constant 0 : i32
    return %arg0, %c0_i32, %c0_i32_0 : i32, i32, i32
  }
  func.func @transform_10(%arg0: i32) -> (i32, i32, i32) {
    %c0_i32 = arith.constant 0 : i32
    %c0_i32_0 = arith.constant 0 : i32
    %c0_i32_1 = arith.constant 0 : i32
    return %arg0, %c0_i32, %c0_i32_0 : i32, i32, i32
  }
  func.func @transform_11(%arg0: i32) -> (i32, i32, i32) {
    %c0_i32 = arith.constant 0 : i32
    %c0_i32_0 = arith.constant 0 : i32
    %c0_i32_1 = arith.constant 0 : i32
    return %arg0, %c0_i32, %c0_i32_0 : i32, i32, i32
  }
  func.func @transform_12(%arg0: i32) -> (i32, i32, i32) {
    %c0_i32 = arith.constant 0 : i32
    %c0_i32_0 = arith.constant 0 : i32
    %c0_i32_1 = arith.constant 0 : i32
    return %arg0, %c0_i32, %c0_i32_0 : i32, i32, i32
  }
  func.func @transform_13(%arg0: i32) -> (i32, i32) {
    %c0_i32 = arith.constant 0 : i32
    %c0_i32_0 = arith.constant 0 : i32
    %c0_i32_1 = arith.constant 0 : i32
    return %c0_i32, %c0_i32_0 : i32, i32
  }
}

module attributes {stable_mosaic.version = 11 : i64} {
  func.func @_gmp_stack_kernel(%arg0: i32, %arg1: memref<28x128xf32, #tpu.memory_space<vmem>>, %arg2: memref<28x128xf32, #tpu.memory_space<vmem>>, %arg3: memref<56x1xi32, #tpu.memory_space<vmem>>, %arg4: memref<56x1xi32, #tpu.memory_space<vmem>>, %arg5: memref<1x56xi32, #tpu.memory_space<vmem>>, %arg6: memref<1x384x128xbf16, #tpu.memory_space<vmem>>, %arg7: memref<1x1x128xf32, #tpu.memory_space<vmem>>, %arg8: memref<1x128x128xbf16, #tpu.memory_space<vmem>>, %arg9: memref<1x1x128xf32, #tpu.memory_space<vmem>>, %arg10: memref<1x256x128xbf16, #tpu.memory_space<vmem>>, %arg11: memref<1x1x128xf32, #tpu.memory_space<vmem>>, %arg12: memref<1x128x128xbf16, #tpu.memory_space<vmem>>, %arg13: memref<1x1x128xf32, #tpu.memory_space<vmem>>, %arg14: memref<28x128xf32, #tpu.memory_space<vmem>>, %arg15: memref<56x28xbf16, #tpu.memory_space<vmem>>, %arg16: memref<56x28xbf16, #tpu.memory_space<vmem>>, %arg17: memref<28x56xbf16, #tpu.memory_space<vmem>>, %arg18: memref<56x128xbf16, #tpu.memory_space<vmem>>) attributes {dimension_semantics = [#tpu.dimension_semantics<arbitrary>], iteration_bounds = array<i64: 2>, scalar_prefetch = 0 : i64, scratch_operands = 4 : i64, tpu.core_type = #tpu.core_type<tc>, window_params = [{pipeline_mode = #tpu.pipeline_mode<synchronous>, transform_indices = @transform_0, window_bounds = array<i64: 28, 128>}, {pipeline_mode = #tpu.pipeline_mode<synchronous>, transform_indices = @transform_1, window_bounds = array<i64: 28, 128>}, {pipeline_mode = #tpu.pipeline_mode<synchronous>, transform_indices = @transform_2, window_bounds = array<i64: 56, 1>}, {pipeline_mode = #tpu.pipeline_mode<synchronous>, transform_indices = @transform_3, window_bounds = array<i64: 56, 1>}, {pipeline_mode = #tpu.pipeline_mode<synchronous>, transform_indices = @transform_4, window_bounds = array<i64: 1, 56>}, {transform_indices = @transform_5, window_bounds = array<i64: 1, 384, 128>}, {transform_indices = @transform_6, window_bounds = array<i64: 1, 1, 128>}, {transform_indices = @transform_7, window_bounds = array<i64: 1, 128, 128>}, {transform_indices = @transform_8, window_bounds = array<i64: 1, 1, 128>}, {transform_indices = @transform_9, window_bounds = array<i64: 1, 256, 128>}, {transform_indices = @transform_10, window_bounds = array<i64: 1, 1, 128>}, {transform_indices = @transform_11, window_bounds = array<i64: 1, 128, 128>}, {transform_indices = @transform_12, window_bounds = array<i64: 1, 1, 128>}, {pipeline_mode = #tpu.pipeline_mode<synchronous>, transform_indices = @transform_13, window_bounds = array<i64: 28, 128>}]} {
    %c0_i32 = arith.constant 0 : i32
    %0 = arith.cmpi eq, %arg0, %c0_i32 : i32
    %1 = arith.extui %0 : i1 to i32
    %c0_i32_0 = arith.constant 0 : i32
    %2 = arith.cmpi ne, %1, %c0_i32_0 : i32
    scf.if %2 {
      %c0_44 = arith.constant 0 : index
      %c0_45 = arith.constant 0 : index
      %54 = vector.load %arg1[%c0_44, %c0_45] : memref<28x128xf32, #tpu.memory_space<vmem>>, vector<28x128xf32>
      %c0_46 = arith.constant 0 : index
      %c0_47 = arith.constant 0 : index
      %55 = vector.load %arg14[%c0_46, %c0_47] : memref<28x128xf32, #tpu.memory_space<vmem>>, vector<28x128xf32>
      tpu.vector_store %arg14[%c0_46, %c0_47], %54 {strides = array<i32>} : memref<28x128xf32, #tpu.memory_space<vmem>>, vector<28x128xf32>,
      %56 = tpu.iota {dimensions = array<i32: 1>} : vector<56x28xi32>
      %c0_48 = arith.constant 0 : index
      %c0_49 = arith.constant 0 : index
      %57 = vector.load %arg3[%c0_48, %c0_49] : memref<56x1xi32, #tpu.memory_space<vmem>>, vector<56x1xi32>
      %58 = vector.broadcast %57 : vector<56x1xi32> to vector<56x28xi32>
      %59 = arith.cmpi eq, %56, %58 : vector<56x28xi32>
      %cst_50 = arith.constant 1.000000e+00 : f32
      %cst_51 = arith.constant 0.000000e+00 : f32
      %60 = vector.broadcast %cst_50 : f32 to vector<56x28xf32>
      %61 = vector.broadcast %cst_51 : f32 to vector<56x28xf32>
      %62 = arith.select %59, %60, %61 : vector<56x28xi1>, vector<56x28xf32>
      %63 = arith.truncf %62 : vector<56x28xf32> to vector<56x28xbf16>
      %c0_52 = arith.constant 0 : index
      %c0_53 = arith.constant 0 : index
      %64 = vector.load %arg15[%c0_52, %c0_53] : memref<56x28xbf16, #tpu.memory_space<vmem>>, vector<56x28xbf16>
      tpu.vector_store %arg15[%c0_52, %c0_53], %63 {strides = array<i32>} : memref<56x28xbf16, #tpu.memory_space<vmem>>, vector<56x28xbf16>,
      %c0_54 = arith.constant 0 : index
      %c0_55 = arith.constant 0 : index
      %65 = vector.load %arg4[%c0_54, %c0_55] : memref<56x1xi32, #tpu.memory_space<vmem>>, vector<56x1xi32>
      %66 = vector.broadcast %65 : vector<56x1xi32> to vector<56x28xi32>
      %67 = arith.cmpi eq, %56, %66 : vector<56x28xi32>
      %cst_56 = arith.constant 1.000000e+00 : f32
      %cst_57 = arith.constant 0.000000e+00 : f32
      %68 = vector.broadcast %cst_56 : f32 to vector<56x28xf32>
      %69 = vector.broadcast %cst_57 : f32 to vector<56x28xf32>
      %70 = arith.select %67, %68, %69 : vector<56x28xi1>, vector<56x28xf32>
      %71 = arith.truncf %70 : vector<56x28xf32> to vector<56x28xbf16>
      %c0_58 = arith.constant 0 : index
      %c0_59 = arith.constant 0 : index
      %72 = vector.load %arg16[%c0_58, %c0_59] : memref<56x28xbf16, #tpu.memory_space<vmem>>, vector<56x28xbf16>
      tpu.vector_store %arg16[%c0_58, %c0_59], %71 {strides = array<i32>} : memref<56x28xbf16, #tpu.memory_space<vmem>>, vector<56x28xbf16>,
      %73 = tpu.iota {dimensions = array<i32: 0>} : vector<28x56xi32>
      %c0_60 = arith.constant 0 : index
      %c0_61 = arith.constant 0 : index
      %74 = vector.load %arg5[%c0_60, %c0_61] : memref<1x56xi32, #tpu.memory_space<vmem>>, vector<1x56xi32>
      %75 = vector.broadcast %74 : vector<1x56xi32> to vector<28x56xi32>
      %76 = arith.cmpi eq, %73, %75 : vector<28x56xi32>
      %cst_62 = arith.constant 1.000000e+00 : f32
      %cst_63 = arith.constant 0.000000e+00 : f32
      %77 = vector.broadcast %cst_62 : f32 to vector<28x56xf32>
      %78 = vector.broadcast %cst_63 : f32 to vector<28x56xf32>
      %79 = arith.select %76, %77, %78 : vector<28x56xi1>, vector<28x56xf32>
      %80 = arith.truncf %79 : vector<28x56xf32> to vector<28x56xbf16>
      %c0_64 = arith.constant 0 : index
      %c0_65 = arith.constant 0 : index
      %81 = vector.load %arg17[%c0_64, %c0_65] : memref<28x56xbf16, #tpu.memory_space<vmem>>, vector<28x56xbf16>
      tpu.vector_store %arg17[%c0_64, %c0_65], %80 {strides = array<i32>} : memref<28x56xbf16, #tpu.memory_space<vmem>>, vector<28x56xbf16>,
      %c0_66 = arith.constant 0 : index
      %c0_67 = arith.constant 0 : index
      %82 = vector.load %arg2[%c0_66, %c0_67] : memref<28x128xf32, #tpu.memory_space<vmem>>, vector<28x128xf32>
      %83 = arith.truncf %82 : vector<28x128xf32> to vector<28x128xbf16>
      %c0_68 = arith.constant 0 : index
      %c0_69 = arith.constant 0 : index
      %84 = vector.load %arg16[%c0_68, %c0_69] : memref<56x28xbf16, #tpu.memory_space<vmem>>, vector<56x28xbf16>
      %cst_70 = arith.constant dense<0.000000e+00> : vector<56x128xf32>
      %85 = tpu.matmul %84, %83, %cst_70 {dimension_numbers = #tpu.dot_dimension_numbers<[1], [0], [0], [1], [0, 0, 1, 1], [], []>} : vector<56x28xbf16>, vector<28x128xbf16>, vector<56x128xf32> -> vector<56x128xf32>
      %c0_71 = arith.constant 0 : index
      %c0_72 = arith.constant 0 : index
      %86 = vector.load %arg15[%c0_71, %c0_72] : memref<56x28xbf16, #tpu.memory_space<vmem>>, vector<56x28xbf16>
      %cst_73 = arith.constant dense<0.000000e+00> : vector<56x128xf32>
      %87 = tpu.matmul %86, %83, %cst_73 {dimension_numbers = #tpu.dot_dimension_numbers<[1], [0], [0], [1], [0, 0, 1, 1], [], []>} : vector<56x28xbf16>, vector<28x128xbf16>, vector<56x128xf32> -> vector<56x128xf32>
      %88 = arith.subf %85, %87 : vector<56x128xf32>
      %89 = arith.truncf %88 : vector<56x128xf32> to vector<56x128xbf16>
      %c0_74 = arith.constant 0 : index
      %c0_75 = arith.constant 0 : index
      %90 = vector.load %arg18[%c0_74, %c0_75] : memref<56x128xbf16, #tpu.memory_space<vmem>>, vector<56x128xbf16>
      tpu.vector_store %arg18[%c0_74, %c0_75], %89 {strides = array<i32>} : memref<56x128xbf16, #tpu.memory_space<vmem>>, vector<56x128xbf16>,
    } else {
    }
    %c0 = arith.constant 0 : index
    %c0_1 = arith.constant 0 : index
    %3 = vector.load %arg14[%c0, %c0_1] : memref<28x128xf32, #tpu.memory_space<vmem>>, vector<28x128xf32>
    %4 = arith.truncf %3 : vector<28x128xf32> to vector<28x128xbf16>
    %c0_2 = arith.constant 0 : index
    %c0_3 = arith.constant 0 : index
    %5 = vector.load %arg15[%c0_2, %c0_3] : memref<56x28xbf16, #tpu.memory_space<vmem>>, vector<56x28xbf16>
    %cst = arith.constant dense<0.000000e+00> : vector<56x128xf32>
    %6 = tpu.matmul %5, %4, %cst {dimension_numbers = #tpu.dot_dimension_numbers<[1], [0], [0], [1], [0, 0, 1, 1], [], []>} : vector<56x28xbf16>, vector<28x128xbf16>, vector<56x128xf32> -> vector<56x128xf32>
    %c0_4 = arith.constant 0 : index
    %c0_5 = arith.constant 0 : index
    %7 = vector.load %arg16[%c0_4, %c0_5] : memref<56x28xbf16, #tpu.memory_space<vmem>>, vector<56x28xbf16>
    %cst_6 = arith.constant dense<0.000000e+00> : vector<56x128xf32>
    %8 = tpu.matmul %7, %4, %cst_6 {dimension_numbers = #tpu.dot_dimension_numbers<[1], [0], [0], [1], [0, 0, 1, 1], [], []>} : vector<56x28xbf16>, vector<28x128xbf16>, vector<56x128xf32> -> vector<56x128xf32>
    %9 = arith.truncf %6 : vector<56x128xf32> to vector<56x128xbf16>
    %10 = arith.truncf %8 : vector<56x128xf32> to vector<56x128xbf16>
    %c0_7 = arith.constant 0 : index
    %c0_8 = arith.constant 0 : index
    %11 = vector.load %arg18[%c0_7, %c0_8] : memref<56x128xbf16, #tpu.memory_space<vmem>>, vector<56x128xbf16>
    %12 = tpu.concatenate %9, %10, %11 in 1 : vector<56x128xbf16>, vector<56x128xbf16>, vector<56x128xbf16> -> vector<56x384xbf16>
    %c0_9 = arith.constant 0 : index
    %c0_10 = arith.constant 0 : index
    %c0_11 = arith.constant 0 : index
    %13 = vector.load %arg6[%c0_9, %c0_10, %c0_11] : memref<1x384x128xbf16, #tpu.memory_space<vmem>>, vector<1x384x128xbf16>
    %14 = vector.shape_cast %13 : vector<1x384x128xbf16> to vector<384x128xbf16>
    %cst_12 = arith.constant dense<0.000000e+00> : vector<56x128xf32>
    %15 = tpu.matmul %12, %14, %cst_12 {dimension_numbers = #tpu.dot_dimension_numbers<[1], [0], [0], [1], [0, 0, 1, 1], [], []>} : vector<56x384xbf16>, vector<384x128xbf16>, vector<56x128xf32> -> vector<56x128xf32>
    %c0_13 = arith.constant 0 : index
    %c0_14 = arith.constant 0 : index
    %c0_15 = arith.constant 0 : index
    %16 = vector.load %arg7[%c0_13, %c0_14, %c0_15] : memref<1x1x128xf32, #tpu.memory_space<vmem>>, vector<1x1x128xf32>
    %17 = vector.shape_cast %16 : vector<1x1x128xf32> to vector<1x128xf32>
    %18 = vector.broadcast %17 : vector<1x128xf32> to vector<56x128xf32>
    %19 = arith.addf %15, %18 : vector<56x128xf32>
    %cst_16 = arith.constant 0.000000e+00 : f32
    %20 = vector.broadcast %cst_16 : f32 to vector<56x128xf32>
    %21 = arith.maximumf %19, %20 : vector<56x128xf32>
    %c0_17 = arith.constant 0 : index
    %c0_18 = arith.constant 0 : index
    %c0_19 = arith.constant 0 : index
    %22 = vector.load %arg8[%c0_17, %c0_18, %c0_19] : memref<1x128x128xbf16, #tpu.memory_space<vmem>>, vector<1x128x128xbf16>
    %23 = vector.shape_cast %22 : vector<1x128x128xbf16> to vector<128x128xbf16>
    %24 = arith.truncf %21 : vector<56x128xf32> to vector<56x128xbf16>
    %cst_20 = arith.constant dense<0.000000e+00> : vector<56x128xf32>
    %25 = tpu.matmul %24, %23, %cst_20 {dimension_numbers = #tpu.dot_dimension_numbers<[1], [0], [0], [1], [0, 0, 1, 1], [], []>} : vector<56x128xbf16>, vector<128x128xbf16>, vector<56x128xf32> -> vector<56x128xf32>
    %c0_21 = arith.constant 0 : index
    %c0_22 = arith.constant 0 : index
    %c0_23 = arith.constant 0 : index
    %26 = vector.load %arg9[%c0_21, %c0_22, %c0_23] : memref<1x1x128xf32, #tpu.memory_space<vmem>>, vector<1x1x128xf32>
    %27 = vector.shape_cast %26 : vector<1x1x128xf32> to vector<1x128xf32>
    %28 = vector.broadcast %27 : vector<1x128xf32> to vector<56x128xf32>
    %29 = arith.addf %25, %28 : vector<56x128xf32>
    %c0_24 = arith.constant 0 : index
    %c0_25 = arith.constant 0 : index
    %30 = vector.load %arg17[%c0_24, %c0_25] : memref<28x56xbf16, #tpu.memory_space<vmem>>, vector<28x56xbf16>
    %31 = arith.truncf %29 : vector<56x128xf32> to vector<56x128xbf16>
    %cst_26 = arith.constant dense<0.000000e+00> : vector<28x128xf32>
    %32 = tpu.matmul %30, %31, %cst_26 {dimension_numbers = #tpu.dot_dimension_numbers<[1], [0], [0], [1], [0, 0, 1, 1], [], []>} : vector<28x56xbf16>, vector<56x128xbf16>, vector<28x128xf32> -> vector<28x128xf32>
    %33 = arith.truncf %32 : vector<28x128xf32> to vector<28x128xbf16>
    %34 = tpu.concatenate %4, %33 in 1 : vector<28x128xbf16>, vector<28x128xbf16> -> vector<28x256xbf16>
    %c0_27 = arith.constant 0 : index
    %c0_28 = arith.constant 0 : index
    %c0_29 = arith.constant 0 : index
    %35 = vector.load %arg10[%c0_27, %c0_28, %c0_29] : memref<1x256x128xbf16, #tpu.memory_space<vmem>>, vector<1x256x128xbf16>
    %36 = vector.shape_cast %35 : vector<1x256x128xbf16> to vector<256x128xbf16>
    %cst_30 = arith.constant dense<0.000000e+00> : vector<28x128xf32>
    %37 = tpu.matmul %34, %36, %cst_30 {dimension_numbers = #tpu.dot_dimension_numbers<[1], [0], [0], [1], [0, 0, 1, 1], [], []>} : vector<28x256xbf16>, vector<256x128xbf16>, vector<28x128xf32> -> vector<28x128xf32>
    %c0_31 = arith.constant 0 : index
    %c0_32 = arith.constant 0 : index
    %c0_33 = arith.constant 0 : index
    %38 = vector.load %arg11[%c0_31, %c0_32, %c0_33] : memref<1x1x128xf32, #tpu.memory_space<vmem>>, vector<1x1x128xf32>
    %39 = vector.shape_cast %38 : vector<1x1x128xf32> to vector<1x128xf32>
    %40 = vector.broadcast %39 : vector<1x128xf32> to vector<28x128xf32>
    %41 = arith.addf %37, %40 : vector<28x128xf32>
    %cst_34 = arith.constant 0.000000e+00 : f32
    %42 = vector.broadcast %cst_34 : f32 to vector<28x128xf32>
    %43 = arith.maximumf %41, %42 : vector<28x128xf32>
    %c0_35 = arith.constant 0 : index
    %c0_36 = arith.constant 0 : index
    %c0_37 = arith.constant 0 : index
    %44 = vector.load %arg12[%c0_35, %c0_36, %c0_37] : memref<1x128x128xbf16, #tpu.memory_space<vmem>>, vector<1x128x128xbf16>
    %45 = vector.shape_cast %44 : vector<1x128x128xbf16> to vector<128x128xbf16>
    %46 = arith.truncf %43 : vector<28x128xf32> to vector<28x128xbf16>
    %cst_38 = arith.constant dense<0.000000e+00> : vector<28x128xf32>
    %47 = tpu.matmul %46, %45, %cst_38 {dimension_numbers = #tpu.dot_dimension_numbers<[1], [0], [0], [1], [0, 0, 1, 1], [], []>} : vector<28x128xbf16>, vector<128x128xbf16>, vector<28x128xf32> -> vector<28x128xf32>
    %48 = arith.addf %3, %47 : vector<28x128xf32>
    %c0_39 = arith.constant 0 : index
    %c0_40 = arith.constant 0 : index
    %c0_41 = arith.constant 0 : index
    %49 = vector.load %arg13[%c0_39, %c0_40, %c0_41] : memref<1x1x128xf32, #tpu.memory_space<vmem>>, vector<1x1x128xf32>
    %50 = vector.shape_cast %49 : vector<1x1x128xf32> to vector<1x128xf32>
    %51 = vector.broadcast %50 : vector<1x128xf32> to vector<28x128xf32>
    %52 = arith.addf %48, %51 : vector<28x128xf32>
    %c0_42 = arith.constant 0 : index
    %c0_43 = arith.constant 0 : index
    %53 = vector.load %arg14[%c0_42, %c0_43] : memref<28x128xf32, #tpu.memory_space<vmem>>, vector<28x128xf32>
    tpu.vector_store %arg14[%c0_42, %c0_43], %52 {strides = array<i32>} : memref<28x128xf32, #tpu.memory_space<vmem>>, vector<28x128xf32>,
    return
  }
  func.func @transform_0(%arg0: i32) -> (i32, i32) {
    %c0_i32 = arith.constant 0 : i32
    %c0_i32_0 = arith.constant 0 : i32
    %c0_i32_1 = arith.constant 0 : i32
    return %c0_i32, %c0_i32_0 : i32, i32
  }
  func.func @transform_1(%arg0: i32) -> (i32, i32) {
    %c0_i32 = arith.constant 0 : i32
    %c0_i32_0 = arith.constant 0 : i32
    %c0_i32_1 = arith.constant 0 : i32
    return %c0_i32, %c0_i32_0 : i32, i32
  }
  func.func @transform_2(%arg0: i32) -> (i32, i32) {
    %c0_i32 = arith.constant 0 : i32
    %c0_i32_0 = arith.constant 0 : i32
    %c0_i32_1 = arith.constant 0 : i32
    return %c0_i32, %c0_i32_0 : i32, i32
  }
  func.func @transform_3(%arg0: i32) -> (i32, i32) {
    %c0_i32 = arith.constant 0 : i32
    %c0_i32_0 = arith.constant 0 : i32
    %c0_i32_1 = arith.constant 0 : i32
    return %c0_i32, %c0_i32_0 : i32, i32
  }
  func.func @transform_4(%arg0: i32) -> (i32, i32) {
    %c0_i32 = arith.constant 0 : i32
    %c0_i32_0 = arith.constant 0 : i32
    %c0_i32_1 = arith.constant 0 : i32
    return %c0_i32, %c0_i32_0 : i32, i32
  }
  func.func @transform_5(%arg0: i32) -> (i32, i32, i32) {
    %c0_i32 = arith.constant 0 : i32
    %c0_i32_0 = arith.constant 0 : i32
    %c0_i32_1 = arith.constant 0 : i32
    return %arg0, %c0_i32, %c0_i32_0 : i32, i32, i32
  }
  func.func @transform_6(%arg0: i32) -> (i32, i32, i32) {
    %c0_i32 = arith.constant 0 : i32
    %c0_i32_0 = arith.constant 0 : i32
    %c0_i32_1 = arith.constant 0 : i32
    return %arg0, %c0_i32, %c0_i32_0 : i32, i32, i32
  }
  func.func @transform_7(%arg0: i32) -> (i32, i32, i32) {
    %c0_i32 = arith.constant 0 : i32
    %c0_i32_0 = arith.constant 0 : i32
    %c0_i32_1 = arith.constant 0 : i32
    return %arg0, %c0_i32, %c0_i32_0 : i32, i32, i32
  }
  func.func @transform_8(%arg0: i32) -> (i32, i32, i32) {
    %c0_i32 = arith.constant 0 : i32
    %c0_i32_0 = arith.constant 0 : i32
    %c0_i32_1 = arith.constant 0 : i32
    return %arg0, %c0_i32, %c0_i32_0 : i32, i32, i32
  }
  func.func @transform_9(%arg0: i32) -> (i32, i32, i32) {
    %c0_i32 = arith.constant 0 : i32
    %c0_i32_0 = arith.constant 0 : i32
    %c0_i32_1 = arith.constant 0 : i32
    return %arg0, %c0_i32, %c0_i32_0 : i32, i32, i32
  }
  func.func @transform_10(%arg0: i32) -> (i32, i32, i32) {
    %c0_i32 = arith.constant 0 : i32
    %c0_i32_0 = arith.constant 0 : i32
    %c0_i32_1 = arith.constant 0 : i32
    return %arg0, %c0_i32, %c0_i32_0 : i32, i32, i32
  }
  func.func @transform_11(%arg0: i32) -> (i32, i32, i32) {
    %c0_i32 = arith.constant 0 : i32
    %c0_i32_0 = arith.constant 0 : i32
    %c0_i32_1 = arith.constant 0 : i32
    return %arg0, %c0_i32, %c0_i32_0 : i32, i32, i32
  }
  func.func @transform_12(%arg0: i32) -> (i32, i32, i32) {
    %c0_i32 = arith.constant 0 : i32
    %c0_i32_0 = arith.constant 0 : i32
    %c0_i32_1 = arith.constant 0 : i32
    return %arg0, %c0_i32, %c0_i32_0 : i32, i32, i32
  }
  func.func @transform_13(%arg0: i32) -> (i32, i32) {
    %c0_i32 = arith.constant 0 : i32
    %c0_i32_0 = arith.constant 0 : i32
    %c0_i32_1 = arith.constant 0 : i32
    return %c0_i32, %c0_i32_0 : i32, i32
  }
}

module attributes {stable_mosaic.version = 11 : i64} {
  func.func @_perceiver_kernel(%arg0: i32, %arg1: i32, %arg2: memref<1x16x128xf32, #tpu.memory_space<vmem>>, %arg3: memref<1x1x16xf32, #tpu.memory_space<vmem>>, %arg4: memref<8x128xf32, #tpu.memory_space<vmem>>, %arg5: memref<1x128xf32, #tpu.memory_space<vmem>>, %arg6: memref<1x128xf32, #tpu.memory_space<vmem>>, %arg7: memref<1x128xf32, #tpu.memory_space<vmem>>, %arg8: memref<1x128xf32, #tpu.memory_space<vmem>>, %arg9: memref<128x128xbf16, #tpu.memory_space<vmem>>, %arg10: memref<1x128xf32, #tpu.memory_space<vmem>>, %arg11: memref<128x256xbf16, #tpu.memory_space<vmem>>, %arg12: memref<1x256xf32, #tpu.memory_space<vmem>>, %arg13: memref<128x128xbf16, #tpu.memory_space<vmem>>, %arg14: memref<1x128xf32, #tpu.memory_space<vmem>>, %arg15: memref<1x128xf32, #tpu.memory_space<vmem>>, %arg16: memref<1x128xf32, #tpu.memory_space<vmem>>, %arg17: memref<128x128xbf16, #tpu.memory_space<vmem>>, %arg18: memref<1x128xf32, #tpu.memory_space<vmem>>, %arg19: memref<128x128xbf16, #tpu.memory_space<vmem>>, %arg20: memref<1x128xf32, #tpu.memory_space<vmem>>, %arg21: memref<1x1x128xf32, #tpu.memory_space<vmem>>, %arg22: memref<1x1x128xf32, #tpu.memory_space<vmem>>, %arg23: memref<1x128x384xbf16, #tpu.memory_space<vmem>>, %arg24: memref<1x1x384xf32, #tpu.memory_space<vmem>>, %arg25: memref<1x128x128xbf16, #tpu.memory_space<vmem>>, %arg26: memref<1x1x128xf32, #tpu.memory_space<vmem>>, %arg27: memref<1x1x128xf32, #tpu.memory_space<vmem>>, %arg28: memref<1x1x128xf32, #tpu.memory_space<vmem>>, %arg29: memref<1x128x128xbf16, #tpu.memory_space<vmem>>, %arg30: memref<1x1x128xf32, #tpu.memory_space<vmem>>, %arg31: memref<1x128x128xbf16, #tpu.memory_space<vmem>>, %arg32: memref<1x1x128xf32, #tpu.memory_space<vmem>>, %arg33: memref<1x128xf32, #tpu.memory_space<vmem>>, %arg34: memref<1x128xf32, #tpu.memory_space<vmem>>, %arg35: memref<1x128xf32, #tpu.memory_space<vmem>>, %arg36: memref<1x128xf32, #tpu.memory_space<vmem>>, %arg37: memref<128x128xbf16, #tpu.memory_space<vmem>>, %arg38: memref<1x128xf32, #tpu.memory_space<vmem>>, %arg39: memref<128x256xbf16, #tpu.memory_space<vmem>>, %arg40: memref<1x256xf32, #tpu.memory_space<vmem>>, %arg41: memref<128x128xbf16, #tpu.memory_space<vmem>>, %arg42: memref<1x128xf32, #tpu.memory_space<vmem>>, %arg43: memref<128x128xbf16, #tpu.memory_space<vmem>>, %arg44: memref<1x128xf32, #tpu.memory_space<vmem>>, %arg45: memref<1x16x128xf32, #tpu.memory_space<vmem>>, %arg46: memref<8x128xf32, #tpu.memory_space<vmem>>) attributes {dimension_semantics = [#tpu.dimension_semantics<parallel>, #tpu.dimension_semantics<arbitrary>], iteration_bounds = array<i64: 2, 4>, scalar_prefetch = 0 : i64, scratch_operands = 1 : i64, tpu.core_type = #tpu.core_type<tc>, window_params = [{transform_indices = @transform_0, window_bounds = array<i64: 1, 16, 128>}, {transform_indices = @transform_1, window_bounds = array<i64: 1, 1, 16>}, {pipeline_mode = #tpu.pipeline_mode<synchronous>, transform_indices = @transform_2, window_bounds = array<i64: 8, 128>}, {pipeline_mode = #tpu.pipeline_mode<synchronous>, transform_indices = @transform_3, window_bounds = array<i64: 1, 128>}, {pipeline_mode = #tpu.pipeline_mode<synchronous>, transform_indices = @transform_4, window_bounds = array<i64: 1, 128>}, {pipeline_mode = #tpu.pipeline_mode<synchronous>, transform_indices = @transform_5, window_bounds = array<i64: 1, 128>}, {pipeline_mode = #tpu.pipeline_mode<synchronous>, transform_indices = @transform_6, window_bounds = array<i64: 1, 128>}, {pipeline_mode = #tpu.pipeline_mode<synchronous>, transform_indices = @transform_7, window_bounds = array<i64: 128, 128>}, {pipeline_mode = #tpu.pipeline_mode<synchronous>, transform_indices = @transform_8, window_bounds = array<i64: 1, 128>}, {pipeline_mode = #tpu.pipeline_mode<synchronous>, transform_indices = @transform_9, window_bounds = array<i64: 128, 256>}, {pipeline_mode = #tpu.pipeline_mode<synchronous>, transform_indices = @transform_10, window_bounds = array<i64: 1, 256>}, {pipeline_mode = #tpu.pipeline_mode<synchronous>, transform_indices = @transform_11, window_bounds = array<i64: 128, 128>}, {pipeline_mode = #tpu.pipeline_mode<synchronous>, transform_indices = @transform_12, window_bounds = array<i64: 1, 128>}, {pipeline_mode = #tpu.pipeline_mode<synchronous>, transform_indices = @transform_13, window_bounds = array<i64: 1, 128>}, {pipeline_mode = #tpu.pipeline_mode<synchronous>, transform_indices = @transform_14, window_bounds = array<i64: 1, 128>}, {pipeline_mode = #tpu.pipeline_mode<synchronous>, transform_indices = @transform_15, window_bounds = array<i64: 128, 128>}, {pipeline_mode = #tpu.pipeline_mode<synchronous>, transform_indices = @transform_16, window_bounds = array<i64: 1, 128>}, {pipeline_mode = #tpu.pipeline_mode<synchronous>, transform_indices = @transform_17, window_bounds = array<i64: 128, 128>}, {pipeline_mode = #tpu.pipeline_mode<synchronous>, transform_indices = @transform_18, window_bounds = array<i64: 1, 128>}, {transform_indices = @transform_19, window_bounds = array<i64: 1, 1, 128>}, {transform_indices = @transform_20, window_bounds = array<i64: 1, 1, 128>}, {transform_indices = @transform_21, window_bounds = array<i64: 1, 128, 384>}, {transform_indices = @transform_22, window_bounds = array<i64: 1, 1, 384>}, {transform_indices = @transform_23, window_bounds = array<i64: 1, 128, 128>}, {transform_indices = @transform_24, window_bounds = array<i64: 1, 1, 128>}, {transform_indices = @transform_25, window_bounds = array<i64: 1, 1, 128>}, {transform_indices = @transform_26, window_bounds = array<i64: 1, 1, 128>}, {transform_indices = @transform_27, window_bounds = array<i64: 1, 128, 128>}, {transform_indices = @transform_28, window_bounds = array<i64: 1, 1, 128>}, {transform_indices = @transform_29, window_bounds = array<i64: 1, 128, 128>}, {transform_indices = @transform_30, window_bounds = array<i64: 1, 1, 128>}, {pipeline_mode = #tpu.pipeline_mode<synchronous>, transform_indices = @transform_31, window_bounds = array<i64: 1, 128>}, {pipeline_mode = #tpu.pipeline_mode<synchronous>, transform_indices = @transform_32, window_bounds = array<i64: 1, 128>}, {pipeline_mode = #tpu.pipeline_mode<synchronous>, transform_indices = @transform_33, window_bounds = array<i64: 1, 128>}, {pipeline_mode = #tpu.pipeline_mode<synchronous>, transform_indices = @transform_34, window_bounds = array<i64: 1, 128>}, {pipeline_mode = #tpu.pipeline_mode<synchronous>, transform_indices = @transform_35, window_bounds = array<i64: 128, 128>}, {pipeline_mode = #tpu.pipeline_mode<synchronous>, transform_indices = @transform_36, window_bounds = array<i64: 1, 128>}, {pipeline_mode = #tpu.pipeline_mode<synchronous>, transform_indices = @transform_37, window_bounds = array<i64: 128, 256>}, {pipeline_mode = #tpu.pipeline_mode<synchronous>, transform_indices = @transform_38, window_bounds = array<i64: 1, 256>}, {pipeline_mode = #tpu.pipeline_mode<synchronous>, transform_indices = @transform_39, window_bounds = array<i64: 128, 128>}, {pipeline_mode = #tpu.pipeline_mode<synchronous>, transform_indices = @transform_40, window_bounds = array<i64: 1, 128>}, {pipeline_mode = #tpu.pipeline_mode<synchronous>, transform_indices = @transform_41, window_bounds = array<i64: 128, 128>}, {pipeline_mode = #tpu.pipeline_mode<synchronous>, transform_indices = @transform_42, window_bounds = array<i64: 1, 128>}, {transform_indices = @transform_43, window_bounds = array<i64: 1, 16, 128>}]} {
    %c0_i32 = arith.constant 0 : i32
    %0 = arith.cmpi eq, %arg1, %c0_i32 : i32
    %1 = arith.extui %0 : i1 to i32
    %c0_i32_0 = arith.constant 0 : i32
    %2 = arith.cmpi ne, %1, %c0_i32_0 : i32
    scf.if %2 {
      %c0 = arith.constant 0 : index
      %c0_3 = arith.constant 0 : index
      %c0_4 = arith.constant 0 : index
      %11 = vector.load %arg2[%c0, %c0_3, %c0_4] : memref<1x16x128xf32, #tpu.memory_space<vmem>>, vector<1x16x128xf32>
      %12 = vector.shape_cast %11 : vector<1x16x128xf32> to vector<16x128xf32>
      %c0_5 = arith.constant 0 : index
      %c0_6 = arith.constant 0 : index
      %c0_7 = arith.constant 0 : index
      %13 = vector.load %arg3[%c0_5, %c0_6, %c0_7] : memref<1x1x16xf32, #tpu.memory_space<vmem>>, vector<1x1x16xf32>
      %14 = vector.shape_cast %13 : vector<1x1x16xf32> to vector<1x16xf32>
      %c0_8 = arith.constant 0 : index
      %c0_9 = arith.constant 0 : index
      %15 = vector.load %arg4[%c0_8, %c0_9] : memref<8x128xf32, #tpu.memory_space<vmem>>, vector<8x128xf32>
      %c0_10 = arith.constant 0 : index
      %c0_11 = arith.constant 0 : index
      %16 = vector.load %arg5[%c0_10, %c0_11] : memref<1x128xf32, #tpu.memory_space<vmem>>, vector<1x128xf32>
      %c0_12 = arith.constant 0 : index
      %c0_13 = arith.constant 0 : index
      %17 = vector.load %arg6[%c0_12, %c0_13] : memref<1x128xf32, #tpu.memory_space<vmem>>, vector<1x128xf32>
      %cst = arith.constant dense<0.000000e+00> : vector<16xf32>
      %18 = vector.multi_reduction <add>, %12, %cst [1] : vector<16x128xf32> to vector<16xf32>
      %19 = vector.shape_cast %18 : vector<16xf32> to vector<16x1xf32>
      %cst_14 = arith.constant 3.200000e+01 : f32
      %20 = vector.broadcast %cst_14 : f32 to vector<16x1xf32>
      %21 = arith.divf %19, %20 : vector<16x1xf32>
      %22 = vector.broadcast %21 : vector<16x1xf32> to vector<16x128xf32>
      %23 = arith.subf %12, %22 : vector<16x128xf32>
      %24 = arith.mulf %23, %23 : vector<16x128xf32>
      %cst_15 = arith.constant dense<0.000000e+00> : vector<16xf32>
      %25 = vector.multi_reduction <add>, %24, %cst_15 [1] : vector<16x128xf32> to vector<16xf32>
      %26 = vector.shape_cast %25 : vector<16xf32> to vector<16x1xf32>
      %cst_16 = arith.constant 9.600000e+01 : f32
      %27 = vector.broadcast %cst_16 : f32 to vector<16x1xf32>
      %28 = arith.mulf %27, %21 : vector<16x1xf32>
      %29 = arith.mulf %28, %21 : vector<16x1xf32>
      %30 = arith.subf %26, %29 : vector<16x1xf32>
      %cst_17 = arith.constant 3.200000e+01 : f32
      %31 = vector.broadcast %cst_17 : f32 to vector<16x1xf32>
      %32 = arith.divf %30, %31 : vector<16x1xf32>
      %cst_18 = arith.constant 9.99999974E-6 : f32
      %33 = vector.broadcast %cst_18 : f32 to vector<16x1xf32>
      %34 = arith.addf %32, %33 : vector<16x1xf32>
      %35 = math.rsqrt %34 : vector<16x1xf32>
      %36 = vector.broadcast %35 : vector<16x1xf32> to vector<16x128xf32>
      %37 = arith.mulf %23, %36 : vector<16x128xf32>
      %38 = vector.broadcast %16 : vector<1x128xf32> to vector<16x128xf32>
      %39 = arith.mulf %37, %38 : vector<16x128xf32>
      %40 = vector.broadcast %17 : vector<1x128xf32> to vector<16x128xf32>
      %41 = arith.addf %39, %40 : vector<16x128xf32>
      %c0_19 = arith.constant 0 : index
      %c0_20 = arith.constant 0 : index
      %42 = vector.load %arg7[%c0_19, %c0_20] : memref<1x128xf32, #tpu.memory_space<vmem>>, vector<1x128xf32>
      %c0_21 = arith.constant 0 : index
      %c0_22 = arith.constant 0 : index
      %43 = vector.load %arg8[%c0_21, %c0_22] : memref<1x128xf32, #tpu.memory_space<vmem>>, vector<1x128xf32>
      %cst_23 = arith.constant dense<0.000000e+00> : vector<8xf32>
      %44 = vector.multi_reduction <add>, %15, %cst_23 [1] : vector<8x128xf32> to vector<8xf32>
      %45 = vector.shape_cast %44 : vector<8xf32> to vector<8x1xf32>
      %cst_24 = arith.constant 3.200000e+01 : f32
      %46 = vector.broadcast %cst_24 : f32 to vector<8x1xf32>
      %47 = arith.divf %45, %46 : vector<8x1xf32>
      %48 = vector.broadcast %47 : vector<8x1xf32> to vector<8x128xf32>
      %49 = arith.subf %15, %48 : vector<8x128xf32>
      %50 = arith.mulf %49, %49 : vector<8x128xf32>
      %cst_25 = arith.constant dense<0.000000e+00> : vector<8xf32>
      %51 = vector.multi_reduction <add>, %50, %cst_25 [1] : vector<8x128xf32> to vector<8xf32>
      %52 = vector.shape_cast %51 : vector<8xf32> to vector<8x1xf32>
      %cst_26 = arith.constant 9.600000e+01 : f32
      %53 = vector.broadcast %cst_26 : f32 to vector<8x1xf32>
      %54 = arith.mulf %53, %47 : vector<8x1xf32>
      %55 = arith.mulf %54, %47 : vector<8x1xf32>
      %56 = arith.subf %52, %55 : vector<8x1xf32>
      %cst_27 = arith.constant 3.200000e+01 : f32
      %57 = vector.broadcast %cst_27 : f32 to vector<8x1xf32>
      %58 = arith.divf %56, %57 : vector<8x1xf32>
      %cst_28 = arith.constant 9.99999974E-6 : f32
      %59 = vector.broadcast %cst_28 : f32 to vector<8x1xf32>
      %60 = arith.addf %58, %59 : vector<8x1xf32>
      %61 = math.rsqrt %60 : vector<8x1xf32>
      %62 = vector.broadcast %61 : vector<8x1xf32> to vector<8x128xf32>
      %63 = arith.mulf %49, %62 : vector<8x128xf32>
      %64 = vector.broadcast %42 : vector<1x128xf32> to vector<8x128xf32>
      %65 = arith.mulf %63, %64 : vector<8x128xf32>
      %66 = vector.broadcast %43 : vector<1x128xf32> to vector<8x128xf32>
      %67 = arith.addf %65, %66 : vector<8x128xf32>
      %c0_29 = arith.constant 0 : index
      %c0_30 = arith.constant 0 : index
      %68 = vector.load %arg9[%c0_29, %c0_30] : memref<128x128xbf16, #tpu.memory_space<vmem>>, vector<128x128xbf16>
      %69 = arith.truncf %67 : vector<8x128xf32> to vector<8x128xbf16>
      %cst_31 = arith.constant dense<0.000000e+00> : vector<8x128xf32>
      %70 = tpu.matmul %69, %68, %cst_31 {dimension_numbers = #tpu.dot_dimension_numbers<[1], [0], [0], [1], [0, 0, 1, 1], [], []>} : vector<8x128xbf16>, vector<128x128xbf16>, vector<8x128xf32> -> vector<8x128xf32>
      %c0_32 = arith.constant 0 : index
      %c0_33 = arith.constant 0 : index
      %71 = vector.load %arg10[%c0_32, %c0_33] : memref<1x128xf32, #tpu.memory_space<vmem>>, vector<1x128xf32>
      %72 = vector.broadcast %71 : vector<1x128xf32> to vector<8x128xf32>
      %73 = arith.addf %70, %72 : vector<8x128xf32>
      %c0_34 = arith.constant 0 : index
      %c0_35 = arith.constant 0 : index
      %74 = vector.load %arg11[%c0_34, %c0_35] : memref<128x256xbf16, #tpu.memory_space<vmem>>, vector<128x256xbf16>
      %75 = arith.truncf %41 : vector<16x128xf32> to vector<16x128xbf16>
      %cst_36 = arith.constant dense<0.000000e+00> : vector<16x256xf32>
      %76 = tpu.matmul %75, %74, %cst_36 {dimension_numbers = #tpu.dot_dimension_numbers<[1], [0], [0], [1], [0, 0, 1, 1], [], []>} : vector<16x128xbf16>, vector<128x256xbf16>, vector<16x256xf32> -> vector<16x256xf32>
      %c0_37 = arith.constant 0 : index
      %c0_38 = arith.constant 0 : index
      %77 = vector.load %arg12[%c0_37, %c0_38] : memref<1x256xf32, #tpu.memory_space<vmem>>, vector<1x256xf32>
      %78 = vector.broadcast %77 : vector<1x256xf32> to vector<16x256xf32>
      %79 = arith.addf %76, %78 : vector<16x256xf32>
      %80 = vector.extract_strided_slice %79 {offsets = [0, 0], sizes = [16, 128], strides = [1, 1]} : vector<16x256xf32> to vector<16x128xf32>
      %81 = vector.extract_strided_slice %79 {offsets = [0, 128], sizes = [16, 128], strides = [1, 1]} : vector<16x256xf32> to vector<16x128xf32>
      %82 = arith.truncf %73 : vector<8x128xf32> to vector<8x128xbf16>
      %83 = arith.truncf %80 : vector<16x128xf32> to vector<16x128xbf16>
      %cst_39 = arith.constant dense<0.000000e+00> : vector<8x16xf32>
      %84 = tpu.matmul %82, %83, %cst_39 {dimension_numbers = #tpu.dot_dimension_numbers<[1], [1], [0], [0], [0, 0, 1, 0], [], []>} : vector<8x128xbf16>, vector<16x128xbf16>, vector<8x16xf32> -> vector<8x16xf32>
      %cst_40 = arith.constant 5.000000e-01 : f32
      %85 = vector.broadcast %cst_40 : f32 to vector<1x16xf32>
      %86 = arith.cmpf ogt, %14, %85 : vector<1x16xf32>
      %cst_41 = arith.constant -1.000000e+30 : f32
      %87 = vector.shape_cast %86 : vector<1x16xi1> to vector<1x16xi1>
      %88 = vector.broadcast %87 : vector<1x16xi1> to vector<8x16xi1>
      %89 = vector.broadcast %cst_41 : f32 to vector<8x16xf32>
      %90 = arith.select %88, %84, %89 : vector<8x16xi1>, vector<8x16xf32>
      %cst_42 = arith.constant dense<0xFF800000> : vector<8xf32>
      %91 = vector.multi_reduction <maximumf>, %90, %cst_42 [1] : vector<8x16xf32> to vector<8xf32>
      %92 = vector.shape_cast %91 : vector<8xf32> to vector<8x1xf32>
      %93 = vector.broadcast %92 : vector<8x1xf32> to vector<8x16xf32>
      %94 = arith.subf %90, %93 : vector<8x16xf32>
      %95 = math.exp %94 : vector<8x16xf32>
      %cst_43 = arith.constant dense<0.000000e+00> : vector<8xf32>
      %96 = vector.multi_reduction <add>, %95, %cst_43 [1] : vector<8x16xf32> to vector<8xf32>
      %97 = vector.shape_cast %96 : vector<8xf32> to vector<8x1xf32>
      %98 = tpu.reciprocal %97 {approx = true} : vector<8x1xf32> -> vector<8x1xf32>
      %99 = vector.broadcast %98 : vector<8x1xf32> to vector<8x16xf32>
      %100 = arith.mulf %95, %99 : vector<8x16xf32>
      %101 = arith.truncf %100 : vector<8x16xf32> to vector<8x16xbf16>
      %102 = arith.truncf %81 : vector<16x128xf32> to vector<16x128xbf16>
      %cst_44 = arith.constant dense<0.000000e+00> : vector<8x128xf32>
      %103 = tpu.matmul %101, %102, %cst_44 {dimension_numbers = #tpu.dot_dimension_numbers<[1], [0], [0], [1], [0, 0, 1, 1], [], []>} : vector<8x16xbf16>, vector<16x128xbf16>, vector<8x128xf32> -> vector<8x128xf32>
      %c0_45 = arith.constant 0 : index
      %c0_46 = arith.constant 0 : index
      %104 = vector.load %arg13[%c0_45, %c0_46] : memref<128x128xbf16, #tpu.memory_space<vmem>>, vector<128x128xbf16>
      %105 = arith.truncf %103 : vector<8x128xf32> to vector<8x128xbf16>
      %cst_47 = arith.constant dense<0.000000e+00> : vector<8x128xf32>
      %106 = tpu.matmul %105, %104, %cst_47 {dimension_numbers = #tpu.dot_dimension_numbers<[1], [0], [0], [1], [0, 0, 1, 1], [], []>} : vector<8x128xbf16>, vector<128x128xbf16>, vector<8x128xf32> -> vector<8x128xf32>
      %107 = arith.addf %15, %106 : vector<8x128xf32>
      %c0_48 = arith.constant 0 : index
      %c0_49 = arith.constant 0 : index
      %108 = vector.load %arg14[%c0_48, %c0_49] : memref<1x128xf32, #tpu.memory_space<vmem>>, vector<1x128xf32>
      %109 = vector.broadcast %108 : vector<1x128xf32> to vector<8x128xf32>
      %110 = arith.addf %107, %109 : vector<8x128xf32>
      %c0_50 = arith.constant 0 : index
      %c0_51 = arith.constant 0 : index
      %111 = vector.load %arg15[%c0_50, %c0_51] : memref<1x128xf32, #tpu.memory_space<vmem>>, vector<1x128xf32>
      %c0_52 = arith.constant 0 : index
      %c0_53 = arith.constant 0 : index
      %112 = vector.load %arg16[%c0_52, %c0_53] : memref<1x128xf32, #tpu.memory_space<vmem>>, vector<1x128xf32>
      %cst_54 = arith.constant dense<0.000000e+00> : vector<8xf32>
      %113 = vector.multi_reduction <add>, %110, %cst_54 [1] : vector<8x128xf32> to vector<8xf32>
      %114 = vector.shape_cast %113 : vector<8xf32> to vector<8x1xf32>
      %cst_55 = arith.constant 3.200000e+01 : f32
      %115 = vector.broadcast %cst_55 : f32 to vector<8x1xf32>
      %116 = arith.divf %114, %115 : vector<8x1xf32>
      %117 = vector.broadcast %116 : vector<8x1xf32> to vector<8x128xf32>
      %118 = arith.subf %110, %117 : vector<8x128xf32>
      %119 = arith.mulf %118, %118 : vector<8x128xf32>
      %cst_56 = arith.constant dense<0.000000e+00> : vector<8xf32>
      %120 = vector.multi_reduction <add>, %119, %cst_56 [1] : vector<8x128xf32> to vector<8xf32>
      %121 = vector.shape_cast %120 : vector<8xf32> to vector<8x1xf32>
      %cst_57 = arith.constant 9.600000e+01 : f32
      %122 = vector.broadcast %cst_57 : f32 to vector<8x1xf32>
      %123 = arith.mulf %122, %116 : vector<8x1xf32>
      %124 = arith.mulf %123, %116 : vector<8x1xf32>
      %125 = arith.subf %121, %124 : vector<8x1xf32>
      %cst_58 = arith.constant 3.200000e+01 : f32
      %126 = vector.broadcast %cst_58 : f32 to vector<8x1xf32>
      %127 = arith.divf %125, %126 : vector<8x1xf32>
      %cst_59 = arith.constant 9.99999974E-6 : f32
      %128 = vector.broadcast %cst_59 : f32 to vector<8x1xf32>
      %129 = arith.addf %127, %128 : vector<8x1xf32>
      %130 = math.rsqrt %129 : vector<8x1xf32>
      %131 = vector.broadcast %130 : vector<8x1xf32> to vector<8x128xf32>
      %132 = arith.mulf %118, %131 : vector<8x128xf32>
      %133 = vector.broadcast %111 : vector<1x128xf32> to vector<8x128xf32>
      %134 = arith.mulf %132, %133 : vector<8x128xf32>
      %135 = vector.broadcast %112 : vector<1x128xf32> to vector<8x128xf32>
      %136 = arith.addf %134, %135 : vector<8x128xf32>
      %c0_60 = arith.constant 0 : index
      %c0_61 = arith.constant 0 : index
      %137 = vector.load %arg17[%c0_60, %c0_61] : memref<128x128xbf16, #tpu.memory_space<vmem>>, vector<128x128xbf16>
      %138 = arith.truncf %136 : vector<8x128xf32> to vector<8x128xbf16>
      %cst_62 = arith.constant dense<0.000000e+00> : vector<8x128xf32>
      %139 = tpu.matmul %138, %137, %cst_62 {dimension_numbers = #tpu.dot_dimension_numbers<[1], [0], [0], [1], [0, 0, 1, 1], [], []>} : vector<8x128xbf16>, vector<128x128xbf16>, vector<8x128xf32> -> vector<8x128xf32>
      %c0_63 = arith.constant 0 : index
      %c0_64 = arith.constant 0 : index
      %140 = vector.load %arg18[%c0_63, %c0_64] : memref<1x128xf32, #tpu.memory_space<vmem>>, vector<1x128xf32>
      %141 = vector.broadcast %140 : vector<1x128xf32> to vector<8x128xf32>
      %142 = arith.addf %139, %141 : vector<8x128xf32>
      %143 = arith.mulf %142, %142 : vector<8x128xf32>
      %144 = arith.mulf %142, %143 : vector<8x128xf32>
      %cst_65 = arith.constant 4.471500e-02 : f32
      %145 = vector.broadcast %cst_65 : f32 to vector<8x128xf32>
      %146 = arith.mulf %145, %144 : vector<8x128xf32>
      %147 = arith.addf %142, %146 : vector<8x128xf32>
      %cst_66 = arith.constant 0.797884583 : f32
      %148 = vector.broadcast %cst_66 : f32 to vector<8x128xf32>
      %149 = arith.mulf %148, %147 : vector<8x128xf32>
      %150 = math.tanh %149 : vector<8x128xf32>
      %cst_67 = arith.constant 1.000000e+00 : f32
      %151 = vector.broadcast %cst_67 : f32 to vector<8x128xf32>
      %152 = arith.addf %151, %150 : vector<8x128xf32>
      %cst_68 = arith.constant 5.000000e-01 : f32
      %153 = vector.broadcast %cst_68 : f32 to vector<8x128xf32>
      %154 = arith.mulf %153, %152 : vector<8x128xf32>
      %155 = arith.mulf %142, %154 : vector<8x128xf32>
      %c0_69 = arith.constant 0 : index
      %c0_70 = arith.constant 0 : index
      %156 = vector.load %arg19[%c0_69, %c0_70] : memref<128x128xbf16, #tpu.memory_space<vmem>>, vector<128x128xbf16>
      %157 = arith.truncf %155 : vector<8x128xf32> to vector<8x128xbf16>
      %cst_71 = arith.constant dense<0.000000e+00> : vector<8x128xf32>
      %158 = tpu.matmul %157, %156, %cst_71 {dimension_numbers = #tpu.dot_dimension_numbers<[1], [0], [0], [1], [0, 0, 1, 1], [], []>} : vector<8x128xbf16>, vector<128x128xbf16>, vector<8x128xf32> -> vector<8x128xf32>
      %159 = arith.addf %110, %158 : vector<8x128xf32>
      %c0_72 = arith.constant 0 : index
      %c0_73 = arith.constant 0 : index
      %160 = vector.load %arg20[%c0_72, %c0_73] : memref<1x128xf32, #tpu.memory_space<vmem>>, vector<1x128xf32>
      %161 = vector.broadcast %160 : vector<1x128xf32> to vector<8x128xf32>
      %162 = arith.addf %159, %161 : vector<8x128xf32>
      %c0_74 = arith.constant 0 : index
      %c0_75 = arith.constant 0 : index
      %163 = vector.load %arg46[%c0_74, %c0_75] : memref<8x128xf32, #tpu.memory_space<vmem>>, vector<8x128xf32>
      tpu.vector_store %arg46[%c0_74, %c0_75], %162 {strides = array<i32>} : memref<8x128xf32, #tpu.memory_space<vmem>>, vector<8x128xf32>,
    } else {
    }
    %c1_i32 = arith.constant 1 : i32
    %3 = arith.cmpi sge, %arg1, %c1_i32 : i32
    %c2_i32 = arith.constant 2 : i32
    %4 = arith.cmpi sle, %arg1, %c2_i32 : i32
    %5 = arith.andi %3, %4 : i1
    %6 = arith.extui %5 : i1 to i32
    %c0_i32_1 = arith.constant 0 : i32
    %7 = arith.cmpi ne, %6, %c0_i32_1 : i32
    scf.if %7 {
      %c0 = arith.constant 0 : index
      %c0_3 = arith.constant 0 : index
      %11 = vector.load %arg46[%c0, %c0_3] : memref<8x128xf32, #tpu.memory_space<vmem>>, vector<8x128xf32>
      %c0_4 = arith.constant 0 : index
      %c0_5 = arith.constant 0 : index
      %c0_6 = arith.constant 0 : index
      %12 = vector.load %arg21[%c0_4, %c0_5, %c0_6] : memref<1x1x128xf32, #tpu.memory_space<vmem>>, vector<1x1x128xf32>
      %13 = vector.shape_cast %12 : vector<1x1x128xf32> to vector<1x128xf32>
      %c0_7 = arith.constant 0 : index
      %c0_8 = arith.constant 0 : index
      %c0_9 = arith.constant 0 : index
      %14 = vector.load %arg22[%c0_7, %c0_8, %c0_9] : memref<1x1x128xf32, #tpu.memory_space<vmem>>, vector<1x1x128xf32>
      %15 = vector.shape_cast %14 : vector<1x1x128xf32> to vector<1x128xf32>
      %cst = arith.constant dense<0.000000e+00> : vector<8xf32>
      %16 = vector.multi_reduction <add>, %11, %cst [1] : vector<8x128xf32> to vector<8xf32>
      %17 = vector.shape_cast %16 : vector<8xf32> to vector<8x1xf32>
      %cst_10 = arith.constant 3.200000e+01 : f32
      %18 = vector.broadcast %cst_10 : f32 to vector<8x1xf32>
      %19 = arith.divf %17, %18 : vector<8x1xf32>
      %20 = vector.broadcast %19 : vector<8x1xf32> to vector<8x128xf32>
      %21 = arith.subf %11, %20 : vector<8x128xf32>
      %22 = arith.mulf %21, %21 : vector<8x128xf32>
      %cst_11 = arith.constant dense<0.000000e+00> : vector<8xf32>
      %23 = vector.multi_reduction <add>, %22, %cst_11 [1] : vector<8x128xf32> to vector<8xf32>
      %24 = vector.shape_cast %23 : vector<8xf32> to vector<8x1xf32>
      %cst_12 = arith.constant 9.600000e+01 : f32
      %25 = vector.broadcast %cst_12 : f32 to vector<8x1xf32>
      %26 = arith.mulf %25, %19 : vector<8x1xf32>
      %27 = arith.mulf %26, %19 : vector<8x1xf32>
      %28 = arith.subf %24, %27 : vector<8x1xf32>
      %cst_13 = arith.constant 3.200000e+01 : f32
      %29 = vector.broadcast %cst_13 : f32 to vector<8x1xf32>
      %30 = arith.divf %28, %29 : vector<8x1xf32>
      %cst_14 = arith.constant 9.99999974E-6 : f32
      %31 = vector.broadcast %cst_14 : f32 to vector<8x1xf32>
      %32 = arith.addf %30, %31 : vector<8x1xf32>
      %33 = math.rsqrt %32 : vector<8x1xf32>
      %34 = vector.broadcast %33 : vector<8x1xf32> to vector<8x128xf32>
      %35 = arith.mulf %21, %34 : vector<8x128xf32>
      %36 = vector.broadcast %13 : vector<1x128xf32> to vector<8x128xf32>
      %37 = arith.mulf %35, %36 : vector<8x128xf32>
      %38 = vector.broadcast %15 : vector<1x128xf32> to vector<8x128xf32>
      %39 = arith.addf %37, %38 : vector<8x128xf32>
      %c0_15 = arith.constant 0 : index
      %c0_16 = arith.constant 0 : index
      %c0_17 = arith.constant 0 : index
      %40 = vector.load %arg23[%c0_15, %c0_16, %c0_17] : memref<1x128x384xbf16, #tpu.memory_space<vmem>>, vector<1x128x384xbf16>
      %41 = vector.shape_cast %40 : vector<1x128x384xbf16> to vector<128x384xbf16>
      %42 = arith.truncf %39 : vector<8x128xf32> to vector<8x128xbf16>
      %cst_18 = arith.constant dense<0.000000e+00> : vector<8x384xf32>
      %43 = tpu.matmul %42, %41, %cst_18 {dimension_numbers = #tpu.dot_dimension_numbers<[1], [0], [0], [1], [0, 0, 1, 1], [], []>} : vector<8x128xbf16>, vector<128x384xbf16>, vector<8x384xf32> -> vector<8x384xf32>
      %c0_19 = arith.constant 0 : index
      %c0_20 = arith.constant 0 : index
      %c0_21 = arith.constant 0 : index
      %44 = vector.load %arg24[%c0_19, %c0_20, %c0_21] : memref<1x1x384xf32, #tpu.memory_space<vmem>>, vector<1x1x384xf32>
      %45 = vector.shape_cast %44 : vector<1x1x384xf32> to vector<1x384xf32>
      %46 = vector.broadcast %45 : vector<1x384xf32> to vector<8x384xf32>
      %47 = arith.addf %43, %46 : vector<8x384xf32>
      %48 = vector.extract_strided_slice %47 {offsets = [0, 0], sizes = [8, 128], strides = [1, 1]} : vector<8x384xf32> to vector<8x128xf32>
      %49 = vector.extract_strided_slice %47 {offsets = [0, 128], sizes = [8, 128], strides = [1, 1]} : vector<8x384xf32> to vector<8x128xf32>
      %50 = vector.extract_strided_slice %47 {offsets = [0, 256], sizes = [8, 128], strides = [1, 1]} : vector<8x384xf32> to vector<8x128xf32>
      %51 = arith.truncf %48 : vector<8x128xf32> to vector<8x128xbf16>
      %52 = arith.truncf %49 : vector<8x128xf32> to vector<8x128xbf16>
      %cst_22 = arith.constant dense<0.000000e+00> : vector<8x8xf32>
      %53 = tpu.matmul %51, %52, %cst_22 {dimension_numbers = #tpu.dot_dimension_numbers<[1], [1], [0], [0], [0, 0, 1, 0], [], []>} : vector<8x128xbf16>, vector<8x128xbf16>, vector<8x8xf32> -> vector<8x8xf32>
      %cst_23 = arith.constant dense<0xFF800000> : vector<8xf32>
      %54 = vector.multi_reduction <maximumf>, %53, %cst_23 [1] : vector<8x8xf32> to vector<8xf32>
      %55 = vector.shape_cast %54 : vector<8xf32> to vector<8x1xf32>
      %56 = vector.broadcast %55 : vector<8x1xf32> to vector<8x8xf32>
      %57 = arith.subf %53, %56 : vector<8x8xf32>
      %58 = math.exp %57 : vector<8x8xf32>
      %cst_24 = arith.constant dense<0.000000e+00> : vector<8xf32>
      %59 = vector.multi_reduction <add>, %58, %cst_24 [1] : vector<8x8xf32> to vector<8xf32>
      %60 = vector.shape_cast %59 : vector<8xf32> to vector<8x1xf32>
      %61 = tpu.reciprocal %60 {approx = true} : vector<8x1xf32> -> vector<8x1xf32>
      %62 = vector.broadcast %61 : vector<8x1xf32> to vector<8x8xf32>
      %63 = arith.mulf %58, %62 : vector<8x8xf32>
      %64 = arith.truncf %63 : vector<8x8xf32> to vector<8x8xbf16>
      %65 = arith.truncf %50 : vector<8x128xf32> to vector<8x128xbf16>
      %cst_25 = arith.constant dense<0.000000e+00> : vector<8x128xf32>
      %66 = tpu.matmul %64, %65, %cst_25 {dimension_numbers = #tpu.dot_dimension_numbers<[1], [0], [0], [1], [0, 0, 1, 1], [], []>} : vector<8x8xbf16>, vector<8x128xbf16>, vector<8x128xf32> -> vector<8x128xf32>
      %c0_26 = arith.constant 0 : index
      %c0_27 = arith.constant 0 : index
      %c0_28 = arith.constant 0 : index
      %67 = vector.load %arg25[%c0_26, %c0_27, %c0_28] : memref<1x128x128xbf16, #tpu.memory_space<vmem>>, vector<1x128x128xbf16>
      %68 = vector.shape_cast %67 : vector<1x128x128xbf16> to vector<128x128xbf16>
      %69 = arith.truncf %66 : vector<8x128xf32> to vector<8x128xbf16>
      %cst_29 = arith.constant dense<0.000000e+00> : vector<8x128xf32>
      %70 = tpu.matmul %69, %68, %cst_29 {dimension_numbers = #tpu.dot_dimension_numbers<[1], [0], [0], [1], [0, 0, 1, 1], [], []>} : vector<8x128xbf16>, vector<128x128xbf16>, vector<8x128xf32> -> vector<8x128xf32>
      %71 = arith.addf %11, %70 : vector<8x128xf32>
      %c0_30 = arith.constant 0 : index
      %c0_31 = arith.constant 0 : index
      %c0_32 = arith.constant 0 : index
      %72 = vector.load %arg26[%c0_30, %c0_31, %c0_32] : memref<1x1x128xf32, #tpu.memory_space<vmem>>, vector<1x1x128xf32>
      %73 = vector.shape_cast %72 : vector<1x1x128xf32> to vector<1x128xf32>
      %74 = vector.broadcast %73 : vector<1x128xf32> to vector<8x128xf32>
      %75 = arith.addf %71, %74 : vector<8x128xf32>
      %c0_33 = arith.constant 0 : index
      %c0_34 = arith.constant 0 : index
      %c0_35 = arith.constant 0 : index
      %76 = vector.load %arg27[%c0_33, %c0_34, %c0_35] : memref<1x1x128xf32, #tpu.memory_space<vmem>>, vector<1x1x128xf32>
      %77 = vector.shape_cast %76 : vector<1x1x128xf32> to vector<1x128xf32>
      %c0_36 = arith.constant 0 : index
      %c0_37 = arith.constant 0 : index
      %c0_38 = arith.constant 0 : index
      %78 = vector.load %arg28[%c0_36, %c0_37, %c0_38] : memref<1x1x128xf32, #tpu.memory_space<vmem>>, vector<1x1x128xf32>
      %79 = vector.shape_cast %78 : vector<1x1x128xf32> to vector<1x128xf32>
      %cst_39 = arith.constant dense<0.000000e+00> : vector<8xf32>
      %80 = vector.multi_reduction <add>, %75, %cst_39 [1] : vector<8x128xf32> to vector<8xf32>
      %81 = vector.shape_cast %80 : vector<8xf32> to vector<8x1xf32>
      %cst_40 = arith.constant 3.200000e+01 : f32
      %82 = vector.broadcast %cst_40 : f32 to vector<8x1xf32>
      %83 = arith.divf %81, %82 : vector<8x1xf32>
      %84 = vector.broadcast %83 : vector<8x1xf32> to vector<8x128xf32>
      %85 = arith.subf %75, %84 : vector<8x128xf32>
      %86 = arith.mulf %85, %85 : vector<8x128xf32>
      %cst_41 = arith.constant dense<0.000000e+00> : vector<8xf32>
      %87 = vector.multi_reduction <add>, %86, %cst_41 [1] : vector<8x128xf32> to vector<8xf32>
      %88 = vector.shape_cast %87 : vector<8xf32> to vector<8x1xf32>
      %cst_42 = arith.constant 9.600000e+01 : f32
      %89 = vector.broadcast %cst_42 : f32 to vector<8x1xf32>
      %90 = arith.mulf %89, %83 : vector<8x1xf32>
      %91 = arith.mulf %90, %83 : vector<8x1xf32>
      %92 = arith.subf %88, %91 : vector<8x1xf32>
      %cst_43 = arith.constant 3.200000e+01 : f32
      %93 = vector.broadcast %cst_43 : f32 to vector<8x1xf32>
      %94 = arith.divf %92, %93 : vector<8x1xf32>
      %cst_44 = arith.constant 9.99999974E-6 : f32
      %95 = vector.broadcast %cst_44 : f32 to vector<8x1xf32>
      %96 = arith.addf %94, %95 : vector<8x1xf32>
      %97 = math.rsqrt %96 : vector<8x1xf32>
      %98 = vector.broadcast %97 : vector<8x1xf32> to vector<8x128xf32>
      %99 = arith.mulf %85, %98 : vector<8x128xf32>
      %100 = vector.broadcast %77 : vector<1x128xf32> to vector<8x128xf32>
      %101 = arith.mulf %99, %100 : vector<8x128xf32>
      %102 = vector.broadcast %79 : vector<1x128xf32> to vector<8x128xf32>
      %103 = arith.addf %101, %102 : vector<8x128xf32>
      %c0_45 = arith.constant 0 : index
      %c0_46 = arith.constant 0 : index
      %c0_47 = arith.constant 0 : index
      %104 = vector.load %arg29[%c0_45, %c0_46, %c0_47] : memref<1x128x128xbf16, #tpu.memory_space<vmem>>, vector<1x128x128xbf16>
      %105 = vector.shape_cast %104 : vector<1x128x128xbf16> to vector<128x128xbf16>
      %106 = arith.truncf %103 : vector<8x128xf32> to vector<8x128xbf16>
      %cst_48 = arith.constant dense<0.000000e+00> : vector<8x128xf32>
      %107 = tpu.matmul %106, %105, %cst_48 {dimension_numbers = #tpu.dot_dimension_numbers<[1], [0], [0], [1], [0, 0, 1, 1], [], []>} : vector<8x128xbf16>, vector<128x128xbf16>, vector<8x128xf32> -> vector<8x128xf32>
      %c0_49 = arith.constant 0 : index
      %c0_50 = arith.constant 0 : index
      %c0_51 = arith.constant 0 : index
      %108 = vector.load %arg30[%c0_49, %c0_50, %c0_51] : memref<1x1x128xf32, #tpu.memory_space<vmem>>, vector<1x1x128xf32>
      %109 = vector.shape_cast %108 : vector<1x1x128xf32> to vector<1x128xf32>
      %110 = vector.broadcast %109 : vector<1x128xf32> to vector<8x128xf32>
      %111 = arith.addf %107, %110 : vector<8x128xf32>
      %112 = arith.mulf %111, %111 : vector<8x128xf32>
      %113 = arith.mulf %111, %112 : vector<8x128xf32>
      %cst_52 = arith.constant 4.471500e-02 : f32
      %114 = vector.broadcast %cst_52 : f32 to vector<8x128xf32>
      %115 = arith.mulf %114, %113 : vector<8x128xf32>
      %116 = arith.addf %111, %115 : vector<8x128xf32>
      %cst_53 = arith.constant 0.797884583 : f32
      %117 = vector.broadcast %cst_53 : f32 to vector<8x128xf32>
      %118 = arith.mulf %117, %116 : vector<8x128xf32>
      %119 = math.tanh %118 : vector<8x128xf32>
      %cst_54 = arith.constant 1.000000e+00 : f32
      %120 = vector.broadcast %cst_54 : f32 to vector<8x128xf32>
      %121 = arith.addf %120, %119 : vector<8x128xf32>
      %cst_55 = arith.constant 5.000000e-01 : f32
      %122 = vector.broadcast %cst_55 : f32 to vector<8x128xf32>
      %123 = arith.mulf %122, %121 : vector<8x128xf32>
      %124 = arith.mulf %111, %123 : vector<8x128xf32>
      %c0_56 = arith.constant 0 : index
      %c0_57 = arith.constant 0 : index
      %c0_58 = arith.constant 0 : index
      %125 = vector.load %arg31[%c0_56, %c0_57, %c0_58] : memref<1x128x128xbf16, #tpu.memory_space<vmem>>, vector<1x128x128xbf16>
      %126 = vector.shape_cast %125 : vector<1x128x128xbf16> to vector<128x128xbf16>
      %127 = arith.truncf %124 : vector<8x128xf32> to vector<8x128xbf16>
      %cst_59 = arith.constant dense<0.000000e+00> : vector<8x128xf32>
      %128 = tpu.matmul %127, %126, %cst_59 {dimension_numbers = #tpu.dot_dimension_numbers<[1], [0], [0], [1], [0, 0, 1, 1], [], []>} : vector<8x128xbf16>, vector<128x128xbf16>, vector<8x128xf32> -> vector<8x128xf32>
      %129 = arith.addf %75, %128 : vector<8x128xf32>
      %c0_60 = arith.constant 0 : index
      %c0_61 = arith.constant 0 : index
      %c0_62 = arith.constant 0 : index
      %130 = vector.load %arg32[%c0_60, %c0_61, %c0_62] : memref<1x1x128xf32, #tpu.memory_space<vmem>>, vector<1x1x128xf32>
      %131 = vector.shape_cast %130 : vector<1x1x128xf32> to vector<1x128xf32>
      %132 = vector.broadcast %131 : vector<1x128xf32> to vector<8x128xf32>
      %133 = arith.addf %129, %132 : vector<8x128xf32>
      %c0_63 = arith.constant 0 : index
      %c0_64 = arith.constant 0 : index
      %134 = vector.load %arg46[%c0_63, %c0_64] : memref<8x128xf32, #tpu.memory_space<vmem>>, vector<8x128xf32>
      tpu.vector_store %arg46[%c0_63, %c0_64], %133 {strides = array<i32>} : memref<8x128xf32, #tpu.memory_space<vmem>>, vector<8x128xf32>,
    } else {
    }
    %c3_i32 = arith.constant 3 : i32
    %8 = arith.cmpi eq, %arg1, %c3_i32 : i32
    %9 = arith.extui %8 : i1 to i32
    %c0_i32_2 = arith.constant 0 : i32
    %10 = arith.cmpi ne, %9, %c0_i32_2 : i32
    scf.if %10 {
      %c0 = arith.constant 0 : index
      %c0_3 = arith.constant 0 : index
      %c0_4 = arith.constant 0 : index
      %11 = vector.load %arg2[%c0, %c0_3, %c0_4] : memref<1x16x128xf32, #tpu.memory_space<vmem>>, vector<1x16x128xf32>
      %12 = vector.shape_cast %11 : vector<1x16x128xf32> to vector<16x128xf32>
      %c0_5 = arith.constant 0 : index
      %c0_6 = arith.constant 0 : index
      %13 = vector.load %arg46[%c0_5, %c0_6] : memref<8x128xf32, #tpu.memory_space<vmem>>, vector<8x128xf32>
      %c0_7 = arith.constant 0 : index
      %c0_8 = arith.constant 0 : index
      %14 = vector.load %arg33[%c0_7, %c0_8] : memref<1x128xf32, #tpu.memory_space<vmem>>, vector<1x128xf32>
      %c0_9 = arith.constant 0 : index
      %c0_10 = arith.constant 0 : index
      %15 = vector.load %arg34[%c0_9, %c0_10] : memref<1x128xf32, #tpu.memory_space<vmem>>, vector<1x128xf32>
      %cst = arith.constant dense<0.000000e+00> : vector<16xf32>
      %16 = vector.multi_reduction <add>, %12, %cst [1] : vector<16x128xf32> to vector<16xf32>
      %17 = vector.shape_cast %16 : vector<16xf32> to vector<16x1xf32>
      %cst_11 = arith.constant 3.200000e+01 : f32
      %18 = vector.broadcast %cst_11 : f32 to vector<16x1xf32>
      %19 = arith.divf %17, %18 : vector<16x1xf32>
      %20 = vector.broadcast %19 : vector<16x1xf32> to vector<16x128xf32>
      %21 = arith.subf %12, %20 : vector<16x128xf32>
      %22 = arith.mulf %21, %21 : vector<16x128xf32>
      %cst_12 = arith.constant dense<0.000000e+00> : vector<16xf32>
      %23 = vector.multi_reduction <add>, %22, %cst_12 [1] : vector<16x128xf32> to vector<16xf32>
      %24 = vector.shape_cast %23 : vector<16xf32> to vector<16x1xf32>
      %cst_13 = arith.constant 9.600000e+01 : f32
      %25 = vector.broadcast %cst_13 : f32 to vector<16x1xf32>
      %26 = arith.mulf %25, %19 : vector<16x1xf32>
      %27 = arith.mulf %26, %19 : vector<16x1xf32>
      %28 = arith.subf %24, %27 : vector<16x1xf32>
      %cst_14 = arith.constant 3.200000e+01 : f32
      %29 = vector.broadcast %cst_14 : f32 to vector<16x1xf32>
      %30 = arith.divf %28, %29 : vector<16x1xf32>
      %cst_15 = arith.constant 9.99999974E-6 : f32
      %31 = vector.broadcast %cst_15 : f32 to vector<16x1xf32>
      %32 = arith.addf %30, %31 : vector<16x1xf32>
      %33 = math.rsqrt %32 : vector<16x1xf32>
      %34 = vector.broadcast %33 : vector<16x1xf32> to vector<16x128xf32>
      %35 = arith.mulf %21, %34 : vector<16x128xf32>
      %36 = vector.broadcast %14 : vector<1x128xf32> to vector<16x128xf32>
      %37 = arith.mulf %35, %36 : vector<16x128xf32>
      %38 = vector.broadcast %15 : vector<1x128xf32> to vector<16x128xf32>
      %39 = arith.addf %37, %38 : vector<16x128xf32>
      %c0_16 = arith.constant 0 : index
      %c0_17 = arith.constant 0 : index
      %40 = vector.load %arg35[%c0_16, %c0_17] : memref<1x128xf32, #tpu.memory_space<vmem>>, vector<1x128xf32>
      %c0_18 = arith.constant 0 : index
      %c0_19 = arith.constant 0 : index
      %41 = vector.load %arg36[%c0_18, %c0_19] : memref<1x128xf32, #tpu.memory_space<vmem>>, vector<1x128xf32>
      %cst_20 = arith.constant dense<0.000000e+00> : vector<8xf32>
      %42 = vector.multi_reduction <add>, %13, %cst_20 [1] : vector<8x128xf32> to vector<8xf32>
      %43 = vector.shape_cast %42 : vector<8xf32> to vector<8x1xf32>
      %cst_21 = arith.constant 3.200000e+01 : f32
      %44 = vector.broadcast %cst_21 : f32 to vector<8x1xf32>
      %45 = arith.divf %43, %44 : vector<8x1xf32>
      %46 = vector.broadcast %45 : vector<8x1xf32> to vector<8x128xf32>
      %47 = arith.subf %13, %46 : vector<8x128xf32>
      %48 = arith.mulf %47, %47 : vector<8x128xf32>
      %cst_22 = arith.constant dense<0.000000e+00> : vector<8xf32>
      %49 = vector.multi_reduction <add>, %48, %cst_22 [1] : vector<8x128xf32> to vector<8xf32>
      %50 = vector.shape_cast %49 : vector<8xf32> to vector<8x1xf32>
      %cst_23 = arith.constant 9.600000e+01 : f32
      %51 = vector.broadcast %cst_23 : f32 to vector<8x1xf32>
      %52 = arith.mulf %51, %45 : vector<8x1xf32>
      %53 = arith.mulf %52, %45 : vector<8x1xf32>
      %54 = arith.subf %50, %53 : vector<8x1xf32>
      %cst_24 = arith.constant 3.200000e+01 : f32
      %55 = vector.broadcast %cst_24 : f32 to vector<8x1xf32>
      %56 = arith.divf %54, %55 : vector<8x1xf32>
      %cst_25 = arith.constant 9.99999974E-6 : f32
      %57 = vector.broadcast %cst_25 : f32 to vector<8x1xf32>
      %58 = arith.addf %56, %57 : vector<8x1xf32>
      %59 = math.rsqrt %58 : vector<8x1xf32>
      %60 = vector.broadcast %59 : vector<8x1xf32> to vector<8x128xf32>
      %61 = arith.mulf %47, %60 : vector<8x128xf32>
      %62 = vector.broadcast %40 : vector<1x128xf32> to vector<8x128xf32>
      %63 = arith.mulf %61, %62 : vector<8x128xf32>
      %64 = vector.broadcast %41 : vector<1x128xf32> to vector<8x128xf32>
      %65 = arith.addf %63, %64 : vector<8x128xf32>
      %c0_26 = arith.constant 0 : index
      %c0_27 = arith.constant 0 : index
      %66 = vector.load %arg37[%c0_26, %c0_27] : memref<128x128xbf16, #tpu.memory_space<vmem>>, vector<128x128xbf16>
      %67 = arith.truncf %39 : vector<16x128xf32> to vector<16x128xbf16>
      %cst_28 = arith.constant dense<0.000000e+00> : vector<16x128xf32>
      %68 = tpu.matmul %67, %66, %cst_28 {dimension_numbers = #tpu.dot_dimension_numbers<[1], [0], [0], [1], [0, 0, 1, 1], [], []>} : vector<16x128xbf16>, vector<128x128xbf16>, vector<16x128xf32> -> vector<16x128xf32>
      %c0_29 = arith.constant 0 : index
      %c0_30 = arith.constant 0 : index
      %69 = vector.load %arg38[%c0_29, %c0_30] : memref<1x128xf32, #tpu.memory_space<vmem>>, vector<1x128xf32>
      %70 = vector.broadcast %69 : vector<1x128xf32> to vector<16x128xf32>
      %71 = arith.addf %68, %70 : vector<16x128xf32>
      %c0_31 = arith.constant 0 : index
      %c0_32 = arith.constant 0 : index
      %72 = vector.load %arg39[%c0_31, %c0_32] : memref<128x256xbf16, #tpu.memory_space<vmem>>, vector<128x256xbf16>
      %73 = arith.truncf %65 : vector<8x128xf32> to vector<8x128xbf16>
      %cst_33 = arith.constant dense<0.000000e+00> : vector<8x256xf32>
      %74 = tpu.matmul %73, %72, %cst_33 {dimension_numbers = #tpu.dot_dimension_numbers<[1], [0], [0], [1], [0, 0, 1, 1], [], []>} : vector<8x128xbf16>, vector<128x256xbf16>, vector<8x256xf32> -> vector<8x256xf32>
      %c0_34 = arith.constant 0 : index
      %c0_35 = arith.constant 0 : index
      %75 = vector.load %arg40[%c0_34, %c0_35] : memref<1x256xf32, #tpu.memory_space<vmem>>, vector<1x256xf32>
      %76 = vector.broadcast %75 : vector<1x256xf32> to vector<8x256xf32>
      %77 = arith.addf %74, %76 : vector<8x256xf32>
      %78 = vector.extract_strided_slice %77 {offsets = [0, 0], sizes = [8, 128], strides = [1, 1]} : vector<8x256xf32> to vector<8x128xf32>
      %79 = vector.extract_strided_slice %77 {offsets = [0, 128], sizes = [8, 128], strides = [1, 1]} : vector<8x256xf32> to vector<8x128xf32>
      %80 = arith.truncf %71 : vector<16x128xf32> to vector<16x128xbf16>
      %81 = arith.truncf %78 : vector<8x128xf32> to vector<8x128xbf16>
      %cst_36 = arith.constant dense<0.000000e+00> : vector<16x8xf32>
      %82 = tpu.matmul %80, %81, %cst_36 {dimension_numbers = #tpu.dot_dimension_numbers<[1], [1], [0], [0], [0, 0, 1, 0], [], []>} : vector<16x128xbf16>, vector<8x128xbf16>, vector<16x8xf32> -> vector<16x8xf32>
      %cst_37 = arith.constant dense<0xFF800000> : vector<16xf32>
      %83 = vector.multi_reduction <maximumf>, %82, %cst_37 [1] : vector<16x8xf32> to vector<16xf32>
      %84 = vector.shape_cast %83 : vector<16xf32> to vector<16x1xf32>
      %85 = vector.broadcast %84 : vector<16x1xf32> to vector<16x8xf32>
      %86 = arith.subf %82, %85 : vector<16x8xf32>
      %87 = math.exp %86 : vector<16x8xf32>
      %cst_38 = arith.constant dense<0.000000e+00> : vector<16xf32>
      %88 = vector.multi_reduction <add>, %87, %cst_38 [1] : vector<16x8xf32> to vector<16xf32>
      %89 = vector.shape_cast %88 : vector<16xf32> to vector<16x1xf32>
      %90 = tpu.reciprocal %89 {approx = true} : vector<16x1xf32> -> vector<16x1xf32>
      %91 = vector.broadcast %90 : vector<16x1xf32> to vector<16x8xf32>
      %92 = arith.mulf %87, %91 : vector<16x8xf32>
      %93 = arith.truncf %92 : vector<16x8xf32> to vector<16x8xbf16>
      %94 = arith.truncf %79 : vector<8x128xf32> to vector<8x128xbf16>
      %cst_39 = arith.constant dense<0.000000e+00> : vector<16x128xf32>
      %95 = tpu.matmul %93, %94, %cst_39 {dimension_numbers = #tpu.dot_dimension_numbers<[1], [0], [0], [1], [0, 0, 1, 1], [], []>} : vector<16x8xbf16>, vector<8x128xbf16>, vector<16x128xf32> -> vector<16x128xf32>
      %c0_40 = arith.constant 0 : index
      %c0_41 = arith.constant 0 : index
      %96 = vector.load %arg41[%c0_40, %c0_41] : memref<128x128xbf16, #tpu.memory_space<vmem>>, vector<128x128xbf16>
      %97 = arith.truncf %95 : vector<16x128xf32> to vector<16x128xbf16>
      %cst_42 = arith.constant dense<0.000000e+00> : vector<16x128xf32>
      %98 = tpu.matmul %97, %96, %cst_42 {dimension_numbers = #tpu.dot_dimension_numbers<[1], [0], [0], [1], [0, 0, 1, 1], [], []>} : vector<16x128xbf16>, vector<128x128xbf16>, vector<16x128xf32> -> vector<16x128xf32>
      %c0_43 = arith.constant 0 : index
      %c0_44 = arith.constant 0 : index
      %99 = vector.load %arg42[%c0_43, %c0_44] : memref<1x128xf32, #tpu.memory_space<vmem>>, vector<1x128xf32>
      %100 = vector.broadcast %99 : vector<1x128xf32> to vector<16x128xf32>
      %101 = arith.addf %98, %100 : vector<16x128xf32>
      %c0_45 = arith.constant 0 : index
      %c0_46 = arith.constant 0 : index
      %102 = vector.load %arg43[%c0_45, %c0_46] : memref<128x128xbf16, #tpu.memory_space<vmem>>, vector<128x128xbf16>
      %103 = arith.truncf %101 : vector<16x128xf32> to vector<16x128xbf16>
      %cst_47 = arith.constant dense<0.000000e+00> : vector<16x128xf32>
      %104 = tpu.matmul %103, %102, %cst_47 {dimension_numbers = #tpu.dot_dimension_numbers<[1], [0], [0], [1], [0, 0, 1, 1], [], []>} : vector<16x128xbf16>, vector<128x128xbf16>, vector<16x128xf32> -> vector<16x128xf32>
      %c0_48 = arith.constant 0 : index
      %c0_49 = arith.constant 0 : index
      %105 = vector.load %arg44[%c0_48, %c0_49] : memref<1x128xf32, #tpu.memory_space<vmem>>, vector<1x128xf32>
      %106 = vector.broadcast %105 : vector<1x128xf32> to vector<16x128xf32>
      %107 = arith.addf %104, %106 : vector<16x128xf32>
      %c0_50 = arith.constant 0 : index
      %c0_51 = arith.constant 0 : index
      %c0_52 = arith.constant 0 : index
      %108 = vector.load %arg45[%c0_50, %c0_51, %c0_52] : memref<1x16x128xf32, #tpu.memory_space<vmem>>, vector<1x16x128xf32>
      %109 = vector.shape_cast %108 : vector<1x16x128xf32> to vector<16x128xf32>
      %110 = vector.shape_cast %107 : vector<16x128xf32> to vector<1x16x128xf32>
      tpu.vector_store %arg45[%c0_50, %c0_51, %c0_52], %110 {strides = array<i32>} : memref<1x16x128xf32, #tpu.memory_space<vmem>>, vector<1x16x128xf32>,
    } else {
    }
    return
  }
  func.func @transform_0(%arg0: i32, %arg1: i32) -> (i32, i32, i32) {
    %c0_i32 = arith.constant 0 : i32
    %c0_i32_0 = arith.constant 0 : i32
    %c0_i32_1 = arith.constant 0 : i32
    return %arg0, %c0_i32, %c0_i32_0 : i32, i32, i32
  }
  func.func @transform_1(%arg0: i32, %arg1: i32) -> (i32, i32, i32) {
    %c0_i32 = arith.constant 0 : i32
    %c0_i32_0 = arith.constant 0 : i32
    %c0_i32_1 = arith.constant 0 : i32
    return %arg0, %c0_i32, %c0_i32_0 : i32, i32, i32
  }
  func.func @transform_2(%arg0: i32, %arg1: i32) -> (i32, i32) {
    %c0_i32 = arith.constant 0 : i32
    %c0_i32_0 = arith.constant 0 : i32
    %c0_i32_1 = arith.constant 0 : i32
    return %c0_i32, %c0_i32_0 : i32, i32
  }
  func.func @transform_3(%arg0: i32, %arg1: i32) -> (i32, i32) {
    %c0_i32 = arith.constant 0 : i32
    %c0_i32_0 = arith.constant 0 : i32
    %c0_i32_1 = arith.constant 0 : i32
    return %c0_i32, %c0_i32_0 : i32, i32
  }
  func.func @transform_4(%arg0: i32, %arg1: i32) -> (i32, i32) {
    %c0_i32 = arith.constant 0 : i32
    %c0_i32_0 = arith.constant 0 : i32
    %c0_i32_1 = arith.constant 0 : i32
    return %c0_i32, %c0_i32_0 : i32, i32
  }
  func.func @transform_5(%arg0: i32, %arg1: i32) -> (i32, i32) {
    %c0_i32 = arith.constant 0 : i32
    %c0_i32_0 = arith.constant 0 : i32
    %c0_i32_1 = arith.constant 0 : i32
    return %c0_i32, %c0_i32_0 : i32, i32
  }
  func.func @transform_6(%arg0: i32, %arg1: i32) -> (i32, i32) {
    %c0_i32 = arith.constant 0 : i32
    %c0_i32_0 = arith.constant 0 : i32
    %c0_i32_1 = arith.constant 0 : i32
    return %c0_i32, %c0_i32_0 : i32, i32
  }
  func.func @transform_7(%arg0: i32, %arg1: i32) -> (i32, i32) {
    %c0_i32 = arith.constant 0 : i32
    %c0_i32_0 = arith.constant 0 : i32
    %c0_i32_1 = arith.constant 0 : i32
    return %c0_i32, %c0_i32_0 : i32, i32
  }
  func.func @transform_8(%arg0: i32, %arg1: i32) -> (i32, i32) {
    %c0_i32 = arith.constant 0 : i32
    %c0_i32_0 = arith.constant 0 : i32
    %c0_i32_1 = arith.constant 0 : i32
    return %c0_i32, %c0_i32_0 : i32, i32
  }
  func.func @transform_9(%arg0: i32, %arg1: i32) -> (i32, i32) {
    %c0_i32 = arith.constant 0 : i32
    %c0_i32_0 = arith.constant 0 : i32
    %c0_i32_1 = arith.constant 0 : i32
    return %c0_i32, %c0_i32_0 : i32, i32
  }
  func.func @transform_10(%arg0: i32, %arg1: i32) -> (i32, i32) {
    %c0_i32 = arith.constant 0 : i32
    %c0_i32_0 = arith.constant 0 : i32
    %c0_i32_1 = arith.constant 0 : i32
    return %c0_i32, %c0_i32_0 : i32, i32
  }
  func.func @transform_11(%arg0: i32, %arg1: i32) -> (i32, i32) {
    %c0_i32 = arith.constant 0 : i32
    %c0_i32_0 = arith.constant 0 : i32
    %c0_i32_1 = arith.constant 0 : i32
    return %c0_i32, %c0_i32_0 : i32, i32
  }
  func.func @transform_12(%arg0: i32, %arg1: i32) -> (i32, i32) {
    %c0_i32 = arith.constant 0 : i32
    %c0_i32_0 = arith.constant 0 : i32
    %c0_i32_1 = arith.constant 0 : i32
    return %c0_i32, %c0_i32_0 : i32, i32
  }
  func.func @transform_13(%arg0: i32, %arg1: i32) -> (i32, i32) {
    %c0_i32 = arith.constant 0 : i32
    %c0_i32_0 = arith.constant 0 : i32
    %c0_i32_1 = arith.constant 0 : i32
    return %c0_i32, %c0_i32_0 : i32, i32
  }
  func.func @transform_14(%arg0: i32, %arg1: i32) -> (i32, i32) {
    %c0_i32 = arith.constant 0 : i32
    %c0_i32_0 = arith.constant 0 : i32
    %c0_i32_1 = arith.constant 0 : i32
    return %c0_i32, %c0_i32_0 : i32, i32
  }
  func.func @transform_15(%arg0: i32, %arg1: i32) -> (i32, i32) {
    %c0_i32 = arith.constant 0 : i32
    %c0_i32_0 = arith.constant 0 : i32
    %c0_i32_1 = arith.constant 0 : i32
    return %c0_i32, %c0_i32_0 : i32, i32
  }
  func.func @transform_16(%arg0: i32, %arg1: i32) -> (i32, i32) {
    %c0_i32 = arith.constant 0 : i32
    %c0_i32_0 = arith.constant 0 : i32
    %c0_i32_1 = arith.constant 0 : i32
    return %c0_i32, %c0_i32_0 : i32, i32
  }
  func.func @transform_17(%arg0: i32, %arg1: i32) -> (i32, i32) {
    %c0_i32 = arith.constant 0 : i32
    %c0_i32_0 = arith.constant 0 : i32
    %c0_i32_1 = arith.constant 0 : i32
    return %c0_i32, %c0_i32_0 : i32, i32
  }
  func.func @transform_18(%arg0: i32, %arg1: i32) -> (i32, i32) {
    %c0_i32 = arith.constant 0 : i32
    %c0_i32_0 = arith.constant 0 : i32
    %c0_i32_1 = arith.constant 0 : i32
    return %c0_i32, %c0_i32_0 : i32, i32
  }
  func.func @transform_19(%arg0: i32, %arg1: i32) -> (i32, i32, i32) {
    %c1_i32 = arith.constant 1 : i32
    %0 = arith.subi %arg1, %c1_i32 : i32
    %c0_i32 = arith.constant 0 : i32
    %c1_i32_0 = arith.constant 1 : i32
    %1 = arith.maxsi %c0_i32, %0 : i32
    %2 = arith.minsi %c1_i32_0, %1 : i32
    %c0_i32_1 = arith.constant 0 : i32
    %c0_i32_2 = arith.constant 0 : i32
    %c0_i32_3 = arith.constant 0 : i32
    return %2, %c0_i32_1, %c0_i32_2 : i32, i32, i32
  }
  func.func @transform_20(%arg0: i32, %arg1: i32) -> (i32, i32, i32) {
    %c1_i32 = arith.constant 1 : i32
    %0 = arith.subi %arg1, %c1_i32 : i32
    %c0_i32 = arith.constant 0 : i32
    %c1_i32_0 = arith.constant 1 : i32
    %1 = arith.maxsi %c0_i32, %0 : i32
    %2 = arith.minsi %c1_i32_0, %1 : i32
    %c0_i32_1 = arith.constant 0 : i32
    %c0_i32_2 = arith.constant 0 : i32
    %c0_i32_3 = arith.constant 0 : i32
    return %2, %c0_i32_1, %c0_i32_2 : i32, i32, i32
  }
  func.func @transform_21(%arg0: i32, %arg1: i32) -> (i32, i32, i32) {
    %c1_i32 = arith.constant 1 : i32
    %0 = arith.subi %arg1, %c1_i32 : i32
    %c0_i32 = arith.constant 0 : i32
    %c1_i32_0 = arith.constant 1 : i32
    %1 = arith.maxsi %c0_i32, %0 : i32
    %2 = arith.minsi %c1_i32_0, %1 : i32
    %c0_i32_1 = arith.constant 0 : i32
    %c0_i32_2 = arith.constant 0 : i32
    %c0_i32_3 = arith.constant 0 : i32
    return %2, %c0_i32_1, %c0_i32_2 : i32, i32, i32
  }
  func.func @transform_22(%arg0: i32, %arg1: i32) -> (i32, i32, i32) {
    %c1_i32 = arith.constant 1 : i32
    %0 = arith.subi %arg1, %c1_i32 : i32
    %c0_i32 = arith.constant 0 : i32
    %c1_i32_0 = arith.constant 1 : i32
    %1 = arith.maxsi %c0_i32, %0 : i32
    %2 = arith.minsi %c1_i32_0, %1 : i32
    %c0_i32_1 = arith.constant 0 : i32
    %c0_i32_2 = arith.constant 0 : i32
    %c0_i32_3 = arith.constant 0 : i32
    return %2, %c0_i32_1, %c0_i32_2 : i32, i32, i32
  }
  func.func @transform_23(%arg0: i32, %arg1: i32) -> (i32, i32, i32) {
    %c1_i32 = arith.constant 1 : i32
    %0 = arith.subi %arg1, %c1_i32 : i32
    %c0_i32 = arith.constant 0 : i32
    %c1_i32_0 = arith.constant 1 : i32
    %1 = arith.maxsi %c0_i32, %0 : i32
    %2 = arith.minsi %c1_i32_0, %1 : i32
    %c0_i32_1 = arith.constant 0 : i32
    %c0_i32_2 = arith.constant 0 : i32
    %c0_i32_3 = arith.constant 0 : i32
    return %2, %c0_i32_1, %c0_i32_2 : i32, i32, i32
  }
  func.func @transform_24(%arg0: i32, %arg1: i32) -> (i32, i32, i32) {
    %c1_i32 = arith.constant 1 : i32
    %0 = arith.subi %arg1, %c1_i32 : i32
    %c0_i32 = arith.constant 0 : i32
    %c1_i32_0 = arith.constant 1 : i32
    %1 = arith.maxsi %c0_i32, %0 : i32
    %2 = arith.minsi %c1_i32_0, %1 : i32
    %c0_i32_1 = arith.constant 0 : i32
    %c0_i32_2 = arith.constant 0 : i32
    %c0_i32_3 = arith.constant 0 : i32
    return %2, %c0_i32_1, %c0_i32_2 : i32, i32, i32
  }
  func.func @transform_25(%arg0: i32, %arg1: i32) -> (i32, i32, i32) {
    %c1_i32 = arith.constant 1 : i32
    %0 = arith.subi %arg1, %c1_i32 : i32
    %c0_i32 = arith.constant 0 : i32
    %c1_i32_0 = arith.constant 1 : i32
    %1 = arith.maxsi %c0_i32, %0 : i32
    %2 = arith.minsi %c1_i32_0, %1 : i32
    %c0_i32_1 = arith.constant 0 : i32
    %c0_i32_2 = arith.constant 0 : i32
    %c0_i32_3 = arith.constant 0 : i32
    return %2, %c0_i32_1, %c0_i32_2 : i32, i32, i32
  }
  func.func @transform_26(%arg0: i32, %arg1: i32) -> (i32, i32, i32) {
    %c1_i32 = arith.constant 1 : i32
    %0 = arith.subi %arg1, %c1_i32 : i32
    %c0_i32 = arith.constant 0 : i32
    %c1_i32_0 = arith.constant 1 : i32
    %1 = arith.maxsi %c0_i32, %0 : i32
    %2 = arith.minsi %c1_i32_0, %1 : i32
    %c0_i32_1 = arith.constant 0 : i32
    %c0_i32_2 = arith.constant 0 : i32
    %c0_i32_3 = arith.constant 0 : i32
    return %2, %c0_i32_1, %c0_i32_2 : i32, i32, i32
  }
  func.func @transform_27(%arg0: i32, %arg1: i32) -> (i32, i32, i32) {
    %c1_i32 = arith.constant 1 : i32
    %0 = arith.subi %arg1, %c1_i32 : i32
    %c0_i32 = arith.constant 0 : i32
    %c1_i32_0 = arith.constant 1 : i32
    %1 = arith.maxsi %c0_i32, %0 : i32
    %2 = arith.minsi %c1_i32_0, %1 : i32
    %c0_i32_1 = arith.constant 0 : i32
    %c0_i32_2 = arith.constant 0 : i32
    %c0_i32_3 = arith.constant 0 : i32
    return %2, %c0_i32_1, %c0_i32_2 : i32, i32, i32
  }
  func.func @transform_28(%arg0: i32, %arg1: i32) -> (i32, i32, i32) {
    %c1_i32 = arith.constant 1 : i32
    %0 = arith.subi %arg1, %c1_i32 : i32
    %c0_i32 = arith.constant 0 : i32
    %c1_i32_0 = arith.constant 1 : i32
    %1 = arith.maxsi %c0_i32, %0 : i32
    %2 = arith.minsi %c1_i32_0, %1 : i32
    %c0_i32_1 = arith.constant 0 : i32
    %c0_i32_2 = arith.constant 0 : i32
    %c0_i32_3 = arith.constant 0 : i32
    return %2, %c0_i32_1, %c0_i32_2 : i32, i32, i32
  }
  func.func @transform_29(%arg0: i32, %arg1: i32) -> (i32, i32, i32) {
    %c1_i32 = arith.constant 1 : i32
    %0 = arith.subi %arg1, %c1_i32 : i32
    %c0_i32 = arith.constant 0 : i32
    %c1_i32_0 = arith.constant 1 : i32
    %1 = arith.maxsi %c0_i32, %0 : i32
    %2 = arith.minsi %c1_i32_0, %1 : i32
    %c0_i32_1 = arith.constant 0 : i32
    %c0_i32_2 = arith.constant 0 : i32
    %c0_i32_3 = arith.constant 0 : i32
    return %2, %c0_i32_1, %c0_i32_2 : i32, i32, i32
  }
  func.func @transform_30(%arg0: i32, %arg1: i32) -> (i32, i32, i32) {
    %c1_i32 = arith.constant 1 : i32
    %0 = arith.subi %arg1, %c1_i32 : i32
    %c0_i32 = arith.constant 0 : i32
    %c1_i32_0 = arith.constant 1 : i32
    %1 = arith.maxsi %c0_i32, %0 : i32
    %2 = arith.minsi %c1_i32_0, %1 : i32
    %c0_i32_1 = arith.constant 0 : i32
    %c0_i32_2 = arith.constant 0 : i32
    %c0_i32_3 = arith.constant 0 : i32
    return %2, %c0_i32_1, %c0_i32_2 : i32, i32, i32
  }
  func.func @transform_31(%arg0: i32, %arg1: i32) -> (i32, i32) {
    %c0_i32 = arith.constant 0 : i32
    %c0_i32_0 = arith.constant 0 : i32
    %c0_i32_1 = arith.constant 0 : i32
    return %c0_i32, %c0_i32_0 : i32, i32
  }
  func.func @transform_32(%arg0: i32, %arg1: i32) -> (i32, i32) {
    %c0_i32 = arith.constant 0 : i32
    %c0_i32_0 = arith.constant 0 : i32
    %c0_i32_1 = arith.constant 0 : i32
    return %c0_i32, %c0_i32_0 : i32, i32
  }
  func.func @transform_33(%arg0: i32, %arg1: i32) -> (i32, i32) {
    %c0_i32 = arith.constant 0 : i32
    %c0_i32_0 = arith.constant 0 : i32
    %c0_i32_1 = arith.constant 0 : i32
    return %c0_i32, %c0_i32_0 : i32, i32
  }
  func.func @transform_34(%arg0: i32, %arg1: i32) -> (i32, i32) {
    %c0_i32 = arith.constant 0 : i32
    %c0_i32_0 = arith.constant 0 : i32
    %c0_i32_1 = arith.constant 0 : i32
    return %c0_i32, %c0_i32_0 : i32, i32
  }
  func.func @transform_35(%arg0: i32, %arg1: i32) -> (i32, i32) {
    %c0_i32 = arith.constant 0 : i32
    %c0_i32_0 = arith.constant 0 : i32
    %c0_i32_1 = arith.constant 0 : i32
    return %c0_i32, %c0_i32_0 : i32, i32
  }
  func.func @transform_36(%arg0: i32, %arg1: i32) -> (i32, i32) {
    %c0_i32 = arith.constant 0 : i32
    %c0_i32_0 = arith.constant 0 : i32
    %c0_i32_1 = arith.constant 0 : i32
    return %c0_i32, %c0_i32_0 : i32, i32
  }
  func.func @transform_37(%arg0: i32, %arg1: i32) -> (i32, i32) {
    %c0_i32 = arith.constant 0 : i32
    %c0_i32_0 = arith.constant 0 : i32
    %c0_i32_1 = arith.constant 0 : i32
    return %c0_i32, %c0_i32_0 : i32, i32
  }
  func.func @transform_38(%arg0: i32, %arg1: i32) -> (i32, i32) {
    %c0_i32 = arith.constant 0 : i32
    %c0_i32_0 = arith.constant 0 : i32
    %c0_i32_1 = arith.constant 0 : i32
    return %c0_i32, %c0_i32_0 : i32, i32
  }
  func.func @transform_39(%arg0: i32, %arg1: i32) -> (i32, i32) {
    %c0_i32 = arith.constant 0 : i32
    %c0_i32_0 = arith.constant 0 : i32
    %c0_i32_1 = arith.constant 0 : i32
    return %c0_i32, %c0_i32_0 : i32, i32
  }
  func.func @transform_40(%arg0: i32, %arg1: i32) -> (i32, i32) {
    %c0_i32 = arith.constant 0 : i32
    %c0_i32_0 = arith.constant 0 : i32
    %c0_i32_1 = arith.constant 0 : i32
    return %c0_i32, %c0_i32_0 : i32, i32
  }
  func.func @transform_41(%arg0: i32, %arg1: i32) -> (i32, i32) {
    %c0_i32 = arith.constant 0 : i32
    %c0_i32_0 = arith.constant 0 : i32
    %c0_i32_1 = arith.constant 0 : i32
    return %c0_i32, %c0_i32_0 : i32, i32
  }
  func.func @transform_42(%arg0: i32, %arg1: i32) -> (i32, i32) {
    %c0_i32 = arith.constant 0 : i32
    %c0_i32_0 = arith.constant 0 : i32
    %c0_i32_1 = arith.constant 0 : i32
    return %c0_i32, %c0_i32_0 : i32, i32
  }
  func.func @transform_43(%arg0: i32, %arg1: i32) -> (i32, i32, i32) {
    %c0_i32 = arith.constant 0 : i32
    %c0_i32_0 = arith.constant 0 : i32
    %c0_i32_1 = arith.constant 0 : i32
    return %arg0, %c0_i32, %c0_i32_0 : i32, i32, i32
  }
}

</mosaic_0001>

<llo_original>
// kernel: fwd.3
$region0: #{fwd.3}
  #allocation0 [shape = 'u32[]', space=smem, size = 0x4, offset = 0x4, fixed_abs, tag = 'smem constant byte address 0x4 - core index']
  #allocation1 [shape = 'u32[72,128]{1,0:T(1,128)}', space=vmem, size = 0x9000, scoped, tag = 'internal scratch']
  #allocation2 [shape = 'bf16[56,28]{1,0:T(8,128)(2,1)}', space=vmem, size = 0x3800, scoped, tag = 'scratch operand']
  #allocation3 [shape = 'bf16[56,28]{1,0:T(8,128)(2,1)}', space=vmem, size = 0x3800, scoped, tag = 'scratch operand']
  #allocation4 [shape = 'bf16[28,56]{1,0:T(8,128)(2,1)}', space=vmem, size = 0x2000, scoped, tag = 'scratch operand']
  #allocation5 [shape = 'bf16[56,128]{1,0:T(8,128)(2,1)}', space=vmem, size = 0x3800, scoped, tag = 'scratch operand']
  %s0 = inlined_call_operand.vmem [shape: f32[28,128], index: 0, kind: input, shape index: {}]
  %s1 = inlined_call_operand.vmem [shape: f32[28,128], index: 1, kind: input, shape index: {}]
  %s2 = inlined_call_operand.vmem [shape: s32[56,1], index: 2, kind: input, shape index: {}]
  %s3 = inlined_call_operand.vmem [shape: s32[56,1], index: 3, kind: input, shape index: {}]
  %s4 = inlined_call_operand.vmem [shape: s32[1,56], index: 4, kind: input, shape index: {}]
  %s5 = inlined_call_operand.hbm [shape: bf16[2,384,128], index: 5, kind: input, shape index: {}]
  %s6 = inlined_call_operand.vmem [shape: f32[2,1,128], index: 6, kind: input, shape index: {}]
  %s7 = inlined_call_operand.hbm [shape: bf16[2,128,128], index: 7, kind: input, shape index: {}]
  %s8 = inlined_call_operand.vmem [shape: f32[2,1,128], index: 8, kind: input, shape index: {}]
  %s9 = inlined_call_operand.hbm [shape: bf16[2,256,128], index: 9, kind: input, shape index: {}]
  %s10 = inlined_call_operand.vmem [shape: f32[2,1,128], index: 10, kind: input, shape index: {}]
  %s11 = inlined_call_operand.hbm [shape: bf16[2,128,128], index: 11, kind: input, shape index: {}]
  %s12 = inlined_call_operand.vmem [shape: f32[2,1,128], index: 12, kind: input, shape index: {}]
  %s13 = inlined_call_operand.vmem [shape: f32[28,128], index: 13, kind: output, shape index: {}]
  %s14 = sld [smem:[#allocation0]]
  $region105: #{fwd.3} parent=0
    _
  %s16 = ssub.s32 1, %s14
  %s17 = scalar_select 0, %s16, %s14
  $region1: #{fwd.3} parent=0
    #allocation6 [shape = 'u8[196608]{0}', space=vmem, size = 0x30000, scoped, tag = 'input window, operand 5']
    #allocation7 [shape = 's32[2]{0}', space=sflag, size = 0x8, scoped, tag = 'scoped memory for fwd.3']
    #allocation8 [shape = 'u8[65536]{0}', space=vmem, size = 0x10000, scoped, tag = 'input window, operand 7']
    #allocation9 [shape = 's32[2]{0}', space=sflag, size = 0x8, scoped, tag = 'scoped memory for fwd.3']
    #allocation10 [shape = 'u8[131072]{0}', space=vmem, size = 0x20000, scoped, tag = 'input window, operand 9']
    #allocation11 [shape = 'u8[65536]{0}', space=vmem, size = 0x10000, scoped, tag = 'input window, operand 11']
    #allocation12 [shape = 's32[2]{0}', space=sflag, size = 0x8, scoped, tag = 'scoped memory for fwd.3']
    %18 = vsyncpa [#allocation7], 0
    %s19 = scalar_lea.sflag [#allocation7], 1
    %20 = vsyncpa %s19, 0
    %21 = vsyncpa [#allocation9], 0
    %s22 = scalar_lea.sflag [#allocation9], 1
    %23 = vsyncpa %s22, 0
    %24 = vsyncpa [#allocation12], 0
    %s25 = scalar_lea.sflag [#allocation12], 1
    %26 = vsyncpa %s25, 0
    loop: start=0, step=1, limit=4
    $region2: #{fwd.3} parent=1 // loop_pre_header
      _
    $region3: #{fwd.3} parent=1 // loop_header
      %s28 = sphi 0, %s32
      %p29 = scmp.ge.s32.totalorder %s28, 4
      %s36 = sphi 0, %s36
      %s38 = sphi 0, %s36
      %s39 = sphi 0, %s38
      %s53 = sphi 0, %s39
      %s57 = sphi 0, %s57
      %s59 = sphi 0, %s57
      %s60 = sphi 0, %s59
      %s74 = sphi 0, %s60
      %s78 = sphi 0, %s78
      %s80 = sphi 0, %s78
      %s81 = sphi 0, %s80
      %s95 = sphi 0, %s81
      %s99 = sphi 0, %s99
      %s101 = sphi 0, %s99
      %s102 = sphi 0, %s101
      %s116 = sphi 0, %s102
      %s120 = sphi 0, %s120
      %s122 = sphi 0, %s120
      %s123 = sphi 0, %s122
      %s137 = sphi 0, %s123
      %s143 = sphi 0, %s145
      %s146 = sphi 0, %s143
      %s147 = sphi 0, %s146
      %s163 = sphi 0, %s147
      %s169 = sphi 0, %s171
      %s172 = sphi 0, %s169
      %s173 = sphi 0, %s172
      %s189 = sphi 0, %s173
      %s195 = sphi 0, %s197
      %s198 = sphi 0, %s195
      %s199 = sphi 0, %s198
      %s215 = sphi 0, %s199
      %s221 = sphi 0, %s223
      %s224 = sphi 0, %s221
      %s225 = sphi 0, %s224
      %s241 = sphi 0, %s225
      %s247 = sphi 0, %s249
      %s250 = sphi 0, %s247
      %s251 = sphi 0, %s250
      %s267 = sphi 0, %s251
      %s273 = sphi 0, %s275
      %s276 = sphi 0, %s273
      %s277 = sphi 0, %s276
      %s293 = sphi 0, %s277
      %s299 = sphi 0, %s301
      %s302 = sphi 0, %s299
      %s303 = sphi 0, %s302
      %s319 = sphi 0, %s303
      %s325 = sphi 0, %s327
      %s328 = sphi 0, %s325
      %s329 = sphi 0, %s328
      %s345 = sphi 0, %s329
      %s349 = sphi 0, %s349
      %s351 = sphi 0, %s349
      %s352 = sphi 0, %s351
      %s366 = sphi 0, %s352
    $region4: #{fwd.3} parent=1 // loop_header_branch
      %31 = sbr.rel (%p29) target = $region8
    $region5: #{fwd.3} parent=1 // loop_body
      %s33 = ssub.s32 %s28, 1
      %s34 = ssub.s32 %s28, 2
      %s35 = sadd.s32 %s28, 1
      %s37 = sadd.s32 %s36, 1
      %p40 = scmp.eq.s32.totalorder %s28, 1
      %p41 = scmp.ne.s32.totalorder %s36, %s38
      %p42 = scmp.eq.s32.totalorder %s28, 0
      %p43 = por %p41, %p42
      %p44 = scmp.ne.s32.totalorder %s36, %s38
      %p45 = scmp.eq.s32.totalorder %s33, 1
      %p46 = por %p44, %p45
      %p47 = scmp.ne.s32.totalorder %s38, %s39
      %p48 = scmp.eq.s32.totalorder %s33, 0
      %p49 = por %p47, %p48
      %p50 = scmp.ne.s32.totalorder %s38, %s39
      %p51 = scmp.eq.s32.totalorder %s34, 1
      %p52 = por %p50, %p51
      %p54 = scmp.ne.s32.totalorder %s39, %s53
      %p55 = scmp.eq.s32.totalorder %s34, 0
      %p56 = por %p54, %p55
      %s58 = sadd.s32 %s57, 1
      %p61 = scmp.eq.s32.totalorder %s28, 1
      %p62 = scmp.ne.s32.totalorder %s57, %s59
      %p63 = scmp.eq.s32.totalorder %s28, 0
      %p64 = por %p62, %p63
      %p65 = scmp.ne.s32.totalorder %s57, %s59
      %p66 = scmp.eq.s32.totalorder %s33, 1
      %p67 = por %p65, %p66
      %p68 = scmp.ne.s32.totalorder %s59, %s60
      %p69 = scmp.eq.s32.totalorder %s33, 0
      %p70 = por %p68, %p69
      %p71 = scmp.ne.s32.totalorder %s59, %s60
      %p72 = scmp.eq.s32.totalorder %s34, 1
      %p73 = por %p71, %p72
      %p75 = scmp.ne.s32.totalorder %s60, %s74
      %p76 = scmp.eq.s32.totalorder %s34, 0
      %p77 = por %p75, %p76
      %s79 = sadd.s32 %s78, 1
      %p82 = scmp.eq.s32.totalorder %s28, 1
      %p83 = scmp.ne.s32.totalorder %s78, %s80
      %p84 = scmp.eq.s32.totalorder %s28, 0
      %p85 = por %p83, %p84
      %p86 = scmp.ne.s32.totalorder %s78, %s80
      %p87 = scmp.eq.s32.totalorder %s33, 1
      %p88 = por %p86, %p87
      %p89 = scmp.ne.s32.totalorder %s80, %s81
      %p90 = scmp.eq.s32.totalorder %s33, 0
      %p91 = por %p89, %p90
      %p92 = scmp.ne.s32.totalorder %s80, %s81
      %p93 = scmp.eq.s32.totalorder %s34, 1
      %p94 = por %p92, %p93
      %p96 = scmp.ne.s32.totalorder %s81, %s95
      %p97 = scmp.eq.s32.totalorder %s34, 0
      %p98 = por %p96, %p97
      %s100 = sadd.s32 %s99, 1
      %p103 = scmp.eq.s32.totalorder %s28, 1
      %p104 = scmp.ne.s32.totalorder %s99, %s101
      %p105 = scmp.eq.s32.totalorder %s28, 0
      %p106 = por %p104, %p105
      %p107 = scmp.ne.s32.totalorder %s99, %s101
      %p108 = scmp.eq.s32.totalorder %s33, 1
      %p109 = por %p107, %p108
      %p110 = scmp.ne.s32.totalorder %s101, %s102
      %p111 = scmp.eq.s32.totalorder %s33, 0
      %p112 = por %p110, %p111
      %p113 = scmp.ne.s32.totalorder %s101, %s102
      %p114 = scmp.eq.s32.totalorder %s34, 1
      %p115 = por %p113, %p114
      %p117 = scmp.ne.s32.totalorder %s102, %s116
      %p118 = scmp.eq.s32.totalorder %s34, 0
      %p119 = por %p117, %p118
      %s121 = sadd.s32 %s120, 1
      %p124 = scmp.eq.s32.totalorder %s28, 1
      %p125 = scmp.ne.s32.totalorder %s120, %s122
      %p126 = scmp.eq.s32.totalorder %s28, 0
      %p127 = por %p125, %p126
      %p128 = scmp.ne.s32.totalorder %s120, %s122
      %p129 = scmp.eq.s32.totalorder %s33, 1
      %p130 = por %p128, %p129
      %p131 = scmp.ne.s32.totalorder %s122, %s123
      %p132 = scmp.eq.s32.totalorder %s33, 0
      %p133 = por %p131, %p132
      %p134 = scmp.ne.s32.totalorder %s122, %s123
      %p135 = scmp.eq.s32.totalorder %s34, 1
      %p136 = por %p134, %p135
      %p138 = scmp.ne.s32.totalorder %s123, %s137
      %p139 = scmp.eq.s32.totalorder %s34, 0
      %p140 = por %p138, %p139
      %s141 = ssub.s32 %s28, %s35
      %p142 = scmp.eq.s32.totalorder %s141, 0
      %s144 = sadd.s32 %s143, 1
      %s145 = scalar_select %p142, %s143, %s144
      %p148 = pneg %p142
      %p149 = scmp.eq.s32.totalorder %s28, 1
      %p150 = por %p148, %p149
      %p151 = scmp.ne.s32.totalorder %s143, %s146
      %p152 = scmp.eq.s32.totalorder %s28, 0
      %p153 = por %p151, %p152
      %p154 = scmp.ne.s32.totalorder %s143, %s146
      %p155 = scmp.eq.s32.totalorder %s33, 1
      %p156 = por %p154, %p155
      %p157 = scmp.ne.s32.totalorder %s146, %s147
      %p158 = scmp.eq.s32.totalorder %s33, 0
      %p159 = por %p157, %p158
      %p160 = scmp.ne.s32.totalorder %s146, %s147
      %p161 = scmp.eq.s32.totalorder %s34, 1
      %p162 = por %p160, %p161
      %p164 = scmp.ne.s32.totalorder %s147, %s163
      %p165 = scmp.eq.s32.totalorder %s34, 0
      %p166 = por %p164, %p165
      %s167 = ssub.s32 %s28, %s35
      %p168 = scmp.eq.s32.totalorder %s167, 0
      %s170 = sadd.s32 %s169, 1
      %s171 = scalar_select %p168, %s169, %s170
      %p174 = pneg %p168
      %p175 = scmp.eq.s32.totalorder %s28, 1
      %p176 = por %p174, %p175
      %p177 = scmp.ne.s32.totalorder %s169, %s172
      %p178 = scmp.eq.s32.totalorder %s28, 0
      %p179 = por %p177, %p178
      %p180 = scmp.ne.s32.totalorder %s169, %s172
      %p181 = scmp.eq.s32.totalorder %s33, 1
      %p182 = por %p180, %p181
      %p183 = scmp.ne.s32.totalorder %s172, %s173
      %p184 = scmp.eq.s32.totalorder %s33, 0
      %p185 = por %p183, %p184
      %p186 = scmp.ne.s32.totalorder %s172, %s173
      %p187 = scmp.eq.s32.totalorder %s34, 1
      %p188 = por %p186, %p187
      %p190 = scmp.ne.s32.totalorder %s173, %s189
      %p191 = scmp.eq.s32.totalorder %s34, 0
      %p192 = por %p190, %p191
      %s193 = ssub.s32 %s28, %s35
      %p194 = scmp.eq.s32.totalorder %s193, 0
      %s196 = sadd.s32 %s195, 1
      %s197 = scalar_select %p194, %s195, %s196
      %p200 = pneg %p194
      %p201 = scmp.eq.s32.totalorder %s28, 1
      %p202 = por %p200, %p201
      %p203 = scmp.ne.s32.totalorder %s195, %s198
      %p204 = scmp.eq.s32.totalorder %s28, 0
      %p205 = por %p203, %p204
      %p206 = scmp.ne.s32.totalorder %s195, %s198
      %p207 = scmp.eq.s32.totalorder %s33, 1
      %p208 = por %p206, %p207
      %p209 = scmp.ne.s32.totalorder %s198, %s199
      %p210 = scmp.eq.s32.totalorder %s33, 0
      %p211 = por %p209, %p210
      %p212 = scmp.ne.s32.totalorder %s198, %s199
      %p213 = scmp.eq.s32.totalorder %s34, 1
      %p214 = por %p212, %p213
      %p216 = scmp.ne.s32.totalorder %s199, %s215
      %p217 = scmp.eq.s32.totalorder %s34, 0
      %p218 = por %p216, %p217
      %s219 = ssub.s32 %s28, %s35
      %p220 = scmp.eq.s32.totalorder %s219, 0
      %s222 = sadd.s32 %s221, 1
      %s223 = scalar_select %p220, %s221, %s222
      %p226 = pneg %p220
      %p227 = scmp.eq.s32.totalorder %s28, 1
      %p228 = por %p226, %p227
      %p229 = scmp.ne.s32.totalorder %s221, %s224
      %p230 = scmp.eq.s32.totalorder %s28, 0
      %p231 = por %p229, %p230
      %p232 = scmp.ne.s32.totalorder %s221, %s224
      %p233 = scmp.eq.s32.totalorder %s33, 1
      %p234 = por %p232, %p233
      %p235 = scmp.ne.s32.totalorder %s224, %s225
      %p236 = scmp.eq.s32.totalorder %s33, 0
      %p237 = por %p235, %p236
      %p238 = scmp.ne.s32.totalorder %s224, %s225
      %p239 = scmp.eq.s32.totalorder %s34, 1
      %p240 = por %p238, %p239
      %p242 = scmp.ne.s32.totalorder %s225, %s241
      %p243 = scmp.eq.s32.totalorder %s34, 0
      %p244 = por %p242, %p243
      %s245 = ssub.s32 %s28, %s35
      %p246 = scmp.eq.s32.totalorder %s245, 0
      %s248 = sadd.s32 %s247, 1
      %s249 = scalar_select %p246, %s247, %s248
      %p252 = pneg %p246
      %p253 = scmp.eq.s32.totalorder %s28, 1
      %p254 = por %p252, %p253
      %p255 = scmp.ne.s32.totalorder %s247, %s250
      %p256 = scmp.eq.s32.totalorder %s28, 0
      %p257 = por %p255, %p256
      %p258 = scmp.ne.s32.totalorder %s247, %s250
      %p259 = scmp.eq.s32.totalorder %s33, 1
      %p260 = por %p258, %p259
      %p261 = scmp.ne.s32.totalorder %s250, %s251
      %p262 = scmp.eq.s32.totalorder %s33, 0
      %p263 = por %p261, %p262
      %p264 = scmp.ne.s32.totalorder %s250, %s251
      %p265 = scmp.eq.s32.totalorder %s34, 1
      %p266 = por %p264, %p265
      %p268 = scmp.ne.s32.totalorder %s251, %s267
      %p269 = scmp.eq.s32.totalorder %s34, 0
      %p270 = por %p268, %p269
      %s271 = ssub.s32 %s28, %s35
      %p272 = scmp.eq.s32.totalorder %s271, 0
      %s274 = sadd.s32 %s273, 1
      %s275 = scalar_select %p272, %s273, %s274
      %p278 = pneg %p272
      %p279 = scmp.eq.s32.totalorder %s28, 1
      %p280 = por %p278, %p279
      %p281 = scmp.ne.s32.totalorder %s273, %s276
      %p282 = scmp.eq.s32.totalorder %s28, 0
      %p283 = por %p281, %p282
      %p284 = scmp.ne.s32.totalorder %s273, %s276
      %p285 = scmp.eq.s32.totalorder %s33, 1
      %p286 = por %p284, %p285
      %p287 = scmp.ne.s32.totalorder %s276, %s277
      %p288 = scmp.eq.s32.totalorder %s33, 0
      %p289 = por %p287, %p288
      %p290 = scmp.ne.s32.totalorder %s276, %s277
      %p291 = scmp.eq.s32.totalorder %s34, 1
      %p292 = por %p290, %p291
      %p294 = scmp.ne.s32.totalorder %s277, %s293
      %p295 = scmp.eq.s32.totalorder %s34, 0
      %p296 = por %p294, %p295
      %s297 = ssub.s32 %s28, %s35
      %p298 = scmp.eq.s32.totalorder %s297, 0
      %s300 = sadd.s32 %s299, 1
      %s301 = scalar_select %p298, %s299, %s300
      %p304 = pneg %p298
      %p305 = scmp.eq.s32.totalorder %s28, 1
      %p306 = por %p304, %p305
      %p307 = scmp.ne.s32.totalorder %s299, %s302
      %p308 = scmp.eq.s32.totalorder %s28, 0
      %p309 = por %p307, %p308
      %p310 = scmp.ne.s32.totalorder %s299, %s302
      %p311 = scmp.eq.s32.totalorder %s33, 1
      %p312 = por %p310, %p311
      %p313 = scmp.ne.s32.totalorder %s302, %s303
      %p314 = scmp.eq.s32.totalorder %s33, 0
      %p315 = por %p313, %p314
      %p316 = scmp.ne.s32.totalorder %s302, %s303
      %p317 = scmp.eq.s32.totalorder %s34, 1
      %p318 = por %p316, %p317
      %p320 = scmp.ne.s32.totalorder %s303, %s319
      %p321 = scmp.eq.s32.totalorder %s34, 0
      %p322 = por %p320, %p321
      %s323 = ssub.s32 %s28, %s35
      %p324 = scmp.eq.s32.totalorder %s323, 0
      %s326 = sadd.s32 %s325, 1
      %s327 = scalar_select %p324, %s325, %s326
      %p330 = pneg %p324
      %p331 = scmp.eq.s32.totalorder %s28, 1
      %p332 = por %p330, %p331
      %p333 = scmp.ne.s32.totalorder %s325, %s328
      %p334 = scmp.eq.s32.totalorder %s28, 0
      %p335 = por %p333, %p334
      %p336 = scmp.ne.s32.totalorder %s325, %s328
      %p337 = scmp.eq.s32.totalorder %s33, 1
      %p338 = por %p336, %p337
      %p339 = scmp.ne.s32.totalorder %s328, %s329
      %p340 = scmp.eq.s32.totalorder %s33, 0
      %p341 = por %p339, %p340
      %p342 = scmp.ne.s32.totalorder %s328, %s329
      %p343 = scmp.eq.s32.totalorder %s34, 1
      %p344 = por %p342, %p343
      %p346 = scmp.ne.s32.totalorder %s329, %s345
      %p347 = scmp.eq.s32.totalorder %s34, 0
      %p348 = por %p346, %p347
      %s350 = sadd.s32 %s349, 1
      %p353 = scmp.eq.s32.totalorder %s28, 1
      %p354 = scmp.ne.s32.totalorder %s349, %s351
      %p355 = scmp.eq.s32.totalorder %s28, 0
      %p356 = por %p354, %p355
      %p357 = scmp.ne.s32.totalorder %s349, %s351
      %p358 = scmp.eq.s32.totalorder %s33, 1
      %p359 = por %p357, %p358
      %p360 = scmp.ne.s32.totalorder %s351, %s352
      %p361 = scmp.eq.s32.totalorder %s33, 0
      %p362 = por %p360, %p361
      %p363 = scmp.ne.s32.totalorder %s351, %s352
      %p364 = scmp.eq.s32.totalorder %s34, 1
      %p365 = por %p363, %p364
      %p367 = scmp.ne.s32.totalorder %s352, %s366
      %p368 = scmp.eq.s32.totalorder %s34, 0
      %p369 = por %p367, %p368
      %p370 = scmp.le.s32.totalorder 1, %s28
      %p371 = scmp.lt.s32.totalorder %s28, 3
      %p372 = pnand %p370, %p371
      %p373 = pneg %p372
      // Predicated region
      $region9: #{fwd.3} parent=5 // pred_check
        _
      $region10: #{fwd.3} parent=5 // pred_check_branch
        %375 = sbr.rel (%p372) target = $region12
      $region11: #{fwd.3} parent=5 // pred_region
        %s376 = ssub.s32 %s28, 1
        // Predicated region
        $region13: #{fwd.3} parent=11 // pred_check
          %p377 = pneg %p49
        $region14: #{fwd.3} parent=11 // pred_check_branch
          %379 = sbr.rel (%p377) target = $region16
        $region15: #{fwd.3} parent=11 // pred_region
          _
        $region16: #{fwd.3} parent=11 // pred_fallthru
          _
        // Predicated region
        $region17: #{fwd.3} parent=11 // pred_check
          %p380 = pneg %p70
        $region18: #{fwd.3} parent=11 // pred_check_branch
          %382 = sbr.rel (%p380) target = $region20
        $region19: #{fwd.3} parent=11 // pred_region
          _
        $region20: #{fwd.3} parent=11 // pred_fallthru
          _
        // Predicated region
        $region21: #{fwd.3} parent=11 // pred_check
          %p383 = pneg %p91
        $region22: #{fwd.3} parent=11 // pred_check_branch
          %385 = sbr.rel (%p383) target = $region24
        $region23: #{fwd.3} parent=11 // pred_region
          _
        $region24: #{fwd.3} parent=11 // pred_fallthru
          _
        // Predicated region
        $region25: #{fwd.3} parent=11 // pred_check
          %p386 = pneg %p112
        $region26: #{fwd.3} parent=11 // pred_check_branch
          %388 = sbr.rel (%p386) target = $region28
        $region27: #{fwd.3} parent=11 // pred_region
          _
        $region28: #{fwd.3} parent=11 // pred_fallthru
          _
        // Predicated region
        $region29: #{fwd.3} parent=11 // pred_check
          %p389 = pneg %p133
        $region30: #{fwd.3} parent=11 // pred_check_branch
          %391 = sbr.rel (%p389) target = $region32
        $region31: #{fwd.3} parent=11 // pred_region
          _
        $region32: #{fwd.3} parent=11 // pred_fallthru
          _
      $region12: #{fwd.3} parent=5 // pred_fallthru
        _
      %p392 = scmp.lt.s32.totalorder %s28, 2
      // Predicated region
      $region33: #{fwd.3} parent=5 // pred_check
        %p393 = pneg %p392
      $region34: #{fwd.3} parent=5 // pred_check_branch
        %395 = sbr.rel (%p393) target = $region36
      $region35: #{fwd.3} parent=5 // pred_region
        // Predicated region
        $region37: #{fwd.3} parent=35 // pred_check
          %p396 = pneg %p153
        $region38: #{fwd.3} parent=35 // pred_check_branch
          %398 = sbr.rel (%p396) target = $region40
        $region39: #{fwd.3} parent=35 // pred_region
          %s399 = sand.u32 %s143, 1
          %s400 = scalar_lea.sflag [#allocation7], %s399
          %s401 = sand.u32 %s143, 1
          %s402 = smul.addr %s401, 192
          %s403 = scalar_lea.vmem [#allocation6], %s402
          %405 = vsyncadd %s400, 0
          %s406 = smul.addr %s28, 48
          %s407 = smul.addr %s406, 4
          %s408 = scalar_lea.hbm %s5, %s407
          %s409 = sshll.u32 %s408, 4
          %s410 = int_to_ptr.hbm [resolvable:$true] %s409
          %s411 = sshll.u32 %s403, 4
          %s412 = int_to_ptr.vmem [resolvable:$true] %s411
          %417 = dma.hbm_to_vmem [thread:$0]  %s410, 3072, %s412, %s400, 64, 64, 4
        $region40: #{fwd.3} parent=35 // pred_fallthru
          _
        // Predicated region
        $region41: #{fwd.3} parent=35 // pred_check
          %p418 = pneg %p179
        $region42: #{fwd.3} parent=35 // pred_check_branch
          %420 = sbr.rel (%p418) target = $region44
        $region43: #{fwd.3} parent=35 // pred_region
          %p421 = scmp.lt.s32.totalorder %s28, 1
          %s422 = scalar_select %p421, %s28, 1
          %s423 = scalar_lea.vmem %s6, %s422
        $region44: #{fwd.3} parent=35 // pred_fallthru
          _
        // Predicated region
        $region45: #{fwd.3} parent=35 // pred_check
          %p424 = pneg %p205
        $region46: #{fwd.3} parent=35 // pred_check_branch
          %426 = sbr.rel (%p424) target = $region48
        $region47: #{fwd.3} parent=35 // pred_region
          %s427 = sand.u32 %s28, 1
          %s428 = scalar_lea.sflag [#allocation9], %s427
          %s429 = sand.u32 %s195, 1
          %s430 = smul.addr %s429, 64
          %s431 = scalar_lea.vmem [#allocation8], %s430
          %433 = vsyncadd %s428, 0
          %s434 = smul.addr %s28, 16
          %s435 = smul.addr %s434, 4
          %s436 = scalar_lea.hbm %s7, %s435
          %s437 = sshll.u32 %s436, 4
          %s438 = int_to_ptr.hbm [resolvable:$true] %s437
          %s439 = sshll.u32 %s431, 4
          %s440 = int_to_ptr.vmem [resolvable:$true] %s439
          %445 = dma.hbm_to_vmem [thread:$0]  %s438, 1024, %s440, %s428, 64, 64, 4
        $region48: #{fwd.3} parent=35 // pred_fallthru
          _
        // Predicated region
        $region49: #{fwd.3} parent=35 // pred_check
          %p446 = pneg %p231
        $region50: #{fwd.3} parent=35 // pred_check_branch
          %448 = sbr.rel (%p446) target = $region52
        $region51: #{fwd.3} parent=35 // pred_region
          %p449 = scmp.lt.s32.totalorder %s28, 1
          %s450 = scalar_select %p449, %s28, 1
          %s451 = scalar_lea.vmem %s8, %s450
        $region52: #{fwd.3} parent=35 // pred_fallthru
          _
        // Predicated region
        $region53: #{fwd.3} parent=35 // pred_check
          %p452 = pneg %p257
        $region54: #{fwd.3} parent=35 // pred_check_branch
          %454 = sbr.rel (%p452) target = $region56
        $region55: #{fwd.3} parent=35 // pred_region
          %s455 = sand.u32 %s28, 1
          %s456 = scalar_lea.sflag [#allocation9], %s455
          %s457 = sand.u32 %s247, 1
          %s458 = smul.addr %s457, 128
          %s459 = scalar_lea.vmem [#allocation10], %s458
          %461 = vsyncadd %s456, 0
          %s462 = smul.addr %s28, 32
          %s463 = smul.addr %s462, 4
          %s464 = scalar_lea.hbm %s9, %s463
          %s465 = sshll.u32 %s464, 4
          %s466 = int_to_ptr.hbm [resolvable:$true] %s465
          %s467 = sshll.u32 %s459, 4
          %s468 = int_to_ptr.vmem [resolvable:$true] %s467
          %473 = dma.hbm_to_vmem [thread:$0]  %s466, 2048, %s468, %s456, 64, 64, 4
        $region56: #{fwd.3} parent=35 // pred_fallthru
          _
        // Predicated region
        $region57: #{fwd.3} parent=35 // pred_check
          %p474 = pneg %p283
        $region58: #{fwd.3} parent=35 // pred_check_branch
          %476 = sbr.rel (%p474) target = $region60
        $region59: #{fwd.3} parent=35 // pred_region
          %p477 = scmp.lt.s32.totalorder %s28, 1
          %s478 = scalar_select %p477, %s28, 1
          %s479 = scalar_lea.vmem %s10, %s478
        $region60: #{fwd.3} parent=35 // pred_fallthru
          _
        // Predicated region
        $region61: #{fwd.3} parent=35 // pred_check
          %p480 = pneg %p309
        $region62: #{fwd.3} parent=35 // pred_check_branch
          %482 = sbr.rel (%p480) target = $region64
        $region63: #{fwd.3} parent=35 // pred_region
          %s483 = sand.u32 %s299, 1
          %s484 = scalar_lea.sflag [#allocation12], %s483
          %s485 = sand.u32 %s299, 1
          %s486 = smul.addr %s485, 64
          %s487 = scalar_lea.vmem [#allocation11], %s486
          %489 = vsyncadd %s484, 0
          %s490 = smul.addr %s28, 16
          %s491 = smul.addr %s490, 4
          %s492 = scalar_lea.hbm %s11, %s491
          %s493 = sshll.u32 %s492, 4
          %s494 = int_to_ptr.hbm [resolvable:$true] %s493
          %s495 = sshll.u32 %s487, 4
          %s496 = int_to_ptr.vmem [resolvable:$true] %s495
          %501 = dma.hbm_to_vmem [thread:$0]  %s494, 1024, %s496, %s484, 64, 64, 4
        $region64: #{fwd.3} parent=35 // pred_fallthru
          _
        // Predicated region
        $region65: #{fwd.3} parent=35 // pred_check
          %p502 = pneg %p335
        $region66: #{fwd.3} parent=35 // pred_check_branch
          %504 = sbr.rel (%p502) target = $region68
        $region67: #{fwd.3} parent=35 // pred_region
          %p505 = scmp.lt.s32.totalorder %s28, 1
          %s506 = scalar_select %p505, %s28, 1
          %s507 = scalar_lea.vmem %s12, %s506
        $region68: #{fwd.3} parent=35 // pred_fallthru
          _
      $region36: #{fwd.3} parent=5 // pred_fallthru
        _
      %p508 = scmp.le.s32.totalorder 1, %s28
      %p509 = scmp.lt.s32.totalorder %s28, 3
      %p510 = pnand %p508, %p509
      %p511 = pneg %p510
      // Predicated region
      $region69: #{fwd.3} parent=5 // pred_check
        _
      $region70: #{fwd.3} parent=5 // pred_check_branch
        %513 = sbr.rel (%p510) target = $region72
      $region71: #{fwd.3} parent=5 // pred_region
        %s514 = ssub.s32 %s28, 1
        %s515 = sand.u32 %s146, 1
        %s516 = scalar_lea.sflag [#allocation7], %s515
        %s517 = sand.u32 %s146, 1
        %s518 = smul.addr %s517, 192
        %s519 = scalar_lea.vmem [#allocation6], %s518
        // Predicated region
        $region73: #{fwd.3} parent=71 // pred_check
          %p520 = pneg %p159
        $region74: #{fwd.3} parent=71 // pred_check_branch
          %522 = sbr.rel (%p520) target = $region76
        $region75: #{fwd.3} parent=71 // pred_region
          %524 = dma.done %s516, 3072
        $region76: #{fwd.3} parent=71 // pred_fallthru
          _
        %s525 = sand.u32 %s33, 1
        %s526 = scalar_lea.sflag [#allocation9], %s525
        %s527 = sand.u32 %s198, 1
        %s528 = smul.addr %s527, 64
        %s529 = scalar_lea.vmem [#allocation8], %s528
        // Predicated region
        $region77: #{fwd.3} parent=71 // pred_check
          %p530 = pneg %p211
        $region78: #{fwd.3} parent=71 // pred_check_branch
          %532 = sbr.rel (%p530) target = $region80
        $region79: #{fwd.3} parent=71 // pred_region
          %534 = dma.done %s526, 1024
        $region80: #{fwd.3} parent=71 // pred_fallthru
          _
        %s535 = sand.u32 %s33, 1
        %s536 = scalar_lea.sflag [#allocation9], %s535
        %s537 = sand.u32 %s250, 1
        %s538 = smul.addr %s537, 128
        %s539 = scalar_lea.vmem [#allocation10], %s538
        // Predicated region
        $region81: #{fwd.3} parent=71 // pred_check
          %p540 = pneg %p263
        $region82: #{fwd.3} parent=71 // pred_check_branch
          %542 = sbr.rel (%p540) target = $region84
        $region83: #{fwd.3} parent=71 // pred_region
          %544 = dma.done %s536, 2048
        $region84: #{fwd.3} parent=71 // pred_fallthru
          _
        %s545 = sand.u32 %s302, 1
        %s546 = scalar_lea.sflag [#allocation12], %s545
        %s547 = sand.u32 %s302, 1
        %s548 = smul.addr %s547, 64
        %s549 = scalar_lea.vmem [#allocation11], %s548
        // Predicated region
        $region85: #{fwd.3} parent=71 // pred_check
          %p550 = pneg %p315
        $region86: #{fwd.3} parent=71 // pred_check_branch
          %552 = sbr.rel (%p550) target = $region88
        $region87: #{fwd.3} parent=71 // pred_region
          %554 = dma.done %s546, 1024
        $region88: #{fwd.3} parent=71 // pred_fallthru
          _
        %p555 = pneg %p49
        %p556 = pneg %p46
        %p557 = pneg %p70
        %p558 = pneg %p67
        %p559 = pneg %p91
        %p560 = pneg %p88
        %p561 = pneg %p112
        %p562 = pneg %p109
        %p563 = pneg %p133
        %p564 = pneg %p130
        %s565 = sand.u32 %s146, 1
        %s566 = scalar_lea.sflag [#allocation7], %s565
        %s567 = sand.u32 %s146, 1
        %s568 = smul.addr %s567, 192
        %s569 = scalar_lea.vmem [#allocation6], %s568
        %p570 = pneg %p159
        %p571 = pneg %p156
        %p572 = scmp.lt.s32.totalorder %s33, 1
        %s573 = scalar_select %p572, %s33, 1
        %s574 = scalar_lea.vmem %s6, %s573
        %p575 = pneg %p185
        %p576 = pneg %p182
        %s577 = sand.u32 %s33, 1
        %s578 = scalar_lea.sflag [#allocation9], %s577
        %s579 = sand.u32 %s198, 1
        %s580 = smul.addr %s579, 64
        %s581 = scalar_lea.vmem [#allocation8], %s580
        %p582 = pneg %p211
        %p583 = pneg %p208
        %p584 = scmp.lt.s32.totalorder %s33, 1
        %s585 = scalar_select %p584, %s33, 1
        %s586 = scalar_lea.vmem %s8, %s585
        %p587 = pneg %p237
        %p588 = pneg %p234
        %s589 = sand.u32 %s33, 1
        %s590 = scalar_lea.sflag [#allocation9], %s589
        %s591 = sand.u32 %s250, 1
        %s592 = smul.addr %s591, 128
        %s593 = scalar_lea.vmem [#allocation10], %s592
        %p594 = pneg %p263
        %p595 = pneg %p260
        %p596 = scmp.lt.s32.totalorder %s33, 1
        %s597 = scalar_select %p596, %s33, 1
        %s598 = scalar_lea.vmem %s10, %s597
        %p599 = pneg %p289
        %p600 = pneg %p286
        %s601 = sand.u32 %s302, 1
        %s602 = scalar_lea.sflag [#allocation12], %s601
        %s603 = sand.u32 %s302, 1
        %s604 = smul.addr %s603, 64
        %s605 = scalar_lea.vmem [#allocation11], %s604
        %p606 = pneg %p315
        %p607 = pneg %p312
        %p608 = scmp.lt.s32.totalorder %s33, 1
        %s609 = scalar_select %p608, %s33, 1
        %s610 = scalar_lea.vmem %s12, %s609
        %p611 = pneg %p341
        %p612 = pneg %p338
        %p613 = pneg %p362
        %p614 = pneg %p359
        %p615 = scmp.lt.s32.totalorder %s33, 1
        %s616 = scalar_select %p615, %s33, 1
        %s617 = scalar_lea.vmem %s6, %s616
        %p618 = scmp.lt.s32.totalorder %s33, 1
        %s619 = scalar_select %p618, %s33, 1
        %s620 = scalar_lea.vmem %s8, %s619
        %p621 = scmp.lt.s32.totalorder %s33, 1
        %s622 = scalar_select %p621, %s33, 1
        %s623 = scalar_lea.vmem %s10, %s622
        %p624 = scmp.lt.s32.totalorder %s33, 1
        %s625 = scalar_select %p624, %s33, 1
        %s626 = scalar_lea.vmem %s12, %s625
        %p628 = scmp.eq.s32.totalorder %s33, 0
        // Predicated region
        $region89: #{fwd.3} parent=71 // pred_check
          %p629 = pneg %p628
        $region90: #{fwd.3} parent=71 // pred_check_branch
          %631 = sbr.rel (%p629) target = $region92
        $region91: #{fwd.3} parent=71 // pred_region
          %v632 = vld [vmem:[%s0] sm:$0xff]
          %v633 = vld [vmem:[%s0 + $0x8] sm:$0xff]
          %v634 = vld [vmem:[%s0 + $0x10] sm:$0xff]
          %v635 = vld [vmem:[%s0 + $0x18] sm:$0xf]
          %636 = vst [vmem:[%s13] sm:$0xff] %v632
          %637 = vst [vmem:[%s13 + $0x8] sm:$0xff] %v633
          %638 = vst [vmem:[%s13 + $0x10] sm:$0xff] %v634
          %639 = vst [vmem:[%s13 + $0x18] sm:$0xf] %v635
          %v640 = vlaneseq
          %v641 = vand.u32 %v640, 127
          %v642 = vld [vmem:[%s2] sm:$0xff]
          %v643 = vld [vmem:[%s2 + $0x8] sm:$0xff]
          %v644 = vld [vmem:[%s2 + $0x10] sm:$0xff]
          %v645 = vld [vmem:[%s2 + $0x18] sm:$0xff]
          %v646 = vld [vmem:[%s2 + $0x20] sm:$0xff]
          %v647 = vld [vmem:[%s2 + $0x28] sm:$0xff]
          %v648 = vld [vmem:[%s2 + $0x30] sm:$0xff]
          %649 = vset.pattern.permute.xlu0 0
          %650 = vperm.xlu0 %649, %v642
          %v651 = vpop.permute.xlu0 %650
          %652 = vset.pattern.permute.xlu0 0
          %653 = vperm.xlu0 %652, %v643
          %v654 = vpop.permute.xlu0 %653
          %655 = vset.pattern.permute.xlu0 0
          %656 = vperm.xlu0 %655, %v644
          %v657 = vpop.permute.xlu0 %656
          %658 = vset.pattern.permute.xlu0 0
          %659 = vperm.xlu0 %658, %v645
          %v660 = vpop.permute.xlu0 %659
          %661 = vset.pattern.permute.xlu0 0
          %662 = vperm.xlu0 %661, %v646
          %v663 = vpop.permute.xlu0 %662
          %664 = vset.pattern.permute.xlu0 0
          %665 = vperm.xlu0 %664, %v647
          %v666 = vpop.permute.xlu0 %665
          %667 = vset.pattern.permute.xlu0 0
          %668 = vperm.xlu0 %667, %v648
          %v669 = vpop.permute.xlu0 %668
          %vm670 = vcmp.eq.s32.totalorder %v641, %v651
          %vm671 = vcmp.eq.s32.totalorder %v641, %v654
          %vm672 = vcmp.eq.s32.totalorder %v641, %v657
          %vm673 = vcmp.eq.s32.totalorder %v641, %v660
          %vm674 = vcmp.eq.s32.totalorder %v641, %v663
          %vm675 = vcmp.eq.s32.totalorder %v641, %v666
          %vm676 = vcmp.eq.s32.totalorder %v641, %v669
          %v677 = vsel %vm670, 1.0, 0.0
          %v678 = vsel %vm671, 1.0, 0.0
          %v679 = vsel %vm672, 1.0, 0.0
          %v680 = vsel %vm673, 1.0, 0.0
          %v681 = vsel %vm674, 1.0, 0.0
          %v682 = vsel %vm675, 1.0, 0.0
          %v683 = vsel %vm676, 1.0, 0.0
          %v684 = vpack.c.bf16 %v677, %v677
          %v685 = vpack.c.bf16 %v678, %v678
          %v686 = vpack.c.bf16 %v679, %v679
          %v687 = vpack.c.bf16 %v680, %v680
          %v688 = vpack.c.bf16 %v681, %v681
          %v689 = vpack.c.bf16 %v682, %v682
          %v690 = vpack.c.bf16 %v683, %v683
          %vm691 = vcmask 224256
          %692 = vst.msk [vmem:[#allocation2] sm:$0xf] %vm691, %v684
          %693 = vst.msk [vmem:[#allocation2 + $0x4] sm:$0xf] %vm691, %v685
          %694 = vst.msk [vmem:[#allocation2 + $0x8] sm:$0xf] %vm691, %v686
          %695 = vst.msk [vmem:[#allocation2 + $0xc] sm:$0xf] %vm691, %v687
          %696 = vst.msk [vmem:[#allocation2 + $0x10] sm:$0xf] %vm691, %v688
          %697 = vst.msk [vmem:[#allocation2 + $0x14] sm:$0xf] %vm691, %v689
          %698 = vst.msk [vmem:[#allocation2 + $0x18] sm:$0xf] %vm691, %v690
          %v699 = vld [vmem:[%s3] sm:$0xff]
          %v700 = vld [vmem:[%s3 + $0x8] sm:$0xff]
          %v701 = vld [vmem:[%s3 + $0x10] sm:$0xff]
          %v702 = vld [vmem:[%s3 + $0x18] sm:$0xff]
          %v703 = vld [vmem:[%s3 + $0x20] sm:$0xff]
          %v704 = vld [vmem:[%s3 + $0x28] sm:$0xff]
          %v705 = vld [vmem:[%s3 + $0x30] sm:$0xff]
          %706 = vset.pattern.permute.xlu0 0
          %707 = vperm.xlu0 %706, %v699
          %v708 = vpop.permute.xlu0 %707
          %709 = vset.pattern.permute.xlu0 0
          %710 = vperm.xlu0 %709, %v700
          %v711 = vpop.permute.xlu0 %710
          %712 = vset.pattern.permute.xlu0 0
          %713 = vperm.xlu0 %712, %v701
          %v714 = vpop.permute.xlu0 %713
          %715 = vset.pattern.permute.xlu0 0
          %716 = vperm.xlu0 %715, %v702
          %v717 = vpop.permute.xlu0 %716
          %718 = vset.pattern.permute.xlu0 0
          %719 = vperm.xlu0 %718, %v703
          %v720 = vpop.permute.xlu0 %719
          %721 = vset.pattern.permute.xlu0 0
          %722 = vperm.xlu0 %721, %v704
          %v723 = vpop.permute.xlu0 %722
          %724 = vset.pattern.permute.xlu0 0
          %725 = vperm.xlu0 %724, %v705
          %v726 = vpop.permute.xlu0 %725
          %vm727 = vcmp.eq.s32.totalorder %v641, %v708
          %vm728 = vcmp.eq.s32.totalorder %v641, %v711
          %vm729 = vcmp.eq.s32.totalorder %v641, %v714
          %vm730 = vcmp.eq.s32.totalorder %v641, %v717
          %vm731 = vcmp.eq.s32.totalorder %v641, %v720
          %vm732 = vcmp.eq.s32.totalorder %v641, %v723
          %vm733 = vcmp.eq.s32.totalorder %v641, %v726
          %v734 = vsel %vm727, 1.0, 0.0
          %v735 = vsel %vm728, 1.0, 0.0
          %v736 = vsel %vm729, 1.0, 0.0
          %v737 = vsel %vm730, 1.0, 0.0
          %v738 = vsel %vm731, 1.0, 0.0
          %v739 = vsel %vm732, 1.0, 0.0
          %v740 = vsel %vm733, 1.0, 0.0
          %v741 = vpack.c.bf16 %v734, %v734
          %v742 = vpack.c.bf16 %v735, %v735
          %v743 = vpack.c.bf16 %v736, %v736
          %v744 = vpack.c.bf16 %v737, %v737
          %v745 = vpack.c.bf16 %v738, %v738
          %v746 = vpack.c.bf16 %v739, %v739
          %v747 = vpack.c.bf16 %v740, %v740
          %748 = vst.msk [vmem:[#allocation3] sm:$0xf] %vm691, %v741
          %749 = vst.msk [vmem:[#allocation3 + $0x4] sm:$0xf] %vm691, %v742
          %750 = vst.msk [vmem:[#allocation3 + $0x8] sm:$0xf] %vm691, %v743
          %751 = vst.msk [vmem:[#allocation3 + $0xc] sm:$0xf] %vm691, %v744
          %752 = vst.msk [vmem:[#allocation3 + $0x10] sm:$0xf] %vm691, %v745
          %753 = vst.msk [vmem:[#allocation3 + $0x14] sm:$0xf] %vm691, %v746
          %754 = vst.msk [vmem:[#allocation3 + $0x18] sm:$0xf] %vm691, %v747
          %v755 = vlaneseq
          %v756 = vshrl.u32 %v755, 7
          %v757 = vadd.s32 %v756, 8
          %v758 = vadd.s32 %v756, 16
          %v759 = vadd.s32 %v756, 24
          %v760 = vld [vmem:[%s4] sm:$0x1]
          %v761 = vperm.slane %v760, 0
          %vm762 = vcmp.eq.s32.totalorder %v756, %v761
          %vm763 = vcmp.eq.s32.totalorder %v757, %v761
          %vm764 = vcmp.eq.s32.totalorder %v758, %v761
          %vm765 = vcmp.eq.s32.totalorder %v759, %v761
          %v766 = vsel %vm762, 1.0, 0.0
          %v767 = vsel %vm763, 1.0, 0.0
          %v768 = vsel %vm764, 1.0, 0.0
          %v769 = vsel %vm765, 1.0, 0.0
          %v770 = vpack.c.bf16 %v766, %v766
          %v771 = vpack.c.bf16 %v767, %v767
          %v772 = vpack.c.bf16 %v768, %v768
          %v773 = vpack.c.bf16 %v769, %v769
          %vm774 = vcmask 453632
          %775 = vst.msk [vmem:[#allocation4] sm:$0xf] %vm774, %v770
          %776 = vst.msk [vmem:[#allocation4 + $0x4] sm:$0xf] %vm774, %v771
          %777 = vst.msk [vmem:[#allocation4 + $0x8] sm:$0xf] %vm774, %v772
          %vm778 = vcmask 451584
          %779 = vst.msk [vmem:[#allocation4 + $0xc] sm:$0x3] %vm778, %v773
          %v780 = vld [vmem:[%s1] sm:$0xff]
          %v781 = vld [vmem:[%s1 + $0x8] sm:$0xff]
          %v782 = vld [vmem:[%s1 + $0x10] sm:$0xff]
          %v783 = vld [vmem:[%s1 + $0x18] sm:$0xf]
          %v784 = vpack.c.bf16 %v781, %v780
          %v785 = vpack.c.bf16 %v783, %v782
          %v786 = vld [vmem:[#allocation3] sm:$0xf]
          %v787 = vld [vmem:[#allocation3 + $0x4] sm:$0xf]
          %v788 = vld [vmem:[#allocation3 + $0x8] sm:$0xf]
          %v789 = vld [vmem:[#allocation3 + $0xc] sm:$0xf]
          %v790 = vld [vmem:[#allocation3 + $0x10] sm:$0xf]
          %v791 = vld [vmem:[#allocation3 + $0x14] sm:$0xf]
          %v792 = vld [vmem:[#allocation3 + $0x18] sm:$0xf]
          %v800 = vunpack.c.l.b16 %v786
          %v801 = vunpack.c.l.b16 %v787
          %v802 = vunpack.c.l.b16 %v788
          %v803 = vunpack.c.l.b16 %v789
          %v804 = vunpack.c.l.b16 %v790
          %v805 = vunpack.c.l.b16 %v791
          %v806 = vunpack.c.l.b16 %v792
          %v807 = vpack.c.b16 %v801, %v800
          %v808 = vpack.c.b16 %v803, %v802
          %v809 = vpack.c.b16 %v805, %v804
          %v810 = vpack.c.b16 %v806, %v806
          %vm811 = vcmask 228352
          %v813 = vsel %vm811, %v807, 0
          %v816 = vsel %vm811, %v808, 0
          %v819 = vsel %vm811, %v809, 0
          %v822 = vsel %vm811, %v810, 0
          %vm824 = vcmask 1045504
          %v826 = vsel %vm824, %v785, 0
          %828 = vmatpush.bf16.msra.mxu0 0
          %829 = vmatpush.bf16.msra.mxu0 0
          %830 = vmatpush.bf16.msra.mxu0 0
          %831 = vmatpush.bf16.msra.mxu0 0
          %832 = vmatpush.bf16.msra.mxu0 0
          %833 = vmatpush.bf16.msra.mxu0 0
          %834 = vmatpush.bf16.msra.mxu0 %v826
          %835 = vmatpush.bf16.msra.mxu0 %v784
          %836 = vmatmul.bf16.gmra.mxu0 %v813
          %v837 = vpop.f32.mrf.mxu0
          %v838 = vadd.f32 0.0, %v837
          %v839 = vpop.f32.mrf.mxu0
          %v840 = vadd.f32 0.0, %v839
          %841 = vmatmul.bf16.gmra.mxu0 %v816
          %v842 = vpop.f32.mrf.mxu0
          %v843 = vadd.f32 0.0, %v842
          %v844 = vpop.f32.mrf.mxu0
          %v845 = vadd.f32 0.0, %v844
          %846 = vmatmul.bf16.gmra.mxu0 %v819
          %v847 = vpop.f32.mrf.mxu0
          %v848 = vadd.f32 0.0, %v847
          %v849 = vpop.f32.mrf.mxu0
          %v850 = vadd.f32 0.0, %v849
          %851 = vmatmul.bf16.gmra.mxu0 %v822
          %v852 = vpop.f32.mrf.mxu0
          %v853 = vadd.f32 0.0, %v852
          %v854 = vpop.f32.mrf.mxu0
          %855 = vdwg.mxu0
          %v856 = vld [vmem:[#allocation2] sm:$0xf]
          %v857 = vld [vmem:[#allocation2 + $0x4] sm:$0xf]
          %v858 = vld [vmem:[#allocation2 + $0x8] sm:$0xf]
          %v859 = vld [vmem:[#allocation2 + $0xc] sm:$0xf]
          %v860 = vld [vmem:[#allocation2 + $0x10] sm:$0xf]
          %v861 = vld [vmem:[#allocation2 + $0x14] sm:$0xf]
          %v862 = vld [vmem:[#allocation2 + $0x18] sm:$0xf]
          %v870 = vunpack.c.l.b16 %v856
          %v871 = vunpack.c.l.b16 %v857
          %v872 = vunpack.c.l.b16 %v858
          %v873 = vunpack.c.l.b16 %v859
          %v874 = vunpack.c.l.b16 %v860
          %v875 = vunpack.c.l.b16 %v861
          %v876 = vunpack.c.l.b16 %v862
          %v877 = vpack.c.b16 %v871, %v870
          %v878 = vpack.c.b16 %v873, %v872
          %v879 = vpack.c.b16 %v875, %v874
          %v880 = vpack.c.b16 %v876, %v876
          %v882 = vsel %vm811, %v877, 0
          %v885 = vsel %vm811, %v878, 0
          %v888 = vsel %vm811, %v879, 0
          %v891 = vsel %vm811, %v880, 0
          %893 = vmatpush.bf16.msra.mxu0 0
          %894 = vmatpush.bf16.msra.mxu0 0
          %895 = vmatpush.bf16.msra.mxu0 0
          %896 = vmatpush.bf16.msra.mxu0 0
          %897 = vmatpush.bf16.msra.mxu0 0
          %898 = vmatpush.bf16.msra.mxu0 0
          %899 = vmatpush.bf16.msra.mxu0 %v826
          %900 = vmatpush.bf16.msra.mxu0 %v784
          %901 = vmatmul.bf16.gmra.mxu0 %v882
          %v902 = vpop.f32.mrf.mxu0
          %v903 = vadd.f32 0.0, %v902
          %v904 = vpop.f32.mrf.mxu0
          %v905 = vadd.f32 0.0, %v904
          %906 = vmatmul.bf16.gmra.mxu0 %v885
          %v907 = vpop.f32.mrf.mxu0
          %v908 = vadd.f32 0.0, %v907
          %v909 = vpop.f32.mrf.mxu0
          %v910 = vadd.f32 0.0, %v909
          %911 = vmatmul.bf16.gmra.mxu0 %v888
          %v912 = vpop.f32.mrf.mxu0
          %v913 = vadd.f32 0.0, %v912
          %v914 = vpop.f32.mrf.mxu0
          %v915 = vadd.f32 0.0, %v914
          %916 = vmatmul.bf16.gmra.mxu0 %v891
          %v917 = vpop.f32.mrf.mxu0
          %v918 = vadd.f32 0.0, %v917
          %v919 = vpop.f32.mrf.mxu0
          %920 = vdwg.mxu0
          %v921 = vsub.f32 %v838, %v903
          %v922 = vsub.f32 %v840, %v905
          %v923 = vsub.f32 %v843, %v908
          %v924 = vsub.f32 %v845, %v910
          %v925 = vsub.f32 %v848, %v913
          %v926 = vsub.f32 %v850, %v915
          %v927 = vsub.f32 %v853, %v918
          %v928 = vpack.c.bf16 %v921, %v921
          %v929 = vpack.c.bf16 %v922, %v922
          %v930 = vpack.c.bf16 %v923, %v923
          %v931 = vpack.c.bf16 %v924, %v924
          %v932 = vpack.c.bf16 %v925, %v925
          %v933 = vpack.c.bf16 %v926, %v926
          %v934 = vpack.c.bf16 %v927, %v927
          %935 = vst [vmem:[#allocation5] sm:$0xf] %v928
          %936 = vst [vmem:[#allocation5 + $0x4] sm:$0xf] %v929
          %937 = vst [vmem:[#allocation5 + $0x8] sm:$0xf] %v930
          %938 = vst [vmem:[#allocation5 + $0xc] sm:$0xf] %v931
          %939 = vst [vmem:[#allocation5 + $0x10] sm:$0xf] %v932
          %940 = vst [vmem:[#allocation5 + $0x14] sm:$0xf] %v933
          %941 = vst [vmem:[#allocation5 + $0x18] sm:$0xf] %v934
        $region92: #{fwd.3} parent=71 // pred_fallthru
          _
        %v942 = vld [vmem:[%s13] sm:$0xff]
        %v943 = vld [vmem:[%s13 + $0x8] sm:$0xff]
        %v944 = vld [vmem:[%s13 + $0x10] sm:$0xff]
        %v945 = vld [vmem:[%s13 + $0x18] sm:$0xf]
        %v946 = vpack.c.bf16 %v942, %v942
        %v947 = vpack.c.bf16 %v943, %v943
        %v948 = vpack.c.bf16 %v944, %v944
        %v949 = vpack.c.bf16 %v945, %v945
        %v950 = vld [vmem:[#allocation2] sm:$0xf]
        %v951 = vld [vmem:[#allocation2 + $0x4] sm:$0xf]
        %v952 = vld [vmem:[#allocation2 + $0x8] sm:$0xf]
        %v953 = vld [vmem:[#allocation2 + $0xc] sm:$0xf]
        %v954 = vld [vmem:[#allocation2 + $0x10] sm:$0xf]
        %v955 = vld [vmem:[#allocation2 + $0x14] sm:$0xf]
        %v956 = vld [vmem:[#allocation2 + $0x18] sm:$0xf]
        %v964 = vunpack.c.l.b16 %v950
        %v965 = vunpack.c.l.b16 %v951
        %v966 = vunpack.c.l.b16 %v952
        %v967 = vunpack.c.l.b16 %v953
        %v968 = vunpack.c.l.b16 %v954
        %v969 = vunpack.c.l.b16 %v955
        %v970 = vunpack.c.l.b16 %v956
        %v971 = vpack.c.b16 %v965, %v964
        %v972 = vpack.c.b16 %v967, %v966
        %v973 = vpack.c.b16 %v969, %v968
        %v974 = vpack.c.b16 %v970, %v970
        %v979 = vunpack.c.l.b16 %v946
        %v980 = vunpack.c.l.b16 %v947
        %v981 = vunpack.c.l.b16 %v948
        %v982 = vunpack.c.l.b16 %v949
        %v983 = vpack.c.b16 %v980, %v979
        %v984 = vpack.c.b16 %v982, %v981
        %vm986 = vcmask 228352
        %v988 = vsel %vm986, %v971, 0
        %v991 = vsel %vm986, %v972, 0
        %v994 = vsel %vm986, %v973, 0
        %v997 = vsel %vm986, %v974, 0
        %vm999 = vcmask 1045504
        %v1001 = vsel %vm999, %v984, 0
        %1003 = vmatpush.bf16.msra.mxu0 0
        %1004 = vmatpush.bf16.msra.mxu0 0
        %1005 = vmatpush.bf16.msra.mxu0 0
        %1006 = vmatpush.bf16.msra.mxu0 0
        %1007 = vmatpush.bf16.msra.mxu0 0
        %1008 = vmatpush.bf16.msra.mxu0 0
        %1009 = vmatpush.bf16.msra.mxu0 %v1001
        %1010 = vmatpush.bf16.msra.mxu0 %v983
        %1011 = vmatmul.bf16.gmra.mxu0 %v988
        %v1012 = vpop.f32.mrf.mxu0
        %v1013 = vadd.f32 0.0, %v1012
        %v1014 = vpop.f32.mrf.mxu0
        %v1015 = vadd.f32 0.0, %v1014
        %1016 = vmatmul.bf16.gmra.mxu0 %v991
        %v1017 = vpop.f32.mrf.mxu0
        %v1018 = vadd.f32 0.0, %v1017
        %v1019 = vpop.f32.mrf.mxu0
        %v1020 = vadd.f32 0.0, %v1019
        %1021 = vmatmul.bf16.gmra.mxu0 %v994
        %v1022 = vpop.f32.mrf.mxu0
        %v1023 = vadd.f32 0.0, %v1022
        %v1024 = vpop.f32.mrf.mxu0
        %v1025 = vadd.f32 0.0, %v1024
        %1026 = vmatmul.bf16.gmra.mxu0 %v997
        %v1027 = vpop.f32.mrf.mxu0
        %v1028 = vadd.f32 0.0, %v1027
        %v1029 = vpop.f32.mrf.mxu0
        %1030 = vdwg.mxu0
        %v1031 = vld [vmem:[#allocation3] sm:$0xf]
        %v1032 = vld [vmem:[#allocation3 + $0x4] sm:$0xf]
        %v1033 = vld [vmem:[#allocation3 + $0x8] sm:$0xf]
        %v1034 = vld [vmem:[#allocation3 + $0xc] sm:$0xf]
        %v1035 = vld [vmem:[#allocation3 + $0x10] sm:$0xf]
        %v1036 = vld [vmem:[#allocation3 + $0x14] sm:$0xf]
        %v1037 = vld [vmem:[#allocation3 + $0x18] sm:$0xf]
        %v1045 = vunpack.c.l.b16 %v1031
        %v1046 = vunpack.c.l.b16 %v1032
        %v1047 = vunpack.c.l.b16 %v1033
        %v1048 = vunpack.c.l.b16 %v1034
        %v1049 = vunpack.c.l.b16 %v1035
        %v1050 = vunpack.c.l.b16 %v1036
        %v1051 = vunpack.c.l.b16 %v1037
        %v1052 = vpack.c.b16 %v1046, %v1045
        %v1053 = vpack.c.b16 %v1048, %v1047
        %v1054 = vpack.c.b16 %v1050, %v1049
        %v1055 = vpack.c.b16 %v1051, %v1051
        %v1057 = vsel %vm986, %v1052, 0
        %v1060 = vsel %vm986, %v1053, 0
        %v1063 = vsel %vm986, %v1054, 0
        %v1066 = vsel %vm986, %v1055, 0
        %1068 = vmatpush.bf16.msra.mxu0 0
        %1069 = vmatpush.bf16.msra.mxu0 0
        %1070 = vmatpush.bf16.msra.mxu0 0
        %1071 = vmatpush.bf16.msra.mxu0 0
        %1072 = vmatpush.bf16.msra.mxu0 0
        %1073 = vmatpush.bf16.msra.mxu0 0
        %1074 = vmatpush.bf16.msra.mxu0 %v1001
        %1075 = vmatpush.bf16.msra.mxu0 %v983
        %1076 = vmatmul.bf16.gmra.mxu0 %v1057
        %v1077 = vpop.f32.mrf.mxu0
        %v1078 = vadd.f32 0.0, %v1077
        %v1079 = vpop.f32.mrf.mxu0
        %v1080 = vadd.f32 0.0, %v1079
        %1081 = vmatmul.bf16.gmra.mxu0 %v1060
        %v1082 = vpop.f32.mrf.mxu0
        %v1083 = vadd.f32 0.0, %v1082
        %v1084 = vpop.f32.mrf.mxu0
        %v1085 = vadd.f32 0.0, %v1084
        %1086 = vmatmul.bf16.gmra.mxu0 %v1063
        %v1087 = vpop.f32.mrf.mxu0
        %v1088 = vadd.f32 0.0, %v1087
        %v1089 = vpop.f32.mrf.mxu0
        %v1090 = vadd.f32 0.0, %v1089
        %1091 = vmatmul.bf16.gmra.mxu0 %v1066
        %v1092 = vpop.f32.mrf.mxu0
        %v1093 = vadd.f32 0.0, %v1092
        %v1094 = vpop.f32.mrf.mxu0
        %1095 = vdwg.mxu0
        %v1096 = vpack.c.bf16 %v1013, %v1013
        %v1097 = vpack.c.bf16 %v1015, %v1015
        %v1098 = vpack.c.bf16 %v1018, %v1018
        %v1099 = vpack.c.bf16 %v1020, %v1020
        %v1100 = vpack.c.bf16 %v1023, %v1023
        %v1101 = vpack.c.bf16 %v1025, %v1025
        %v1102 = vpack.c.bf16 %v1028, %v1028
        %v1103 = vpack.c.bf16 %v1078, %v1078
        %v1104 = vpack.c.bf16 %v1080, %v1080
        %v1105 = vpack.c.bf16 %v1083, %v1083
        %v1106 = vpack.c.bf16 %v1085, %v1085
        %v1107 = vpack.c.bf16 %v1088, %v1088
        %v1108 = vpack.c.bf16 %v1090, %v1090
        %v1109 = vpack.c.bf16 %v1093, %v1093
        %v1110 = vld [vmem:[#allocation5] sm:$0xf]
        %v1111 = vld [vmem:[#allocation5 + $0x4] sm:$0xf]
        %v1112 = vld [vmem:[#allocation5 + $0x8] sm:$0xf]
        %v1113 = vld [vmem:[#allocation5 + $0xc] sm:$0xf]
        %v1114 = vld [vmem:[#allocation5 + $0x10] sm:$0xf]
        %v1115 = vld [vmem:[#allocation5 + $0x14] sm:$0xf]
        %v1116 = vld [vmem:[#allocation5 + $0x18] sm:$0xf]
        %v1124 = vunpack.c.l.b16 %v1096
        %v1125 = vunpack.c.l.b16 %v1097
        %v1126 = vunpack.c.l.b16 %v1098
        %v1127 = vunpack.c.l.b16 %v1099
        %v1128 = vunpack.c.l.b16 %v1100
        %v1129 = vunpack.c.l.b16 %v1101
        %v1130 = vunpack.c.l.b16 %v1102
        %v1131 = vpack.c.b16 %v1125, %v1124
        %v1132 = vpack.c.b16 %v1127, %v1126
        %v1133 = vpack.c.b16 %v1129, %v1128
        %v1134 = vpack.c.b16 %v1130, %v1130
        %v1146 = vunpack.c.l.b16 %v1103
        %v1147 = vunpack.c.l.b16 %v1104
        %v1148 = vunpack.c.l.b16 %v1105
        %v1149 = vunpack.c.l.b16 %v1106
        %v1150 = vunpack.c.l.b16 %v1107
        %v1151 = vunpack.c.l.b16 %v1108
        %v1152 = vunpack.c.l.b16 %v1109
        %v1153 = vpack.c.b16 %v1147, %v1146
        %v1154 = vpack.c.b16 %v1149, %v1148
        %v1155 = vpack.c.b16 %v1151, %v1150
        %v1156 = vpack.c.b16 %v1152, %v1152
        %v1168 = vunpack.c.l.b16 %v1110
        %v1169 = vunpack.c.l.b16 %v1111
        %v1170 = vunpack.c.l.b16 %v1112
        %v1171 = vunpack.c.l.b16 %v1113
        %v1172 = vunpack.c.l.b16 %v1114
        %v1173 = vunpack.c.l.b16 %v1115
        %v1174 = vunpack.c.l.b16 %v1116
        %v1175 = vpack.c.b16 %v1169, %v1168
        %v1176 = vpack.c.b16 %v1171, %v1170
        %v1177 = vpack.c.b16 %v1173, %v1172
        %v1178 = vpack.c.b16 %v1174, %v1174
        %v1183 = vld [vmem:[%s519] sm:$0xf]
        %v1184 = vld [vmem:[%s519 + $0x4] sm:$0xf]
        %v1185 = vld [vmem:[%s519 + $0x8] sm:$0xf]
        %v1186 = vld [vmem:[%s519 + $0xc] sm:$0xf]
        %v1187 = vld [vmem:[%s519 + $0x10] sm:$0xf]
        %v1188 = vld [vmem:[%s519 + $0x14] sm:$0xf]
        %v1189 = vld [vmem:[%s519 + $0x18] sm:$0xf]
        %v1190 = vld [vmem:[%s519 + $0x1c] sm:$0xf]
        %v1191 = vld [vmem:[%s519 + $0x20] sm:$0xf]
        %v1192 = vld [vmem:[%s519 + $0x24] sm:$0xf]
        %v1193 = vld [vmem:[%s519 + $0x28] sm:$0xf]
        %v1194 = vld [vmem:[%s519 + $0x2c] sm:$0xf]
        %v1195 = vld [vmem:[%s519 + $0x30] sm:$0xf]
        %v1196 = vld [vmem:[%s519 + $0x34] sm:$0xf]
        %v1197 = vld [vmem:[%s519 + $0x38] sm:$0xf]
        %v1198 = vld [vmem:[%s519 + $0x3c] sm:$0xf]
        %v1199 = vld [vmem:[%s519 + $0x40] sm:$0xf]
        %v1200 = vld [vmem:[%s519 + $0x44] sm:$0xf]
        %v1201 = vld [vmem:[%s519 + $0x48] sm:$0xf]
        %v1202 = vld [vmem:[%s519 + $0x4c] sm:$0xf]
        %v1203 = vld [vmem:[%s519 + $0x50] sm:$0xf]
        %v1204 = vld [vmem:[%s519 + $0x54] sm:$0xf]
        %v1205 = vld [vmem:[%s519 + $0x58] sm:$0xf]
        %v1206 = vld [vmem:[%s519 + $0x5c] sm:$0xf]
        %v1207 = vld [vmem:[%s519 + $0x60] sm:$0xf]
        %v1208 = vld [vmem:[%s519 + $0x64] sm:$0xf]
        %v1209 = vld [vmem:[%s519 + $0x68] sm:$0xf]
        %v1210 = vld [vmem:[%s519 + $0x6c] sm:$0xf]
        %v1211 = vld [vmem:[%s519 + $0x70] sm:$0xf]
        %v1212 = vld [vmem:[%s519 + $0x74] sm:$0xf]
        %v1213 = vld [vmem:[%s519 + $0x78] sm:$0xf]
        %v1214 = vld [vmem:[%s519 + $0x7c] sm:$0xf]
        %v1215 = vld [vmem:[%s519 + $0x80] sm:$0xf]
        %v1216 = vld [vmem:[%s519 + $0x84] sm:$0xf]
        %v1217 = vld [vmem:[%s519 + $0x88] sm:$0xf]
        %v1218 = vld [vmem:[%s519 + $0x8c] sm:$0xf]
        %v1219 = vld [vmem:[%s519 + $0x90] sm:$0xf]
        %v1220 = vld [vmem:[%s519 + $0x94] sm:$0xf]
        %v1221 = vld [vmem:[%s519 + $0x98] sm:$0xf]
        %v1222 = vld [vmem:[%s519 + $0x9c] sm:$0xf]
        %v1223 = vld [vmem:[%s519 + $0xa0] sm:$0xf]
        %v1224 = vld [vmem:[%s519 + $0xa4] sm:$0xf]
        %v1225 = vld [vmem:[%s519 + $0xa8] sm:$0xf]
        %v1226 = vld [vmem:[%s519 + $0xac] sm:$0xf]
        %v1227 = vld [vmem:[%s519 + $0xb0] sm:$0xf]
        %v1228 = vld [vmem:[%s519 + $0xb4] sm:$0xf]
        %v1229 = vld [vmem:[%s519 + $0xb8] sm:$0xf]
        %v1230 = vld [vmem:[%s519 + $0xbc] sm:$0xf]
        %v1231 = vld [vmem:[%s617] sm:$0x1]
        %v1233 = vperm.slane %v1231, 0
        %v1283 = vunpack.c.l.b16 %v1183
        %v1284 = vunpack.c.l.b16 %v1184
        %v1285 = vunpack.c.l.b16 %v1185
        %v1286 = vunpack.c.l.b16 %v1186
        %v1287 = vunpack.c.l.b16 %v1187
        %v1288 = vunpack.c.l.b16 %v1188
        %v1289 = vunpack.c.l.b16 %v1189
        %v1290 = vunpack.c.l.b16 %v1190
        %v1291 = vunpack.c.l.b16 %v1191
        %v1292 = vunpack.c.l.b16 %v1192
        %v1293 = vunpack.c.l.b16 %v1193
        %v1294 = vunpack.c.l.b16 %v1194
        %v1295 = vunpack.c.l.b16 %v1195
        %v1296 = vunpack.c.l.b16 %v1196
        %v1297 = vunpack.c.l.b16 %v1197
        %v1298 = vunpack.c.l.b16 %v1198
        %v1299 = vunpack.c.l.b16 %v1199
        %v1300 = vunpack.c.l.b16 %v1200
        %v1301 = vunpack.c.l.b16 %v1201
        %v1302 = vunpack.c.l.b16 %v1202
        %v1303 = vunpack.c.l.b16 %v1203
        %v1304 = vunpack.c.l.b16 %v1204
        %v1305 = vunpack.c.l.b16 %v1205
        %v1306 = vunpack.c.l.b16 %v1206
        %v1307 = vunpack.c.l.b16 %v1207
        %v1308 = vunpack.c.l.b16 %v1208
        %v1309 = vunpack.c.l.b16 %v1209
        %v1310 = vunpack.c.l.b16 %v1210
        %v1311 = vunpack.c.l.b16 %v1211
        %v1312 = vunpack.c.l.b16 %v1212
        %v1313 = vunpack.c.l.b16 %v1213
        %v1314 = vunpack.c.l.b16 %v1214
        %v1315 = vunpack.c.l.b16 %v1215
        %v1316 = vunpack.c.l.b16 %v1216
        %v1317 = vunpack.c.l.b16 %v1217
        %v1318 = vunpack.c.l.b16 %v1218
        %v1319 = vunpack.c.l.b16 %v1219
        %v1320 = vunpack.c.l.b16 %v1220
        %v1321 = vunpack.c.l.b16 %v1221
        %v1322 = vunpack.c.l.b16 %v1222
        %v1323 = vunpack.c.l.b16 %v1223
        %v1324 = vunpack.c.l.b16 %v1224
        %v1325 = vunpack.c.l.b16 %v1225
        %v1326 = vunpack.c.l.b16 %v1226
        %v1327 = vunpack.c.l.b16 %v1227
        %v1328 = vunpack.c.l.b16 %v1228
        %v1329 = vunpack.c.l.b16 %v1229
        %v1330 = vunpack.c.l.b16 %v1230
        %v1331 = vpack.c.b16 %v1284, %v1283
        %v1332 = vpack.c.b16 %v1286, %v1285
        %v1333 = vpack.c.b16 %v1288, %v1287
        %v1334 = vpack.c.b16 %v1290, %v1289
        %v1335 = vpack.c.b16 %v1292, %v1291
        %v1336 = vpack.c.b16 %v1294, %v1293
        %v1337 = vpack.c.b16 %v1296, %v1295
        %v1338 = vpack.c.b16 %v1298, %v1297
        %v1339 = vpack.c.b16 %v1300, %v1299
        %v1340 = vpack.c.b16 %v1302, %v1301
        %v1341 = vpack.c.b16 %v1304, %v1303
        %v1342 = vpack.c.b16 %v1306, %v1305
        %v1343 = vpack.c.b16 %v1308, %v1307
        %v1344 = vpack.c.b16 %v1310, %v1309
        %v1345 = vpack.c.b16 %v1312, %v1311
        %v1346 = vpack.c.b16 %v1314, %v1313
        %v1347 = vpack.c.b16 %v1316, %v1315
        %v1348 = vpack.c.b16 %v1318, %v1317
        %v1349 = vpack.c.b16 %v1320, %v1319
        %v1350 = vpack.c.b16 %v1322, %v1321
        %v1351 = vpack.c.b16 %v1324, %v1323
        %v1352 = vpack.c.b16 %v1326, %v1325
        %v1353 = vpack.c.b16 %v1328, %v1327
        %v1354 = vpack.c.b16 %v1330, %v1329
        %1379 = vmatpush.bf16.msra.mxu0 %v1338
        %1380 = vmatpush.bf16.msra.mxu0 %v1337
        %1381 = vmatpush.bf16.msra.mxu0 %v1336
        %1382 = vmatpush.bf16.msra.mxu0 %v1335
        %1383 = vmatpush.bf16.msra.mxu0 %v1334
        %1384 = vmatpush.bf16.msra.mxu0 %v1333
        %1385 = vmatpush.bf16.msra.mxu0 %v1332
        %1386 = vmatpush.bf16.msra.mxu0 %v1331
        %1387 = vmatmul.bf16.gmra.mxu0 %v1131
        %v1388 = vpop.f32.mrf.mxu0
        %v1389 = vadd.f32 %v1233, %v1388
        %v1390 = vpop.f32.mrf.mxu0
        %v1391 = vadd.f32 %v1233, %v1390
        %1392 = vmatmul.bf16.gmra.mxu0 %v1132
        %v1393 = vpop.f32.mrf.mxu0
        %v1394 = vadd.f32 %v1233, %v1393
        %v1395 = vpop.f32.mrf.mxu0
        %v1396 = vadd.f32 %v1233, %v1395
        %1397 = vmatmul.bf16.gmra.mxu0 %v1133
        %v1398 = vpop.f32.mrf.mxu0
        %v1399 = vadd.f32 %v1233, %v1398
        %v1400 = vpop.f32.mrf.mxu0
        %v1401 = vadd.f32 %v1233, %v1400
        %1402 = vmatmul.bf16.gmra.mxu0 %v1134
        %v1403 = vpop.f32.mrf.mxu0
        %v1404 = vadd.f32 %v1233, %v1403
        %v1405 = vpop.f32.mrf.mxu0
        %1406 = vdwg.mxu0
        %1407 = vmatpush.bf16.msra.mxu0 %v1346
        %1408 = vmatpush.bf16.msra.mxu0 %v1345
        %1409 = vmatpush.bf16.msra.mxu0 %v1344
        %1410 = vmatpush.bf16.msra.mxu0 %v1343
        %1411 = vmatpush.bf16.msra.mxu0 %v1342
        %1412 = vmatpush.bf16.msra.mxu0 %v1341
        %1413 = vmatpush.bf16.msra.mxu0 %v1340
        %1414 = vmatpush.bf16.msra.mxu0 %v1339
        %1415 = vmatmul.bf16.gmra.mxu0 %v1153
        %v1416 = vpop.f32.mrf.mxu0
        %v1417 = vadd.f32 %v1389, %v1416
        %v1418 = vpop.f32.mrf.mxu0
        %v1419 = vadd.f32 %v1391, %v1418
        %1420 = vmatmul.bf16.gmra.mxu0 %v1154
        %v1421 = vpop.f32.mrf.mxu0
        %v1422 = vadd.f32 %v1394, %v1421
        %v1423 = vpop.f32.mrf.mxu0
        %v1424 = vadd.f32 %v1396, %v1423
        %1425 = vmatmul.bf16.gmra.mxu0 %v1155
        %v1426 = vpop.f32.mrf.mxu0
        %v1427 = vadd.f32 %v1399, %v1426
        %v1428 = vpop.f32.mrf.mxu0
        %v1429 = vadd.f32 %v1401, %v1428
        %1430 = vmatmul.bf16.gmra.mxu0 %v1156
        %v1431 = vpop.f32.mrf.mxu0
        %v1432 = vadd.f32 %v1404, %v1431
        %v1433 = vpop.f32.mrf.mxu0
        %1434 = vdwg.mxu0
        %1435 = vmatpush.bf16.msra.mxu0 %v1354
        %1436 = vmatpush.bf16.msra.mxu0 %v1353
        %1437 = vmatpush.bf16.msra.mxu0 %v1352
        %1438 = vmatpush.bf16.msra.mxu0 %v1351
        %1439 = vmatpush.bf16.msra.mxu0 %v1350
        %1440 = vmatpush.bf16.msra.mxu0 %v1349
        %1441 = vmatpush.bf16.msra.mxu0 %v1348
        %1442 = vmatpush.bf16.msra.mxu0 %v1347
        %1443 = vmatmul.bf16.gmra.mxu0 %v1175
        %v1444 = vpop.f32.mrf.mxu0
        %v1445 = vadd.f32 %v1417, %v1444
        %v1446 = vpop.f32.mrf.mxu0
        %v1447 = vadd.f32 %v1419, %v1446
        %1448 = vmatmul.bf16.gmra.mxu0 %v1176
        %v1449 = vpop.f32.mrf.mxu0
        %v1450 = vadd.f32 %v1422, %v1449
        %v1451 = vpop.f32.mrf.mxu0
        %v1452 = vadd.f32 %v1424, %v1451
        %1453 = vmatmul.bf16.gmra.mxu0 %v1177
        %v1454 = vpop.f32.mrf.mxu0
        %v1455 = vadd.f32 %v1427, %v1454
        %v1456 = vpop.f32.mrf.mxu0
        %v1457 = vadd.f32 %v1429, %v1456
        %1458 = vmatmul.bf16.gmra.mxu0 %v1178
        %v1459 = vpop.f32.mrf.mxu0
        %v1460 = vadd.f32 %v1432, %v1459
        %v1461 = vpop.f32.mrf.mxu0
        %1462 = vdwg.mxu0
        %v1463 = vmax.f32 %v1445, 0.0
        %v1464 = vmax.f32 %v1447, 0.0
        %v1465 = vmax.f32 %v1450, 0.0
        %v1466 = vmax.f32 %v1452, 0.0
        %v1467 = vmax.f32 %v1455, 0.0
        %v1468 = vmax.f32 %v1457, 0.0
        %v1469 = vmax.f32 %v1460, 0.0
        %v1470 = vld [vmem:[%s529] sm:$0xf]
        %v1471 = vld [vmem:[%s529 + $0x4] sm:$0xf]
        %v1472 = vld [vmem:[%s529 + $0x8] sm:$0xf]
        %v1473 = vld [vmem:[%s529 + $0xc] sm:$0xf]
        %v1474 = vld [vmem:[%s529 + $0x10] sm:$0xf]
        %v1475 = vld [vmem:[%s529 + $0x14] sm:$0xf]
        %v1476 = vld [vmem:[%s529 + $0x18] sm:$0xf]
        %v1477 = vld [vmem:[%s529 + $0x1c] sm:$0xf]
        %v1478 = vld [vmem:[%s529 + $0x20] sm:$0xf]
        %v1479 = vld [vmem:[%s529 + $0x24] sm:$0xf]
        %v1480 = vld [vmem:[%s529 + $0x28] sm:$0xf]
        %v1481 = vld [vmem:[%s529 + $0x2c] sm:$0xf]
        %v1482 = vld [vmem:[%s529 + $0x30] sm:$0xf]
        %v1483 = vld [vmem:[%s529 + $0x34] sm:$0xf]
        %v1484 = vld [vmem:[%s529 + $0x38] sm:$0xf]
        %v1485 = vld [vmem:[%s529 + $0x3c] sm:$0xf]
        %v1486 = vpack.c.bf16 %v1464, %v1463
        %v1487 = vpack.c.bf16 %v1466, %v1465
        %v1488 = vpack.c.bf16 %v1468, %v1467
        %v1489 = vpack.c.bf16 %v1469, %v1469
        %v1490 = vld [vmem:[%s620] sm:$0x1]
        %v1492 = vperm.slane %v1490, 0
        %v1510 = vunpack.c.l.b16 %v1470
        %v1511 = vunpack.c.l.b16 %v1471
        %v1512 = vunpack.c.l.b16 %v1472
        %v1513 = vunpack.c.l.b16 %v1473
        %v1514 = vunpack.c.l.b16 %v1474
        %v1515 = vunpack.c.l.b16 %v1475
        %v1516 = vunpack.c.l.b16 %v1476
        %v1517 = vunpack.c.l.b16 %v1477
        %v1518 = vunpack.c.l.b16 %v1478
        %v1519 = vunpack.c.l.b16 %v1479
        %v1520 = vunpack.c.l.b16 %v1480
        %v1521 = vunpack.c.l.b16 %v1481
        %v1522 = vunpack.c.l.b16 %v1482
        %v1523 = vunpack.c.l.b16 %v1483
        %v1524 = vunpack.c.l.b16 %v1484
        %v1525 = vunpack.c.l.b16 %v1485
        %v1526 = vpack.c.b16 %v1511, %v1510
        %v1527 = vpack.c.b16 %v1513, %v1512
        %v1528 = vpack.c.b16 %v1515, %v1514
        %v1529 = vpack.c.b16 %v1517, %v1516
        %v1530 = vpack.c.b16 %v1519, %v1518
        %v1531 = vpack.c.b16 %v1521, %v1520
        %v1532 = vpack.c.b16 %v1523, %v1522
        %v1533 = vpack.c.b16 %v1525, %v1524
        %1542 = vmatpush.bf16.msra.mxu0 %v1533
        %1543 = vmatpush.bf16.msra.mxu0 %v1532
        %1544 = vmatpush.bf16.msra.mxu0 %v1531
        %1545 = vmatpush.bf16.msra.mxu0 %v1530
        %1546 = vmatpush.bf16.msra.mxu0 %v1529
        %1547 = vmatpush.bf16.msra.mxu0 %v1528
        %1548 = vmatpush.bf16.msra.mxu0 %v1527
        %1549 = vmatpush.bf16.msra.mxu0 %v1526
        %1550 = vmatmul.bf16.gmra.mxu0 %v1486
        %v1551 = vpop.f32.mrf.mxu0
        %v1552 = vadd.f32 %v1492, %v1551
        %v1553 = vpop.f32.mrf.mxu0
        %v1554 = vadd.f32 %v1492, %v1553
        %1555 = vmatmul.bf16.gmra.mxu0 %v1487
        %v1556 = vpop.f32.mrf.mxu0
        %v1557 = vadd.f32 %v1492, %v1556
        %v1558 = vpop.f32.mrf.mxu0
        %v1559 = vadd.f32 %v1492, %v1558
        %1560 = vmatmul.bf16.gmra.mxu0 %v1488
        %v1561 = vpop.f32.mrf.mxu0
        %v1562 = vadd.f32 %v1492, %v1561
        %v1563 = vpop.f32.mrf.mxu0
        %v1564 = vadd.f32 %v1492, %v1563
        %1565 = vmatmul.bf16.gmra.mxu0 %v1489
        %v1566 = vpop.f32.mrf.mxu0
        %v1567 = vadd.f32 %v1492, %v1566
        %v1568 = vpop.f32.mrf.mxu0
        %1569 = vdwg.mxu0
        %v1570 = vld [vmem:[#allocation4] sm:$0xf]
        %v1571 = vld [vmem:[#allocation4 + $0x4] sm:$0xf]
        %v1572 = vld [vmem:[#allocation4 + $0x8] sm:$0xf]
        %v1573 = vld [vmem:[#allocation4 + $0xc] sm:$0x3]
        %v1574 = vpack.c.bf16 %v1554, %v1552
        %v1575 = vpack.c.bf16 %v1559, %v1557
        %v1576 = vpack.c.bf16 %v1564, %v1562
        %v1577 = vpack.c.bf16 %v1567, %v1567
        %v1582 = vunpack.c.l.b16 %v1570
        %v1583 = vunpack.c.l.b16 %v1571
        %v1584 = vunpack.c.l.b16 %v1572
        %v1585 = vunpack.c.l.b16 %v1573
        %v1586 = vpack.c.b16 %v1583, %v1582
        %v1587 = vpack.c.b16 %v1585, %v1584
        %vm1588 = vcmask 457728
        %v1590 = vsel %vm1588, %v1586, 0
        %v1593 = vsel %vm1588, %v1587, 0
        %vm1595 = vcmask 1043456
        %v1597 = vsel %vm1595, %v1577, 0
        %1599 = vmatpush.bf16.msra.mxu0 0
        %1600 = vmatpush.bf16.msra.mxu0 0
        %1601 = vmatpush.bf16.msra.mxu0 0
        %1602 = vmatpush.bf16.msra.mxu0 0
        %1603 = vmatpush.bf16.msra.mxu0 %v1597
        %1604 = vmatpush.bf16.msra.mxu0 %v1576
        %1605 = vmatpush.bf16.msra.mxu0 %v1575
        %1606 = vmatpush.bf16.msra.mxu0 %v1574
        %1607 = vmatmul.bf16.gmra.mxu0 %v1590
        %v1608 = vpop.f32.mrf.mxu0
        %v1609 = vadd.f32 0.0, %v1608
        %v1610 = vpop.f32.mrf.mxu0
        %v1611 = vadd.f32 0.0, %v1610
        %1612 = vmatmul.bf16.gmra.mxu0 %v1593
        %v1613 = vpop.f32.mrf.mxu0
        %v1614 = vadd.f32 0.0, %v1613
        %v1615 = vpop.f32.mrf.mxu0
        %v1616 = vadd.f32 0.0, %v1615
        %1617 = vdwg.mxu0
        %v1618 = vpack.c.bf16 %v1609, %v1609
        %v1619 = vpack.c.bf16 %v1611, %v1611
        %v1620 = vpack.c.bf16 %v1614, %v1614
        %v1621 = vpack.c.bf16 %v1616, %v1616
        %v1627 = vunpack.c.l.b16 %v1618
        %v1628 = vunpack.c.l.b16 %v1619
        %v1629 = vunpack.c.l.b16 %v1620
        %v1630 = vunpack.c.l.b16 %v1621
        %v1631 = vpack.c.b16 %v1628, %v1627
        %v1632 = vpack.c.b16 %v1630, %v1629
        %v1635 = vld [vmem:[%s539] sm:$0xf]
        %v1636 = vld [vmem:[%s539 + $0x4] sm:$0xf]
        %v1637 = vld [vmem:[%s539 + $0x8] sm:$0xf]
        %v1638 = vld [vmem:[%s539 + $0xc] sm:$0xf]
        %v1639 = vld [vmem:[%s539 + $0x10] sm:$0xf]
        %v1640 = vld [vmem:[%s539 + $0x14] sm:$0xf]
        %v1641 = vld [vmem:[%s539 + $0x18] sm:$0xf]
        %v1642 = vld [vmem:[%s539 + $0x1c] sm:$0xf]
        %v1643 = vld [vmem:[%s539 + $0x20] sm:$0xf]
        %v1644 = vld [vmem:[%s539 + $0x24] sm:$0xf]
        %v1645 = vld [vmem:[%s539 + $0x28] sm:$0xf]
        %v1646 = vld [vmem:[%s539 + $0x2c] sm:$0xf]
        %v1647 = vld [vmem:[%s539 + $0x30] sm:$0xf]
        %v1648 = vld [vmem:[%s539 + $0x34] sm:$0xf]
        %v1649 = vld [vmem:[%s539 + $0x38] sm:$0xf]
        %v1650 = vld [vmem:[%s539 + $0x3c] sm:$0xf]
        %v1651 = vld [vmem:[%s539 + $0x40] sm:$0xf]
        %v1652 = vld [vmem:[%s539 + $0x44] sm:$0xf]
        %v1653 = vld [vmem:[%s539 + $0x48] sm:$0xf]
        %v1654 = vld [vmem:[%s539 + $0x4c] sm:$0xf]
        %v1655 = vld [vmem:[%s539 + $0x50] sm:$0xf]
        %v1656 = vld [vmem:[%s539 + $0x54] sm:$0xf]
        %v1657 = vld [vmem:[%s539 + $0x58] sm:$0xf]
        %v1658 = vld [vmem:[%s539 + $0x5c] sm:$0xf]
        %v1659 = vld [vmem:[%s539 + $0x60] sm:$0xf]
        %v1660 = vld [vmem:[%s539 + $0x64] sm:$0xf]
        %v1661 = vld [vmem:[%s539 + $0x68] sm:$0xf]
        %v1662 = vld [vmem:[%s539 + $0x6c] sm:$0xf]
        %v1663 = vld [vmem:[%s539 + $0x70] sm:$0xf]
        %v1664 = vld [vmem:[%s539 + $0x74] sm:$0xf]
        %v1665 = vld [vmem:[%s539 + $0x78] sm:$0xf]
        %v1666 = vld [vmem:[%s539 + $0x7c] sm:$0xf]
        %v1667 = vld [vmem:[%s623] sm:$0x1]
        %v1669 = vperm.slane %v1667, 0
        %v1703 = vunpack.c.l.b16 %v1635
        %v1704 = vunpack.c.l.b16 %v1636
        %v1705 = vunpack.c.l.b16 %v1637
        %v1706 = vunpack.c.l.b16 %v1638
        %v1707 = vunpack.c.l.b16 %v1639
        %v1708 = vunpack.c.l.b16 %v1640
        %v1709 = vunpack.c.l.b16 %v1641
        %v1710 = vunpack.c.l.b16 %v1642
        %v1711 = vunpack.c.l.b16 %v1643
        %v1712 = vunpack.c.l.b16 %v1644
        %v1713 = vunpack.c.l.b16 %v1645
        %v1714 = vunpack.c.l.b16 %v1646
        %v1715 = vunpack.c.l.b16 %v1647
        %v1716 = vunpack.c.l.b16 %v1648
        %v1717 = vunpack.c.l.b16 %v1649
        %v1718 = vunpack.c.l.b16 %v1650
        %v1719 = vunpack.c.l.b16 %v1651
        %v1720 = vunpack.c.l.b16 %v1652
        %v1721 = vunpack.c.l.b16 %v1653
        %v1722 = vunpack.c.l.b16 %v1654
        %v1723 = vunpack.c.l.b16 %v1655
        %v1724 = vunpack.c.l.b16 %v1656
        %v1725 = vunpack.c.l.b16 %v1657
        %v1726 = vunpack.c.l.b16 %v1658
        %v1727 = vunpack.c.l.b16 %v1659
        %v1728 = vunpack.c.l.b16 %v1660
        %v1729 = vunpack.c.l.b16 %v1661
        %v1730 = vunpack.c.l.b16 %v1662
        %v1731 = vunpack.c.l.b16 %v1663
        %v1732 = vunpack.c.l.b16 %v1664
        %v1733 = vunpack.c.l.b16 %v1665
        %v1734 = vunpack.c.l.b16 %v1666
        %v1735 = vpack.c.b16 %v1704, %v1703
        %v1736 = vpack.c.b16 %v1706, %v1705
        %v1737 = vpack.c.b16 %v1708, %v1707
        %v1738 = vpack.c.b16 %v1710, %v1709
        %v1739 = vpack.c.b16 %v1712, %v1711
        %v1740 = vpack.c.b16 %v1714, %v1713
        %v1741 = vpack.c.b16 %v1716, %v1715
        %v1742 = vpack.c.b16 %v1718, %v1717
        %v1743 = vpack.c.b16 %v1720, %v1719
        %v1744 = vpack.c.b16 %v1722, %v1721
        %v1745 = vpack.c.b16 %v1724, %v1723
        %v1746 = vpack.c.b16 %v1726, %v1725
        %v1747 = vpack.c.b16 %v1728, %v1727
        %v1748 = vpack.c.b16 %v1730, %v1729
        %v1749 = vpack.c.b16 %v1732, %v1731
        %v1750 = vpack.c.b16 %v1734, %v1733
        %1767 = vmatpush.bf16.msra.mxu0 %v1742
        %1768 = vmatpush.bf16.msra.mxu0 %v1741
        %1769 = vmatpush.bf16.msra.mxu0 %v1740
        %1770 = vmatpush.bf16.msra.mxu0 %v1739
        %1771 = vmatpush.bf16.msra.mxu0 %v1738
        %1772 = vmatpush.bf16.msra.mxu0 %v1737
        %1773 = vmatpush.bf16.msra.mxu0 %v1736
        %1774 = vmatpush.bf16.msra.mxu0 %v1735
        %1775 = vmatmul.bf16.gmra.mxu0 %v983
        %v1776 = vpop.f32.mrf.mxu0
        %v1777 = vadd.f32 %v1669, %v1776
        %v1778 = vpop.f32.mrf.mxu0
        %v1779 = vadd.f32 %v1669, %v1778
        %1780 = vmatmul.bf16.gmra.mxu0 %v984
        %v1781 = vpop.f32.mrf.mxu0
        %v1782 = vadd.f32 %v1669, %v1781
        %v1783 = vpop.f32.mrf.mxu0
        %v1784 = vadd.f32 %v1669, %v1783
        %1785 = vdwg.mxu0
        %1786 = vmatpush.bf16.msra.mxu0 %v1750
        %1787 = vmatpush.bf16.msra.mxu0 %v1749
        %1788 = vmatpush.bf16.msra.mxu0 %v1748
        %1789 = vmatpush.bf16.msra.mxu0 %v1747
        %1790 = vmatpush.bf16.msra.mxu0 %v1746
        %1791 = vmatpush.bf16.msra.mxu0 %v1745
        %1792 = vmatpush.bf16.msra.mxu0 %v1744
        %1793 = vmatpush.bf16.msra.mxu0 %v1743
        %1794 = vmatmul.bf16.gmra.mxu0 %v1631
        %v1795 = vpop.f32.mrf.mxu0
        %v1796 = vadd.f32 %v1777, %v1795
        %v1797 = vpop.f32.mrf.mxu0
        %v1798 = vadd.f32 %v1779, %v1797
        %1799 = vmatmul.bf16.gmra.mxu0 %v1632
        %v1800 = vpop.f32.mrf.mxu0
        %v1801 = vadd.f32 %v1782, %v1800
        %v1802 = vpop.f32.mrf.mxu0
        %v1803 = vadd.f32 %v1784, %v1802
        %1804 = vdwg.mxu0
        %v1805 = vmax.f32 %v1796, 0.0
        %v1806 = vmax.f32 %v1798, 0.0
        %v1807 = vmax.f32 %v1801, 0.0
        %v1808 = vmax.f32 %v1803, 0.0
        %v1809 = vld [vmem:[%s549] sm:$0xf]
        %v1810 = vld [vmem:[%s549 + $0x4] sm:$0xf]
        %v1811 = vld [vmem:[%s549 + $0x8] sm:$0xf]
        %v1812 = vld [vmem:[%s549 + $0xc] sm:$0xf]
        %v1813 = vld [vmem:[%s549 + $0x10] sm:$0xf]
        %v1814 = vld [vmem:[%s549 + $0x14] sm:$0xf]
        %v1815 = vld [vmem:[%s549 + $0x18] sm:$0xf]
        %v1816 = vld [vmem:[%s549 + $0x1c] sm:$0xf]
        %v1817 = vld [vmem:[%s549 + $0x20] sm:$0xf]
        %v1818 = vld [vmem:[%s549 + $0x24] sm:$0xf]
        %v1819 = vld [vmem:[%s549 + $0x28] sm:$0xf]
        %v1820 = vld [vmem:[%s549 + $0x2c] sm:$0xf]
        %v1821 = vld [vmem:[%s549 + $0x30] sm:$0xf]
        %v1822 = vld [vmem:[%s549 + $0x34] sm:$0xf]
        %v1823 = vld [vmem:[%s549 + $0x38] sm:$0xf]
        %v1824 = vld [vmem:[%s549 + $0x3c] sm:$0xf]
        %v1825 = vpack.c.bf16 %v1806, %v1805
        %v1826 = vpack.c.bf16 %v1808, %v1807
        %v1843 = vunpack.c.l.b16 %v1809
        %v1844 = vunpack.c.l.b16 %v1810
        %v1845 = vunpack.c.l.b16 %v1811
        %v1846 = vunpack.c.l.b16 %v1812
        %v1847 = vunpack.c.l.b16 %v1813
        %v1848 = vunpack.c.l.b16 %v1814
        %v1849 = vunpack.c.l.b16 %v1815
        %v1850 = vunpack.c.l.b16 %v1816
        %v1851 = vunpack.c.l.b16 %v1817
        %v1852 = vunpack.c.l.b16 %v1818
        %v1853 = vunpack.c.l.b16 %v1819
        %v1854 = vunpack.c.l.b16 %v1820
        %v1855 = vunpack.c.l.b16 %v1821
        %v1856 = vunpack.c.l.b16 %v1822
        %v1857 = vunpack.c.l.b16 %v1823
        %v1858 = vunpack.c.l.b16 %v1824
        %v1859 = vpack.c.b16 %v1844, %v1843
        %v1860 = vpack.c.b16 %v1846, %v1845
        %v1861 = vpack.c.b16 %v1848, %v1847
        %v1862 = vpack.c.b16 %v1850, %v1849
        %v1863 = vpack.c.b16 %v1852, %v1851
        %v1864 = vpack.c.b16 %v1854, %v1853
        %v1865 = vpack.c.b16 %v1856, %v1855
        %v1866 = vpack.c.b16 %v1858, %v1857
        %1875 = vmatpush.bf16.msra.mxu0 %v1866
        %1876 = vmatpush.bf16.msra.mxu0 %v1865
        %1877 = vmatpush.bf16.msra.mxu0 %v1864
        %1878 = vmatpush.bf16.msra.mxu0 %v1863
        %1879 = vmatpush.bf16.msra.mxu0 %v1862
        %1880 = vmatpush.bf16.msra.mxu0 %v1861
        %1881 = vmatpush.bf16.msra.mxu0 %v1860
        %1882 = vmatpush.bf16.msra.mxu0 %v1859
        %1883 = vmatmul.bf16.gmra.mxu0 %v1825
        %v1884 = vpop.f32.mrf.mxu0
        %v1885 = vadd.f32 0.0, %v1884
        %v1886 = vpop.f32.mrf.mxu0
        %v1887 = vadd.f32 0.0, %v1886
        %1888 = vmatmul.bf16.gmra.mxu0 %v1826
        %v1889 = vpop.f32.mrf.mxu0
        %v1890 = vadd.f32 0.0, %v1889
        %v1891 = vpop.f32.mrf.mxu0
        %v1892 = vadd.f32 0.0, %v1891
        %1893 = vdwg.mxu0
        %v1894 = vadd.f32 %v942, %v1885
        %v1895 = vadd.f32 %v943, %v1887
        %v1896 = vadd.f32 %v944, %v1890
        %v1897 = vadd.f32 %v945, %v1892
        %v1898 = vld [vmem:[%s626] sm:$0x1]
        %v1900 = vperm.slane %v1898, 0
        %v1902 = vadd.f32 %v1894, %v1900
        %v1903 = vadd.f32 %v1895, %v1900
        %v1904 = vadd.f32 %v1896, %v1900
        %v1905 = vadd.f32 %v1897, %v1900
        %1906 = vst [vmem:[%s13] sm:$0xff] %v1902
        %1907 = vst [vmem:[%s13 + $0x8] sm:$0xff] %v1903
        %1908 = vst [vmem:[%s13 + $0x10] sm:$0xff] %v1904
        %1909 = vst [vmem:[%s13 + $0x18] sm:$0xf] %v1905
        // Predicated region
        $region93: #{fwd.3} parent=71 // pred_check
          %p1910 = pneg %p359
        $region94: #{fwd.3} parent=71 // pred_check_branch
          %1912 = sbr.rel (%p1910) target = $region96
        $region95: #{fwd.3} parent=71 // pred_region
          _
        $region96: #{fwd.3} parent=71 // pred_fallthru
          _
        // Predicated region
        $region97: #{fwd.3} parent=71 // pred_check
          %p1913 = pneg %p359
        $region98: #{fwd.3} parent=71 // pred_check_branch
          %1915 = sbr.rel (%p1913) target = $region100
        $region99: #{fwd.3} parent=71 // pred_region
          _
        $region100: #{fwd.3} parent=71 // pred_fallthru
          _
      $region72: #{fwd.3} parent=5 // pred_fallthru
        _
      %p1916 = scmp.le.s32.totalorder 2, %s28
      // Predicated region
      $region101: #{fwd.3} parent=5 // pred_check
        %p1917 = pneg %p1916
      $region102: #{fwd.3} parent=5 // pred_check_branch
        %1919 = sbr.rel (%p1917) target = $region104
      $region103: #{fwd.3} parent=5 // pred_region
        %s1920 = ssub.s32 %s28, 2
      $region104: #{fwd.3} parent=5 // pred_fallthru
        _
    $region6: #{fwd.3} parent=1 // loop_footer
      %s32 = sadd.s32 1, %s28
    $region7: #{fwd.3} parent=1 // loop_footer_branch
      %27 = sbr.rel target = $region3
    $region8: #{fwd.3} parent=1 // loop_exit
      _
    %1921 = vsyncpa [#allocation7], 1
    %s1922 = scalar_lea.sflag [#allocation7], 1
    %1923 = vsyncpa %s1922, 1
    %1924 = vsyncpa [#allocation9], 1
    %s1925 = scalar_lea.sflag [#allocation9], 1
    %1926 = vsyncpa %s1925, 1
    %1927 = vsyncpa [#allocation12], 1
    %s1928 = scalar_lea.sflag [#allocation12], 1
    %1929 = vsyncpa %s1928, 1

// kernel: fwd.5
$region0: #{fwd.5}
  #allocation0 [shape = 'u32[]', space=smem, size = 0x4, offset = 0x4, fixed_abs, tag = 'smem constant byte address 0x4 - core index']
  #allocation1 [shape = 'u32[72,128]{1,0:T(1,128)}', space=vmem, size = 0x9000, scoped, tag = 'internal scratch']
  #allocation2 [shape = 'bf16[56,28]{1,0:T(8,128)(2,1)}', space=vmem, size = 0x3800, scoped, tag = 'scratch operand']
  #allocation3 [shape = 'bf16[56,28]{1,0:T(8,128)(2,1)}', space=vmem, size = 0x3800, scoped, tag = 'scratch operand']
  #allocation4 [shape = 'bf16[28,56]{1,0:T(8,128)(2,1)}', space=vmem, size = 0x2000, scoped, tag = 'scratch operand']
  #allocation5 [shape = 'bf16[56,128]{1,0:T(8,128)(2,1)}', space=vmem, size = 0x3800, scoped, tag = 'scratch operand']
  %s0 = inlined_call_operand.vmem [shape: f32[28,128], index: 0, kind: input, shape index: {}]
  %s1 = inlined_call_operand.vmem [shape: f32[28,128], index: 1, kind: input, shape index: {}]
  %s2 = inlined_call_operand.vmem [shape: s32[56,1], index: 2, kind: input, shape index: {}]
  %s3 = inlined_call_operand.vmem [shape: s32[56,1], index: 3, kind: input, shape index: {}]
  %s4 = inlined_call_operand.vmem [shape: s32[1,56], index: 4, kind: input, shape index: {}]
  %s5 = inlined_call_operand.vmem [shape: bf16[2,384,128], index: 5, kind: input, shape index: {}]
  %s6 = inlined_call_operand.vmem [shape: f32[2,1,128], index: 6, kind: input, shape index: {}]
  %s7 = inlined_call_operand.vmem [shape: bf16[2,128,128], index: 7, kind: input, shape index: {}]
  %s8 = inlined_call_operand.vmem [shape: f32[2,1,128], index: 8, kind: input, shape index: {}]
  %s9 = inlined_call_operand.hbm [shape: bf16[2,256,128], index: 9, kind: input, shape index: {}]
  %s10 = inlined_call_operand.vmem [shape: f32[2,1,128], index: 10, kind: input, shape index: {}]
  %s11 = inlined_call_operand.hbm [shape: bf16[2,128,128], index: 11, kind: input, shape index: {}]
  %s12 = inlined_call_operand.hbm [shape: f32[2,1,128], index: 12, kind: input, shape index: {}]
  %s13 = inlined_call_operand.hbm [shape: f32[28,128], index: 13, kind: output, shape index: {}]
  %s14 = sld [smem:[#allocation0]]
  $region101: #{fwd.5} parent=0
    _
  %s16 = ssub.s32 1, %s14
  %s17 = scalar_select 0, %s16, %s14
  $region1: #{fwd.5} parent=0
    #allocation6 [shape = 'u8[131072]{0}', space=vmem, size = 0x20000, scoped, tag = 'input window, operand 9']
    #allocation7 [shape = 's32[2]{0}', space=sflag, size = 0x8, scoped, tag = 'scoped memory for fwd.5']
    #allocation8 [shape = 's32[2]{0}', space=sflag, size = 0x8, scoped, tag = 'scoped memory for fwd.5']
    #allocation9 [shape = 'u8[65536]{0}', space=vmem, size = 0x10000, scoped, tag = 'input window, operand 11']
    #allocation10 [shape = 's32[2]{0}', space=sflag, size = 0x8, scoped, tag = 'scoped memory for fwd.5']
    #allocation11 [shape = 'u8[1024]{0}', space=vmem, size = 0x400, scoped, tag = 'input window, operand 12']
    #allocation12 [shape = 'u8[16384]{0}', space=vmem, size = 0x4000, scoped, tag = 'output window, operand 0, single buffered']
    %18 = vsyncpa [#allocation7], 0
    %s19 = scalar_lea.sflag [#allocation7], 1
    %20 = vsyncpa %s19, 0
    %21 = vsyncpa [#allocation10], 0
    %s22 = scalar_lea.sflag [#allocation10], 1
    %23 = vsyncpa %s22, 0
    %24 = vsyncpa [#allocation8], 0
    loop: start=0, step=1, limit=4
    $region2: #{fwd.5} parent=1 // loop_pre_header
      _
    $region3: #{fwd.5} parent=1 // loop_header
      %s26 = sphi 0, %s30
      %p27 = scmp.ge.s32.totalorder %s26, 4
      %s34 = sphi 0, %s34
      %s36 = sphi 0, %s34
      %s37 = sphi 0, %s36
      %s51 = sphi 0, %s37
      %s55 = sphi 0, %s55
      %s57 = sphi 0, %s55
      %s58 = sphi 0, %s57
      %s72 = sphi 0, %s58
      %s76 = sphi 0, %s76
      %s78 = sphi 0, %s76
      %s79 = sphi 0, %s78
      %s93 = sphi 0, %s79
      %s97 = sphi 0, %s97
      %s99 = sphi 0, %s97
      %s100 = sphi 0, %s99
      %s114 = sphi 0, %s100
      %s118 = sphi 0, %s118
      %s120 = sphi 0, %s118
      %s121 = sphi 0, %s120
      %s135 = sphi 0, %s121
      %s141 = sphi 0, %s143
      %s144 = sphi 0, %s141
      %s145 = sphi 0, %s144
      %s161 = sphi 0, %s145
      %s167 = sphi 0, %s169
      %s170 = sphi 0, %s167
      %s171 = sphi 0, %s170
      %s187 = sphi 0, %s171
      %s193 = sphi 0, %s195
      %s196 = sphi 0, %s193
      %s197 = sphi 0, %s196
      %s213 = sphi 0, %s197
      %s219 = sphi 0, %s221
      %s222 = sphi 0, %s219
      %s223 = sphi 0, %s222
      %s239 = sphi 0, %s223
      %s245 = sphi 0, %s247
      %s248 = sphi 0, %s245
      %s249 = sphi 0, %s248
      %s265 = sphi 0, %s249
      %s271 = sphi 0, %s273
      %s274 = sphi 0, %s271
      %s275 = sphi 0, %s274
      %s291 = sphi 0, %s275
      %s297 = sphi 0, %s299
      %s300 = sphi 0, %s297
      %s301 = sphi 0, %s300
      %s317 = sphi 0, %s301
      %s323 = sphi 0, %s325
      %s326 = sphi 0, %s323
      %s327 = sphi 0, %s326
      %s343 = sphi 0, %s327
      %s347 = sphi 0, %s347
      %s349 = sphi 0, %s347
      %s350 = sphi 0, %s349
      %s364 = sphi 0, %s350
    $region4: #{fwd.5} parent=1 // loop_header_branch
      %29 = sbr.rel (%p27) target = $region8
    $region5: #{fwd.5} parent=1 // loop_body
      %s31 = ssub.s32 %s26, 1
      %s32 = ssub.s32 %s26, 2
      %s33 = sadd.s32 %s26, 1
      %s35 = sadd.s32 %s34, 1
      %p38 = scmp.eq.s32.totalorder %s26, 1
      %p39 = scmp.ne.s32.totalorder %s34, %s36
      %p40 = scmp.eq.s32.totalorder %s26, 0
      %p41 = por %p39, %p40
      %p42 = scmp.ne.s32.totalorder %s34, %s36
      %p43 = scmp.eq.s32.totalorder %s31, 1
      %p44 = por %p42, %p43
      %p45 = scmp.ne.s32.totalorder %s36, %s37
      %p46 = scmp.eq.s32.totalorder %s31, 0
      %p47 = por %p45, %p46
      %p48 = scmp.ne.s32.totalorder %s36, %s37
      %p49 = scmp.eq.s32.totalorder %s32, 1
      %p50 = por %p48, %p49
      %p52 = scmp.ne.s32.totalorder %s37, %s51
      %p53 = scmp.eq.s32.totalorder %s32, 0
      %p54 = por %p52, %p53
      %s56 = sadd.s32 %s55, 1
      %p59 = scmp.eq.s32.totalorder %s26, 1
      %p60 = scmp.ne.s32.totalorder %s55, %s57
      %p61 = scmp.eq.s32.totalorder %s26, 0
      %p62 = por %p60, %p61
      %p63 = scmp.ne.s32.totalorder %s55, %s57
      %p64 = scmp.eq.s32.totalorder %s31, 1
      %p65 = por %p63, %p64
      %p66 = scmp.ne.s32.totalorder %s57, %s58
      %p67 = scmp.eq.s32.totalorder %s31, 0
      %p68 = por %p66, %p67
      %p69 = scmp.ne.s32.totalorder %s57, %s58
      %p70 = scmp.eq.s32.totalorder %s32, 1
      %p71 = por %p69, %p70
      %p73 = scmp.ne.s32.totalorder %s58, %s72
      %p74 = scmp.eq.s32.totalorder %s32, 0
      %p75 = por %p73, %p74
      %s77 = sadd.s32 %s76, 1
      %p80 = scmp.eq.s32.totalorder %s26, 1
      %p81 = scmp.ne.s32.totalorder %s76, %s78
      %p82 = scmp.eq.s32.totalorder %s26, 0
      %p83 = por %p81, %p82
      %p84 = scmp.ne.s32.totalorder %s76, %s78
      %p85 = scmp.eq.s32.totalorder %s31, 1
      %p86 = por %p84, %p85
      %p87 = scmp.ne.s32.totalorder %s78, %s79
      %p88 = scmp.eq.s32.totalorder %s31, 0
      %p89 = por %p87, %p88
      %p90 = scmp.ne.s32.totalorder %s78, %s79
      %p91 = scmp.eq.s32.totalorder %s32, 1
      %p92 = por %p90, %p91
      %p94 = scmp.ne.s32.totalorder %s79, %s93
      %p95 = scmp.eq.s32.totalorder %s32, 0
      %p96 = por %p94, %p95
      %s98 = sadd.s32 %s97, 1
      %p101 = scmp.eq.s32.totalorder %s26, 1
      %p102 = scmp.ne.s32.totalorder %s97, %s99
      %p103 = scmp.eq.s32.totalorder %s26, 0
      %p104 = por %p102, %p103
      %p105 = scmp.ne.s32.totalorder %s97, %s99
      %p106 = scmp.eq.s32.totalorder %s31, 1
      %p107 = por %p105, %p106
      %p108 = scmp.ne.s32.totalorder %s99, %s100
      %p109 = scmp.eq.s32.totalorder %s31, 0
      %p110 = por %p108, %p109
      %p111 = scmp.ne.s32.totalorder %s99, %s100
      %p112 = scmp.eq.s32.totalorder %s32, 1
      %p113 = por %p111, %p112
      %p115 = scmp.ne.s32.totalorder %s100, %s114
      %p116 = scmp.eq.s32.totalorder %s32, 0
      %p117 = por %p115, %p116
      %s119 = sadd.s32 %s118, 1
      %p122 = scmp.eq.s32.totalorder %s26, 1
      %p123 = scmp.ne.s32.totalorder %s118, %s120
      %p124 = scmp.eq.s32.totalorder %s26, 0
      %p125 = por %p123, %p124
      %p126 = scmp.ne.s32.totalorder %s118, %s120
      %p127 = scmp.eq.s32.totalorder %s31, 1
      %p128 = por %p126, %p127
      %p129 = scmp.ne.s32.totalorder %s120, %s121
      %p130 = scmp.eq.s32.totalorder %s31, 0
      %p131 = por %p129, %p130
      %p132 = scmp.ne.s32.totalorder %s120, %s121
      %p133 = scmp.eq.s32.totalorder %s32, 1
      %p134 = por %p132, %p133
      %p136 = scmp.ne.s32.totalorder %s121, %s135
      %p137 = scmp.eq.s32.totalorder %s32, 0
      %p138 = por %p136, %p137
      %s139 = ssub.s32 %s26, %s33
      %p140 = scmp.eq.s32.totalorder %s139, 0
      %s142 = sadd.s32 %s141, 1
      %s143 = scalar_select %p140, %s141, %s142
      %p146 = pneg %p140
      %p147 = scmp.eq.s32.totalorder %s26, 1
      %p148 = por %p146, %p147
      %p149 = scmp.ne.s32.totalorder %s141, %s144
      %p150 = scmp.eq.s32.totalorder %s26, 0
      %p151 = por %p149, %p150
      %p152 = scmp.ne.s32.totalorder %s141, %s144
      %p153 = scmp.eq.s32.totalorder %s31, 1
      %p154 = por %p152, %p153
      %p155 = scmp.ne.s32.totalorder %s144, %s145
      %p156 = scmp.eq.s32.totalorder %s31, 0
      %p157 = por %p155, %p156
      %p158 = scmp.ne.s32.totalorder %s144, %s145
      %p159 = scmp.eq.s32.totalorder %s32, 1
      %p160 = por %p158, %p159
      %p162 = scmp.ne.s32.totalorder %s145, %s161
      %p163 = scmp.eq.s32.totalorder %s32, 0
      %p164 = por %p162, %p163
      %s165 = ssub.s32 %s26, %s33
      %p166 = scmp.eq.s32.totalorder %s165, 0
      %s168 = sadd.s32 %s167, 1
      %s169 = scalar_select %p166, %s167, %s168
      %p172 = pneg %p166
      %p173 = scmp.eq.s32.totalorder %s26, 1
      %p174 = por %p172, %p173
      %p175 = scmp.ne.s32.totalorder %s167, %s170
      %p176 = scmp.eq.s32.totalorder %s26, 0
      %p177 = por %p175, %p176
      %p178 = scmp.ne.s32.totalorder %s167, %s170
      %p179 = scmp.eq.s32.totalorder %s31, 1
      %p180 = por %p178, %p179
      %p181 = scmp.ne.s32.totalorder %s170, %s171
      %p182 = scmp.eq.s32.totalorder %s31, 0
      %p183 = por %p181, %p182
      %p184 = scmp.ne.s32.totalorder %s170, %s171
      %p185 = scmp.eq.s32.totalorder %s32, 1
      %p186 = por %p184, %p185
      %p188 = scmp.ne.s32.totalorder %s171, %s187
      %p189 = scmp.eq.s32.totalorder %s32, 0
      %p190 = por %p188, %p189
      %s191 = ssub.s32 %s26, %s33
      %p192 = scmp.eq.s32.totalorder %s191, 0
      %s194 = sadd.s32 %s193, 1
      %s195 = scalar_select %p192, %s193, %s194
      %p198 = pneg %p192
      %p199 = scmp.eq.s32.totalorder %s26, 1
      %p200 = por %p198, %p199
      %p201 = scmp.ne.s32.totalorder %s193, %s196
      %p202 = scmp.eq.s32.totalorder %s26, 0
      %p203 = por %p201, %p202
      %p204 = scmp.ne.s32.totalorder %s193, %s196
      %p205 = scmp.eq.s32.totalorder %s31, 1
      %p206 = por %p204, %p205
      %p207 = scmp.ne.s32.totalorder %s196, %s197
      %p208 = scmp.eq.s32.totalorder %s31, 0
      %p209 = por %p207, %p208
      %p210 = scmp.ne.s32.totalorder %s196, %s197
      %p211 = scmp.eq.s32.totalorder %s32, 1
      %p212 = por %p210, %p211
      %p214 = scmp.ne.s32.totalorder %s197, %s213
      %p215 = scmp.eq.s32.totalorder %s32, 0
      %p216 = por %p214, %p215
      %s217 = ssub.s32 %s26, %s33
      %p218 = scmp.eq.s32.totalorder %s217, 0
      %s220 = sadd.s32 %s219, 1
      %s221 = scalar_select %p218, %s219, %s220
      %p224 = pneg %p218
      %p225 = scmp.eq.s32.totalorder %s26, 1
      %p226 = por %p224, %p225
      %p227 = scmp.ne.s32.totalorder %s219, %s222
      %p228 = scmp.eq.s32.totalorder %s26, 0
      %p229 = por %p227, %p228
      %p230 = scmp.ne.s32.totalorder %s219, %s222
      %p231 = scmp.eq.s32.totalorder %s31, 1
      %p232 = por %p230, %p231
      %p233 = scmp.ne.s32.totalorder %s222, %s223
      %p234 = scmp.eq.s32.totalorder %s31, 0
      %p235 = por %p233, %p234
      %p236 = scmp.ne.s32.totalorder %s222, %s223
      %p237 = scmp.eq.s32.totalorder %s32, 1
      %p238 = por %p236, %p237
      %p240 = scmp.ne.s32.totalorder %s223, %s239
      %p241 = scmp.eq.s32.totalorder %s32, 0
      %p242 = por %p240, %p241
      %s243 = ssub.s32 %s26, %s33
      %p244 = scmp.eq.s32.totalorder %s243, 0
      %s246 = sadd.s32 %s245, 1
      %s247 = scalar_select %p244, %s245, %s246
      %p250 = pneg %p244
      %p251 = scmp.eq.s32.totalorder %s26, 1
      %p252 = por %p250, %p251
      %p253 = scmp.ne.s32.totalorder %s245, %s248
      %p254 = scmp.eq.s32.totalorder %s26, 0
      %p255 = por %p253, %p254
      %p256 = scmp.ne.s32.totalorder %s245, %s248
      %p257 = scmp.eq.s32.totalorder %s31, 1
      %p258 = por %p256, %p257
      %p259 = scmp.ne.s32.totalorder %s248, %s249
      %p260 = scmp.eq.s32.totalorder %s31, 0
      %p261 = por %p259, %p260
      %p262 = scmp.ne.s32.totalorder %s248, %s249
      %p263 = scmp.eq.s32.totalorder %s32, 1
      %p264 = por %p262, %p263
      %p266 = scmp.ne.s32.totalorder %s249, %s265
      %p267 = scmp.eq.s32.totalorder %s32, 0
      %p268 = por %p266, %p267
      %s269 = ssub.s32 %s26, %s33
      %p270 = scmp.eq.s32.totalorder %s269, 0
      %s272 = sadd.s32 %s271, 1
      %s273 = scalar_select %p270, %s271, %s272
      %p276 = pneg %p270
      %p277 = scmp.eq.s32.totalorder %s26, 1
      %p278 = por %p276, %p277
      %p279 = scmp.ne.s32.totalorder %s271, %s274
      %p280 = scmp.eq.s32.totalorder %s26, 0
      %p281 = por %p279, %p280
      %p282 = scmp.ne.s32.totalorder %s271, %s274
      %p283 = scmp.eq.s32.totalorder %s31, 1
      %p284 = por %p282, %p283
      %p285 = scmp.ne.s32.totalorder %s274, %s275
      %p286 = scmp.eq.s32.totalorder %s31, 0
      %p287 = por %p285, %p286
      %p288 = scmp.ne.s32.totalorder %s274, %s275
      %p289 = scmp.eq.s32.totalorder %s32, 1
      %p290 = por %p288, %p289
      %p292 = scmp.ne.s32.totalorder %s275, %s291
      %p293 = scmp.eq.s32.totalorder %s32, 0
      %p294 = por %p292, %p293
      %s295 = ssub.s32 %s26, %s33
      %p296 = scmp.eq.s32.totalorder %s295, 0
      %s298 = sadd.s32 %s297, 1
      %s299 = scalar_select %p296, %s297, %s298
      %p302 = pneg %p296
      %p303 = scmp.eq.s32.totalorder %s26, 1
      %p304 = por %p302, %p303
      %p305 = scmp.ne.s32.totalorder %s297, %s300
      %p306 = scmp.eq.s32.totalorder %s26, 0
      %p307 = por %p305, %p306
      %p308 = scmp.ne.s32.totalorder %s297, %s300
      %p309 = scmp.eq.s32.totalorder %s31, 1
      %p310 = por %p308, %p309
      %p311 = scmp.ne.s32.totalorder %s300, %s301
      %p312 = scmp.eq.s32.totalorder %s31, 0
      %p313 = por %p311, %p312
      %p314 = scmp.ne.s32.totalorder %s300, %s301
      %p315 = scmp.eq.s32.totalorder %s32, 1
      %p316 = por %p314, %p315
      %p318 = scmp.ne.s32.totalorder %s301, %s317
      %p319 = scmp.eq.s32.totalorder %s32, 0
      %p320 = por %p318, %p319
      %s321 = ssub.s32 %s26, %s33
      %p322 = scmp.eq.s32.totalorder %s321, 0
      %s324 = sadd.s32 %s323, 1
      %s325 = scalar_select %p322, %s323, %s324
      %p328 = pneg %p322
      %p329 = scmp.eq.s32.totalorder %s26, 1
      %p330 = por %p328, %p329
      %p331 = scmp.ne.s32.totalorder %s323, %s326
      %p332 = scmp.eq.s32.totalorder %s26, 0
      %p333 = por %p331, %p332
      %p334 = scmp.ne.s32.totalorder %s323, %s326
      %p335 = scmp.eq.s32.totalorder %s31, 1
      %p336 = por %p334, %p335
      %p337 = scmp.ne.s32.totalorder %s326, %s327
      %p338 = scmp.eq.s32.totalorder %s31, 0
      %p339 = por %p337, %p338
      %p340 = scmp.ne.s32.totalorder %s326, %s327
      %p341 = scmp.eq.s32.totalorder %s32, 1
      %p342 = por %p340, %p341
      %p344 = scmp.ne.s32.totalorder %s327, %s343
      %p345 = scmp.eq.s32.totalorder %s32, 0
      %p346 = por %p344, %p345
      %s348 = sadd.s32 %s347, 1
      %p351 = scmp.eq.s32.totalorder %s26, 1
      %p352 = scmp.ne.s32.totalorder %s347, %s349
      %p353 = scmp.eq.s32.totalorder %s26, 0
      %p354 = por %p352, %p353
      %p355 = scmp.ne.s32.totalorder %s347, %s349
      %p356 = scmp.eq.s32.totalorder %s31, 1
      %p357 = por %p355, %p356
      %p358 = scmp.ne.s32.totalorder %s349, %s350
      %p359 = scmp.eq.s32.totalorder %s31, 0
      %p360 = por %p358, %p359
      %p361 = scmp.ne.s32.totalorder %s349, %s350
      %p362 = scmp.eq.s32.totalorder %s32, 1
      %p363 = por %p361, %p362
      %p365 = scmp.ne.s32.totalorder %s350, %s364
      %p366 = scmp.eq.s32.totalorder %s32, 0
      %p367 = por %p365, %p366
      %p368 = scmp.le.s32.totalorder 1, %s26
      %p369 = scmp.lt.s32.totalorder %s26, 3
      %p370 = pnand %p368, %p369
      %p371 = pneg %p370
      // Predicated region
      $region9: #{fwd.5} parent=5 // pred_check
        _
      $region10: #{fwd.5} parent=5 // pred_check_branch
        %373 = sbr.rel (%p370) target = $region12
      $region11: #{fwd.5} parent=5 // pred_region
        %s374 = ssub.s32 %s26, 1
        // Predicated region
        $region13: #{fwd.5} parent=11 // pred_check
          %p375 = pneg %p47
        $region14: #{fwd.5} parent=11 // pred_check_branch
          %377 = sbr.rel (%p375) target = $region16
        $region15: #{fwd.5} parent=11 // pred_region
          _
        $region16: #{fwd.5} parent=11 // pred_fallthru
          _
        // Predicated region
        $region17: #{fwd.5} parent=11 // pred_check
          %p378 = pneg %p68
        $region18: #{fwd.5} parent=11 // pred_check_branch
          %380 = sbr.rel (%p378) target = $region20
        $region19: #{fwd.5} parent=11 // pred_region
          _
        $region20: #{fwd.5} parent=11 // pred_fallthru
          _
        // Predicated region
        $region21: #{fwd.5} parent=11 // pred_check
          %p381 = pneg %p89
        $region22: #{fwd.5} parent=11 // pred_check_branch
          %383 = sbr.rel (%p381) target = $region24
        $region23: #{fwd.5} parent=11 // pred_region
          _
        $region24: #{fwd.5} parent=11 // pred_fallthru
          _
        // Predicated region
        $region25: #{fwd.5} parent=11 // pred_check
          %p384 = pneg %p110
        $region26: #{fwd.5} parent=11 // pred_check_branch
          %386 = sbr.rel (%p384) target = $region28
        $region27: #{fwd.5} parent=11 // pred_region
          _
        $region28: #{fwd.5} parent=11 // pred_fallthru
          _
        // Predicated region
        $region29: #{fwd.5} parent=11 // pred_check
          %p387 = pneg %p131
        $region30: #{fwd.5} parent=11 // pred_check_branch
          %389 = sbr.rel (%p387) target = $region32
        $region31: #{fwd.5} parent=11 // pred_region
          _
        $region32: #{fwd.5} parent=11 // pred_fallthru
          _
      $region12: #{fwd.5} parent=5 // pred_fallthru
        _
      %p390 = scmp.lt.s32.totalorder %s26, 2
      // Predicated region
      $region33: #{fwd.5} parent=5 // pred_check
        %p391 = pneg %p390
      $region34: #{fwd.5} parent=5 // pred_check_branch
        %393 = sbr.rel (%p391) target = $region36
      $region35: #{fwd.5} parent=5 // pred_region
        // Predicated region
        $region37: #{fwd.5} parent=35 // pred_check
          %p394 = pneg %p151
        $region38: #{fwd.5} parent=35 // pred_check_branch
          %396 = sbr.rel (%p394) target = $region40
        $region39: #{fwd.5} parent=35 // pred_region
          %p397 = scmp.lt.s32.totalorder %s26, 1
          %s398 = scalar_select %p397, %s26, 1
          %s399 = smul.addr %s398, 48
          %s400 = smul.addr %s399, 4
          %s401 = scalar_lea.vmem %s5, %s400
        $region40: #{fwd.5} parent=35 // pred_fallthru
          _
        // Predicated region
        $region41: #{fwd.5} parent=35 // pred_check
          %p402 = pneg %p177
        $region42: #{fwd.5} parent=35 // pred_check_branch
          %404 = sbr.rel (%p402) target = $region44
        $region43: #{fwd.5} parent=35 // pred_region
          %p405 = scmp.lt.s32.totalorder %s26, 1
          %s406 = scalar_select %p405, %s26, 1
          %s407 = scalar_lea.vmem %s6, %s406
        $region44: #{fwd.5} parent=35 // pred_fallthru
          _
        // Predicated region
        $region45: #{fwd.5} parent=35 // pred_check
          %p408 = pneg %p203
        $region46: #{fwd.5} parent=35 // pred_check_branch
          %410 = sbr.rel (%p408) target = $region48
        $region47: #{fwd.5} parent=35 // pred_region
          %p411 = scmp.lt.s32.totalorder %s26, 1
          %s412 = scalar_select %p411, %s26, 1
          %s413 = smul.addr %s412, 16
          %s414 = smul.addr %s413, 4
          %s415 = scalar_lea.vmem %s7, %s414
        $region48: #{fwd.5} parent=35 // pred_fallthru
          _
        // Predicated region
        $region49: #{fwd.5} parent=35 // pred_check
          %p416 = pneg %p229
        $region50: #{fwd.5} parent=35 // pred_check_branch
          %418 = sbr.rel (%p416) target = $region52
        $region51: #{fwd.5} parent=35 // pred_region
          %p419 = scmp.lt.s32.totalorder %s26, 1
          %s420 = scalar_select %p419, %s26, 1
          %s421 = scalar_lea.vmem %s8, %s420
        $region52: #{fwd.5} parent=35 // pred_fallthru
          _
        // Predicated region
        $region53: #{fwd.5} parent=35 // pred_check
          %p422 = pneg %p255
        $region54: #{fwd.5} parent=35 // pred_check_branch
          %424 = sbr.rel (%p422) target = $region56
        $region55: #{fwd.5} parent=35 // pred_region
          %s425 = sand.u32 %s245, 1
          %s426 = scalar_lea.sflag [#allocation7], %s425
          %s427 = sand.u32 %s245, 1
          %s428 = smul.addr %s427, 128
          %s429 = scalar_lea.vmem [#allocation6], %s428
          %431 = vsyncadd %s426, 0
          %s432 = smul.addr %s26, 32
          %s433 = smul.addr %s432, 4
          %s434 = scalar_lea.hbm %s9, %s433
          %s435 = sshll.u32 %s434, 4
          %s436 = int_to_ptr.hbm [resolvable:$true] %s435
          %s437 = sshll.u32 %s429, 4
          %s438 = int_to_ptr.vmem [resolvable:$true] %s437
          %443 = dma.hbm_to_vmem [thread:$0]  %s436, 2048, %s438, %s426, 64, 64, 4
        $region56: #{fwd.5} parent=35 // pred_fallthru
          _
        // Predicated region
        $region57: #{fwd.5} parent=35 // pred_check
          %p444 = pneg %p281
        $region58: #{fwd.5} parent=35 // pred_check_branch
          %446 = sbr.rel (%p444) target = $region60
        $region59: #{fwd.5} parent=35 // pred_region
          %p447 = scmp.lt.s32.totalorder %s26, 1
          %s448 = scalar_select %p447, %s26, 1
          %s449 = scalar_lea.vmem %s10, %s448
        $region60: #{fwd.5} parent=35 // pred_fallthru
          _
        // Predicated region
        $region61: #{fwd.5} parent=35 // pred_check
          %p450 = pneg %p307
        $region62: #{fwd.5} parent=35 // pred_check_branch
          %452 = sbr.rel (%p450) target = $region64
        $region63: #{fwd.5} parent=35 // pred_region
          %s453 = sand.u32 %s26, 1
          %s454 = scalar_lea.sflag [#allocation10], %s453
          %s455 = sand.u32 %s297, 1
          %s456 = smul.addr %s455, 64
          %s457 = scalar_lea.vmem [#allocation9], %s456
          %459 = vsyncadd %s454, 0
          %s460 = smul.addr %s26, 16
          %s461 = smul.addr %s460, 4
          %s462 = scalar_lea.hbm %s11, %s461
          %s463 = sshll.u32 %s462, 4
          %s464 = int_to_ptr.hbm [resolvable:$true] %s463
          %s465 = sshll.u32 %s457, 4
          %s466 = int_to_ptr.vmem [resolvable:$true] %s465
          %471 = dma.hbm_to_vmem [thread:$0]  %s464, 1024, %s466, %s454, 64, 64, 4
        $region64: #{fwd.5} parent=35 // pred_fallthru
          _
        // Predicated region
        $region65: #{fwd.5} parent=35 // pred_check
          %p472 = pneg %p333
        $region66: #{fwd.5} parent=35 // pred_check_branch
          %474 = sbr.rel (%p472) target = $region68
        $region67: #{fwd.5} parent=35 // pred_region
          %s475 = sand.u32 %s26, 1
          %s476 = scalar_lea.sflag [#allocation10], %s475
          %s477 = sand.u32 %s323, 1
          %s478 = scalar_lea.vmem [#allocation11], %s477
          %480 = vsyncadd %s476, 0
          %s481 = scalar_lea.hbm %s12, %s26
          %s483 = sshll.u32 %s481, 4
          %s484 = int_to_ptr.hbm [resolvable:$true] %s483
          %s485 = sshll.u32 %s478, 4
          %s486 = int_to_ptr.vmem [resolvable:$true] %s485
          %488 = dma.hbm_to_vmem [thread:$0]  %s484, 16, %s486, %s476
        $region68: #{fwd.5} parent=35 // pred_fallthru
          _
      $region36: #{fwd.5} parent=5 // pred_fallthru
        _
      %p489 = scmp.le.s32.totalorder 1, %s26
      %p490 = scmp.lt.s32.totalorder %s26, 3
      %p491 = pnand %p489, %p490
      %p492 = pneg %p491
      // Predicated region
      $region69: #{fwd.5} parent=5 // pred_check
        _
      $region70: #{fwd.5} parent=5 // pred_check_branch
        %494 = sbr.rel (%p491) target = $region72
      $region71: #{fwd.5} parent=5 // pred_region
        %s495 = ssub.s32 %s26, 1
        %s496 = sand.u32 %s248, 1
        %s497 = scalar_lea.sflag [#allocation7], %s496
        %s498 = sand.u32 %s248, 1
        %s499 = smul.addr %s498, 128
        %s500 = scalar_lea.vmem [#allocation6], %s499
        // Predicated region
        $region73: #{fwd.5} parent=71 // pred_check
          %p501 = pneg %p261
        $region74: #{fwd.5} parent=71 // pred_check_branch
          %503 = sbr.rel (%p501) target = $region76
        $region75: #{fwd.5} parent=71 // pred_region
          %505 = dma.done %s497, 2048
        $region76: #{fwd.5} parent=71 // pred_fallthru
          _
        %s506 = sand.u32 %s31, 1
        %s507 = scalar_lea.sflag [#allocation10], %s506
        %s508 = sand.u32 %s300, 1
        %s509 = smul.addr %s508, 64
        %s510 = scalar_lea.vmem [#allocation9], %s509
        // Predicated region
        $region77: #{fwd.5} parent=71 // pred_check
          %p511 = pneg %p313
        $region78: #{fwd.5} parent=71 // pred_check_branch
          %513 = sbr.rel (%p511) target = $region80
        $region79: #{fwd.5} parent=71 // pred_region
          %515 = dma.done %s507, 1024
        $region80: #{fwd.5} parent=71 // pred_fallthru
          _
        %s516 = sand.u32 %s31, 1
        %s517 = scalar_lea.sflag [#allocation10], %s516
        %s518 = sand.u32 %s326, 1
        %s519 = scalar_lea.vmem [#allocation11], %s518
        // Predicated region
        $region81: #{fwd.5} parent=71 // pred_check
          %p520 = pneg %p339
        $region82: #{fwd.5} parent=71 // pred_check_branch
          %522 = sbr.rel (%p520) target = $region84
        $region83: #{fwd.5} parent=71 // pred_region
          %524 = dma.done %s517, 16
        $region84: #{fwd.5} parent=71 // pred_fallthru
          _
        %p525 = pneg %p47
        %p526 = pneg %p44
        %p527 = pneg %p68
        %p528 = pneg %p65
        %p529 = pneg %p89
        %p530 = pneg %p86
        %p531 = pneg %p110
        %p532 = pneg %p107
        %p533 = pneg %p131
        %p534 = pneg %p128
        %p535 = scmp.lt.s32.totalorder %s31, 1
        %s536 = scalar_select %p535, %s31, 1
        %s537 = smul.addr %s536, 48
        %s538 = smul.addr %s537, 4
        %s539 = scalar_lea.vmem %s5, %s538
        %p540 = pneg %p157
        %p541 = pneg %p154
        %p542 = scmp.lt.s32.totalorder %s31, 1
        %s543 = scalar_select %p542, %s31, 1
        %s544 = scalar_lea.vmem %s6, %s543
        %p545 = pneg %p183
        %p546 = pneg %p180
        %p547 = scmp.lt.s32.totalorder %s31, 1
        %s548 = scalar_select %p547, %s31, 1
        %s549 = smul.addr %s548, 16
        %s550 = smul.addr %s549, 4
        %s551 = scalar_lea.vmem %s7, %s550
        %p552 = pneg %p209
        %p553 = pneg %p206
        %p554 = scmp.lt.s32.totalorder %s31, 1
        %s555 = scalar_select %p554, %s31, 1
        %s556 = scalar_lea.vmem %s8, %s555
        %p557 = pneg %p235
        %p558 = pneg %p232
        %s559 = sand.u32 %s248, 1
        %s560 = scalar_lea.sflag [#allocation7], %s559
        %s561 = sand.u32 %s248, 1
        %s562 = smul.addr %s561, 128
        %s563 = scalar_lea.vmem [#allocation6], %s562
        %p564 = pneg %p261
        %p565 = pneg %p258
        %p566 = scmp.lt.s32.totalorder %s31, 1
        %s567 = scalar_select %p566, %s31, 1
        %s568 = scalar_lea.vmem %s10, %s567
        %p569 = pneg %p287
        %p570 = pneg %p284
        %s571 = sand.u32 %s31, 1
        %s572 = scalar_lea.sflag [#allocation10], %s571
        %s573 = sand.u32 %s300, 1
        %s574 = smul.addr %s573, 64
        %s575 = scalar_lea.vmem [#allocation9], %s574
        %p576 = pneg %p313
        %p577 = pneg %p310
        %s578 = sand.u32 %s31, 1
        %s579 = scalar_lea.sflag [#allocation10], %s578
        %s580 = sand.u32 %s326, 1
        %s581 = scalar_lea.vmem [#allocation11], %s580
        %p582 = pneg %p339
        %p583 = pneg %p336
        %p584 = pneg %p360
        %p585 = pneg %p357
        %p586 = scmp.lt.s32.totalorder %s31, 1
        %s587 = scalar_select %p586, %s31, 1
        %s588 = smul.addr %s587, 48
        %s589 = smul.addr %s588, 4
        %s590 = scalar_lea.vmem %s5, %s589
        %p591 = scmp.lt.s32.totalorder %s31, 1
        %s592 = scalar_select %p591, %s31, 1
        %s593 = scalar_lea.vmem %s6, %s592
        %p594 = scmp.lt.s32.totalorder %s31, 1
        %s595 = scalar_select %p594, %s31, 1
        %s596 = smul.addr %s595, 16
        %s597 = smul.addr %s596, 4
        %s598 = scalar_lea.vmem %s7, %s597
        %p599 = scmp.lt.s32.totalorder %s31, 1
        %s600 = scalar_select %p599, %s31, 1
        %s601 = scalar_lea.vmem %s8, %s600
        %p602 = scmp.lt.s32.totalorder %s31, 1
        %s603 = scalar_select %p602, %s31, 1
        %s604 = scalar_lea.vmem %s10, %s603
        %p606 = scmp.eq.s32.totalorder %s31, 0
        // Predicated region
        $region85: #{fwd.5} parent=71 // pred_check
          %p607 = pneg %p606
        $region86: #{fwd.5} parent=71 // pred_check_branch
          %609 = sbr.rel (%p607) target = $region88
        $region87: #{fwd.5} parent=71 // pred_region
          %v610 = vld [vmem:[%s0] sm:$0xff]
          %v611 = vld [vmem:[%s0 + $0x8] sm:$0xff]
          %v612 = vld [vmem:[%s0 + $0x10] sm:$0xff]
          %v613 = vld [vmem:[%s0 + $0x18] sm:$0xf]
          %614 = vst [vmem:[#allocation12] sm:$0xff] %v610
          %615 = vst [vmem:[#allocation12 + $0x8] sm:$0xff] %v611
          %616 = vst [vmem:[#allocation12 + $0x10] sm:$0xff] %v612
          %617 = vst [vmem:[#allocation12 + $0x18] sm:$0xf] %v613
          %v618 = vlaneseq
          %v619 = vand.u32 %v618, 127
          %v620 = vld [vmem:[%s2] sm:$0xff]
          %v621 = vld [vmem:[%s2 + $0x8] sm:$0xff]
          %v622 = vld [vmem:[%s2 + $0x10] sm:$0xff]
          %v623 = vld [vmem:[%s2 + $0x18] sm:$0xff]
          %v624 = vld [vmem:[%s2 + $0x20] sm:$0xff]
          %v625 = vld [vmem:[%s2 + $0x28] sm:$0xff]
          %v626 = vld [vmem:[%s2 + $0x30] sm:$0xff]
          %627 = vset.pattern.permute.xlu0 0
          %628 = vperm.xlu0 %627, %v620
          %v629 = vpop.permute.xlu0 %628
          %630 = vset.pattern.permute.xlu0 0
          %631 = vperm.xlu0 %630, %v621
          %v632 = vpop.permute.xlu0 %631
          %633 = vset.pattern.permute.xlu0 0
          %634 = vperm.xlu0 %633, %v622
          %v635 = vpop.permute.xlu0 %634
          %636 = vset.pattern.permute.xlu0 0
          %637 = vperm.xlu0 %636, %v623
          %v638 = vpop.permute.xlu0 %637
          %639 = vset.pattern.permute.xlu0 0
          %640 = vperm.xlu0 %639, %v624
          %v641 = vpop.permute.xlu0 %640
          %642 = vset.pattern.permute.xlu0 0
          %643 = vperm.xlu0 %642, %v625
          %v644 = vpop.permute.xlu0 %643
          %645 = vset.pattern.permute.xlu0 0
          %646 = vperm.xlu0 %645, %v626
          %v647 = vpop.permute.xlu0 %646
          %vm648 = vcmp.eq.s32.totalorder %v619, %v629
          %vm649 = vcmp.eq.s32.totalorder %v619, %v632
          %vm650 = vcmp.eq.s32.totalorder %v619, %v635
          %vm651 = vcmp.eq.s32.totalorder %v619, %v638
          %vm652 = vcmp.eq.s32.totalorder %v619, %v641
          %vm653 = vcmp.eq.s32.totalorder %v619, %v644
          %vm654 = vcmp.eq.s32.totalorder %v619, %v647
          %v655 = vsel %vm648, 1.0, 0.0
          %v656 = vsel %vm649, 1.0, 0.0
          %v657 = vsel %vm650, 1.0, 0.0
          %v658 = vsel %vm651, 1.0, 0.0
          %v659 = vsel %vm652, 1.0, 0.0
          %v660 = vsel %vm653, 1.0, 0.0
          %v661 = vsel %vm654, 1.0, 0.0
          %v662 = vpack.c.bf16 %v655, %v655
          %v663 = vpack.c.bf16 %v656, %v656
          %v664 = vpack.c.bf16 %v657, %v657
          %v665 = vpack.c.bf16 %v658, %v658
          %v666 = vpack.c.bf16 %v659, %v659
          %v667 = vpack.c.bf16 %v660, %v660
          %v668 = vpack.c.bf16 %v661, %v661
          %vm669 = vcmask 224256
          %670 = vst.msk [vmem:[#allocation2] sm:$0xf] %vm669, %v662
          %671 = vst.msk [vmem:[#allocation2 + $0x4] sm:$0xf] %vm669, %v663
          %672 = vst.msk [vmem:[#allocation2 + $0x8] sm:$0xf] %vm669, %v664
          %673 = vst.msk [vmem:[#allocation2 + $0xc] sm:$0xf] %vm669, %v665
          %674 = vst.msk [vmem:[#allocation2 + $0x10] sm:$0xf] %vm669, %v666
          %675 = vst.msk [vmem:[#allocation2 + $0x14] sm:$0xf] %vm669, %v667
          %676 = vst.msk [vmem:[#allocation2 + $0x18] sm:$0xf] %vm669, %v668
          %v677 = vld [vmem:[%s3] sm:$0xff]
          %v678 = vld [vmem:[%s3 + $0x8] sm:$0xff]
          %v679 = vld [vmem:[%s3 + $0x10] sm:$0xff]
          %v680 = vld [vmem:[%s3 + $0x18] sm:$0xff]
          %v681 = vld [vmem:[%s3 + $0x20] sm:$0xff]
          %v682 = vld [vmem:[%s3 + $0x28] sm:$0xff]
          %v683 = vld [vmem:[%s3 + $0x30] sm:$0xff]
          %684 = vset.pattern.permute.xlu0 0
          %685 = vperm.xlu0 %684, %v677
          %v686 = vpop.permute.xlu0 %685
          %687 = vset.pattern.permute.xlu0 0
          %688 = vperm.xlu0 %687, %v678
          %v689 = vpop.permute.xlu0 %688
          %690 = vset.pattern.permute.xlu0 0
          %691 = vperm.xlu0 %690, %v679
          %v692 = vpop.permute.xlu0 %691
          %693 = vset.pattern.permute.xlu0 0
          %694 = vperm.xlu0 %693, %v680
          %v695 = vpop.permute.xlu0 %694
          %696 = vset.pattern.permute.xlu0 0
          %697 = vperm.xlu0 %696, %v681
          %v698 = vpop.permute.xlu0 %697
          %699 = vset.pattern.permute.xlu0 0
          %700 = vperm.xlu0 %699, %v682
          %v701 = vpop.permute.xlu0 %700
          %702 = vset.pattern.permute.xlu0 0
          %703 = vperm.xlu0 %702, %v683
          %v704 = vpop.permute.xlu0 %703
          %vm705 = vcmp.eq.s32.totalorder %v619, %v686
          %vm706 = vcmp.eq.s32.totalorder %v619, %v689
          %vm707 = vcmp.eq.s32.totalorder %v619, %v692
          %vm708 = vcmp.eq.s32.totalorder %v619, %v695
          %vm709 = vcmp.eq.s32.totalorder %v619, %v698
          %vm710 = vcmp.eq.s32.totalorder %v619, %v701
          %vm711 = vcmp.eq.s32.totalorder %v619, %v704
          %v712 = vsel %vm705, 1.0, 0.0
          %v713 = vsel %vm706, 1.0, 0.0
          %v714 = vsel %vm707, 1.0, 0.0
          %v715 = vsel %vm708, 1.0, 0.0
          %v716 = vsel %vm709, 1.0, 0.0
          %v717 = vsel %vm710, 1.0, 0.0
          %v718 = vsel %vm711, 1.0, 0.0
          %v719 = vpack.c.bf16 %v712, %v712
          %v720 = vpack.c.bf16 %v713, %v713
          %v721 = vpack.c.bf16 %v714, %v714
          %v722 = vpack.c.bf16 %v715, %v715
          %v723 = vpack.c.bf16 %v716, %v716
          %v724 = vpack.c.bf16 %v717, %v717
          %v725 = vpack.c.bf16 %v718, %v718
          %726 = vst.msk [vmem:[#allocation3] sm:$0xf] %vm669, %v719
          %727 = vst.msk [vmem:[#allocation3 + $0x4] sm:$0xf] %vm669, %v720
          %728 = vst.msk [vmem:[#allocation3 + $0x8] sm:$0xf] %vm669, %v721
          %729 = vst.msk [vmem:[#allocation3 + $0xc] sm:$0xf] %vm669, %v722
          %730 = vst.msk [vmem:[#allocation3 + $0x10] sm:$0xf] %vm669, %v723
          %731 = vst.msk [vmem:[#allocation3 + $0x14] sm:$0xf] %vm669, %v724
          %732 = vst.msk [vmem:[#allocation3 + $0x18] sm:$0xf] %vm669, %v725
          %v733 = vlaneseq
          %v734 = vshrl.u32 %v733, 7
          %v735 = vadd.s32 %v734, 8
          %v736 = vadd.s32 %v734, 16
          %v737 = vadd.s32 %v734, 24
          %v738 = vld [vmem:[%s4] sm:$0x1]
          %v739 = vperm.slane %v738, 0
          %vm740 = vcmp.eq.s32.totalorder %v734, %v739
          %vm741 = vcmp.eq.s32.totalorder %v735, %v739
          %vm742 = vcmp.eq.s32.totalorder %v736, %v739
          %vm743 = vcmp.eq.s32.totalorder %v737, %v739
          %v744 = vsel %vm740, 1.0, 0.0
          %v745 = vsel %vm741, 1.0, 0.0
          %v746 = vsel %vm742, 1.0, 0.0
          %v747 = vsel %vm743, 1.0, 0.0
          %v748 = vpack.c.bf16 %v744, %v744
          %v749 = vpack.c.bf16 %v745, %v745
          %v750 = vpack.c.bf16 %v746, %v746
          %v751 = vpack.c.bf16 %v747, %v747
          %vm752 = vcmask 453632
          %753 = vst.msk [vmem:[#allocation4] sm:$0xf] %vm752, %v748
          %754 = vst.msk [vmem:[#allocation4 + $0x4] sm:$0xf] %vm752, %v749
          %755 = vst.msk [vmem:[#allocation4 + $0x8] sm:$0xf] %vm752, %v750
          %vm756 = vcmask 451584
          %757 = vst.msk [vmem:[#allocation4 + $0xc] sm:$0x3] %vm756, %v751
          %v758 = vld [vmem:[%s1] sm:$0xff]
          %v759 = vld [vmem:[%s1 + $0x8] sm:$0xff]
          %v760 = vld [vmem:[%s1 + $0x10] sm:$0xff]
          %v761 = vld [vmem:[%s1 + $0x18] sm:$0xf]
          %v762 = vpack.c.bf16 %v759, %v758
          %v763 = vpack.c.bf16 %v761, %v760
          %v764 = vld [vmem:[#allocation3] sm:$0xf]
          %v765 = vld [vmem:[#allocation3 + $0x4] sm:$0xf]
          %v766 = vld [vmem:[#allocation3 + $0x8] sm:$0xf]
          %v767 = vld [vmem:[#allocation3 + $0xc] sm:$0xf]
          %v768 = vld [vmem:[#allocation3 + $0x10] sm:$0xf]
          %v769 = vld [vmem:[#allocation3 + $0x14] sm:$0xf]
          %v770 = vld [vmem:[#allocation3 + $0x18] sm:$0xf]
          %v778 = vunpack.c.l.b16 %v764
          %v779 = vunpack.c.l.b16 %v765
          %v780 = vunpack.c.l.b16 %v766
          %v781 = vunpack.c.l.b16 %v767
          %v782 = vunpack.c.l.b16 %v768
          %v783 = vunpack.c.l.b16 %v769
          %v784 = vunpack.c.l.b16 %v770
          %v785 = vpack.c.b16 %v779, %v778
          %v786 = vpack.c.b16 %v781, %v780
          %v787 = vpack.c.b16 %v783, %v782
          %v788 = vpack.c.b16 %v784, %v784
          %vm789 = vcmask 228352
          %v791 = vsel %vm789, %v785, 0
          %v794 = vsel %vm789, %v786, 0
          %v797 = vsel %vm789, %v787, 0
          %v800 = vsel %vm789, %v788, 0
          %vm802 = vcmask 1045504
          %v804 = vsel %vm802, %v763, 0
          %806 = vmatpush.bf16.msra.mxu0 0
          %807 = vmatpush.bf16.msra.mxu0 0
          %808 = vmatpush.bf16.msra.mxu0 0
          %809 = vmatpush.bf16.msra.mxu0 0
          %810 = vmatpush.bf16.msra.mxu0 0
          %811 = vmatpush.bf16.msra.mxu0 0
          %812 = vmatpush.bf16.msra.mxu0 %v804
          %813 = vmatpush.bf16.msra.mxu0 %v762
          %814 = vmatmul.bf16.gmra.mxu0 %v791
          %v815 = vpop.f32.mrf.mxu0
          %v816 = vadd.f32 0.0, %v815
          %v817 = vpop.f32.mrf.mxu0
          %v818 = vadd.f32 0.0, %v817
          %819 = vmatmul.bf16.gmra.mxu0 %v794
          %v820 = vpop.f32.mrf.mxu0
          %v821 = vadd.f32 0.0, %v820
          %v822 = vpop.f32.mrf.mxu0
          %v823 = vadd.f32 0.0, %v822
          %824 = vmatmul.bf16.gmra.mxu0 %v797
          %v825 = vpop.f32.mrf.mxu0
          %v826 = vadd.f32 0.0, %v825
          %v827 = vpop.f32.mrf.mxu0
          %v828 = vadd.f32 0.0, %v827
          %829 = vmatmul.bf16.gmra.mxu0 %v800
          %v830 = vpop.f32.mrf.mxu0
          %v831 = vadd.f32 0.0, %v830
          %v832 = vpop.f32.mrf.mxu0
          %833 = vdwg.mxu0
          %v834 = vld [vmem:[#allocation2] sm:$0xf]
          %v835 = vld [vmem:[#allocation2 + $0x4] sm:$0xf]
          %v836 = vld [vmem:[#allocation2 + $0x8] sm:$0xf]
          %v837 = vld [vmem:[#allocation2 + $0xc] sm:$0xf]
          %v838 = vld [vmem:[#allocation2 + $0x10] sm:$0xf]
          %v839 = vld [vmem:[#allocation2 + $0x14] sm:$0xf]
          %v840 = vld [vmem:[#allocation2 + $0x18] sm:$0xf]
          %v848 = vunpack.c.l.b16 %v834
          %v849 = vunpack.c.l.b16 %v835
          %v850 = vunpack.c.l.b16 %v836
          %v851 = vunpack.c.l.b16 %v837
          %v852 = vunpack.c.l.b16 %v838
          %v853 = vunpack.c.l.b16 %v839
          %v854 = vunpack.c.l.b16 %v840
          %v855 = vpack.c.b16 %v849, %v848
          %v856 = vpack.c.b16 %v851, %v850
          %v857 = vpack.c.b16 %v853, %v852
          %v858 = vpack.c.b16 %v854, %v854
          %v860 = vsel %vm789, %v855, 0
          %v863 = vsel %vm789, %v856, 0
          %v866 = vsel %vm789, %v857, 0
          %v869 = vsel %vm789, %v858, 0
          %871 = vmatpush.bf16.msra.mxu0 0
          %872 = vmatpush.bf16.msra.mxu0 0
          %873 = vmatpush.bf16.msra.mxu0 0
          %874 = vmatpush.bf16.msra.mxu0 0
          %875 = vmatpush.bf16.msra.mxu0 0
          %876 = vmatpush.bf16.msra.mxu0 0
          %877 = vmatpush.bf16.msra.mxu0 %v804
          %878 = vmatpush.bf16.msra.mxu0 %v762
          %879 = vmatmul.bf16.gmra.mxu0 %v860
          %v880 = vpop.f32.mrf.mxu0
          %v881 = vadd.f32 0.0, %v880
          %v882 = vpop.f32.mrf.mxu0
          %v883 = vadd.f32 0.0, %v882
          %884 = vmatmul.bf16.gmra.mxu0 %v863
          %v885 = vpop.f32.mrf.mxu0
          %v886 = vadd.f32 0.0, %v885
          %v887 = vpop.f32.mrf.mxu0
          %v888 = vadd.f32 0.0, %v887
          %889 = vmatmul.bf16.gmra.mxu0 %v866
          %v890 = vpop.f32.mrf.mxu0
          %v891 = vadd.f32 0.0, %v890
          %v892 = vpop.f32.mrf.mxu0
          %v893 = vadd.f32 0.0, %v892
          %894 = vmatmul.bf16.gmra.mxu0 %v869
          %v895 = vpop.f32.mrf.mxu0
          %v896 = vadd.f32 0.0, %v895
          %v897 = vpop.f32.mrf.mxu0
          %898 = vdwg.mxu0
          %v899 = vsub.f32 %v816, %v881
          %v900 = vsub.f32 %v818, %v883
          %v901 = vsub.f32 %v821, %v886
          %v902 = vsub.f32 %v823, %v888
          %v903 = vsub.f32 %v826, %v891
          %v904 = vsub.f32 %v828, %v893
          %v905 = vsub.f32 %v831, %v896
          %v906 = vpack.c.bf16 %v899, %v899
          %v907 = vpack.c.bf16 %v900, %v900
          %v908 = vpack.c.bf16 %v901, %v901
          %v909 = vpack.c.bf16 %v902, %v902
          %v910 = vpack.c.bf16 %v903, %v903
          %v911 = vpack.c.bf16 %v904, %v904
          %v912 = vpack.c.bf16 %v905, %v905
          %913 = vst [vmem:[#allocation5] sm:$0xf] %v906
          %914 = vst [vmem:[#allocation5 + $0x4] sm:$0xf] %v907
          %915 = vst [vmem:[#allocation5 + $0x8] sm:$0xf] %v908
          %916 = vst [vmem:[#allocation5 + $0xc] sm:$0xf] %v909
          %917 = vst [vmem:[#allocation5 + $0x10] sm:$0xf] %v910
          %918 = vst [vmem:[#allocation5 + $0x14] sm:$0xf] %v911
          %919 = vst [vmem:[#allocation5 + $0x18] sm:$0xf] %v912
        $region88: #{fwd.5} parent=71 // pred_fallthru
          _
        %v920 = vld [vmem:[#allocation12] sm:$0xff]
        %v921 = vld [vmem:[#allocation12 + $0x8] sm:$0xff]
        %v922 = vld [vmem:[#allocation12 + $0x10] sm:$0xff]
        %v923 = vld [vmem:[#allocation12 + $0x18] sm:$0xf]
        %v924 = vpack.c.bf16 %v920, %v920
        %v925 = vpack.c.bf16 %v921, %v921
        %v926 = vpack.c.bf16 %v922, %v922
        %v927 = vpack.c.bf16 %v923, %v923
        %v928 = vld [vmem:[#allocation2] sm:$0xf]
        %v929 = vld [vmem:[#allocation2 + $0x4] sm:$0xf]
        %v930 = vld [vmem:[#allocation2 + $0x8] sm:$0xf]
        %v931 = vld [vmem:[#allocation2 + $0xc] sm:$0xf]
        %v932 = vld [vmem:[#allocation2 + $0x10] sm:$0xf]
        %v933 = vld [vmem:[#allocation2 + $0x14] sm:$0xf]
        %v934 = vld [vmem:[#allocation2 + $0x18] sm:$0xf]
        %v942 = vunpack.c.l.b16 %v928
        %v943 = vunpack.c.l.b16 %v929
        %v944 = vunpack.c.l.b16 %v930
        %v945 = vunpack.c.l.b16 %v931
        %v946 = vunpack.c.l.b16 %v932
        %v947 = vunpack.c.l.b16 %v933
        %v948 = vunpack.c.l.b16 %v934
        %v949 = vpack.c.b16 %v943, %v942
        %v950 = vpack.c.b16 %v945, %v944
        %v951 = vpack.c.b16 %v947, %v946
        %v952 = vpack.c.b16 %v948, %v948
        %v957 = vunpack.c.l.b16 %v924
        %v958 = vunpack.c.l.b16 %v925
        %v959 = vunpack.c.l.b16 %v926
        %v960 = vunpack.c.l.b16 %v927
        %v961 = vpack.c.b16 %v958, %v957
        %v962 = vpack.c.b16 %v960, %v959
        %vm964 = vcmask 228352
        %v966 = vsel %vm964, %v949, 0
        %v969 = vsel %vm964, %v950, 0
        %v972 = vsel %vm964, %v951, 0
        %v975 = vsel %vm964, %v952, 0
        %vm977 = vcmask 1045504
        %v979 = vsel %vm977, %v962, 0
        %981 = vmatpush.bf16.msra.mxu0 0
        %982 = vmatpush.bf16.msra.mxu0 0
        %983 = vmatpush.bf16.msra.mxu0 0
        %984 = vmatpush.bf16.msra.mxu0 0
        %985 = vmatpush.bf16.msra.mxu0 0
        %986 = vmatpush.bf16.msra.mxu0 0
        %987 = vmatpush.bf16.msra.mxu0 %v979
        %988 = vmatpush.bf16.msra.mxu0 %v961
        %989 = vmatmul.bf16.gmra.mxu0 %v966
        %v990 = vpop.f32.mrf.mxu0
        %v991 = vadd.f32 0.0, %v990
        %v992 = vpop.f32.mrf.mxu0
        %v993 = vadd.f32 0.0, %v992
        %994 = vmatmul.bf16.gmra.mxu0 %v969
        %v995 = vpop.f32.mrf.mxu0
        %v996 = vadd.f32 0.0, %v995
        %v997 = vpop.f32.mrf.mxu0
        %v998 = vadd.f32 0.0, %v997
        %999 = vmatmul.bf16.gmra.mxu0 %v972
        %v1000 = vpop.f32.mrf.mxu0
        %v1001 = vadd.f32 0.0, %v1000
        %v1002 = vpop.f32.mrf.mxu0
        %v1003 = vadd.f32 0.0, %v1002
        %1004 = vmatmul.bf16.gmra.mxu0 %v975
        %v1005 = vpop.f32.mrf.mxu0
        %v1006 = vadd.f32 0.0, %v1005
        %v1007 = vpop.f32.mrf.mxu0
        %1008 = vdwg.mxu0
        %v1009 = vld [vmem:[#allocation3] sm:$0xf]
        %v1010 = vld [vmem:[#allocation3 + $0x4] sm:$0xf]
        %v1011 = vld [vmem:[#allocation3 + $0x8] sm:$0xf]
        %v1012 = vld [vmem:[#allocation3 + $0xc] sm:$0xf]
        %v1013 = vld [vmem:[#allocation3 + $0x10] sm:$0xf]
        %v1014 = vld [vmem:[#allocation3 + $0x14] sm:$0xf]
        %v1015 = vld [vmem:[#allocation3 + $0x18] sm:$0xf]
        %v1023 = vunpack.c.l.b16 %v1009
        %v1024 = vunpack.c.l.b16 %v1010
        %v1025 = vunpack.c.l.b16 %v1011
        %v1026 = vunpack.c.l.b16 %v1012
        %v1027 = vunpack.c.l.b16 %v1013
        %v1028 = vunpack.c.l.b16 %v1014
        %v1029 = vunpack.c.l.b16 %v1015
        %v1030 = vpack.c.b16 %v1024, %v1023
        %v1031 = vpack.c.b16 %v1026, %v1025
        %v1032 = vpack.c.b16 %v1028, %v1027
        %v1033 = vpack.c.b16 %v1029, %v1029
        %v1035 = vsel %vm964, %v1030, 0
        %v1038 = vsel %vm964, %v1031, 0
        %v1041 = vsel %vm964, %v1032, 0
        %v1044 = vsel %vm964, %v1033, 0
        %1046 = vmatpush.bf16.msra.mxu0 0
        %1047 = vmatpush.bf16.msra.mxu0 0
        %1048 = vmatpush.bf16.msra.mxu0 0
        %1049 = vmatpush.bf16.msra.mxu0 0
        %1050 = vmatpush.bf16.msra.mxu0 0
        %1051 = vmatpush.bf16.msra.mxu0 0
        %1052 = vmatpush.bf16.msra.mxu0 %v979
        %1053 = vmatpush.bf16.msra.mxu0 %v961
        %1054 = vmatmul.bf16.gmra.mxu0 %v1035
        %v1055 = vpop.f32.mrf.mxu0
        %v1056 = vadd.f32 0.0, %v1055
        %v1057 = vpop.f32.mrf.mxu0
        %v1058 = vadd.f32 0.0, %v1057
        %1059 = vmatmul.bf16.gmra.mxu0 %v1038
        %v1060 = vpop.f32.mrf.mxu0
        %v1061 = vadd.f32 0.0, %v1060
        %v1062 = vpop.f32.mrf.mxu0
        %v1063 = vadd.f32 0.0, %v1062
        %1064 = vmatmul.bf16.gmra.mxu0 %v1041
        %v1065 = vpop.f32.mrf.mxu0
        %v1066 = vadd.f32 0.0, %v1065
        %v1067 = vpop.f32.mrf.mxu0
        %v1068 = vadd.f32 0.0, %v1067
        %1069 = vmatmul.bf16.gmra.mxu0 %v1044
        %v1070 = vpop.f32.mrf.mxu0
        %v1071 = vadd.f32 0.0, %v1070
        %v1072 = vpop.f32.mrf.mxu0
        %1073 = vdwg.mxu0
        %v1074 = vpack.c.bf16 %v991, %v991
        %v1075 = vpack.c.bf16 %v993, %v993
        %v1076 = vpack.c.bf16 %v996, %v996
        %v1077 = vpack.c.bf16 %v998, %v998
        %v1078 = vpack.c.bf16 %v1001, %v1001
        %v1079 = vpack.c.bf16 %v1003, %v1003
        %v1080 = vpack.c.bf16 %v1006, %v1006
        %v1081 = vpack.c.bf16 %v1056, %v1056
        %v1082 = vpack.c.bf16 %v1058, %v1058
        %v1083 = vpack.c.bf16 %v1061, %v1061
        %v1084 = vpack.c.bf16 %v1063, %v1063
        %v1085 = vpack.c.bf16 %v1066, %v1066
        %v1086 = vpack.c.bf16 %v1068, %v1068
        %v1087 = vpack.c.bf16 %v1071, %v1071
        %v1088 = vld [vmem:[#allocation5] sm:$0xf]
        %v1089 = vld [vmem:[#allocation5 + $0x4] sm:$0xf]
        %v1090 = vld [vmem:[#allocation5 + $0x8] sm:$0xf]
        %v1091 = vld [vmem:[#allocation5 + $0xc] sm:$0xf]
        %v1092 = vld [vmem:[#allocation5 + $0x10] sm:$0xf]
        %v1093 = vld [vmem:[#allocation5 + $0x14] sm:$0xf]
        %v1094 = vld [vmem:[#allocation5 + $0x18] sm:$0xf]
        %v1102 = vunpack.c.l.b16 %v1074
        %v1103 = vunpack.c.l.b16 %v1075
        %v1104 = vunpack.c.l.b16 %v1076
        %v1105 = vunpack.c.l.b16 %v1077
        %v1106 = vunpack.c.l.b16 %v1078
        %v1107 = vunpack.c.l.b16 %v1079
        %v1108 = vunpack.c.l.b16 %v1080
        %v1109 = vpack.c.b16 %v1103, %v1102
        %v1110 = vpack.c.b16 %v1105, %v1104
        %v1111 = vpack.c.b16 %v1107, %v1106
        %v1112 = vpack.c.b16 %v1108, %v1108
        %v1124 = vunpack.c.l.b16 %v1081
        %v1125 = vunpack.c.l.b16 %v1082
        %v1126 = vunpack.c.l.b16 %v1083
        %v1127 = vunpack.c.l.b16 %v1084
        %v1128 = vunpack.c.l.b16 %v1085
        %v1129 = vunpack.c.l.b16 %v1086
        %v1130 = vunpack.c.l.b16 %v1087
        %v1131 = vpack.c.b16 %v1125, %v1124
        %v1132 = vpack.c.b16 %v1127, %v1126
        %v1133 = vpack.c.b16 %v1129, %v1128
        %v1134 = vpack.c.b16 %v1130, %v1130
        %v1146 = vunpack.c.l.b16 %v1088
        %v1147 = vunpack.c.l.b16 %v1089
        %v1148 = vunpack.c.l.b16 %v1090
        %v1149 = vunpack.c.l.b16 %v1091
        %v1150 = vunpack.c.l.b16 %v1092
        %v1151 = vunpack.c.l.b16 %v1093
        %v1152 = vunpack.c.l.b16 %v1094
        %v1153 = vpack.c.b16 %v1147, %v1146
        %v1154 = vpack.c.b16 %v1149, %v1148
        %v1155 = vpack.c.b16 %v1151, %v1150
        %v1156 = vpack.c.b16 %v1152, %v1152
        %v1161 = vld [vmem:[%s590] sm:$0xf]
        %v1162 = vld [vmem:[%s590 + $0x4] sm:$0xf]
        %v1163 = vld [vmem:[%s590 + $0x8] sm:$0xf]
        %v1164 = vld [vmem:[%s590 + $0xc] sm:$0xf]
        %v1165 = vld [vmem:[%s590 + $0x10] sm:$0xf]
        %v1166 = vld [vmem:[%s590 + $0x14] sm:$0xf]
        %v1167 = vld [vmem:[%s590 + $0x18] sm:$0xf]
        %v1168 = vld [vmem:[%s590 + $0x1c] sm:$0xf]
        %v1169 = vld [vmem:[%s590 + $0x20] sm:$0xf]
        %v1170 = vld [vmem:[%s590 + $0x24] sm:$0xf]
        %v1171 = vld [vmem:[%s590 + $0x28] sm:$0xf]
        %v1172 = vld [vmem:[%s590 + $0x2c] sm:$0xf]
        %v1173 = vld [vmem:[%s590 + $0x30] sm:$0xf]
        %v1174 = vld [vmem:[%s590 + $0x34] sm:$0xf]
        %v1175 = vld [vmem:[%s590 + $0x38] sm:$0xf]
        %v1176 = vld [vmem:[%s590 + $0x3c] sm:$0xf]
        %v1177 = vld [vmem:[%s590 + $0x40] sm:$0xf]
        %v1178 = vld [vmem:[%s590 + $0x44] sm:$0xf]
        %v1179 = vld [vmem:[%s590 + $0x48] sm:$0xf]
        %v1180 = vld [vmem:[%s590 + $0x4c] sm:$0xf]
        %v1181 = vld [vmem:[%s590 + $0x50] sm:$0xf]
        %v1182 = vld [vmem:[%s590 + $0x54] sm:$0xf]
        %v1183 = vld [vmem:[%s590 + $0x58] sm:$0xf]
        %v1184 = vld [vmem:[%s590 + $0x5c] sm:$0xf]
        %v1185 = vld [vmem:[%s590 + $0x60] sm:$0xf]
        %v1186 = vld [vmem:[%s590 + $0x64] sm:$0xf]
        %v1187 = vld [vmem:[%s590 + $0x68] sm:$0xf]
        %v1188 = vld [vmem:[%s590 + $0x6c] sm:$0xf]
        %v1189 = vld [vmem:[%s590 + $0x70] sm:$0xf]
        %v1190 = vld [vmem:[%s590 + $0x74] sm:$0xf]
        %v1191 = vld [vmem:[%s590 + $0x78] sm:$0xf]
        %v1192 = vld [vmem:[%s590 + $0x7c] sm:$0xf]
        %v1193 = vld [vmem:[%s590 + $0x80] sm:$0xf]
        %v1194 = vld [vmem:[%s590 + $0x84] sm:$0xf]
        %v1195 = vld [vmem:[%s590 + $0x88] sm:$0xf]
        %v1196 = vld [vmem:[%s590 + $0x8c] sm:$0xf]
        %v1197 = vld [vmem:[%s590 + $0x90] sm:$0xf]
        %v1198 = vld [vmem:[%s590 + $0x94] sm:$0xf]
        %v1199 = vld [vmem:[%s590 + $0x98] sm:$0xf]
        %v1200 = vld [vmem:[%s590 + $0x9c] sm:$0xf]
        %v1201 = vld [vmem:[%s590 + $0xa0] sm:$0xf]
        %v1202 = vld [vmem:[%s590 + $0xa4] sm:$0xf]
        %v1203 = vld [vmem:[%s590 + $0xa8] sm:$0xf]
        %v1204 = vld [vmem:[%s590 + $0xac] sm:$0xf]
        %v1205 = vld [vmem:[%s590 + $0xb0] sm:$0xf]
        %v1206 = vld [vmem:[%s590 + $0xb4] sm:$0xf]
        %v1207 = vld [vmem:[%s590 + $0xb8] sm:$0xf]
        %v1208 = vld [vmem:[%s590 + $0xbc] sm:$0xf]
        %v1209 = vld [vmem:[%s593] sm:$0x1]
        %v1211 = vperm.slane %v1209, 0
        %v1261 = vunpack.c.l.b16 %v1161
        %v1262 = vunpack.c.l.b16 %v1162
        %v1263 = vunpack.c.l.b16 %v1163
        %v1264 = vunpack.c.l.b16 %v1164
        %v1265 = vunpack.c.l.b16 %v1165
        %v1266 = vunpack.c.l.b16 %v1166
        %v1267 = vunpack.c.l.b16 %v1167
        %v1268 = vunpack.c.l.b16 %v1168
        %v1269 = vunpack.c.l.b16 %v1169
        %v1270 = vunpack.c.l.b16 %v1170
        %v1271 = vunpack.c.l.b16 %v1171
        %v1272 = vunpack.c.l.b16 %v1172
        %v1273 = vunpack.c.l.b16 %v1173
        %v1274 = vunpack.c.l.b16 %v1174
        %v1275 = vunpack.c.l.b16 %v1175
        %v1276 = vunpack.c.l.b16 %v1176
        %v1277 = vunpack.c.l.b16 %v1177
        %v1278 = vunpack.c.l.b16 %v1178
        %v1279 = vunpack.c.l.b16 %v1179
        %v1280 = vunpack.c.l.b16 %v1180
        %v1281 = vunpack.c.l.b16 %v1181
        %v1282 = vunpack.c.l.b16 %v1182
        %v1283 = vunpack.c.l.b16 %v1183
        %v1284 = vunpack.c.l.b16 %v1184
        %v1285 = vunpack.c.l.b16 %v1185
        %v1286 = vunpack.c.l.b16 %v1186
        %v1287 = vunpack.c.l.b16 %v1187
        %v1288 = vunpack.c.l.b16 %v1188
        %v1289 = vunpack.c.l.b16 %v1189
        %v1290 = vunpack.c.l.b16 %v1190
        %v1291 = vunpack.c.l.b16 %v1191
        %v1292 = vunpack.c.l.b16 %v1192
        %v1293 = vunpack.c.l.b16 %v1193
        %v1294 = vunpack.c.l.b16 %v1194
        %v1295 = vunpack.c.l.b16 %v1195
        %v1296 = vunpack.c.l.b16 %v1196
        %v1297 = vunpack.c.l.b16 %v1197
        %v1298 = vunpack.c.l.b16 %v1198
        %v1299 = vunpack.c.l.b16 %v1199
        %v1300 = vunpack.c.l.b16 %v1200
        %v1301 = vunpack.c.l.b16 %v1201
        %v1302 = vunpack.c.l.b16 %v1202
        %v1303 = vunpack.c.l.b16 %v1203
        %v1304 = vunpack.c.l.b16 %v1204
        %v1305 = vunpack.c.l.b16 %v1205
        %v1306 = vunpack.c.l.b16 %v1206
        %v1307 = vunpack.c.l.b16 %v1207
        %v1308 = vunpack.c.l.b16 %v1208
        %v1309 = vpack.c.b16 %v1262, %v1261
        %v1310 = vpack.c.b16 %v1264, %v1263
        %v1311 = vpack.c.b16 %v1266, %v1265
        %v1312 = vpack.c.b16 %v1268, %v1267
        %v1313 = vpack.c.b16 %v1270, %v1269
        %v1314 = vpack.c.b16 %v1272, %v1271
        %v1315 = vpack.c.b16 %v1274, %v1273
        %v1316 = vpack.c.b16 %v1276, %v1275
        %v1317 = vpack.c.b16 %v1278, %v1277
        %v1318 = vpack.c.b16 %v1280, %v1279
        %v1319 = vpack.c.b16 %v1282, %v1281
        %v1320 = vpack.c.b16 %v1284, %v1283
        %v1321 = vpack.c.b16 %v1286, %v1285
        %v1322 = vpack.c.b16 %v1288, %v1287
        %v1323 = vpack.c.b16 %v1290, %v1289
        %v1324 = vpack.c.b16 %v1292, %v1291
        %v1325 = vpack.c.b16 %v1294, %v1293
        %v1326 = vpack.c.b16 %v1296, %v1295
        %v1327 = vpack.c.b16 %v1298, %v1297
        %v1328 = vpack.c.b16 %v1300, %v1299
        %v1329 = vpack.c.b16 %v1302, %v1301
        %v1330 = vpack.c.b16 %v1304, %v1303
        %v1331 = vpack.c.b16 %v1306, %v1305
        %v1332 = vpack.c.b16 %v1308, %v1307
        %1357 = vmatpush.bf16.msra.mxu0 %v1316
        %1358 = vmatpush.bf16.msra.mxu0 %v1315
        %1359 = vmatpush.bf16.msra.mxu0 %v1314
        %1360 = vmatpush.bf16.msra.mxu0 %v1313
        %1361 = vmatpush.bf16.msra.mxu0 %v1312
        %1362 = vmatpush.bf16.msra.mxu0 %v1311
        %1363 = vmatpush.bf16.msra.mxu0 %v1310
        %1364 = vmatpush.bf16.msra.mxu0 %v1309
        %1365 = vmatmul.bf16.gmra.mxu0 %v1109
        %v1366 = vpop.f32.mrf.mxu0
        %v1367 = vadd.f32 %v1211, %v1366
        %v1368 = vpop.f32.mrf.mxu0
        %v1369 = vadd.f32 %v1211, %v1368
        %1370 = vmatmul.bf16.gmra.mxu0 %v1110
        %v1371 = vpop.f32.mrf.mxu0
        %v1372 = vadd.f32 %v1211, %v1371
        %v1373 = vpop.f32.mrf.mxu0
        %v1374 = vadd.f32 %v1211, %v1373
        %1375 = vmatmul.bf16.gmra.mxu0 %v1111
        %v1376 = vpop.f32.mrf.mxu0
        %v1377 = vadd.f32 %v1211, %v1376
        %v1378 = vpop.f32.mrf.mxu0
        %v1379 = vadd.f32 %v1211, %v1378
        %1380 = vmatmul.bf16.gmra.mxu0 %v1112
        %v1381 = vpop.f32.mrf.mxu0
        %v1382 = vadd.f32 %v1211, %v1381
        %v1383 = vpop.f32.mrf.mxu0
        %1384 = vdwg.mxu0
        %1385 = vmatpush.bf16.msra.mxu0 %v1324
        %1386 = vmatpush.bf16.msra.mxu0 %v1323
        %1387 = vmatpush.bf16.msra.mxu0 %v1322
        %1388 = vmatpush.bf16.msra.mxu0 %v1321
        %1389 = vmatpush.bf16.msra.mxu0 %v1320
        %1390 = vmatpush.bf16.msra.mxu0 %v1319
        %1391 = vmatpush.bf16.msra.mxu0 %v1318
        %1392 = vmatpush.bf16.msra.mxu0 %v1317
        %1393 = vmatmul.bf16.gmra.mxu0 %v1131
        %v1394 = vpop.f32.mrf.mxu0
        %v1395 = vadd.f32 %v1367, %v1394
        %v1396 = vpop.f32.mrf.mxu0
        %v1397 = vadd.f32 %v1369, %v1396
        %1398 = vmatmul.bf16.gmra.mxu0 %v1132
        %v1399 = vpop.f32.mrf.mxu0
        %v1400 = vadd.f32 %v1372, %v1399
        %v1401 = vpop.f32.mrf.mxu0
        %v1402 = vadd.f32 %v1374, %v1401
        %1403 = vmatmul.bf16.gmra.mxu0 %v1133
        %v1404 = vpop.f32.mrf.mxu0
        %v1405 = vadd.f32 %v1377, %v1404
        %v1406 = vpop.f32.mrf.mxu0
        %v1407 = vadd.f32 %v1379, %v1406
        %1408 = vmatmul.bf16.gmra.mxu0 %v1134
        %v1409 = vpop.f32.mrf.mxu0
        %v1410 = vadd.f32 %v1382, %v1409
        %v1411 = vpop.f32.mrf.mxu0
        %1412 = vdwg.mxu0
        %1413 = vmatpush.bf16.msra.mxu0 %v1332
        %1414 = vmatpush.bf16.msra.mxu0 %v1331
        %1415 = vmatpush.bf16.msra.mxu0 %v1330
        %1416 = vmatpush.bf16.msra.mxu0 %v1329
        %1417 = vmatpush.bf16.msra.mxu0 %v1328
        %1418 = vmatpush.bf16.msra.mxu0 %v1327
        %1419 = vmatpush.bf16.msra.mxu0 %v1326
        %1420 = vmatpush.bf16.msra.mxu0 %v1325
        %1421 = vmatmul.bf16.gmra.mxu0 %v1153
        %v1422 = vpop.f32.mrf.mxu0
        %v1423 = vadd.f32 %v1395, %v1422
        %v1424 = vpop.f32.mrf.mxu0
        %v1425 = vadd.f32 %v1397, %v1424
        %1426 = vmatmul.bf16.gmra.mxu0 %v1154
        %v1427 = vpop.f32.mrf.mxu0
        %v1428 = vadd.f32 %v1400, %v1427
        %v1429 = vpop.f32.mrf.mxu0
        %v1430 = vadd.f32 %v1402, %v1429
        %1431 = vmatmul.bf16.gmra.mxu0 %v1155
        %v1432 = vpop.f32.mrf.mxu0
        %v1433 = vadd.f32 %v1405, %v1432
        %v1434 = vpop.f32.mrf.mxu0
        %v1435 = vadd.f32 %v1407, %v1434
        %1436 = vmatmul.bf16.gmra.mxu0 %v1156
        %v1437 = vpop.f32.mrf.mxu0
        %v1438 = vadd.f32 %v1410, %v1437
        %v1439 = vpop.f32.mrf.mxu0
        %1440 = vdwg.mxu0
        %v1441 = vmax.f32 %v1423, 0.0
        %v1442 = vmax.f32 %v1425, 0.0
        %v1443 = vmax.f32 %v1428, 0.0
        %v1444 = vmax.f32 %v1430, 0.0
        %v1445 = vmax.f32 %v1433, 0.0
        %v1446 = vmax.f32 %v1435, 0.0
        %v1447 = vmax.f32 %v1438, 0.0
        %v1448 = vld [vmem:[%s598] sm:$0xf]
        %v1449 = vld [vmem:[%s598 + $0x4] sm:$0xf]
        %v1450 = vld [vmem:[%s598 + $0x8] sm:$0xf]
        %v1451 = vld [vmem:[%s598 + $0xc] sm:$0xf]
        %v1452 = vld [vmem:[%s598 + $0x10] sm:$0xf]
        %v1453 = vld [vmem:[%s598 + $0x14] sm:$0xf]
        %v1454 = vld [vmem:[%s598 + $0x18] sm:$0xf]
        %v1455 = vld [vmem:[%s598 + $0x1c] sm:$0xf]
        %v1456 = vld [vmem:[%s598 + $0x20] sm:$0xf]
        %v1457 = vld [vmem:[%s598 + $0x24] sm:$0xf]
        %v1458 = vld [vmem:[%s598 + $0x28] sm:$0xf]
        %v1459 = vld [vmem:[%s598 + $0x2c] sm:$0xf]
        %v1460 = vld [vmem:[%s598 + $0x30] sm:$0xf]
        %v1461 = vld [vmem:[%s598 + $0x34] sm:$0xf]
        %v1462 = vld [vmem:[%s598 + $0x38] sm:$0xf]
        %v1463 = vld [vmem:[%s598 + $0x3c] sm:$0xf]
        %v1464 = vpack.c.bf16 %v1442, %v1441
        %v1465 = vpack.c.bf16 %v1444, %v1443
        %v1466 = vpack.c.bf16 %v1446, %v1445
        %v1467 = vpack.c.bf16 %v1447, %v1447
        %v1468 = vld [vmem:[%s601] sm:$0x1]
        %v1470 = vperm.slane %v1468, 0
        %v1488 = vunpack.c.l.b16 %v1448
        %v1489 = vunpack.c.l.b16 %v1449
        %v1490 = vunpack.c.l.b16 %v1450
        %v1491 = vunpack.c.l.b16 %v1451
        %v1492 = vunpack.c.l.b16 %v1452
        %v1493 = vunpack.c.l.b16 %v1453
        %v1494 = vunpack.c.l.b16 %v1454
        %v1495 = vunpack.c.l.b16 %v1455
        %v1496 = vunpack.c.l.b16 %v1456
        %v1497 = vunpack.c.l.b16 %v1457
        %v1498 = vunpack.c.l.b16 %v1458
        %v1499 = vunpack.c.l.b16 %v1459
        %v1500 = vunpack.c.l.b16 %v1460
        %v1501 = vunpack.c.l.b16 %v1461
        %v1502 = vunpack.c.l.b16 %v1462
        %v1503 = vunpack.c.l.b16 %v1463
        %v1504 = vpack.c.b16 %v1489, %v1488
        %v1505 = vpack.c.b16 %v1491, %v1490
        %v1506 = vpack.c.b16 %v1493, %v1492
        %v1507 = vpack.c.b16 %v1495, %v1494
        %v1508 = vpack.c.b16 %v1497, %v1496
        %v1509 = vpack.c.b16 %v1499, %v1498
        %v1510 = vpack.c.b16 %v1501, %v1500
        %v1511 = vpack.c.b16 %v1503, %v1502
        %1520 = vmatpush.bf16.msra.mxu0 %v1511
        %1521 = vmatpush.bf16.msra.mxu0 %v1510
        %1522 = vmatpush.bf16.msra.mxu0 %v1509
        %1523 = vmatpush.bf16.msra.mxu0 %v1508
        %1524 = vmatpush.bf16.msra.mxu0 %v1507
        %1525 = vmatpush.bf16.msra.mxu0 %v1506
        %1526 = vmatpush.bf16.msra.mxu0 %v1505
        %1527 = vmatpush.bf16.msra.mxu0 %v1504
        %1528 = vmatmul.bf16.gmra.mxu0 %v1464
        %v1529 = vpop.f32.mrf.mxu0
        %v1530 = vadd.f32 %v1470, %v1529
        %v1531 = vpop.f32.mrf.mxu0
        %v1532 = vadd.f32 %v1470, %v1531
        %1533 = vmatmul.bf16.gmra.mxu0 %v1465
        %v1534 = vpop.f32.mrf.mxu0
        %v1535 = vadd.f32 %v1470, %v1534
        %v1536 = vpop.f32.mrf.mxu0
        %v1537 = vadd.f32 %v1470, %v1536
        %1538 = vmatmul.bf16.gmra.mxu0 %v1466
        %v1539 = vpop.f32.mrf.mxu0
        %v1540 = vadd.f32 %v1470, %v1539
        %v1541 = vpop.f32.mrf.mxu0
        %v1542 = vadd.f32 %v1470, %v1541
        %1543 = vmatmul.bf16.gmra.mxu0 %v1467
        %v1544 = vpop.f32.mrf.mxu0
        %v1545 = vadd.f32 %v1470, %v1544
        %v1546 = vpop.f32.mrf.mxu0
        %1547 = vdwg.mxu0
        %v1548 = vld [vmem:[#allocation4] sm:$0xf]
        %v1549 = vld [vmem:[#allocation4 + $0x4] sm:$0xf]
        %v1550 = vld [vmem:[#allocation4 + $0x8] sm:$0xf]
        %v1551 = vld [vmem:[#allocation4 + $0xc] sm:$0x3]
        %v1552 = vpack.c.bf16 %v1532, %v1530
        %v1553 = vpack.c.bf16 %v1537, %v1535
        %v1554 = vpack.c.bf16 %v1542, %v1540
        %v1555 = vpack.c.bf16 %v1545, %v1545
        %v1560 = vunpack.c.l.b16 %v1548
        %v1561 = vunpack.c.l.b16 %v1549
        %v1562 = vunpack.c.l.b16 %v1550
        %v1563 = vunpack.c.l.b16 %v1551
        %v1564 = vpack.c.b16 %v1561, %v1560
        %v1565 = vpack.c.b16 %v1563, %v1562
        %vm1566 = vcmask 457728
        %v1568 = vsel %vm1566, %v1564, 0
        %v1571 = vsel %vm1566, %v1565, 0
        %vm1573 = vcmask 1043456
        %v1575 = vsel %vm1573, %v1555, 0
        %1577 = vmatpush.bf16.msra.mxu0 0
        %1578 = vmatpush.bf16.msra.mxu0 0
        %1579 = vmatpush.bf16.msra.mxu0 0
        %1580 = vmatpush.bf16.msra.mxu0 0
        %1581 = vmatpush.bf16.msra.mxu0 %v1575
        %1582 = vmatpush.bf16.msra.mxu0 %v1554
        %1583 = vmatpush.bf16.msra.mxu0 %v1553
        %1584 = vmatpush.bf16.msra.mxu0 %v1552
        %1585 = vmatmul.bf16.gmra.mxu0 %v1568
        %v1586 = vpop.f32.mrf.mxu0
        %v1587 = vadd.f32 0.0, %v1586
        %v1588 = vpop.f32.mrf.mxu0
        %v1589 = vadd.f32 0.0, %v1588
        %1590 = vmatmul.bf16.gmra.mxu0 %v1571
        %v1591 = vpop.f32.mrf.mxu0
        %v1592 = vadd.f32 0.0, %v1591
        %v1593 = vpop.f32.mrf.mxu0
        %v1594 = vadd.f32 0.0, %v1593
        %1595 = vdwg.mxu0
        %v1596 = vpack.c.bf16 %v1587, %v1587
        %v1597 = vpack.c.bf16 %v1589, %v1589
        %v1598 = vpack.c.bf16 %v1592, %v1592
        %v1599 = vpack.c.bf16 %v1594, %v1594
        %v1605 = vunpack.c.l.b16 %v1596
        %v1606 = vunpack.c.l.b16 %v1597
        %v1607 = vunpack.c.l.b16 %v1598
        %v1608 = vunpack.c.l.b16 %v1599
        %v1609 = vpack.c.b16 %v1606, %v1605
        %v1610 = vpack.c.b16 %v1608, %v1607
        %v1613 = vld [vmem:[%s500] sm:$0xf]
        %v1614 = vld [vmem:[%s500 + $0x4] sm:$0xf]
        %v1615 = vld [vmem:[%s500 + $0x8] sm:$0xf]
        %v1616 = vld [vmem:[%s500 + $0xc] sm:$0xf]
        %v1617 = vld [vmem:[%s500 + $0x10] sm:$0xf]
        %v1618 = vld [vmem:[%s500 + $0x14] sm:$0xf]
        %v1619 = vld [vmem:[%s500 + $0x18] sm:$0xf]
        %v1620 = vld [vmem:[%s500 + $0x1c] sm:$0xf]
        %v1621 = vld [vmem:[%s500 + $0x20] sm:$0xf]
        %v1622 = vld [vmem:[%s500 + $0x24] sm:$0xf]
        %v1623 = vld [vmem:[%s500 + $0x28] sm:$0xf]
        %v1624 = vld [vmem:[%s500 + $0x2c] sm:$0xf]
        %v1625 = vld [vmem:[%s500 + $0x30] sm:$0xf]
        %v1626 = vld [vmem:[%s500 + $0x34] sm:$0xf]
        %v1627 = vld [vmem:[%s500 + $0x38] sm:$0xf]
        %v1628 = vld [vmem:[%s500 + $0x3c] sm:$0xf]
        %v1629 = vld [vmem:[%s500 + $0x40] sm:$0xf]
        %v1630 = vld [vmem:[%s500 + $0x44] sm:$0xf]
        %v1631 = vld [vmem:[%s500 + $0x48] sm:$0xf]
        %v1632 = vld [vmem:[%s500 + $0x4c] sm:$0xf]
        %v1633 = vld [vmem:[%s500 + $0x50] sm:$0xf]
        %v1634 = vld [vmem:[%s500 + $0x54] sm:$0xf]
        %v1635 = vld [vmem:[%s500 + $0x58] sm:$0xf]
        %v1636 = vld [vmem:[%s500 + $0x5c] sm:$0xf]
        %v1637 = vld [vmem:[%s500 + $0x60] sm:$0xf]
        %v1638 = vld [vmem:[%s500 + $0x64] sm:$0xf]
        %v1639 = vld [vmem:[%s500 + $0x68] sm:$0xf]
        %v1640 = vld [vmem:[%s500 + $0x6c] sm:$0xf]
        %v1641 = vld [vmem:[%s500 + $0x70] sm:$0xf]
        %v1642 = vld [vmem:[%s500 + $0x74] sm:$0xf]
        %v1643 = vld [vmem:[%s500 + $0x78] sm:$0xf]
        %v1644 = vld [vmem:[%s500 + $0x7c] sm:$0xf]
        %v1645 = vld [vmem:[%s604] sm:$0x1]
        %v1647 = vperm.slane %v1645, 0
        %v1681 = vunpack.c.l.b16 %v1613
        %v1682 = vunpack.c.l.b16 %v1614
        %v1683 = vunpack.c.l.b16 %v1615
        %v1684 = vunpack.c.l.b16 %v1616
        %v1685 = vunpack.c.l.b16 %v1617
        %v1686 = vunpack.c.l.b16 %v1618
        %v1687 = vunpack.c.l.b16 %v1619
        %v1688 = vunpack.c.l.b16 %v1620
        %v1689 = vunpack.c.l.b16 %v1621
        %v1690 = vunpack.c.l.b16 %v1622
        %v1691 = vunpack.c.l.b16 %v1623
        %v1692 = vunpack.c.l.b16 %v1624
        %v1693 = vunpack.c.l.b16 %v1625
        %v1694 = vunpack.c.l.b16 %v1626
        %v1695 = vunpack.c.l.b16 %v1627
        %v1696 = vunpack.c.l.b16 %v1628
        %v1697 = vunpack.c.l.b16 %v1629
        %v1698 = vunpack.c.l.b16 %v1630
        %v1699 = vunpack.c.l.b16 %v1631
        %v1700 = vunpack.c.l.b16 %v1632
        %v1701 = vunpack.c.l.b16 %v1633
        %v1702 = vunpack.c.l.b16 %v1634
        %v1703 = vunpack.c.l.b16 %v1635
        %v1704 = vunpack.c.l.b16 %v1636
        %v1705 = vunpack.c.l.b16 %v1637
        %v1706 = vunpack.c.l.b16 %v1638
        %v1707 = vunpack.c.l.b16 %v1639
        %v1708 = vunpack.c.l.b16 %v1640
        %v1709 = vunpack.c.l.b16 %v1641
        %v1710 = vunpack.c.l.b16 %v1642
        %v1711 = vunpack.c.l.b16 %v1643
        %v1712 = vunpack.c.l.b16 %v1644
        %v1713 = vpack.c.b16 %v1682, %v1681
        %v1714 = vpack.c.b16 %v1684, %v1683
        %v1715 = vpack.c.b16 %v1686, %v1685
        %v1716 = vpack.c.b16 %v1688, %v1687
        %v1717 = vpack.c.b16 %v1690, %v1689
        %v1718 = vpack.c.b16 %v1692, %v1691
        %v1719 = vpack.c.b16 %v1694, %v1693
        %v1720 = vpack.c.b16 %v1696, %v1695
        %v1721 = vpack.c.b16 %v1698, %v1697
        %v1722 = vpack.c.b16 %v1700, %v1699
        %v1723 = vpack.c.b16 %v1702, %v1701
        %v1724 = vpack.c.b16 %v1704, %v1703
        %v1725 = vpack.c.b16 %v1706, %v1705
        %v1726 = vpack.c.b16 %v1708, %v1707
        %v1727 = vpack.c.b16 %v1710, %v1709
        %v1728 = vpack.c.b16 %v1712, %v1711
        %1745 = vmatpush.bf16.msra.mxu0 %v1720
        %1746 = vmatpush.bf16.msra.mxu0 %v1719
        %1747 = vmatpush.bf16.msra.mxu0 %v1718
        %1748 = vmatpush.bf16.msra.mxu0 %v1717
        %1749 = vmatpush.bf16.msra.mxu0 %v1716
        %1750 = vmatpush.bf16.msra.mxu0 %v1715
        %1751 = vmatpush.bf16.msra.mxu0 %v1714
        %1752 = vmatpush.bf16.msra.mxu0 %v1713
        %1753 = vmatmul.bf16.gmra.mxu0 %v961
        %v1754 = vpop.f32.mrf.mxu0
        %v1755 = vadd.f32 %v1647, %v1754
        %v1756 = vpop.f32.mrf.mxu0
        %v1757 = vadd.f32 %v1647, %v1756
        %1758 = vmatmul.bf16.gmra.mxu0 %v962
        %v1759 = vpop.f32.mrf.mxu0
        %v1760 = vadd.f32 %v1647, %v1759
        %v1761 = vpop.f32.mrf.mxu0
        %v1762 = vadd.f32 %v1647, %v1761
        %1763 = vdwg.mxu0
        %1764 = vmatpush.bf16.msra.mxu0 %v1728
        %1765 = vmatpush.bf16.msra.mxu0 %v1727
        %1766 = vmatpush.bf16.msra.mxu0 %v1726
        %1767 = vmatpush.bf16.msra.mxu0 %v1725
        %1768 = vmatpush.bf16.msra.mxu0 %v1724
        %1769 = vmatpush.bf16.msra.mxu0 %v1723
        %1770 = vmatpush.bf16.msra.mxu0 %v1722
        %1771 = vmatpush.bf16.msra.mxu0 %v1721
        %1772 = vmatmul.bf16.gmra.mxu0 %v1609
        %v1773 = vpop.f32.mrf.mxu0
        %v1774 = vadd.f32 %v1755, %v1773
        %v1775 = vpop.f32.mrf.mxu0
        %v1776 = vadd.f32 %v1757, %v1775
        %1777 = vmatmul.bf16.gmra.mxu0 %v1610
        %v1778 = vpop.f32.mrf.mxu0
        %v1779 = vadd.f32 %v1760, %v1778
        %v1780 = vpop.f32.mrf.mxu0
        %v1781 = vadd.f32 %v1762, %v1780
        %1782 = vdwg.mxu0
        %v1783 = vmax.f32 %v1774, 0.0
        %v1784 = vmax.f32 %v1776, 0.0
        %v1785 = vmax.f32 %v1779, 0.0
        %v1786 = vmax.f32 %v1781, 0.0
        %v1787 = vld [vmem:[%s510] sm:$0xf]
        %v1788 = vld [vmem:[%s510 + $0x4] sm:$0xf]
        %v1789 = vld [vmem:[%s510 + $0x8] sm:$0xf]
        %v1790 = vld [vmem:[%s510 + $0xc] sm:$0xf]
        %v1791 = vld [vmem:[%s510 + $0x10] sm:$0xf]
        %v1792 = vld [vmem:[%s510 + $0x14] sm:$0xf]
        %v1793 = vld [vmem:[%s510 + $0x18] sm:$0xf]
        %v1794 = vld [vmem:[%s510 + $0x1c] sm:$0xf]
        %v1795 = vld [vmem:[%s510 + $0x20] sm:$0xf]
        %v1796 = vld [vmem:[%s510 + $0x24] sm:$0xf]
        %v1797 = vld [vmem:[%s510 + $0x28] sm:$0xf]
        %v1798 = vld [vmem:[%s510 + $0x2c] sm:$0xf]
        %v1799 = vld [vmem:[%s510 + $0x30] sm:$0xf]
        %v1800 = vld [vmem:[%s510 + $0x34] sm:$0xf]
        %v1801 = vld [vmem:[%s510 + $0x38] sm:$0xf]
        %v1802 = vld [vmem:[%s510 + $0x3c] sm:$0xf]
        %v1803 = vpack.c.bf16 %v1784, %v1783
        %v1804 = vpack.c.bf16 %v1786, %v1785
        %v1821 = vunpack.c.l.b16 %v1787
        %v1822 = vunpack.c.l.b16 %v1788
        %v1823 = vunpack.c.l.b16 %v1789
        %v1824 = vunpack.c.l.b16 %v1790
        %v1825 = vunpack.c.l.b16 %v1791
        %v1826 = vunpack.c.l.b16 %v1792
        %v1827 = vunpack.c.l.b16 %v1793
        %v1828 = vunpack.c.l.b16 %v1794
        %v1829 = vunpack.c.l.b16 %v1795
        %v1830 = vunpack.c.l.b16 %v1796
        %v1831 = vunpack.c.l.b16 %v1797
        %v1832 = vunpack.c.l.b16 %v1798
        %v1833 = vunpack.c.l.b16 %v1799
        %v1834 = vunpack.c.l.b16 %v1800
        %v1835 = vunpack.c.l.b16 %v1801
        %v1836 = vunpack.c.l.b16 %v1802
        %v1837 = vpack.c.b16 %v1822, %v1821
        %v1838 = vpack.c.b16 %v1824, %v1823
        %v1839 = vpack.c.b16 %v1826, %v1825
        %v1840 = vpack.c.b16 %v1828, %v1827
        %v1841 = vpack.c.b16 %v1830, %v1829
        %v1842 = vpack.c.b16 %v1832, %v1831
        %v1843 = vpack.c.b16 %v1834, %v1833
        %v1844 = vpack.c.b16 %v1836, %v1835
        %1853 = vmatpush.bf16.msra.mxu0 %v1844
        %1854 = vmatpush.bf16.msra.mxu0 %v1843
        %1855 = vmatpush.bf16.msra.mxu0 %v1842
        %1856 = vmatpush.bf16.msra.mxu0 %v1841
        %1857 = vmatpush.bf16.msra.mxu0 %v1840
        %1858 = vmatpush.bf16.msra.mxu0 %v1839
        %1859 = vmatpush.bf16.msra.mxu0 %v1838
        %1860 = vmatpush.bf16.msra.mxu0 %v1837
        %1861 = vmatmul.bf16.gmra.mxu0 %v1803
        %v1862 = vpop.f32.mrf.mxu0
        %v1863 = vadd.f32 0.0, %v1862
        %v1864 = vpop.f32.mrf.mxu0
        %v1865 = vadd.f32 0.0, %v1864
        %1866 = vmatmul.bf16.gmra.mxu0 %v1804
        %v1867 = vpop.f32.mrf.mxu0
        %v1868 = vadd.f32 0.0, %v1867
        %v1869 = vpop.f32.mrf.mxu0
        %v1870 = vadd.f32 0.0, %v1869
        %1871 = vdwg.mxu0
        %v1872 = vadd.f32 %v920, %v1863
        %v1873 = vadd.f32 %v921, %v1865
        %v1874 = vadd.f32 %v922, %v1868
        %v1875 = vadd.f32 %v923, %v1870
        %v1876 = vld [vmem:[%s519] sm:$0x1]
        %v1878 = vperm.slane %v1876, 0
        %v1880 = vadd.f32 %v1872, %v1878
        %v1881 = vadd.f32 %v1873, %v1878
        %v1882 = vadd.f32 %v1874, %v1878
        %v1883 = vadd.f32 %v1875, %v1878
        %1884 = vst [vmem:[#allocation12] sm:$0xff] %v1880
        %1885 = vst [vmem:[#allocation12 + $0x8] sm:$0xff] %v1881
        %1886 = vst [vmem:[#allocation12 + $0x10] sm:$0xff] %v1882
        %1887 = vst [vmem:[#allocation12 + $0x18] sm:$0xf] %v1883
        // Predicated region
        $region89: #{fwd.5} parent=71 // pred_check
          %p1888 = pneg %p357
        $region90: #{fwd.5} parent=71 // pred_check_branch
          %1890 = sbr.rel (%p1888) target = $region92
        $region91: #{fwd.5} parent=71 // pred_region
          %1892 = vsyncadd [#allocation8], 0
          %s1893 = sshll.u32 [#allocation12], 4
          %s1894 = int_to_ptr.vmem [resolvable:$true] %s1893
          %s1895 = sshll.u32 %s13, 4
          %s1896 = int_to_ptr.hbm [resolvable:$true] %s1895
          %1901 = dma.vmem_to_hbm [thread:$0]  %s1894, 512, %s1896, [#allocation8], 128, 128, 8
        $region92: #{fwd.5} parent=71 // pred_fallthru
          _
        // Predicated region
        $region93: #{fwd.5} parent=71 // pred_check
          %p1902 = pneg %p357
        $region94: #{fwd.5} parent=71 // pred_check_branch
          %1904 = sbr.rel (%p1902) target = $region96
        $region95: #{fwd.5} parent=71 // pred_region
          %1906 = dma.done [#allocation8], 512
        $region96: #{fwd.5} parent=71 // pred_fallthru
          _
      $region72: #{fwd.5} parent=5 // pred_fallthru
        _
      %p1907 = scmp.le.s32.totalorder 2, %s26
      // Predicated region
      $region97: #{fwd.5} parent=5 // pred_check
        %p1908 = pneg %p1907
      $region98: #{fwd.5} parent=5 // pred_check_branch
        %1910 = sbr.rel (%p1908) target = $region100
      $region99: #{fwd.5} parent=5 // pred_region
        %s1911 = ssub.s32 %s26, 2
      $region100: #{fwd.5} parent=5 // pred_fallthru
        _
    $region6: #{fwd.5} parent=1 // loop_footer
      %s30 = sadd.s32 1, %s26
    $region7: #{fwd.5} parent=1 // loop_footer_branch
      %25 = sbr.rel target = $region3
    $region8: #{fwd.5} parent=1 // loop_exit
      _
    %1912 = vsyncpa [#allocation7], 1
    %s1913 = scalar_lea.sflag [#allocation7], 1
    %1914 = vsyncpa %s1913, 1
    %1915 = vsyncpa [#allocation10], 1
    %s1916 = scalar_lea.sflag [#allocation10], 1
    %1917 = vsyncpa %s1916, 1
    %1918 = vsyncpa [#allocation8], 1
    %s1919 = scalar_lea.sflag [#allocation8], 1
    %1920 = vsyncpa %s1919, 1

// kernel: fwd.4
$region0: #{fwd.4}
  #allocation0 [shape = 'u32[]', space=smem, size = 0x4, offset = 0x4, fixed_abs, tag = 'smem constant byte address 0x4 - core index']
  #allocation1 [shape = 'u32[72,128]{1,0:T(1,128)}', space=vmem, size = 0x9000, scoped, tag = 'internal scratch']
  #allocation2 [shape = 'f32[8,128]{1,0:T(8,128)}', space=vmem, size = 0x1000, scoped, tag = 'scratch operand']
  %s0 = inlined_call_operand.smem [shape: u32[44], index: -1, kind: input, shape index: {}]
  %s1 = sld [smem:[%s0]]
  %s2 = scalar_lea.smem %s0, 1
  %s3 = sld [smem:[%s2]]
  %s4 = scalar_lea.smem %s0, 2
  %s5 = sld [smem:[%s4]]
  %s6 = scalar_lea.smem %s0, 3
  %s7 = sld [smem:[%s6]]
  %s8 = scalar_lea.smem %s0, 4
  %s9 = sld [smem:[%s8]]
  %s10 = scalar_lea.smem %s0, 5
  %s11 = sld [smem:[%s10]]
  %s12 = scalar_lea.smem %s0, 6
  %s13 = sld [smem:[%s12]]
  %s14 = scalar_lea.smem %s0, 7
  %s15 = sld [smem:[%s14]]
  %s16 = scalar_lea.smem %s0, 8
  %s17 = sld [smem:[%s16]]
  %s18 = scalar_lea.smem %s0, 9
  %s19 = sld [smem:[%s18]]
  %s20 = scalar_lea.smem %s0, 10
  %s21 = sld [smem:[%s20]]
  %s22 = scalar_lea.smem %s0, 11
  %s23 = sld [smem:[%s22]]
  %s24 = scalar_lea.smem %s0, 12
  %s25 = sld [smem:[%s24]]
  %s26 = scalar_lea.smem %s0, 13
  %s27 = sld [smem:[%s26]]
  %s28 = scalar_lea.smem %s0, 14
  %s29 = sld [smem:[%s28]]
  %s30 = scalar_lea.smem %s0, 15
  %s31 = sld [smem:[%s30]]
  %s32 = scalar_lea.smem %s0, 16
  %s33 = sld [smem:[%s32]]
  %s34 = scalar_lea.smem %s0, 17
  %s35 = sld [smem:[%s34]]
  %s36 = scalar_lea.smem %s0, 18
  %s37 = sld [smem:[%s36]]
  %s38 = scalar_lea.smem %s0, 19
  %s39 = sld [smem:[%s38]]
  %s40 = scalar_lea.smem %s0, 20
  %s41 = sld [smem:[%s40]]
  %s42 = scalar_lea.smem %s0, 21
  %s43 = sld [smem:[%s42]]
  %s44 = scalar_lea.smem %s0, 22
  %s45 = sld [smem:[%s44]]
  %s46 = scalar_lea.smem %s0, 23
  %s47 = sld [smem:[%s46]]
  %s48 = scalar_lea.smem %s0, 24
  %s49 = sld [smem:[%s48]]
  %s50 = scalar_lea.smem %s0, 25
  %s51 = sld [smem:[%s50]]
  %s52 = scalar_lea.smem %s0, 26
  %s53 = sld [smem:[%s52]]
  %s54 = scalar_lea.smem %s0, 27
  %s55 = sld [smem:[%s54]]
  %s56 = scalar_lea.smem %s0, 28
  %s57 = sld [smem:[%s56]]
  %s58 = scalar_lea.smem %s0, 29
  %s59 = sld [smem:[%s58]]
  %s60 = scalar_lea.smem %s0, 30
  %s61 = sld [smem:[%s60]]
  %s62 = scalar_lea.smem %s0, 31
  %s63 = sld [smem:[%s62]]
  %s64 = scalar_lea.smem %s0, 32
  %s65 = sld [smem:[%s64]]
  %s66 = scalar_lea.smem %s0, 33
  %s67 = sld [smem:[%s66]]
  %s68 = scalar_lea.smem %s0, 34
  %s69 = sld [smem:[%s68]]
  %s70 = scalar_lea.smem %s0, 35
  %s71 = sld [smem:[%s70]]
  %s72 = scalar_lea.smem %s0, 36
  %s73 = sld [smem:[%s72]]
  %s74 = scalar_lea.smem %s0, 37
  %s75 = sld [smem:[%s74]]
  %s76 = scalar_lea.smem %s0, 38
  %s77 = sld [smem:[%s76]]
  %s78 = scalar_lea.smem %s0, 39
  %s79 = sld [smem:[%s78]]
  %s80 = scalar_lea.smem %s0, 40
  %s81 = sld [smem:[%s80]]
  %s82 = scalar_lea.smem %s0, 41
  %s83 = sld [smem:[%s82]]
  %s84 = scalar_lea.smem %s0, 42
  %s85 = sld [smem:[%s84]]
  %s86 = scalar_lea.smem %s0, 43
  %s87 = sld [smem:[%s86]]
  %s88 = sld [smem:[#allocation0]]
  $region337: #{fwd.4} parent=0
    _
  %s90 = ssub.s32 1, %s88
  %s91 = scalar_select 0, %s90, %s88
  $region1: #{fwd.4} parent=0
    #allocation3 [shape = 'u8[512]{0}', space=vmem, size = 0x400, scoped, tag = 'input window, operand 3, single buffered']
    #allocation4 [shape = 's32[2]{0}', space=sflag, size = 0x8, scoped, tag = 'scoped memory for fwd.4']
    #allocation5 [shape = 'u8[512]{0}', space=vmem, size = 0x400, scoped, tag = 'input window, operand 4, single buffered']
    #allocation6 [shape = 's32[1]{0}', space=sflag, size = 0x4, scoped, tag = 'scoped memory for fwd.4']
    #allocation7 [shape = 'u8[512]{0}', space=vmem, size = 0x400, scoped, tag = 'input window, operand 5, single buffered']
    #allocation8 [shape = 'u8[512]{0}', space=vmem, size = 0x400, scoped, tag = 'input window, operand 6, single buffered']
    #allocation9 [shape = 's32[1]{0}', space=sflag, size = 0x4, scoped, tag = 'scoped memory for fwd.4']
    #allocation10 [shape = 'u8[512]{0}', space=vmem, size = 0x400, scoped, tag = 'input window, operand 8, single buffered']
    #allocation11 [shape = 'u8[65536]{0}', space=vmem, size = 0x10000, scoped, tag = 'input window, operand 9, single buffered']
    #allocation12 [shape = 's32[1]{0}', space=sflag, size = 0x4, scoped, tag = 'scoped memory for fwd.4']
    #allocation13 [shape = 'u8[32768]{0}', space=vmem, size = 0x8000, scoped, tag = 'input window, operand 11, single buffered']
    #allocation14 [shape = 'u8[512]{0}', space=vmem, size = 0x400, scoped, tag = 'input window, operand 12, single buffered']
    #allocation15 [shape = 's32[1]{0}', space=sflag, size = 0x4, scoped, tag = 'scoped memory for fwd.4']
    #allocation16 [shape = 'u8[512]{0}', space=vmem, size = 0x400, scoped, tag = 'input window, operand 13, single buffered']
    #allocation17 [shape = 'u8[512]{0}', space=vmem, size = 0x400, scoped, tag = 'input window, operand 14, single buffered']
    #allocation18 [shape = 's32[1]{0}', space=sflag, size = 0x4, scoped, tag = 'scoped memory for fwd.4']
    #allocation19 [shape = 'u8[32768]{0}', space=vmem, size = 0x8000, scoped, tag = 'input window, operand 15, single buffered']
    #allocation20 [shape = 'u8[512]{0}', space=vmem, size = 0x400, scoped, tag = 'input window, operand 16, single buffered']
    #allocation21 [shape = 's32[1]{0}', space=sflag, size = 0x4, scoped, tag = 'scoped memory for fwd.4']
    #allocation22 [shape = 'u8[32768]{0}', space=vmem, size = 0x8000, scoped, tag = 'input window, operand 17, single buffered']
    #allocation23 [shape = 'u8[512]{0}', space=vmem, size = 0x400, scoped, tag = 'input window, operand 18, single buffered']
    #allocation24 [shape = 's32[1]{0}', space=sflag, size = 0x4, scoped, tag = 'scoped memory for fwd.4']
    #allocation25 [shape = 'u8[196608]{0}', space=vmem, size = 0x30000, scoped, tag = 'input window, operand 21']
    #allocation26 [shape = 'u8[65536]{0}', space=vmem, size = 0x10000, scoped, tag = 'input window, operand 23']
    #allocation27 [shape = 'u8[65536]{0}', space=vmem, size = 0x10000, scoped, tag = 'input window, operand 27']
    #allocation28 [shape = 'u8[65536]{0}', space=vmem, size = 0x10000, scoped, tag = 'input window, operand 29']
    #allocation29 [shape = 'u8[512]{0}', space=vmem, size = 0x400, scoped, tag = 'input window, operand 31, single buffered']
    #allocation30 [shape = 'u8[512]{0}', space=vmem, size = 0x400, scoped, tag = 'input window, operand 32, single buffered']
    #allocation31 [shape = 'u8[512]{0}', space=vmem, size = 0x400, scoped, tag = 'input window, operand 33, single buffered']
    #allocation32 [shape = 'u8[512]{0}', space=vmem, size = 0x400, scoped, tag = 'input window, operand 34, single buffered']
    #allocation33 [shape = 'u8[32768]{0}', space=vmem, size = 0x8000, scoped, tag = 'input window, operand 35, single buffered']
    #allocation34 [shape = 'u8[512]{0}', space=vmem, size = 0x400, scoped, tag = 'input window, operand 36, single buffered']
    #allocation35 [shape = 'u8[65536]{0}', space=vmem, size = 0x10000, scoped, tag = 'input window, operand 37, single buffered']
    #allocation36 [shape = 'u8[1024]{0}', space=vmem, size = 0x400, scoped, tag = 'input window, operand 38, single buffered']
    #allocation37 [shape = 's32[1]{0}', space=sflag, size = 0x4, scoped, tag = 'scoped memory for fwd.4']
    #allocation38 [shape = 'u8[32768]{0}', space=vmem, size = 0x8000, scoped, tag = 'input window, operand 39, single buffered']
    #allocation39 [shape = 'u8[512]{0}', space=vmem, size = 0x400, scoped, tag = 'input window, operand 40, single buffered']
    #allocation40 [shape = 's32[1]{0}', space=sflag, size = 0x4, scoped, tag = 'scoped memory for fwd.4']
    #allocation41 [shape = 'u8[32768]{0}', space=vmem, size = 0x8000, scoped, tag = 'input window, operand 41, single buffered']
    #allocation42 [shape = 'u8[512]{0}', space=vmem, size = 0x400, scoped, tag = 'input window, operand 42, single buffered']
    #allocation43 [shape = 's32[1]{0}', space=sflag, size = 0x4, scoped, tag = 'scoped memory for fwd.4']
    %92 = vsyncpa [#allocation4], 0
    %93 = vsyncpa [#allocation6], 0
    %94 = vsyncpa [#allocation9], 0
    %95 = vsyncpa [#allocation12], 0
    %96 = vsyncpa [#allocation15], 0
    %97 = vsyncpa [#allocation18], 0
    %98 = vsyncpa [#allocation21], 0
    %99 = vsyncpa [#allocation24], 0
    %100 = vsyncpa [#allocation37], 0
    %101 = vsyncpa [#allocation40], 0
    %102 = vsyncpa [#allocation43], 0
    loop: start=0, step=1, limit=10
    $region2: #{fwd.4} parent=1 // loop_pre_header
      _
    $region3: #{fwd.4} parent=1 // loop_header
      %s104 = sphi 0, %s108
      %p105 = scmp.ge.s32.totalorder %s104, 10
      %s111 = sphi 0, %s123
      %s112 = sphi 0, %s119
      %s113 = sphi 0, %s111
      %s114 = sphi 0, %s112
      %s115 = sphi 0, %s113
      %s116 = sphi 0, %s114
      %s126 = sphi 0, %s128
      %s129 = sphi 0, %s126
      %s130 = sphi 0, %s129
      %s146 = sphi 0, %s130
      %s152 = sphi 0, %s154
      %s155 = sphi 0, %s152
      %s156 = sphi 0, %s155
      %s172 = sphi 0, %s156
      %s176 = sphi 0, %s176
      %s178 = sphi 0, %s176
      %s179 = sphi 0, %s178
      %s193 = sphi 0, %s179
      %s197 = sphi 0, %s197
      %s199 = sphi 0, %s197
      %s200 = sphi 0, %s199
      %s214 = sphi 0, %s200
      %s218 = sphi 0, %s218
      %s220 = sphi 0, %s218
      %s221 = sphi 0, %s220
      %s235 = sphi 0, %s221
      %s239 = sphi 0, %s239
      %s241 = sphi 0, %s239
      %s242 = sphi 0, %s241
      %s256 = sphi 0, %s242
      %s260 = sphi 0, %s260
      %s262 = sphi 0, %s260
      %s263 = sphi 0, %s262
      %s277 = sphi 0, %s263
      %s281 = sphi 0, %s281
      %s283 = sphi 0, %s281
      %s284 = sphi 0, %s283
      %s298 = sphi 0, %s284
      %s302 = sphi 0, %s302
      %s304 = sphi 0, %s302
      %s305 = sphi 0, %s304
      %s319 = sphi 0, %s305
      %s323 = sphi 0, %s323
      %s325 = sphi 0, %s323
      %s326 = sphi 0, %s325
      %s340 = sphi 0, %s326
      %s344 = sphi 0, %s344
      %s346 = sphi 0, %s344
      %s347 = sphi 0, %s346
      %s361 = sphi 0, %s347
      %s365 = sphi 0, %s365
      %s367 = sphi 0, %s365
      %s368 = sphi 0, %s367
      %s382 = sphi 0, %s368
      %s386 = sphi 0, %s386
      %s388 = sphi 0, %s386
      %s389 = sphi 0, %s388
      %s403 = sphi 0, %s389
      %s407 = sphi 0, %s407
      %s409 = sphi 0, %s407
      %s410 = sphi 0, %s409
      %s424 = sphi 0, %s410
      %s428 = sphi 0, %s428
      %s430 = sphi 0, %s428
      %s431 = sphi 0, %s430
      %s445 = sphi 0, %s431
      %s449 = sphi 0, %s449
      %s451 = sphi 0, %s449
      %s452 = sphi 0, %s451
      %s466 = sphi 0, %s452
      %s470 = sphi 0, %s470
      %s472 = sphi 0, %s470
      %s473 = sphi 0, %s472
      %s487 = sphi 0, %s473
      %s491 = sphi 0, %s491
      %s493 = sphi 0, %s491
      %s494 = sphi 0, %s493
      %s508 = sphi 0, %s494
      %s512 = sphi 0, %s512
      %s514 = sphi 0, %s512
      %s515 = sphi 0, %s514
      %s529 = sphi 0, %s515
      %s545 = sphi 0, %s547
      %s548 = sphi 0, %s545
      %s549 = sphi 0, %s548
      %s565 = sphi 0, %s549
      %s581 = sphi 0, %s583
      %s584 = sphi 0, %s581
      %s585 = sphi 0, %s584
      %s601 = sphi 0, %s585
      %s617 = sphi 0, %s619
      %s620 = sphi 0, %s617
      %s621 = sphi 0, %s620
      %s637 = sphi 0, %s621
      %s653 = sphi 0, %s655
      %s656 = sphi 0, %s653
      %s657 = sphi 0, %s656
      %s673 = sphi 0, %s657
      %s689 = sphi 0, %s691
      %s692 = sphi 0, %s689
      %s693 = sphi 0, %s692
      %s709 = sphi 0, %s693
      %s725 = sphi 0, %s727
      %s728 = sphi 0, %s725
      %s729 = sphi 0, %s728
      %s745 = sphi 0, %s729
      %s761 = sphi 0, %s763
      %s764 = sphi 0, %s761
      %s765 = sphi 0, %s764
      %s781 = sphi 0, %s765
      %s797 = sphi 0, %s799
      %s800 = sphi 0, %s797
      %s801 = sphi 0, %s800
      %s817 = sphi 0, %s801
      %s833 = sphi 0, %s835
      %s836 = sphi 0, %s833
      %s837 = sphi 0, %s836
      %s853 = sphi 0, %s837
      %s869 = sphi 0, %s871
      %s872 = sphi 0, %s869
      %s873 = sphi 0, %s872
      %s889 = sphi 0, %s873
      %s905 = sphi 0, %s907
      %s908 = sphi 0, %s905
      %s909 = sphi 0, %s908
      %s925 = sphi 0, %s909
      %s941 = sphi 0, %s943
      %s944 = sphi 0, %s941
      %s945 = sphi 0, %s944
      %s961 = sphi 0, %s945
      %s965 = sphi 0, %s965
      %s967 = sphi 0, %s965
      %s968 = sphi 0, %s967
      %s982 = sphi 0, %s968
      %s986 = sphi 0, %s986
      %s988 = sphi 0, %s986
      %s989 = sphi 0, %s988
      %s1003 = sphi 0, %s989
      %s1007 = sphi 0, %s1007
      %s1009 = sphi 0, %s1007
      %s1010 = sphi 0, %s1009
      %s1024 = sphi 0, %s1010
      %s1028 = sphi 0, %s1028
      %s1030 = sphi 0, %s1028
      %s1031 = sphi 0, %s1030
      %s1045 = sphi 0, %s1031
      %s1049 = sphi 0, %s1049
      %s1051 = sphi 0, %s1049
      %s1052 = sphi 0, %s1051
      %s1066 = sphi 0, %s1052
      %s1070 = sphi 0, %s1070
      %s1072 = sphi 0, %s1070
      %s1073 = sphi 0, %s1072
      %s1087 = sphi 0, %s1073
      %s1091 = sphi 0, %s1091
      %s1093 = sphi 0, %s1091
      %s1094 = sphi 0, %s1093
      %s1108 = sphi 0, %s1094
      %s1112 = sphi 0, %s1112
      %s1114 = sphi 0, %s1112
      %s1115 = sphi 0, %s1114
      %s1129 = sphi 0, %s1115
      %s1133 = sphi 0, %s1133
      %s1135 = sphi 0, %s1133
      %s1136 = sphi 0, %s1135
      %s1150 = sphi 0, %s1136
      %s1154 = sphi 0, %s1154
      %s1156 = sphi 0, %s1154
      %s1157 = sphi 0, %s1156
      %s1171 = sphi 0, %s1157
      %s1175 = sphi 0, %s1175
      %s1177 = sphi 0, %s1175
      %s1178 = sphi 0, %s1177
      %s1192 = sphi 0, %s1178
      %s1196 = sphi 0, %s1196
      %s1198 = sphi 0, %s1196
      %s1199 = sphi 0, %s1198
      %s1213 = sphi 0, %s1199
      %s1219 = sphi 0, %s1221
      %s1222 = sphi 0, %s1219
      %s1223 = sphi 0, %s1222
      %s1239 = sphi 0, %s1223
    $region4: #{fwd.4} parent=1 // loop_header_branch
      %107 = sbr.rel (%p105) target = $region8
    $region5: #{fwd.4} parent=1 // loop_body
      %s109 = ssub.s32 %s104, 1
      %s110 = ssub.s32 %s104, 2
      %s117 = sadd.s32 1, %s112
      %p118 = scmp.ge.s32.totalorder %s117, 4
      %s119 = scalar_select %p118, 0, %s117
      %s120 = sadd.s32 1, %s111
      %s121 = scalar_select %p118, %s120, %s111
      %p122 = scmp.ge.s32.totalorder %s121, 2
      %s123 = scalar_select %p122, 0, %s121
      %s124 = ssub.s32 %s111, %s123
      %p125 = scmp.eq.s32.totalorder %s124, 0
      %s127 = sadd.s32 %s126, 1
      %s128 = scalar_select %p125, %s126, %s127
      %p131 = pneg %p125
      %p132 = scmp.eq.s32.totalorder %s104, 7
      %p133 = por %p131, %p132
      %p134 = scmp.ne.s32.totalorder %s126, %s129
      %p135 = scmp.eq.s32.totalorder %s104, 0
      %p136 = por %p134, %p135
      %p137 = scmp.ne.s32.totalorder %s126, %s129
      %p138 = scmp.eq.s32.totalorder %s109, 7
      %p139 = por %p137, %p138
      %p140 = scmp.ne.s32.totalorder %s129, %s130
      %p141 = scmp.eq.s32.totalorder %s109, 0
      %p142 = por %p140, %p141
      %p143 = scmp.ne.s32.totalorder %s129, %s130
      %p144 = scmp.eq.s32.totalorder %s110, 7
      %p145 = por %p143, %p144
      %p147 = scmp.ne.s32.totalorder %s130, %s146
      %p148 = scmp.eq.s32.totalorder %s110, 0
      %p149 = por %p147, %p148
      %s150 = ssub.s32 %s111, %s123
      %p151 = scmp.eq.s32.totalorder %s150, 0
      %s153 = sadd.s32 %s152, 1
      %s154 = scalar_select %p151, %s152, %s153
      %p157 = pneg %p151
      %p158 = scmp.eq.s32.totalorder %s104, 7
      %p159 = por %p157, %p158
      %p160 = scmp.ne.s32.totalorder %s152, %s155
      %p161 = scmp.eq.s32.totalorder %s104, 0
      %p162 = por %p160, %p161
      %p163 = scmp.ne.s32.totalorder %s152, %s155
      %p164 = scmp.eq.s32.totalorder %s109, 7
      %p165 = por %p163, %p164
      %p166 = scmp.ne.s32.totalorder %s155, %s156
      %p167 = scmp.eq.s32.totalorder %s109, 0
      %p168 = por %p166, %p167
      %p169 = scmp.ne.s32.totalorder %s155, %s156
      %p170 = scmp.eq.s32.totalorder %s110, 7
      %p171 = por %p169, %p170
      %p173 = scmp.ne.s32.totalorder %s156, %s172
      %p174 = scmp.eq.s32.totalorder %s110, 0
      %p175 = por %p173, %p174
      %s177 = sadd.s32 %s176, 1
      %p180 = scmp.eq.s32.totalorder %s104, 7
      %p181 = scmp.ne.s32.totalorder %s176, %s178
      %p182 = scmp.eq.s32.totalorder %s104, 0
      %p183 = por %p181, %p182
      %p184 = scmp.ne.s32.totalorder %s176, %s178
      %p185 = scmp.eq.s32.totalorder %s109, 7
      %p186 = por %p184, %p185
      %p187 = scmp.ne.s32.totalorder %s178, %s179
      %p188 = scmp.eq.s32.totalorder %s109, 0
      %p189 = por %p187, %p188
      %p190 = scmp.ne.s32.totalorder %s178, %s179
      %p191 = scmp.eq.s32.totalorder %s110, 7
      %p192 = por %p190, %p191
      %p194 = scmp.ne.s32.totalorder %s179, %s193
      %p195 = scmp.eq.s32.totalorder %s110, 0
      %p196 = por %p194, %p195
      %s198 = sadd.s32 %s197, 1
      %p201 = scmp.eq.s32.totalorder %s104, 7
      %p202 = scmp.ne.s32.totalorder %s197, %s199
      %p203 = scmp.eq.s32.totalorder %s104, 0
      %p204 = por %p202, %p203
      %p205 = scmp.ne.s32.totalorder %s197, %s199
      %p206 = scmp.eq.s32.totalorder %s109, 7
      %p207 = por %p205, %p206
      %p208 = scmp.ne.s32.totalorder %s199, %s200
      %p209 = scmp.eq.s32.totalorder %s109, 0
      %p210 = por %p208, %p209
      %p211 = scmp.ne.s32.totalorder %s199, %s200
      %p212 = scmp.eq.s32.totalorder %s110, 7
      %p213 = por %p211, %p212
      %p215 = scmp.ne.s32.totalorder %s200, %s214
      %p216 = scmp.eq.s32.totalorder %s110, 0
      %p217 = por %p215, %p216
      %s219 = sadd.s32 %s218, 1
      %p222 = scmp.eq.s32.totalorder %s104, 7
      %p223 = scmp.ne.s32.totalorder %s218, %s220
      %p224 = scmp.eq.s32.totalorder %s104, 0
      %p225 = por %p223, %p224
      %p226 = scmp.ne.s32.totalorder %s218, %s220
      %p227 = scmp.eq.s32.totalorder %s109, 7
      %p228 = por %p226, %p227
      %p229 = scmp.ne.s32.totalorder %s220, %s221
      %p230 = scmp.eq.s32.totalorder %s109, 0
      %p231 = por %p229, %p230
      %p232 = scmp.ne.s32.totalorder %s220, %s221
      %p233 = scmp.eq.s32.totalorder %s110, 7
      %p234 = por %p232, %p233
      %p236 = scmp.ne.s32.totalorder %s221, %s235
      %p237 = scmp.eq.s32.totalorder %s110, 0
      %p238 = por %p236, %p237
      %s240 = sadd.s32 %s239, 1
      %p243 = scmp.eq.s32.totalorder %s104, 7
      %p244 = scmp.ne.s32.totalorder %s239, %s241
      %p245 = scmp.eq.s32.totalorder %s104, 0
      %p246 = por %p244, %p245
      %p247 = scmp.ne.s32.totalorder %s239, %s241
      %p248 = scmp.eq.s32.totalorder %s109, 7
      %p249 = por %p247, %p248
      %p250 = scmp.ne.s32.totalorder %s241, %s242
      %p251 = scmp.eq.s32.totalorder %s109, 0
      %p252 = por %p250, %p251
      %p253 = scmp.ne.s32.totalorder %s241, %s242
      %p254 = scmp.eq.s32.totalorder %s110, 7
      %p255 = por %p253, %p254
      %p257 = scmp.ne.s32.totalorder %s242, %s256
      %p258 = scmp.eq.s32.totalorder %s110, 0
      %p259 = por %p257, %p258
      %s261 = sadd.s32 %s260, 1
      %p264 = scmp.eq.s32.totalorder %s104, 7
      %p265 = scmp.ne.s32.totalorder %s260, %s262
      %p266 = scmp.eq.s32.totalorder %s104, 0
      %p267 = por %p265, %p266
      %p268 = scmp.ne.s32.totalorder %s260, %s262
      %p269 = scmp.eq.s32.totalorder %s109, 7
      %p270 = por %p268, %p269
      %p271 = scmp.ne.s32.totalorder %s262, %s263
      %p272 = scmp.eq.s32.totalorder %s109, 0
      %p273 = por %p271, %p272
      %p274 = scmp.ne.s32.totalorder %s262, %s263
      %p275 = scmp.eq.s32.totalorder %s110, 7
      %p276 = por %p274, %p275
      %p278 = scmp.ne.s32.totalorder %s263, %s277
      %p279 = scmp.eq.s32.totalorder %s110, 0
      %p280 = por %p278, %p279
      %s282 = sadd.s32 %s281, 1
      %p285 = scmp.eq.s32.totalorder %s104, 7
      %p286 = scmp.ne.s32.totalorder %s281, %s283
      %p287 = scmp.eq.s32.totalorder %s104, 0
      %p288 = por %p286, %p287
      %p289 = scmp.ne.s32.totalorder %s281, %s283
      %p290 = scmp.eq.s32.totalorder %s109, 7
      %p291 = por %p289, %p290
      %p292 = scmp.ne.s32.totalorder %s283, %s284
      %p293 = scmp.eq.s32.totalorder %s109, 0
      %p294 = por %p292, %p293
      %p295 = scmp.ne.s32.totalorder %s283, %s284
      %p296 = scmp.eq.s32.totalorder %s110, 7
      %p297 = por %p295, %p296
      %p299 = scmp.ne.s32.totalorder %s284, %s298
      %p300 = scmp.eq.s32.totalorder %s110, 0
      %p301 = por %p299, %p300
      %s303 = sadd.s32 %s302, 1
      %p306 = scmp.eq.s32.totalorder %s104, 7
      %p307 = scmp.ne.s32.totalorder %s302, %s304
      %p308 = scmp.eq.s32.totalorder %s104, 0
      %p309 = por %p307, %p308
      %p310 = scmp.ne.s32.totalorder %s302, %s304
      %p311 = scmp.eq.s32.totalorder %s109, 7
      %p312 = por %p310, %p311
      %p313 = scmp.ne.s32.totalorder %s304, %s305
      %p314 = scmp.eq.s32.totalorder %s109, 0
      %p315 = por %p313, %p314
      %p316 = scmp.ne.s32.totalorder %s304, %s305
      %p317 = scmp.eq.s32.totalorder %s110, 7
      %p318 = por %p316, %p317
      %p320 = scmp.ne.s32.totalorder %s305, %s319
      %p321 = scmp.eq.s32.totalorder %s110, 0
      %p322 = por %p320, %p321
      %s324 = sadd.s32 %s323, 1
      %p327 = scmp.eq.s32.totalorder %s104, 7
      %p328 = scmp.ne.s32.totalorder %s323, %s325
      %p329 = scmp.eq.s32.totalorder %s104, 0
      %p330 = por %p328, %p329
      %p331 = scmp.ne.s32.totalorder %s323, %s325
      %p332 = scmp.eq.s32.totalorder %s109, 7
      %p333 = por %p331, %p332
      %p334 = scmp.ne.s32.totalorder %s325, %s326
      %p335 = scmp.eq.s32.totalorder %s109, 0
      %p336 = por %p334, %p335
      %p337 = scmp.ne.s32.totalorder %s325, %s326
      %p338 = scmp.eq.s32.totalorder %s110, 7
      %p339 = por %p337, %p338
      %p341 = scmp.ne.s32.totalorder %s326, %s340
      %p342 = scmp.eq.s32.totalorder %s110, 0
      %p343 = por %p341, %p342
      %s345 = sadd.s32 %s344, 1
      %p348 = scmp.eq.s32.totalorder %s104, 7
      %p349 = scmp.ne.s32.totalorder %s344, %s346
      %p350 = scmp.eq.s32.totalorder %s104, 0
      %p351 = por %p349, %p350
      %p352 = scmp.ne.s32.totalorder %s344, %s346
      %p353 = scmp.eq.s32.totalorder %s109, 7
      %p354 = por %p352, %p353
      %p355 = scmp.ne.s32.totalorder %s346, %s347
      %p356 = scmp.eq.s32.totalorder %s109, 0
      %p357 = por %p355, %p356
      %p358 = scmp.ne.s32.totalorder %s346, %s347
      %p359 = scmp.eq.s32.totalorder %s110, 7
      %p360 = por %p358, %p359
      %p362 = scmp.ne.s32.totalorder %s347, %s361
      %p363 = scmp.eq.s32.totalorder %s110, 0
      %p364 = por %p362, %p363
      %s366 = sadd.s32 %s365, 1
      %p369 = scmp.eq.s32.totalorder %s104, 7
      %p370 = scmp.ne.s32.totalorder %s365, %s367
      %p371 = scmp.eq.s32.totalorder %s104, 0
      %p372 = por %p370, %p371
      %p373 = scmp.ne.s32.totalorder %s365, %s367
      %p374 = scmp.eq.s32.totalorder %s109, 7
      %p375 = por %p373, %p374
      %p376 = scmp.ne.s32.totalorder %s367, %s368
      %p377 = scmp.eq.s32.totalorder %s109, 0
      %p378 = por %p376, %p377
      %p379 = scmp.ne.s32.totalorder %s367, %s368
      %p380 = scmp.eq.s32.totalorder %s110, 7
      %p381 = por %p379, %p380
      %p383 = scmp.ne.s32.totalorder %s368, %s382
      %p384 = scmp.eq.s32.totalorder %s110, 0
      %p385 = por %p383, %p384
      %s387 = sadd.s32 %s386, 1
      %p390 = scmp.eq.s32.totalorder %s104, 7
      %p391 = scmp.ne.s32.totalorder %s386, %s388
      %p392 = scmp.eq.s32.totalorder %s104, 0
      %p393 = por %p391, %p392
      %p394 = scmp.ne.s32.totalorder %s386, %s388
      %p395 = scmp.eq.s32.totalorder %s109, 7
      %p396 = por %p394, %p395
      %p397 = scmp.ne.s32.totalorder %s388, %s389
      %p398 = scmp.eq.s32.totalorder %s109, 0
      %p399 = por %p397, %p398
      %p400 = scmp.ne.s32.totalorder %s388, %s389
      %p401 = scmp.eq.s32.totalorder %s110, 7
      %p402 = por %p400, %p401
      %p404 = scmp.ne.s32.totalorder %s389, %s403
      %p405 = scmp.eq.s32.totalorder %s110, 0
      %p406 = por %p404, %p405
      %s408 = sadd.s32 %s407, 1
      %p411 = scmp.eq.s32.totalorder %s104, 7
      %p412 = scmp.ne.s32.totalorder %s407, %s409
      %p413 = scmp.eq.s32.totalorder %s104, 0
      %p414 = por %p412, %p413
      %p415 = scmp.ne.s32.totalorder %s407, %s409
      %p416 = scmp.eq.s32.totalorder %s109, 7
      %p417 = por %p415, %p416
      %p418 = scmp.ne.s32.totalorder %s409, %s410
      %p419 = scmp.eq.s32.totalorder %s109, 0
      %p420 = por %p418, %p419
      %p421 = scmp.ne.s32.totalorder %s409, %s410
      %p422 = scmp.eq.s32.totalorder %s110, 7
      %p423 = por %p421, %p422
      %p425 = scmp.ne.s32.totalorder %s410, %s424
      %p426 = scmp.eq.s32.totalorder %s110, 0
      %p427 = por %p425, %p426
      %s429 = sadd.s32 %s428, 1
      %p432 = scmp.eq.s32.totalorder %s104, 7
      %p433 = scmp.ne.s32.totalorder %s428, %s430
      %p434 = scmp.eq.s32.totalorder %s104, 0
      %p435 = por %p433, %p434
      %p436 = scmp.ne.s32.totalorder %s428, %s430
      %p437 = scmp.eq.s32.totalorder %s109, 7
      %p438 = por %p436, %p437
      %p439 = scmp.ne.s32.totalorder %s430, %s431
      %p440 = scmp.eq.s32.totalorder %s109, 0
      %p441 = por %p439, %p440
      %p442 = scmp.ne.s32.totalorder %s430, %s431
      %p443 = scmp.eq.s32.totalorder %s110, 7
      %p444 = por %p442, %p443
      %p446 = scmp.ne.s32.totalorder %s431, %s445
      %p447 = scmp.eq.s32.totalorder %s110, 0
      %p448 = por %p446, %p447
      %s450 = sadd.s32 %s449, 1
      %p453 = scmp.eq.s32.totalorder %s104, 7
      %p454 = scmp.ne.s32.totalorder %s449, %s451
      %p455 = scmp.eq.s32.totalorder %s104, 0
      %p456 = por %p454, %p455
      %p457 = scmp.ne.s32.totalorder %s449, %s451
      %p458 = scmp.eq.s32.totalorder %s109, 7
      %p459 = por %p457, %p458
      %p460 = scmp.ne.s32.totalorder %s451, %s452
      %p461 = scmp.eq.s32.totalorder %s109, 0
      %p462 = por %p460, %p461
      %p463 = scmp.ne.s32.totalorder %s451, %s452
      %p464 = scmp.eq.s32.totalorder %s110, 7
      %p465 = por %p463, %p464
      %p467 = scmp.ne.s32.totalorder %s452, %s466
      %p468 = scmp.eq.s32.totalorder %s110, 0
      %p469 = por %p467, %p468
      %s471 = sadd.s32 %s470, 1
      %p474 = scmp.eq.s32.totalorder %s104, 7
      %p475 = scmp.ne.s32.totalorder %s470, %s472
      %p476 = scmp.eq.s32.totalorder %s104, 0
      %p477 = por %p475, %p476
      %p478 = scmp.ne.s32.totalorder %s470, %s472
      %p479 = scmp.eq.s32.totalorder %s109, 7
      %p480 = por %p478, %p479
      %p481 = scmp.ne.s32.totalorder %s472, %s473
      %p482 = scmp.eq.s32.totalorder %s109, 0
      %p483 = por %p481, %p482
      %p484 = scmp.ne.s32.totalorder %s472, %s473
      %p485 = scmp.eq.s32.totalorder %s110, 7
      %p486 = por %p484, %p485
      %p488 = scmp.ne.s32.totalorder %s473, %s487
      %p489 = scmp.eq.s32.totalorder %s110, 0
      %p490 = por %p488, %p489
      %s492 = sadd.s32 %s491, 1
      %p495 = scmp.eq.s32.totalorder %s104, 7
      %p496 = scmp.ne.s32.totalorder %s491, %s493
      %p497 = scmp.eq.s32.totalorder %s104, 0
      %p498 = por %p496, %p497
      %p499 = scmp.ne.s32.totalorder %s491, %s493
      %p500 = scmp.eq.s32.totalorder %s109, 7
      %p501 = por %p499, %p500
      %p502 = scmp.ne.s32.totalorder %s493, %s494
      %p503 = scmp.eq.s32.totalorder %s109, 0
      %p504 = por %p502, %p503
      %p505 = scmp.ne.s32.totalorder %s493, %s494
      %p506 = scmp.eq.s32.totalorder %s110, 7
      %p507 = por %p505, %p506
      %p509 = scmp.ne.s32.totalorder %s494, %s508
      %p510 = scmp.eq.s32.totalorder %s110, 0
      %p511 = por %p509, %p510
      %s513 = sadd.s32 %s512, 1
      %p516 = scmp.eq.s32.totalorder %s104, 7
      %p517 = scmp.ne.s32.totalorder %s512, %s514
      %p518 = scmp.eq.s32.totalorder %s104, 0
      %p519 = por %p517, %p518
      %p520 = scmp.ne.s32.totalorder %s512, %s514
      %p521 = scmp.eq.s32.totalorder %s109, 7
      %p522 = por %p520, %p521
      %p523 = scmp.ne.s32.totalorder %s514, %s515
      %p524 = scmp.eq.s32.totalorder %s109, 0
      %p525 = por %p523, %p524
      %p526 = scmp.ne.s32.totalorder %s514, %s515
      %p527 = scmp.eq.s32.totalorder %s110, 7
      %p528 = por %p526, %p527
      %p530 = scmp.ne.s32.totalorder %s515, %s529
      %p531 = scmp.eq.s32.totalorder %s110, 0
      %p532 = por %p530, %p531
      %s533 = ssub.s32 %s112, 1
      %p534 = scmp.gt.s32.totalorder %s533, 0
      %s535 = scalar_select %p534, %s533, 0
      %p536 = scmp.lt.s32.totalorder %s535, 1
      %s537 = scalar_select %p536, %s535, 1
      %s538 = ssub.s32 %s119, 1
      %p539 = scmp.gt.s32.totalorder %s538, 0
      %s540 = scalar_select %p539, %s538, 0
      %p541 = scmp.lt.s32.totalorder %s540, 1
      %s542 = scalar_select %p541, %s540, 1
      %s543 = ssub.s32 %s537, %s542
      %p544 = scmp.eq.s32.totalorder %s543, 0
      %s546 = sadd.s32 %s545, 1
      %s547 = scalar_select %p544, %s545, %s546
      %p550 = pneg %p544
      %p551 = scmp.eq.s32.totalorder %s104, 7
      %p552 = por %p550, %p551
      %p553 = scmp.ne.s32.totalorder %s545, %s548
      %p554 = scmp.eq.s32.totalorder %s104, 0
      %p555 = por %p553, %p554
      %p556 = scmp.ne.s32.totalorder %s545, %s548
      %p557 = scmp.eq.s32.totalorder %s109, 7
      %p558 = por %p556, %p557
      %p559 = scmp.ne.s32.totalorder %s548, %s549
      %p560 = scmp.eq.s32.totalorder %s109, 0
      %p561 = por %p559, %p560
      %p562 = scmp.ne.s32.totalorder %s548, %s549
      %p563 = scmp.eq.s32.totalorder %s110, 7
      %p564 = por %p562, %p563
      %p566 = scmp.ne.s32.totalorder %s549, %s565
      %p567 = scmp.eq.s32.totalorder %s110, 0
      %p568 = por %p566, %p567
      %s569 = ssub.s32 %s112, 1
      %p570 = scmp.gt.s32.totalorder %s569, 0
      %s571 = scalar_select %p570, %s569, 0
      %p572 = scmp.lt.s32.totalorder %s571, 1
      %s573 = scalar_select %p572, %s571, 1
      %s574 = ssub.s32 %s119, 1
      %p575 = scmp.gt.s32.totalorder %s574, 0
      %s576 = scalar_select %p575, %s574, 0
      %p577 = scmp.lt.s32.totalorder %s576, 1
      %s578 = scalar_select %p577, %s576, 1
      %s579 = ssub.s32 %s573, %s578
      %p580 = scmp.eq.s32.totalorder %s579, 0
      %s582 = sadd.s32 %s581, 1
      %s583 = scalar_select %p580, %s581, %s582
      %p586 = pneg %p580
      %p587 = scmp.eq.s32.totalorder %s104, 7
      %p588 = por %p586, %p587
      %p589 = scmp.ne.s32.totalorder %s581, %s584
      %p590 = scmp.eq.s32.totalorder %s104, 0
      %p591 = por %p589, %p590
      %p592 = scmp.ne.s32.totalorder %s581, %s584
      %p593 = scmp.eq.s32.totalorder %s109, 7
      %p594 = por %p592, %p593
      %p595 = scmp.ne.s32.totalorder %s584, %s585
      %p596 = scmp.eq.s32.totalorder %s109, 0
      %p597 = por %p595, %p596
      %p598 = scmp.ne.s32.totalorder %s584, %s585
      %p599 = scmp.eq.s32.totalorder %s110, 7
      %p600 = por %p598, %p599
      %p602 = scmp.ne.s32.totalorder %s585, %s601
      %p603 = scmp.eq.s32.totalorder %s110, 0
      %p604 = por %p602, %p603
      %s605 = ssub.s32 %s112, 1
      %p606 = scmp.gt.s32.totalorder %s605, 0
      %s607 = scalar_select %p606, %s605, 0
      %p608 = scmp.lt.s32.totalorder %s607, 1
      %s609 = scalar_select %p608, %s607, 1
      %s610 = ssub.s32 %s119, 1
      %p611 = scmp.gt.s32.totalorder %s610, 0
      %s612 = scalar_select %p611, %s610, 0
      %p613 = scmp.lt.s32.totalorder %s612, 1
      %s614 = scalar_select %p613, %s612, 1
      %s615 = ssub.s32 %s609, %s614
      %p616 = scmp.eq.s32.totalorder %s615, 0
      %s618 = sadd.s32 %s617, 1
      %s619 = scalar_select %p616, %s617, %s618
      %p622 = pneg %p616
      %p623 = scmp.eq.s32.totalorder %s104, 7
      %p624 = por %p622, %p623
      %p625 = scmp.ne.s32.totalorder %s617, %s620
      %p626 = scmp.eq.s32.totalorder %s104, 0
      %p627 = por %p625, %p626
      %p628 = scmp.ne.s32.totalorder %s617, %s620
      %p629 = scmp.eq.s32.totalorder %s109, 7
      %p630 = por %p628, %p629
      %p631 = scmp.ne.s32.totalorder %s620, %s621
      %p632 = scmp.eq.s32.totalorder %s109, 0
      %p633 = por %p631, %p632
      %p634 = scmp.ne.s32.totalorder %s620, %s621
      %p635 = scmp.eq.s32.totalorder %s110, 7
      %p636 = por %p634, %p635
      %p638 = scmp.ne.s32.totalorder %s621, %s637
      %p639 = scmp.eq.s32.totalorder %s110, 0
      %p640 = por %p638, %p639
      %s641 = ssub.s32 %s112, 1
      %p642 = scmp.gt.s32.totalorder %s641, 0
      %s643 = scalar_select %p642, %s641, 0
      %p644 = scmp.lt.s32.totalorder %s643, 1
      %s645 = scalar_select %p644, %s643, 1
      %s646 = ssub.s32 %s119, 1
      %p647 = scmp.gt.s32.totalorder %s646, 0
      %s648 = scalar_select %p647, %s646, 0
      %p649 = scmp.lt.s32.totalorder %s648, 1
      %s650 = scalar_select %p649, %s648, 1
      %s651 = ssub.s32 %s645, %s650
      %p652 = scmp.eq.s32.totalorder %s651, 0
      %s654 = sadd.s32 %s653, 1
      %s655 = scalar_select %p652, %s653, %s654
      %p658 = pneg %p652
      %p659 = scmp.eq.s32.totalorder %s104, 7
      %p660 = por %p658, %p659
      %p661 = scmp.ne.s32.totalorder %s653, %s656
      %p662 = scmp.eq.s32.totalorder %s104, 0
      %p663 = por %p661, %p662
      %p664 = scmp.ne.s32.totalorder %s653, %s656
      %p665 = scmp.eq.s32.totalorder %s109, 7
      %p666 = por %p664, %p665
      %p667 = scmp.ne.s32.totalorder %s656, %s657
      %p668 = scmp.eq.s32.totalorder %s109, 0
      %p669 = por %p667, %p668
      %p670 = scmp.ne.s32.totalorder %s656, %s657
      %p671 = scmp.eq.s32.totalorder %s110, 7
      %p672 = por %p670, %p671
      %p674 = scmp.ne.s32.totalorder %s657, %s673
      %p675 = scmp.eq.s32.totalorder %s110, 0
      %p676 = por %p674, %p675
      %s677 = ssub.s32 %s112, 1
      %p678 = scmp.gt.s32.totalorder %s677, 0
      %s679 = scalar_select %p678, %s677, 0
      %p680 = scmp.lt.s32.totalorder %s679, 1
      %s681 = scalar_select %p680, %s679, 1
      %s682 = ssub.s32 %s119, 1
      %p683 = scmp.gt.s32.totalorder %s682, 0
      %s684 = scalar_select %p683, %s682, 0
      %p685 = scmp.lt.s32.totalorder %s684, 1
      %s686 = scalar_select %p685, %s684, 1
      %s687 = ssub.s32 %s681, %s686
      %p688 = scmp.eq.s32.totalorder %s687, 0
      %s690 = sadd.s32 %s689, 1
      %s691 = scalar_select %p688, %s689, %s690
      %p694 = pneg %p688
      %p695 = scmp.eq.s32.totalorder %s104, 7
      %p696 = por %p694, %p695
      %p697 = scmp.ne.s32.totalorder %s689, %s692
      %p698 = scmp.eq.s32.totalorder %s104, 0
      %p699 = por %p697, %p698
      %p700 = scmp.ne.s32.totalorder %s689, %s692
      %p701 = scmp.eq.s32.totalorder %s109, 7
      %p702 = por %p700, %p701
      %p703 = scmp.ne.s32.totalorder %s692, %s693
      %p704 = scmp.eq.s32.totalorder %s109, 0
      %p705 = por %p703, %p704
      %p706 = scmp.ne.s32.totalorder %s692, %s693
      %p707 = scmp.eq.s32.totalorder %s110, 7
      %p708 = por %p706, %p707
      %p710 = scmp.ne.s32.totalorder %s693, %s709
      %p711 = scmp.eq.s32.totalorder %s110, 0
      %p712 = por %p710, %p711
      %s713 = ssub.s32 %s112, 1
      %p714 = scmp.gt.s32.totalorder %s713, 0
      %s715 = scalar_select %p714, %s713, 0
      %p716 = scmp.lt.s32.totalorder %s715, 1
      %s717 = scalar_select %p716, %s715, 1
      %s718 = ssub.s32 %s119, 1
      %p719 = scmp.gt.s32.totalorder %s718, 0
      %s720 = scalar_select %p719, %s718, 0
      %p721 = scmp.lt.s32.totalorder %s720, 1
      %s722 = scalar_select %p721, %s720, 1
      %s723 = ssub.s32 %s717, %s722
      %p724 = scmp.eq.s32.totalorder %s723, 0
      %s726 = sadd.s32 %s725, 1
      %s727 = scalar_select %p724, %s725, %s726
      %p730 = pneg %p724
      %p731 = scmp.eq.s32.totalorder %s104, 7
      %p732 = por %p730, %p731
      %p733 = scmp.ne.s32.totalorder %s725, %s728
      %p734 = scmp.eq.s32.totalorder %s104, 0
      %p735 = por %p733, %p734
      %p736 = scmp.ne.s32.totalorder %s725, %s728
      %p737 = scmp.eq.s32.totalorder %s109, 7
      %p738 = por %p736, %p737
      %p739 = scmp.ne.s32.totalorder %s728, %s729
      %p740 = scmp.eq.s32.totalorder %s109, 0
      %p741 = por %p739, %p740
      %p742 = scmp.ne.s32.totalorder %s728, %s729
      %p743 = scmp.eq.s32.totalorder %s110, 7
      %p744 = por %p742, %p743
      %p746 = scmp.ne.s32.totalorder %s729, %s745
      %p747 = scmp.eq.s32.totalorder %s110, 0
      %p748 = por %p746, %p747
      %s749 = ssub.s32 %s112, 1
      %p750 = scmp.gt.s32.totalorder %s749, 0
      %s751 = scalar_select %p750, %s749, 0
      %p752 = scmp.lt.s32.totalorder %s751, 1
      %s753 = scalar_select %p752, %s751, 1
      %s754 = ssub.s32 %s119, 1
      %p755 = scmp.gt.s32.totalorder %s754, 0
      %s756 = scalar_select %p755, %s754, 0
      %p757 = scmp.lt.s32.totalorder %s756, 1
      %s758 = scalar_select %p757, %s756, 1
      %s759 = ssub.s32 %s753, %s758
      %p760 = scmp.eq.s32.totalorder %s759, 0
      %s762 = sadd.s32 %s761, 1
      %s763 = scalar_select %p760, %s761, %s762
      %p766 = pneg %p760
      %p767 = scmp.eq.s32.totalorder %s104, 7
      %p768 = por %p766, %p767
      %p769 = scmp.ne.s32.totalorder %s761, %s764
      %p770 = scmp.eq.s32.totalorder %s104, 0
      %p771 = por %p769, %p770
      %p772 = scmp.ne.s32.totalorder %s761, %s764
      %p773 = scmp.eq.s32.totalorder %s109, 7
      %p774 = por %p772, %p773
      %p775 = scmp.ne.s32.totalorder %s764, %s765
      %p776 = scmp.eq.s32.totalorder %s109, 0
      %p777 = por %p775, %p776
      %p778 = scmp.ne.s32.totalorder %s764, %s765
      %p779 = scmp.eq.s32.totalorder %s110, 7
      %p780 = por %p778, %p779
      %p782 = scmp.ne.s32.totalorder %s765, %s781
      %p783 = scmp.eq.s32.totalorder %s110, 0
      %p784 = por %p782, %p783
      %s785 = ssub.s32 %s112, 1
      %p786 = scmp.gt.s32.totalorder %s785, 0
      %s787 = scalar_select %p786, %s785, 0
      %p788 = scmp.lt.s32.totalorder %s787, 1
      %s789 = scalar_select %p788, %s787, 1
      %s790 = ssub.s32 %s119, 1
      %p791 = scmp.gt.s32.totalorder %s790, 0
      %s792 = scalar_select %p791, %s790, 0
      %p793 = scmp.lt.s32.totalorder %s792, 1
      %s794 = scalar_select %p793, %s792, 1
      %s795 = ssub.s32 %s789, %s794
      %p796 = scmp.eq.s32.totalorder %s795, 0
      %s798 = sadd.s32 %s797, 1
      %s799 = scalar_select %p796, %s797, %s798
      %p802 = pneg %p796
      %p803 = scmp.eq.s32.totalorder %s104, 7
      %p804 = por %p802, %p803
      %p805 = scmp.ne.s32.totalorder %s797, %s800
      %p806 = scmp.eq.s32.totalorder %s104, 0
      %p807 = por %p805, %p806
      %p808 = scmp.ne.s32.totalorder %s797, %s800
      %p809 = scmp.eq.s32.totalorder %s109, 7
      %p810 = por %p808, %p809
      %p811 = scmp.ne.s32.totalorder %s800, %s801
      %p812 = scmp.eq.s32.totalorder %s109, 0
      %p813 = por %p811, %p812
      %p814 = scmp.ne.s32.totalorder %s800, %s801
      %p815 = scmp.eq.s32.totalorder %s110, 7
      %p816 = por %p814, %p815
      %p818 = scmp.ne.s32.totalorder %s801, %s817
      %p819 = scmp.eq.s32.totalorder %s110, 0
      %p820 = por %p818, %p819
      %s821 = ssub.s32 %s112, 1
      %p822 = scmp.gt.s32.totalorder %s821, 0
      %s823 = scalar_select %p822, %s821, 0
      %p824 = scmp.lt.s32.totalorder %s823, 1
      %s825 = scalar_select %p824, %s823, 1
      %s826 = ssub.s32 %s119, 1
      %p827 = scmp.gt.s32.totalorder %s826, 0
      %s828 = scalar_select %p827, %s826, 0
      %p829 = scmp.lt.s32.totalorder %s828, 1
      %s830 = scalar_select %p829, %s828, 1
      %s831 = ssub.s32 %s825, %s830
      %p832 = scmp.eq.s32.totalorder %s831, 0
      %s834 = sadd.s32 %s833, 1
      %s835 = scalar_select %p832, %s833, %s834
      %p838 = pneg %p832
      %p839 = scmp.eq.s32.totalorder %s104, 7
      %p840 = por %p838, %p839
      %p841 = scmp.ne.s32.totalorder %s833, %s836
      %p842 = scmp.eq.s32.totalorder %s104, 0
      %p843 = por %p841, %p842
      %p844 = scmp.ne.s32.totalorder %s833, %s836
      %p845 = scmp.eq.s32.totalorder %s109, 7
      %p846 = por %p844, %p845
      %p847 = scmp.ne.s32.totalorder %s836, %s837
      %p848 = scmp.eq.s32.totalorder %s109, 0
      %p849 = por %p847, %p848
      %p850 = scmp.ne.s32.totalorder %s836, %s837
      %p851 = scmp.eq.s32.totalorder %s110, 7
      %p852 = por %p850, %p851
      %p854 = scmp.ne.s32.totalorder %s837, %s853
      %p855 = scmp.eq.s32.totalorder %s110, 0
      %p856 = por %p854, %p855
      %s857 = ssub.s32 %s112, 1
      %p858 = scmp.gt.s32.totalorder %s857, 0
      %s859 = scalar_select %p858, %s857, 0
      %p860 = scmp.lt.s32.totalorder %s859, 1
      %s861 = scalar_select %p860, %s859, 1
      %s862 = ssub.s32 %s119, 1
      %p863 = scmp.gt.s32.totalorder %s862, 0
      %s864 = scalar_select %p863, %s862, 0
      %p865 = scmp.lt.s32.totalorder %s864, 1
      %s866 = scalar_select %p865, %s864, 1
      %s867 = ssub.s32 %s861, %s866
      %p868 = scmp.eq.s32.totalorder %s867, 0
      %s870 = sadd.s32 %s869, 1
      %s871 = scalar_select %p868, %s869, %s870
      %p874 = pneg %p868
      %p875 = scmp.eq.s32.totalorder %s104, 7
      %p876 = por %p874, %p875
      %p877 = scmp.ne.s32.totalorder %s869, %s872
      %p878 = scmp.eq.s32.totalorder %s104, 0
      %p879 = por %p877, %p878
      %p880 = scmp.ne.s32.totalorder %s869, %s872
      %p881 = scmp.eq.s32.totalorder %s109, 7
      %p882 = por %p880, %p881
      %p883 = scmp.ne.s32.totalorder %s872, %s873
      %p884 = scmp.eq.s32.totalorder %s109, 0
      %p885 = por %p883, %p884
      %p886 = scmp.ne.s32.totalorder %s872, %s873
      %p887 = scmp.eq.s32.totalorder %s110, 7
      %p888 = por %p886, %p887
      %p890 = scmp.ne.s32.totalorder %s873, %s889
      %p891 = scmp.eq.s32.totalorder %s110, 0
      %p892 = por %p890, %p891
      %s893 = ssub.s32 %s112, 1
      %p894 = scmp.gt.s32.totalorder %s893, 0
      %s895 = scalar_select %p894, %s893, 0
      %p896 = scmp.lt.s32.totalorder %s895, 1
      %s897 = scalar_select %p896, %s895, 1
      %s898 = ssub.s32 %s119, 1
      %p899 = scmp.gt.s32.totalorder %s898, 0
      %s900 = scalar_select %p899, %s898, 0
      %p901 = scmp.lt.s32.totalorder %s900, 1
      %s902 = scalar_select %p901, %s900, 1
      %s903 = ssub.s32 %s897, %s902
      %p904 = scmp.eq.s32.totalorder %s903, 0
      %s906 = sadd.s32 %s905, 1
      %s907 = scalar_select %p904, %s905, %s906
      %p910 = pneg %p904
      %p911 = scmp.eq.s32.totalorder %s104, 7
      %p912 = por %p910, %p911
      %p913 = scmp.ne.s32.totalorder %s905, %s908
      %p914 = scmp.eq.s32.totalorder %s104, 0
      %p915 = por %p913, %p914
      %p916 = scmp.ne.s32.totalorder %s905, %s908
      %p917 = scmp.eq.s32.totalorder %s109, 7
      %p918 = por %p916, %p917
      %p919 = scmp.ne.s32.totalorder %s908, %s909
      %p920 = scmp.eq.s32.totalorder %s109, 0
      %p921 = por %p919, %p920
      %p922 = scmp.ne.s32.totalorder %s908, %s909
      %p923 = scmp.eq.s32.totalorder %s110, 7
      %p924 = por %p922, %p923
      %p926 = scmp.ne.s32.totalorder %s909, %s925
      %p927 = scmp.eq.s32.totalorder %s110, 0
      %p928 = por %p926, %p927
      %s929 = ssub.s32 %s112, 1
      %p930 = scmp.gt.s32.totalorder %s929, 0
      %s931 = scalar_select %p930, %s929, 0
      %p932 = scmp.lt.s32.totalorder %s931, 1
      %s933 = scalar_select %p932, %s931, 1
      %s934 = ssub.s32 %s119, 1
      %p935 = scmp.gt.s32.totalorder %s934, 0
      %s936 = scalar_select %p935, %s934, 0
      %p937 = scmp.lt.s32.totalorder %s936, 1
      %s938 = scalar_select %p937, %s936, 1
      %s939 = ssub.s32 %s933, %s938
      %p940 = scmp.eq.s32.totalorder %s939, 0
      %s942 = sadd.s32 %s941, 1
      %s943 = scalar_select %p940, %s941, %s942
      %p946 = pneg %p940
      %p947 = scmp.eq.s32.totalorder %s104, 7
      %p948 = por %p946, %p947
      %p949 = scmp.ne.s32.totalorder %s941, %s944
      %p950 = scmp.eq.s32.totalorder %s104, 0
      %p951 = por %p949, %p950
      %p952 = scmp.ne.s32.totalorder %s941, %s944
      %p953 = scmp.eq.s32.totalorder %s109, 7
      %p954 = por %p952, %p953
      %p955 = scmp.ne.s32.totalorder %s944, %s945
      %p956 = scmp.eq.s32.totalorder %s109, 0
      %p957 = por %p955, %p956
      %p958 = scmp.ne.s32.totalorder %s944, %s945
      %p959 = scmp.eq.s32.totalorder %s110, 7
      %p960 = por %p958, %p959
      %p962 = scmp.ne.s32.totalorder %s945, %s961
      %p963 = scmp.eq.s32.totalorder %s110, 0
      %p964 = por %p962, %p963
      %s966 = sadd.s32 %s965, 1
      %p969 = scmp.eq.s32.totalorder %s104, 7
      %p970 = scmp.ne.s32.totalorder %s965, %s967
      %p971 = scmp.eq.s32.totalorder %s104, 0
      %p972 = por %p970, %p971
      %p973 = scmp.ne.s32.totalorder %s965, %s967
      %p974 = scmp.eq.s32.totalorder %s109, 7
      %p975 = por %p973, %p974
      %p976 = scmp.ne.s32.totalorder %s967, %s968
      %p977 = scmp.eq.s32.totalorder %s109, 0
      %p978 = por %p976, %p977
      %p979 = scmp.ne.s32.totalorder %s967, %s968
      %p980 = scmp.eq.s32.totalorder %s110, 7
      %p981 = por %p979, %p980
      %p983 = scmp.ne.s32.totalorder %s968, %s982
      %p984 = scmp.eq.s32.totalorder %s110, 0
      %p985 = por %p983, %p984
      %s987 = sadd.s32 %s986, 1
      %p990 = scmp.eq.s32.totalorder %s104, 7
      %p991 = scmp.ne.s32.totalorder %s986, %s988
      %p992 = scmp.eq.s32.totalorder %s104, 0
      %p993 = por %p991, %p992
      %p994 = scmp.ne.s32.totalorder %s986, %s988
      %p995 = scmp.eq.s32.totalorder %s109, 7
      %p996 = por %p994, %p995
      %p997 = scmp.ne.s32.totalorder %s988, %s989
      %p998 = scmp.eq.s32.totalorder %s109, 0
      %p999 = por %p997, %p998
      %p1000 = scmp.ne.s32.totalorder %s988, %s989
      %p1001 = scmp.eq.s32.totalorder %s110, 7
      %p1002 = por %p1000, %p1001
      %p1004 = scmp.ne.s32.totalorder %s989, %s1003
      %p1005 = scmp.eq.s32.totalorder %s110, 0
      %p1006 = por %p1004, %p1005
      %s1008 = sadd.s32 %s1007, 1
      %p1011 = scmp.eq.s32.totalorder %s104, 7
      %p1012 = scmp.ne.s32.totalorder %s1007, %s1009
      %p1013 = scmp.eq.s32.totalorder %s104, 0
      %p1014 = por %p1012, %p1013
      %p1015 = scmp.ne.s32.totalorder %s1007, %s1009
      %p1016 = scmp.eq.s32.totalorder %s109, 7
      %p1017 = por %p1015, %p1016
      %p1018 = scmp.ne.s32.totalorder %s1009, %s1010
      %p1019 = scmp.eq.s32.totalorder %s109, 0
      %p1020 = por %p1018, %p1019
      %p1021 = scmp.ne.s32.totalorder %s1009, %s1010
      %p1022 = scmp.eq.s32.totalorder %s110, 7
      %p1023 = por %p1021, %p1022
      %p1025 = scmp.ne.s32.totalorder %s1010, %s1024
      %p1026 = scmp.eq.s32.totalorder %s110, 0
      %p1027 = por %p1025, %p1026
      %s1029 = sadd.s32 %s1028, 1
      %p1032 = scmp.eq.s32.totalorder %s104, 7
      %p1033 = scmp.ne.s32.totalorder %s1028, %s1030
      %p1034 = scmp.eq.s32.totalorder %s104, 0
      %p1035 = por %p1033, %p1034
      %p1036 = scmp.ne.s32.totalorder %s1028, %s1030
      %p1037 = scmp.eq.s32.totalorder %s109, 7
      %p1038 = por %p1036, %p1037
      %p1039 = scmp.ne.s32.totalorder %s1030, %s1031
      %p1040 = scmp.eq.s32.totalorder %s109, 0
      %p1041 = por %p1039, %p1040
      %p1042 = scmp.ne.s32.totalorder %s1030, %s1031
      %p1043 = scmp.eq.s32.totalorder %s110, 7
      %p1044 = por %p1042, %p1043
      %p1046 = scmp.ne.s32.totalorder %s1031, %s1045
      %p1047 = scmp.eq.s32.totalorder %s110, 0
      %p1048 = por %p1046, %p1047
      %s1050 = sadd.s32 %s1049, 1
      %p1053 = scmp.eq.s32.totalorder %s104, 7
      %p1054 = scmp.ne.s32.totalorder %s1049, %s1051
      %p1055 = scmp.eq.s32.totalorder %s104, 0
      %p1056 = por %p1054, %p1055
      %p1057 = scmp.ne.s32.totalorder %s1049, %s1051
      %p1058 = scmp.eq.s32.totalorder %s109, 7
      %p1059 = por %p1057, %p1058
      %p1060 = scmp.ne.s32.totalorder %s1051, %s1052
      %p1061 = scmp.eq.s32.totalorder %s109, 0
      %p1062 = por %p1060, %p1061
      %p1063 = scmp.ne.s32.totalorder %s1051, %s1052
      %p1064 = scmp.eq.s32.totalorder %s110, 7
      %p1065 = por %p1063, %p1064
      %p1067 = scmp.ne.s32.totalorder %s1052, %s1066
      %p1068 = scmp.eq.s32.totalorder %s110, 0
      %p1069 = por %p1067, %p1068
      %s1071 = sadd.s32 %s1070, 1
      %p1074 = scmp.eq.s32.totalorder %s104, 7
      %p1075 = scmp.ne.s32.totalorder %s1070, %s1072
      %p1076 = scmp.eq.s32.totalorder %s104, 0
      %p1077 = por %p1075, %p1076
      %p1078 = scmp.ne.s32.totalorder %s1070, %s1072
      %p1079 = scmp.eq.s32.totalorder %s109, 7
      %p1080 = por %p1078, %p1079
      %p1081 = scmp.ne.s32.totalorder %s1072, %s1073
      %p1082 = scmp.eq.s32.totalorder %s109, 0
      %p1083 = por %p1081, %p1082
      %p1084 = scmp.ne.s32.totalorder %s1072, %s1073
      %p1085 = scmp.eq.s32.totalorder %s110, 7
      %p1086 = por %p1084, %p1085
      %p1088 = scmp.ne.s32.totalorder %s1073, %s1087
      %p1089 = scmp.eq.s32.totalorder %s110, 0
      %p1090 = por %p1088, %p1089
      %s1092 = sadd.s32 %s1091, 1
      %p1095 = scmp.eq.s32.totalorder %s104, 7
      %p1096 = scmp.ne.s32.totalorder %s1091, %s1093
      %p1097 = scmp.eq.s32.totalorder %s104, 0
      %p1098 = por %p1096, %p1097
      %p1099 = scmp.ne.s32.totalorder %s1091, %s1093
      %p1100 = scmp.eq.s32.totalorder %s109, 7
      %p1101 = por %p1099, %p1100
      %p1102 = scmp.ne.s32.totalorder %s1093, %s1094
      %p1103 = scmp.eq.s32.totalorder %s109, 0
      %p1104 = por %p1102, %p1103
      %p1105 = scmp.ne.s32.totalorder %s1093, %s1094
      %p1106 = scmp.eq.s32.totalorder %s110, 7
      %p1107 = por %p1105, %p1106
      %p1109 = scmp.ne.s32.totalorder %s1094, %s1108
      %p1110 = scmp.eq.s32.totalorder %s110, 0
      %p1111 = por %p1109, %p1110
      %s1113 = sadd.s32 %s1112, 1
      %p1116 = scmp.eq.s32.totalorder %s104, 7
      %p1117 = scmp.ne.s32.totalorder %s1112, %s1114
      %p1118 = scmp.eq.s32.totalorder %s104, 0
      %p1119 = por %p1117, %p1118
      %p1120 = scmp.ne.s32.totalorder %s1112, %s1114
      %p1121 = scmp.eq.s32.totalorder %s109, 7
      %p1122 = por %p1120, %p1121
      %p1123 = scmp.ne.s32.totalorder %s1114, %s1115
      %p1124 = scmp.eq.s32.totalorder %s109, 0
      %p1125 = por %p1123, %p1124
      %p1126 = scmp.ne.s32.totalorder %s1114, %s1115
      %p1127 = scmp.eq.s32.totalorder %s110, 7
      %p1128 = por %p1126, %p1127
      %p1130 = scmp.ne.s32.totalorder %s1115, %s1129
      %p1131 = scmp.eq.s32.totalorder %s110, 0
      %p1132 = por %p1130, %p1131
      %s1134 = sadd.s32 %s1133, 1
      %p1137 = scmp.eq.s32.totalorder %s104, 7
      %p1138 = scmp.ne.s32.totalorder %s1133, %s1135
      %p1139 = scmp.eq.s32.totalorder %s104, 0
      %p1140 = por %p1138, %p1139
      %p1141 = scmp.ne.s32.totalorder %s1133, %s1135
      %p1142 = scmp.eq.s32.totalorder %s109, 7
      %p1143 = por %p1141, %p1142
      %p1144 = scmp.ne.s32.totalorder %s1135, %s1136
      %p1145 = scmp.eq.s32.totalorder %s109, 0
      %p1146 = por %p1144, %p1145
      %p1147 = scmp.ne.s32.totalorder %s1135, %s1136
      %p1148 = scmp.eq.s32.totalorder %s110, 7
      %p1149 = por %p1147, %p1148
      %p1151 = scmp.ne.s32.totalorder %s1136, %s1150
      %p1152 = scmp.eq.s32.totalorder %s110, 0
      %p1153 = por %p1151, %p1152
      %s1155 = sadd.s32 %s1154, 1
      %p1158 = scmp.eq.s32.totalorder %s104, 7
      %p1159 = scmp.ne.s32.totalorder %s1154, %s1156
      %p1160 = scmp.eq.s32.totalorder %s104, 0
      %p1161 = por %p1159, %p1160
      %p1162 = scmp.ne.s32.totalorder %s1154, %s1156
      %p1163 = scmp.eq.s32.totalorder %s109, 7
      %p1164 = por %p1162, %p1163
      %p1165 = scmp.ne.s32.totalorder %s1156, %s1157
      %p1166 = scmp.eq.s32.totalorder %s109, 0
      %p1167 = por %p1165, %p1166
      %p1168 = scmp.ne.s32.totalorder %s1156, %s1157
      %p1169 = scmp.eq.s32.totalorder %s110, 7
      %p1170 = por %p1168, %p1169
      %p1172 = scmp.ne.s32.totalorder %s1157, %s1171
      %p1173 = scmp.eq.s32.totalorder %s110, 0
      %p1174 = por %p1172, %p1173
      %s1176 = sadd.s32 %s1175, 1
      %p1179 = scmp.eq.s32.totalorder %s104, 7
      %p1180 = scmp.ne.s32.totalorder %s1175, %s1177
      %p1181 = scmp.eq.s32.totalorder %s104, 0
      %p1182 = por %p1180, %p1181
      %p1183 = scmp.ne.s32.totalorder %s1175, %s1177
      %p1184 = scmp.eq.s32.totalorder %s109, 7
      %p1185 = por %p1183, %p1184
      %p1186 = scmp.ne.s32.totalorder %s1177, %s1178
      %p1187 = scmp.eq.s32.totalorder %s109, 0
      %p1188 = por %p1186, %p1187
      %p1189 = scmp.ne.s32.totalorder %s1177, %s1178
      %p1190 = scmp.eq.s32.totalorder %s110, 7
      %p1191 = por %p1189, %p1190
      %p1193 = scmp.ne.s32.totalorder %s1178, %s1192
      %p1194 = scmp.eq.s32.totalorder %s110, 0
      %p1195 = por %p1193, %p1194
      %s1197 = sadd.s32 %s1196, 1
      %p1200 = scmp.eq.s32.totalorder %s104, 7
      %p1201 = scmp.ne.s32.totalorder %s1196, %s1198
      %p1202 = scmp.eq.s32.totalorder %s104, 0
      %p1203 = por %p1201, %p1202
      %p1204 = scmp.ne.s32.totalorder %s1196, %s1198
      %p1205 = scmp.eq.s32.totalorder %s109, 7
      %p1206 = por %p1204, %p1205
      %p1207 = scmp.ne.s32.totalorder %s1198, %s1199
      %p1208 = scmp.eq.s32.totalorder %s109, 0
      %p1209 = por %p1207, %p1208
      %p1210 = scmp.ne.s32.totalorder %s1198, %s1199
      %p1211 = scmp.eq.s32.totalorder %s110, 7
      %p1212 = por %p1210, %p1211
      %p1214 = scmp.ne.s32.totalorder %s1199, %s1213
      %p1215 = scmp.eq.s32.totalorder %s110, 0
      %p1216 = por %p1214, %p1215
      %s1217 = ssub.s32 %s111, %s123
      %p1218 = scmp.eq.s32.totalorder %s1217, 0
      %s1220 = sadd.s32 %s1219, 1
      %s1221 = scalar_select %p1218, %s1219, %s1220
      %p1224 = pneg %p1218
      %p1225 = scmp.eq.s32.totalorder %s104, 7
      %p1226 = por %p1224, %p1225
      %p1227 = scmp.ne.s32.totalorder %s1219, %s1222
      %p1228 = scmp.eq.s32.totalorder %s104, 0
      %p1229 = por %p1227, %p1228
      %p1230 = scmp.ne.s32.totalorder %s1219, %s1222
      %p1231 = scmp.eq.s32.totalorder %s109, 7
      %p1232 = por %p1230, %p1231
      %p1233 = scmp.ne.s32.totalorder %s1222, %s1223
      %p1234 = scmp.eq.s32.totalorder %s109, 0
      %p1235 = por %p1233, %p1234
      %p1236 = scmp.ne.s32.totalorder %s1222, %s1223
      %p1237 = scmp.eq.s32.totalorder %s110, 7
      %p1238 = por %p1236, %p1237
      %p1240 = scmp.ne.s32.totalorder %s1223, %s1239
      %p1241 = scmp.eq.s32.totalorder %s110, 0
      %p1242 = por %p1240, %p1241
      %p1243 = scmp.le.s32.totalorder 1, %s104
      %p1244 = scmp.lt.s32.totalorder %s104, 9
      %p1245 = pnand %p1243, %p1244
      %p1246 = pneg %p1245
      // Predicated region
      $region9: #{fwd.4} parent=5 // pred_check
        _
      $region10: #{fwd.4} parent=5 // pred_check_branch
        %1248 = sbr.rel (%p1245) target = $region12
      $region11: #{fwd.4} parent=5 // pred_region
        %s1249 = ssub.s32 %s104, 1
        // Predicated region
        $region13: #{fwd.4} parent=11 // pred_check
          %p1250 = pneg %p189
        $region14: #{fwd.4} parent=11 // pred_check_branch
          %1252 = sbr.rel (%p1250) target = $region16
        $region15: #{fwd.4} parent=11 // pred_region
          _
        $region16: #{fwd.4} parent=11 // pred_fallthru
          _
        // Predicated region
        $region17: #{fwd.4} parent=11 // pred_check
          %p1253 = pneg %p210
        $region18: #{fwd.4} parent=11 // pred_check_branch
          %1255 = sbr.rel (%p1253) target = $region20
        $region19: #{fwd.4} parent=11 // pred_region
          %1257 = vsyncadd [#allocation4], 0
          %s1259 = sshll.u32 %s7, 4
          %s1260 = int_to_ptr.hbm [resolvable:$true] %s1259
          %s1261 = sshll.u32 [#allocation3], 4
          %s1262 = int_to_ptr.vmem [resolvable:$true] %s1261
          %1264 = dma.hbm_to_vmem [thread:$0]  %s1260, 16, %s1262, [#allocation4]
        $region20: #{fwd.4} parent=11 // pred_fallthru
          _
        // Predicated region
        $region21: #{fwd.4} parent=11 // pred_check
          %p1265 = pneg %p231
        $region22: #{fwd.4} parent=11 // pred_check_branch
          %1267 = sbr.rel (%p1265) target = $region24
        $region23: #{fwd.4} parent=11 // pred_region
          %1269 = vsyncadd [#allocation6], 0
          %s1271 = sshll.u32 %s9, 4
          %s1272 = int_to_ptr.hbm [resolvable:$true] %s1271
          %s1273 = sshll.u32 [#allocation5], 4
          %s1274 = int_to_ptr.vmem [resolvable:$true] %s1273
          %1276 = dma.hbm_to_vmem [thread:$0]  %s1272, 16, %s1274, [#allocation6]
        $region24: #{fwd.4} parent=11 // pred_fallthru
          _
        // Predicated region
        $region25: #{fwd.4} parent=11 // pred_check
          %p1277 = pneg %p252
        $region26: #{fwd.4} parent=11 // pred_check_branch
          %1279 = sbr.rel (%p1277) target = $region28
        $region27: #{fwd.4} parent=11 // pred_region
          %1281 = vsyncadd [#allocation6], 0
          %s1283 = sshll.u32 %s11, 4
          %s1284 = int_to_ptr.hbm [resolvable:$true] %s1283
          %s1285 = sshll.u32 [#allocation7], 4
          %s1286 = int_to_ptr.vmem [resolvable:$true] %s1285
          %1288 = dma.hbm_to_vmem [thread:$0]  %s1284, 16, %s1286, [#allocation6]
        $region28: #{fwd.4} parent=11 // pred_fallthru
          _
        // Predicated region
        $region29: #{fwd.4} parent=11 // pred_check
          %p1289 = pneg %p273
        $region30: #{fwd.4} parent=11 // pred_check_branch
          %1291 = sbr.rel (%p1289) target = $region32
        $region31: #{fwd.4} parent=11 // pred_region
          %1293 = vsyncadd [#allocation9], 0
          %s1295 = sshll.u32 %s13, 4
          %s1296 = int_to_ptr.hbm [resolvable:$true] %s1295
          %s1297 = sshll.u32 [#allocation8], 4
          %s1298 = int_to_ptr.vmem [resolvable:$true] %s1297
          %1300 = dma.hbm_to_vmem [thread:$0]  %s1296, 16, %s1298, [#allocation9]
        $region32: #{fwd.4} parent=11 // pred_fallthru
          _
        // Predicated region
        $region33: #{fwd.4} parent=11 // pred_check
          %p1301 = pneg %p294
        $region34: #{fwd.4} parent=11 // pred_check_branch
          %1303 = sbr.rel (%p1301) target = $region36
        $region35: #{fwd.4} parent=11 // pred_region
          _
        $region36: #{fwd.4} parent=11 // pred_fallthru
          _
        // Predicated region
        $region37: #{fwd.4} parent=11 // pred_check
          %p1304 = pneg %p315
        $region38: #{fwd.4} parent=11 // pred_check_branch
          %1306 = sbr.rel (%p1304) target = $region40
        $region39: #{fwd.4} parent=11 // pred_region
          %1308 = vsyncadd [#allocation9], 0
          %s1310 = sshll.u32 %s17, 4
          %s1311 = int_to_ptr.hbm [resolvable:$true] %s1310
          %s1312 = sshll.u32 [#allocation10], 4
          %s1313 = int_to_ptr.vmem [resolvable:$true] %s1312
          %1315 = dma.hbm_to_vmem [thread:$0]  %s1311, 16, %s1313, [#allocation9]
        $region40: #{fwd.4} parent=11 // pred_fallthru
          _
        // Predicated region
        $region41: #{fwd.4} parent=11 // pred_check
          %p1316 = pneg %p336
        $region42: #{fwd.4} parent=11 // pred_check_branch
          %1318 = sbr.rel (%p1316) target = $region44
        $region43: #{fwd.4} parent=11 // pred_region
          %1320 = vsyncadd [#allocation12], 0
          %s1321 = sshll.u32 %s19, 4
          %s1322 = int_to_ptr.hbm [resolvable:$true] %s1321
          %s1323 = sshll.u32 [#allocation11], 4
          %s1324 = int_to_ptr.vmem [resolvable:$true] %s1323
          %1329 = dma.hbm_to_vmem [thread:$0]  %s1322, 2048, %s1324, [#allocation12], 128, 128, 8
        $region44: #{fwd.4} parent=11 // pred_fallthru
          _
        // Predicated region
        $region45: #{fwd.4} parent=11 // pred_check
          %p1330 = pneg %p357
        $region46: #{fwd.4} parent=11 // pred_check_branch
          %1332 = sbr.rel (%p1330) target = $region48
        $region47: #{fwd.4} parent=11 // pred_region
          _
        $region48: #{fwd.4} parent=11 // pred_fallthru
          _
        // Predicated region
        $region49: #{fwd.4} parent=11 // pred_check
          %p1333 = pneg %p378
        $region50: #{fwd.4} parent=11 // pred_check_branch
          %1335 = sbr.rel (%p1333) target = $region52
        $region51: #{fwd.4} parent=11 // pred_region
          %1337 = vsyncadd [#allocation12], 0
          %s1338 = sshll.u32 %s23, 4
          %s1339 = int_to_ptr.hbm [resolvable:$true] %s1338
          %s1340 = sshll.u32 [#allocation13], 4
          %s1341 = int_to_ptr.vmem [resolvable:$true] %s1340
          %1346 = dma.hbm_to_vmem [thread:$0]  %s1339, 1024, %s1341, [#allocation12], 64, 64, 4
        $region52: #{fwd.4} parent=11 // pred_fallthru
          _
        // Predicated region
        $region53: #{fwd.4} parent=11 // pred_check
          %p1347 = pneg %p399
        $region54: #{fwd.4} parent=11 // pred_check_branch
          %1349 = sbr.rel (%p1347) target = $region56
        $region55: #{fwd.4} parent=11 // pred_region
          %1351 = vsyncadd [#allocation15], 0
          %s1353 = sshll.u32 %s25, 4
          %s1354 = int_to_ptr.hbm [resolvable:$true] %s1353
          %s1355 = sshll.u32 [#allocation14], 4
          %s1356 = int_to_ptr.vmem [resolvable:$true] %s1355
          %1358 = dma.hbm_to_vmem [thread:$0]  %s1354, 16, %s1356, [#allocation15]
        $region56: #{fwd.4} parent=11 // pred_fallthru
          _
        // Predicated region
        $region57: #{fwd.4} parent=11 // pred_check
          %p1359 = pneg %p420
        $region58: #{fwd.4} parent=11 // pred_check_branch
          %1361 = sbr.rel (%p1359) target = $region60
        $region59: #{fwd.4} parent=11 // pred_region
          %1363 = vsyncadd [#allocation15], 0
          %s1365 = sshll.u32 %s27, 4
          %s1366 = int_to_ptr.hbm [resolvable:$true] %s1365
          %s1367 = sshll.u32 [#allocation16], 4
          %s1368 = int_to_ptr.vmem [resolvable:$true] %s1367
          %1370 = dma.hbm_to_vmem [thread:$0]  %s1366, 16, %s1368, [#allocation15]
        $region60: #{fwd.4} parent=11 // pred_fallthru
          _
        // Predicated region
        $region61: #{fwd.4} parent=11 // pred_check
          %p1371 = pneg %p441
        $region62: #{fwd.4} parent=11 // pred_check_branch
          %1373 = sbr.rel (%p1371) target = $region64
        $region63: #{fwd.4} parent=11 // pred_region
          %1375 = vsyncadd [#allocation18], 0
          %s1377 = sshll.u32 %s29, 4
          %s1378 = int_to_ptr.hbm [resolvable:$true] %s1377
          %s1379 = sshll.u32 [#allocation17], 4
          %s1380 = int_to_ptr.vmem [resolvable:$true] %s1379
          %1382 = dma.hbm_to_vmem [thread:$0]  %s1378, 16, %s1380, [#allocation18]
        $region64: #{fwd.4} parent=11 // pred_fallthru
          _
        // Predicated region
        $region65: #{fwd.4} parent=11 // pred_check
          %p1383 = pneg %p462
        $region66: #{fwd.4} parent=11 // pred_check_branch
          %1385 = sbr.rel (%p1383) target = $region68
        $region67: #{fwd.4} parent=11 // pred_region
          %1387 = vsyncadd [#allocation18], 0
          %s1388 = sshll.u32 %s31, 4
          %s1389 = int_to_ptr.hbm [resolvable:$true] %s1388
          %s1390 = sshll.u32 [#allocation19], 4
          %s1391 = int_to_ptr.vmem [resolvable:$true] %s1390
          %1396 = dma.hbm_to_vmem [thread:$0]  %s1389, 1024, %s1391, [#allocation18], 64, 64, 4
        $region68: #{fwd.4} parent=11 // pred_fallthru
          _
        // Predicated region
        $region69: #{fwd.4} parent=11 // pred_check
          %p1397 = pneg %p483
        $region70: #{fwd.4} parent=11 // pred_check_branch
          %1399 = sbr.rel (%p1397) target = $region72
        $region71: #{fwd.4} parent=11 // pred_region
          %1401 = vsyncadd [#allocation21], 0
          %s1403 = sshll.u32 %s33, 4
          %s1404 = int_to_ptr.hbm [resolvable:$true] %s1403
          %s1405 = sshll.u32 [#allocation20], 4
          %s1406 = int_to_ptr.vmem [resolvable:$true] %s1405
          %1408 = dma.hbm_to_vmem [thread:$0]  %s1404, 16, %s1406, [#allocation21]
        $region72: #{fwd.4} parent=11 // pred_fallthru
          _
        // Predicated region
        $region73: #{fwd.4} parent=11 // pred_check
          %p1409 = pneg %p504
        $region74: #{fwd.4} parent=11 // pred_check_branch
          %1411 = sbr.rel (%p1409) target = $region76
        $region75: #{fwd.4} parent=11 // pred_region
          %1413 = vsyncadd [#allocation21], 0
          %s1414 = sshll.u32 %s35, 4
          %s1415 = int_to_ptr.hbm [resolvable:$true] %s1414
          %s1416 = sshll.u32 [#allocation22], 4
          %s1417 = int_to_ptr.vmem [resolvable:$true] %s1416
          %1422 = dma.hbm_to_vmem [thread:$0]  %s1415, 1024, %s1417, [#allocation21], 64, 64, 4
        $region76: #{fwd.4} parent=11 // pred_fallthru
          _
        // Predicated region
        $region77: #{fwd.4} parent=11 // pred_check
          %p1423 = pneg %p525
        $region78: #{fwd.4} parent=11 // pred_check_branch
          %1425 = sbr.rel (%p1423) target = $region80
        $region79: #{fwd.4} parent=11 // pred_region
          %1427 = vsyncadd [#allocation24], 0
          %s1429 = sshll.u32 %s37, 4
          %s1430 = int_to_ptr.hbm [resolvable:$true] %s1429
          %s1431 = sshll.u32 [#allocation23], 4
          %s1432 = int_to_ptr.vmem [resolvable:$true] %s1431
          %1434 = dma.hbm_to_vmem [thread:$0]  %s1430, 16, %s1432, [#allocation24]
        $region80: #{fwd.4} parent=11 // pred_fallthru
          _
        // Predicated region
        $region81: #{fwd.4} parent=11 // pred_check
          %p1435 = pneg %p978
        $region82: #{fwd.4} parent=11 // pred_check_branch
          %1437 = sbr.rel (%p1435) target = $region84
        $region83: #{fwd.4} parent=11 // pred_region
          %1439 = vsyncadd [#allocation6], 0
          %s1441 = sshll.u32 %s63, 4
          %s1442 = int_to_ptr.hbm [resolvable:$true] %s1441
          %s1443 = sshll.u32 [#allocation29], 4
          %s1444 = int_to_ptr.vmem [resolvable:$true] %s1443
          %1446 = dma.hbm_to_vmem [thread:$0]  %s1442, 16, %s1444, [#allocation6]
        $region84: #{fwd.4} parent=11 // pred_fallthru
          _
        // Predicated region
        $region85: #{fwd.4} parent=11 // pred_check
          %p1447 = pneg %p999
        $region86: #{fwd.4} parent=11 // pred_check_branch
          %1449 = sbr.rel (%p1447) target = $region88
        $region87: #{fwd.4} parent=11 // pred_region
          %1451 = vsyncadd [#allocation9], 0
          %s1453 = sshll.u32 %s65, 4
          %s1454 = int_to_ptr.hbm [resolvable:$true] %s1453
          %s1455 = sshll.u32 [#allocation30], 4
          %s1456 = int_to_ptr.vmem [resolvable:$true] %s1455
          %1458 = dma.hbm_to_vmem [thread:$0]  %s1454, 16, %s1456, [#allocation9]
        $region88: #{fwd.4} parent=11 // pred_fallthru
          _
        // Predicated region
        $region89: #{fwd.4} parent=11 // pred_check
          %p1459 = pneg %p1020
        $region90: #{fwd.4} parent=11 // pred_check_branch
          %1461 = sbr.rel (%p1459) target = $region92
        $region91: #{fwd.4} parent=11 // pred_region
          %1463 = vsyncadd [#allocation12], 0
          %s1465 = sshll.u32 %s67, 4
          %s1466 = int_to_ptr.hbm [resolvable:$true] %s1465
          %s1467 = sshll.u32 [#allocation31], 4
          %s1468 = int_to_ptr.vmem [resolvable:$true] %s1467
          %1470 = dma.hbm_to_vmem [thread:$0]  %s1466, 16, %s1468, [#allocation12]
        $region92: #{fwd.4} parent=11 // pred_fallthru
          _
        // Predicated region
        $region93: #{fwd.4} parent=11 // pred_check
          %p1471 = pneg %p1041
        $region94: #{fwd.4} parent=11 // pred_check_branch
          %1473 = sbr.rel (%p1471) target = $region96
        $region95: #{fwd.4} parent=11 // pred_region
          %1475 = vsyncadd [#allocation15], 0
          %s1477 = sshll.u32 %s69, 4
          %s1478 = int_to_ptr.hbm [resolvable:$true] %s1477
          %s1479 = sshll.u32 [#allocation32], 4
          %s1480 = int_to_ptr.vmem [resolvable:$true] %s1479
          %1482 = dma.hbm_to_vmem [thread:$0]  %s1478, 16, %s1480, [#allocation15]
        $region96: #{fwd.4} parent=11 // pred_fallthru
          _
        // Predicated region
        $region97: #{fwd.4} parent=11 // pred_check
          %p1483 = pneg %p1062
        $region98: #{fwd.4} parent=11 // pred_check_branch
          %1485 = sbr.rel (%p1483) target = $region100
        $region99: #{fwd.4} parent=11 // pred_region
          %1487 = vsyncadd [#allocation18], 0
          %s1488 = sshll.u32 %s71, 4
          %s1489 = int_to_ptr.hbm [resolvable:$true] %s1488
          %s1490 = sshll.u32 [#allocation33], 4
          %s1491 = int_to_ptr.vmem [resolvable:$true] %s1490
          %1496 = dma.hbm_to_vmem [thread:$0]  %s1489, 1024, %s1491, [#allocation18], 64, 64, 4
        $region100: #{fwd.4} parent=11 // pred_fallthru
          _
        // Predicated region
        $region101: #{fwd.4} parent=11 // pred_check
          %p1497 = pneg %p1083
        $region102: #{fwd.4} parent=11 // pred_check_branch
          %1499 = sbr.rel (%p1497) target = $region104
        $region103: #{fwd.4} parent=11 // pred_region
          %1501 = vsyncadd [#allocation21], 0
          %s1503 = sshll.u32 %s73, 4
          %s1504 = int_to_ptr.hbm [resolvable:$true] %s1503
          %s1505 = sshll.u32 [#allocation34], 4
          %s1506 = int_to_ptr.vmem [resolvable:$true] %s1505
          %1508 = dma.hbm_to_vmem [thread:$0]  %s1504, 16, %s1506, [#allocation21]
        $region104: #{fwd.4} parent=11 // pred_fallthru
          _
        // Predicated region
        $region105: #{fwd.4} parent=11 // pred_check
          %p1509 = pneg %p1104
        $region106: #{fwd.4} parent=11 // pred_check_branch
          %1511 = sbr.rel (%p1509) target = $region108
        $region107: #{fwd.4} parent=11 // pred_region
          %1513 = vsyncadd [#allocation24], 0
          %s1514 = sshll.u32 %s75, 4
          %s1515 = int_to_ptr.hbm [resolvable:$true] %s1514
          %s1516 = sshll.u32 [#allocation35], 4
          %s1517 = int_to_ptr.vmem [resolvable:$true] %s1516
          %1522 = dma.hbm_to_vmem [thread:$0]  %s1515, 2048, %s1517, [#allocation24], 128, 128, 8
        $region108: #{fwd.4} parent=11 // pred_fallthru
          _
        // Predicated region
        $region109: #{fwd.4} parent=11 // pred_check
          %p1523 = pneg %p1125
        $region110: #{fwd.4} parent=11 // pred_check_branch
          %1525 = sbr.rel (%p1523) target = $region112
        $region111: #{fwd.4} parent=11 // pred_region
          %1527 = vsyncadd [#allocation37], 0
          %s1529 = sshll.u32 %s77, 4
          %s1530 = int_to_ptr.hbm [resolvable:$true] %s1529
          %s1531 = sshll.u32 [#allocation36], 4
          %s1532 = int_to_ptr.vmem [resolvable:$true] %s1531
          %1534 = dma.hbm_to_vmem [thread:$0]  %s1530, 32, %s1532, [#allocation37]
        $region112: #{fwd.4} parent=11 // pred_fallthru
          _
        // Predicated region
        $region113: #{fwd.4} parent=11 // pred_check
          %p1535 = pneg %p1146
        $region114: #{fwd.4} parent=11 // pred_check_branch
          %1537 = sbr.rel (%p1535) target = $region116
        $region115: #{fwd.4} parent=11 // pred_region
          %1539 = vsyncadd [#allocation37], 0
          %s1540 = sshll.u32 %s79, 4
          %s1541 = int_to_ptr.hbm [resolvable:$true] %s1540
          %s1542 = sshll.u32 [#allocation38], 4
          %s1543 = int_to_ptr.vmem [resolvable:$true] %s1542
          %1548 = dma.hbm_to_vmem [thread:$0]  %s1541, 1024, %s1543, [#allocation37], 64, 64, 4
        $region116: #{fwd.4} parent=11 // pred_fallthru
          _
        // Predicated region
        $region117: #{fwd.4} parent=11 // pred_check
          %p1549 = pneg %p1167
        $region118: #{fwd.4} parent=11 // pred_check_branch
          %1551 = sbr.rel (%p1549) target = $region120
        $region119: #{fwd.4} parent=11 // pred_region
          %1553 = vsyncadd [#allocation40], 0
          %s1555 = sshll.u32 %s81, 4
          %s1556 = int_to_ptr.hbm [resolvable:$true] %s1555
          %s1557 = sshll.u32 [#allocation39], 4
          %s1558 = int_to_ptr.vmem [resolvable:$true] %s1557
          %1560 = dma.hbm_to_vmem [thread:$0]  %s1556, 16, %s1558, [#allocation40]
        $region120: #{fwd.4} parent=11 // pred_fallthru
          _
        // Predicated region
        $region121: #{fwd.4} parent=11 // pred_check
          %p1561 = pneg %p1188
        $region122: #{fwd.4} parent=11 // pred_check_branch
          %1563 = sbr.rel (%p1561) target = $region124
        $region123: #{fwd.4} parent=11 // pred_region
          %1565 = vsyncadd [#allocation40], 0
          %s1566 = sshll.u32 %s83, 4
          %s1567 = int_to_ptr.hbm [resolvable:$true] %s1566
          %s1568 = sshll.u32 [#allocation41], 4
          %s1569 = int_to_ptr.vmem [resolvable:$true] %s1568
          %1574 = dma.hbm_to_vmem [thread:$0]  %s1567, 1024, %s1569, [#allocation40], 64, 64, 4
        $region124: #{fwd.4} parent=11 // pred_fallthru
          _
        // Predicated region
        $region125: #{fwd.4} parent=11 // pred_check
          %p1575 = pneg %p1209
        $region126: #{fwd.4} parent=11 // pred_check_branch
          %1577 = sbr.rel (%p1575) target = $region128
        $region127: #{fwd.4} parent=11 // pred_region
          %1579 = vsyncadd [#allocation43], 0
          %s1581 = sshll.u32 %s85, 4
          %s1582 = int_to_ptr.hbm [resolvable:$true] %s1581
          %s1583 = sshll.u32 [#allocation42], 4
          %s1584 = int_to_ptr.vmem [resolvable:$true] %s1583
          %1586 = dma.hbm_to_vmem [thread:$0]  %s1582, 16, %s1584, [#allocation43]
        $region128: #{fwd.4} parent=11 // pred_fallthru
          _
      $region12: #{fwd.4} parent=5 // pred_fallthru
        _
      %p1587 = scmp.lt.s32.totalorder %s104, 8
      // Predicated region
      $region129: #{fwd.4} parent=5 // pred_check
        %p1588 = pneg %p1587
      $region130: #{fwd.4} parent=5 // pred_check_branch
        %1590 = sbr.rel (%p1588) target = $region132
      $region131: #{fwd.4} parent=5 // pred_region
        // Predicated region
        $region133: #{fwd.4} parent=131 // pred_check
          %p1591 = pneg %p136
        $region134: #{fwd.4} parent=131 // pred_check_branch
          %1593 = sbr.rel (%p1591) target = $region136
        $region135: #{fwd.4} parent=131 // pred_region
          %p1594 = scmp.lt.s32.totalorder %s111, 1
          %s1595 = scalar_select %p1594, %s111, 1
          %s1596 = smul.addr %s1595, 2
          %s1597 = smul.addr %s1596, 8
          %s1598 = scalar_lea.vmem %s1, %s1597
        $region136: #{fwd.4} parent=131 // pred_fallthru
          _
        // Predicated region
        $region137: #{fwd.4} parent=131 // pred_check
          %p1599 = pneg %p162
        $region138: #{fwd.4} parent=131 // pred_check_branch
          %1601 = sbr.rel (%p1599) target = $region140
        $region139: #{fwd.4} parent=131 // pred_region
          %p1602 = scmp.lt.s32.totalorder %s111, 1
          %s1603 = scalar_select %p1602, %s111, 1
          %s1604 = scalar_lea.vmem %s3, %s1603
        $region140: #{fwd.4} parent=131 // pred_fallthru
          _
        // Predicated region
        $region141: #{fwd.4} parent=131 // pred_check
          %p1605 = pneg %p555
        $region142: #{fwd.4} parent=131 // pred_check_branch
          %1607 = sbr.rel (%p1605) target = $region144
        $region143: #{fwd.4} parent=131 // pred_region
          %s1608 = ssub.s32 %s112, 1
          %p1609 = scmp.gt.s32.totalorder %s1608, 0
          %s1610 = scalar_select %p1609, %s1608, 0
          %p1611 = scmp.lt.s32.totalorder %s1610, 1
          %s1612 = scalar_select %p1611, %s1610, 1
          %p1613 = scmp.lt.s32.totalorder %s1612, 1
          %s1614 = scalar_select %p1613, %s1612, 1
          %s1615 = scalar_lea.vmem %s39, %s1614
          %s1616 = ssub.s32 %s112, 1
          %p1617 = scmp.gt.s32.totalorder %s1616, 0
          %s1618 = scalar_select %p1617, %s1616, 0
          %p1619 = scmp.lt.s32.totalorder %s1618, 1
          %s1620 = scalar_select %p1619, %s1618, 1
        $region144: #{fwd.4} parent=131 // pred_fallthru
          _
        // Predicated region
        $region145: #{fwd.4} parent=131 // pred_check
          %p1621 = pneg %p591
        $region146: #{fwd.4} parent=131 // pred_check_branch
          %1623 = sbr.rel (%p1621) target = $region148
        $region147: #{fwd.4} parent=131 // pred_region
          %s1624 = ssub.s32 %s112, 1
          %p1625 = scmp.gt.s32.totalorder %s1624, 0
          %s1626 = scalar_select %p1625, %s1624, 0
          %p1627 = scmp.lt.s32.totalorder %s1626, 1
          %s1628 = scalar_select %p1627, %s1626, 1
          %p1629 = scmp.lt.s32.totalorder %s1628, 1
          %s1630 = scalar_select %p1629, %s1628, 1
          %s1631 = scalar_lea.vmem %s41, %s1630
          %s1632 = ssub.s32 %s112, 1
          %p1633 = scmp.gt.s32.totalorder %s1632, 0
          %s1634 = scalar_select %p1633, %s1632, 0
          %p1635 = scmp.lt.s32.totalorder %s1634, 1
          %s1636 = scalar_select %p1635, %s1634, 1
        $region148: #{fwd.4} parent=131 // pred_fallthru
          _
        // Predicated region
        $region149: #{fwd.4} parent=131 // pred_check
          %p1637 = pneg %p627
        $region150: #{fwd.4} parent=131 // pred_check_branch
          %1639 = sbr.rel (%p1637) target = $region152
        $region151: #{fwd.4} parent=131 // pred_region
          %s1640 = sand.u32 %s104, 1
          %s1641 = scalar_lea.sflag [#allocation4], %s1640
          %s1642 = sand.u32 %s617, 1
          %s1643 = smul.addr %s1642, 192
          %s1644 = scalar_lea.vmem [#allocation25], %s1643
          %s1645 = ssub.s32 %s112, 1
          %p1646 = scmp.gt.s32.totalorder %s1645, 0
          %s1647 = scalar_select %p1646, %s1645, 0
          %p1648 = scmp.lt.s32.totalorder %s1647, 1
          %s1649 = scalar_select %p1648, %s1647, 1
          %1651 = vsyncadd %s1641, 0
          %s1652 = smul.addr %s1649, 48
          %s1653 = smul.addr %s1652, 4
          %s1654 = scalar_lea.hbm %s43, %s1653
          %s1655 = sshll.u32 %s1654, 4
          %s1656 = int_to_ptr.hbm [resolvable:$true] %s1655
          %s1657 = sshll.u32 %s1644, 4
          %s1658 = int_to_ptr.vmem [resolvable:$true] %s1657
          %1663 = dma.hbm_to_vmem [thread:$0]  %s1656, 3072, %s1658, %s1641, 192, 192, 12
        $region152: #{fwd.4} parent=131 // pred_fallthru
          _
        // Predicated region
        $region153: #{fwd.4} parent=131 // pred_check
          %p1664 = pneg %p663
        $region154: #{fwd.4} parent=131 // pred_check_branch
          %1666 = sbr.rel (%p1664) target = $region156
        $region155: #{fwd.4} parent=131 // pred_region
          %s1667 = ssub.s32 %s112, 1
          %p1668 = scmp.gt.s32.totalorder %s1667, 0
          %s1669 = scalar_select %p1668, %s1667, 0
          %p1670 = scmp.lt.s32.totalorder %s1669, 1
          %s1671 = scalar_select %p1670, %s1669, 1
          %p1672 = scmp.lt.s32.totalorder %s1671, 1
          %s1673 = scalar_select %p1672, %s1671, 1
          %s1674 = smul.addr %s1673, 3
          %s1675 = scalar_lea.vmem %s45, %s1674
          %s1676 = ssub.s32 %s112, 1
          %p1677 = scmp.gt.s32.totalorder %s1676, 0
          %s1678 = scalar_select %p1677, %s1676, 0
          %p1679 = scmp.lt.s32.totalorder %s1678, 1
          %s1680 = scalar_select %p1679, %s1678, 1
        $region156: #{fwd.4} parent=131 // pred_fallthru
          _
        // Predicated region
        $region157: #{fwd.4} parent=131 // pred_check
          %p1681 = pneg %p699
        $region158: #{fwd.4} parent=131 // pred_check_branch
          %1683 = sbr.rel (%p1681) target = $region160
        $region159: #{fwd.4} parent=131 // pred_region
          %s1684 = sand.u32 %s104, 1
          %s1685 = scalar_lea.sflag [#allocation4], %s1684
          %s1686 = sand.u32 %s689, 1
          %s1687 = smul.addr %s1686, 64
          %s1688 = scalar_lea.vmem [#allocation26], %s1687
          %s1689 = ssub.s32 %s112, 1
          %p1690 = scmp.gt.s32.totalorder %s1689, 0
          %s1691 = scalar_select %p1690, %s1689, 0
          %p1692 = scmp.lt.s32.totalorder %s1691, 1
          %s1693 = scalar_select %p1692, %s1691, 1
          %1695 = vsyncadd %s1685, 0
          %s1696 = smul.addr %s1693, 16
          %s1697 = smul.addr %s1696, 4
          %s1698 = scalar_lea.hbm %s47, %s1697
          %s1699 = sshll.u32 %s1698, 4
          %s1700 = int_to_ptr.hbm [resolvable:$true] %s1699
          %s1701 = sshll.u32 %s1688, 4
          %s1702 = int_to_ptr.vmem [resolvable:$true] %s1701
          %1707 = dma.hbm_to_vmem [thread:$0]  %s1700, 1024, %s1702, %s1685, 64, 64, 4
        $region160: #{fwd.4} parent=131 // pred_fallthru
          _
        // Predicated region
        $region161: #{fwd.4} parent=131 // pred_check
          %p1708 = pneg %p735
        $region162: #{fwd.4} parent=131 // pred_check_branch
          %1710 = sbr.rel (%p1708) target = $region164
        $region163: #{fwd.4} parent=131 // pred_region
          %s1711 = ssub.s32 %s112, 1
          %p1712 = scmp.gt.s32.totalorder %s1711, 0
          %s1713 = scalar_select %p1712, %s1711, 0
          %p1714 = scmp.lt.s32.totalorder %s1713, 1
          %s1715 = scalar_select %p1714, %s1713, 1
          %p1716 = scmp.lt.s32.totalorder %s1715, 1
          %s1717 = scalar_select %p1716, %s1715, 1
          %s1718 = scalar_lea.vmem %s49, %s1717
          %s1719 = ssub.s32 %s112, 1
          %p1720 = scmp.gt.s32.totalorder %s1719, 0
          %s1721 = scalar_select %p1720, %s1719, 0
          %p1722 = scmp.lt.s32.totalorder %s1721, 1
          %s1723 = scalar_select %p1722, %s1721, 1
        $region164: #{fwd.4} parent=131 // pred_fallthru
          _
        // Predicated region
        $region165: #{fwd.4} parent=131 // pred_check
          %p1724 = pneg %p771
        $region166: #{fwd.4} parent=131 // pred_check_branch
          %1726 = sbr.rel (%p1724) target = $region168
        $region167: #{fwd.4} parent=131 // pred_region
          %s1727 = ssub.s32 %s112, 1
          %p1728 = scmp.gt.s32.totalorder %s1727, 0
          %s1729 = scalar_select %p1728, %s1727, 0
          %p1730 = scmp.lt.s32.totalorder %s1729, 1
          %s1731 = scalar_select %p1730, %s1729, 1
          %p1732 = scmp.lt.s32.totalorder %s1731, 1
          %s1733 = scalar_select %p1732, %s1731, 1
          %s1734 = scalar_lea.vmem %s51, %s1733
          %s1735 = ssub.s32 %s112, 1
          %p1736 = scmp.gt.s32.totalorder %s1735, 0
          %s1737 = scalar_select %p1736, %s1735, 0
          %p1738 = scmp.lt.s32.totalorder %s1737, 1
          %s1739 = scalar_select %p1738, %s1737, 1
        $region168: #{fwd.4} parent=131 // pred_fallthru
          _
        // Predicated region
        $region169: #{fwd.4} parent=131 // pred_check
          %p1740 = pneg %p807
        $region170: #{fwd.4} parent=131 // pred_check_branch
          %1742 = sbr.rel (%p1740) target = $region172
        $region171: #{fwd.4} parent=131 // pred_region
          %s1743 = ssub.s32 %s112, 1
          %p1744 = scmp.gt.s32.totalorder %s1743, 0
          %s1745 = scalar_select %p1744, %s1743, 0
          %p1746 = scmp.lt.s32.totalorder %s1745, 1
          %s1747 = scalar_select %p1746, %s1745, 1
          %p1748 = scmp.lt.s32.totalorder %s1747, 1
          %s1749 = scalar_select %p1748, %s1747, 1
          %s1750 = scalar_lea.vmem %s53, %s1749
          %s1751 = ssub.s32 %s112, 1
          %p1752 = scmp.gt.s32.totalorder %s1751, 0
          %s1753 = scalar_select %p1752, %s1751, 0
          %p1754 = scmp.lt.s32.totalorder %s1753, 1
          %s1755 = scalar_select %p1754, %s1753, 1
        $region172: #{fwd.4} parent=131 // pred_fallthru
          _
        // Predicated region
        $region173: #{fwd.4} parent=131 // pred_check
          %p1756 = pneg %p843
        $region174: #{fwd.4} parent=131 // pred_check_branch
          %1758 = sbr.rel (%p1756) target = $region176
        $region175: #{fwd.4} parent=131 // pred_region
          %s1759 = sand.u32 %s104, 1
          %s1760 = scalar_lea.sflag [#allocation4], %s1759
          %s1761 = sand.u32 %s833, 1
          %s1762 = smul.addr %s1761, 64
          %s1763 = scalar_lea.vmem [#allocation27], %s1762
          %s1764 = ssub.s32 %s112, 1
          %p1765 = scmp.gt.s32.totalorder %s1764, 0
          %s1766 = scalar_select %p1765, %s1764, 0
          %p1767 = scmp.lt.s32.totalorder %s1766, 1
          %s1768 = scalar_select %p1767, %s1766, 1
          %1770 = vsyncadd %s1760, 0
          %s1771 = smul.addr %s1768, 16
          %s1772 = smul.addr %s1771, 4
          %s1773 = scalar_lea.hbm %s55, %s1772
          %s1774 = sshll.u32 %s1773, 4
          %s1775 = int_to_ptr.hbm [resolvable:$true] %s1774
          %s1776 = sshll.u32 %s1763, 4
          %s1777 = int_to_ptr.vmem [resolvable:$true] %s1776
          %1782 = dma.hbm_to_vmem [thread:$0]  %s1775, 1024, %s1777, %s1760, 64, 64, 4
        $region176: #{fwd.4} parent=131 // pred_fallthru
          _
        // Predicated region
        $region177: #{fwd.4} parent=131 // pred_check
          %p1783 = pneg %p879
        $region178: #{fwd.4} parent=131 // pred_check_branch
          %1785 = sbr.rel (%p1783) target = $region180
        $region179: #{fwd.4} parent=131 // pred_region
          %s1786 = ssub.s32 %s112, 1
          %p1787 = scmp.gt.s32.totalorder %s1786, 0
          %s1788 = scalar_select %p1787, %s1786, 0
          %p1789 = scmp.lt.s32.totalorder %s1788, 1
          %s1790 = scalar_select %p1789, %s1788, 1
          %p1791 = scmp.lt.s32.totalorder %s1790, 1
          %s1792 = scalar_select %p1791, %s1790, 1
          %s1793 = scalar_lea.vmem %s57, %s1792
          %s1794 = ssub.s32 %s112, 1
          %p1795 = scmp.gt.s32.totalorder %s1794, 0
          %s1796 = scalar_select %p1795, %s1794, 0
          %p1797 = scmp.lt.s32.totalorder %s1796, 1
          %s1798 = scalar_select %p1797, %s1796, 1
        $region180: #{fwd.4} parent=131 // pred_fallthru
          _
        // Predicated region
        $region181: #{fwd.4} parent=131 // pred_check
          %p1799 = pneg %p915
        $region182: #{fwd.4} parent=131 // pred_check_branch
          %1801 = sbr.rel (%p1799) target = $region184
        $region183: #{fwd.4} parent=131 // pred_region
          %s1802 = sand.u32 %s104, 1
          %s1803 = scalar_lea.sflag [#allocation4], %s1802
          %s1804 = sand.u32 %s905, 1
          %s1805 = smul.addr %s1804, 64
          %s1806 = scalar_lea.vmem [#allocation28], %s1805
          %s1807 = ssub.s32 %s112, 1
          %p1808 = scmp.gt.s32.totalorder %s1807, 0
          %s1809 = scalar_select %p1808, %s1807, 0
          %p1810 = scmp.lt.s32.totalorder %s1809, 1
          %s1811 = scalar_select %p1810, %s1809, 1
          %1813 = vsyncadd %s1803, 0
          %s1814 = smul.addr %s1811, 16
          %s1815 = smul.addr %s1814, 4
          %s1816 = scalar_lea.hbm %s59, %s1815
          %s1817 = sshll.u32 %s1816, 4
          %s1818 = int_to_ptr.hbm [resolvable:$true] %s1817
          %s1819 = sshll.u32 %s1806, 4
          %s1820 = int_to_ptr.vmem [resolvable:$true] %s1819
          %1825 = dma.hbm_to_vmem [thread:$0]  %s1818, 1024, %s1820, %s1803, 64, 64, 4
        $region184: #{fwd.4} parent=131 // pred_fallthru
          _
        // Predicated region
        $region185: #{fwd.4} parent=131 // pred_check
          %p1826 = pneg %p951
        $region186: #{fwd.4} parent=131 // pred_check_branch
          %1828 = sbr.rel (%p1826) target = $region188
        $region187: #{fwd.4} parent=131 // pred_region
          %s1829 = ssub.s32 %s112, 1
          %p1830 = scmp.gt.s32.totalorder %s1829, 0
          %s1831 = scalar_select %p1830, %s1829, 0
          %p1832 = scmp.lt.s32.totalorder %s1831, 1
          %s1833 = scalar_select %p1832, %s1831, 1
          %p1834 = scmp.lt.s32.totalorder %s1833, 1
          %s1835 = scalar_select %p1834, %s1833, 1
          %s1836 = scalar_lea.vmem %s61, %s1835
          %s1837 = ssub.s32 %s112, 1
          %p1838 = scmp.gt.s32.totalorder %s1837, 0
          %s1839 = scalar_select %p1838, %s1837, 0
          %p1840 = scmp.lt.s32.totalorder %s1839, 1
          %s1841 = scalar_select %p1840, %s1839, 1
        $region188: #{fwd.4} parent=131 // pred_fallthru
          _
      $region132: #{fwd.4} parent=5 // pred_fallthru
        _
      %p1842 = scmp.le.s32.totalorder 1, %s104
      %p1843 = scmp.lt.s32.totalorder %s104, 9
      %p1844 = pnand %p1842, %p1843
      %p1845 = pneg %p1844
      // Predicated region
      $region189: #{fwd.4} parent=5 // pred_check
        _
      $region190: #{fwd.4} parent=5 // pred_check_branch
        %1847 = sbr.rel (%p1844) target = $region192
      $region191: #{fwd.4} parent=5 // pred_region
        %s1848 = ssub.s32 %s104, 1
        // Predicated region
        $region193: #{fwd.4} parent=191 // pred_check
          %p1849 = pneg %p210
        $region194: #{fwd.4} parent=191 // pred_check_branch
          %1851 = sbr.rel (%p1849) target = $region196
        $region195: #{fwd.4} parent=191 // pred_region
          %1853 = dma.done [#allocation4], 16
        $region196: #{fwd.4} parent=191 // pred_fallthru
          _
        // Predicated region
        $region197: #{fwd.4} parent=191 // pred_check
          %p1854 = pneg %p231
        $region198: #{fwd.4} parent=191 // pred_check_branch
          %1856 = sbr.rel (%p1854) target = $region200
        $region199: #{fwd.4} parent=191 // pred_region
          %1858 = dma.done [#allocation6], 16
        $region200: #{fwd.4} parent=191 // pred_fallthru
          _
        // Predicated region
        $region201: #{fwd.4} parent=191 // pred_check
          %p1859 = pneg %p252
        $region202: #{fwd.4} parent=191 // pred_check_branch
          %1861 = sbr.rel (%p1859) target = $region204
        $region203: #{fwd.4} parent=191 // pred_region
          %1863 = dma.done [#allocation6], 16
        $region204: #{fwd.4} parent=191 // pred_fallthru
          _
        // Predicated region
        $region205: #{fwd.4} parent=191 // pred_check
          %p1864 = pneg %p273
        $region206: #{fwd.4} parent=191 // pred_check_branch
          %1866 = sbr.rel (%p1864) target = $region208
        $region207: #{fwd.4} parent=191 // pred_region
          %1868 = dma.done [#allocation9], 16
        $region208: #{fwd.4} parent=191 // pred_fallthru
          _
        // Predicated region
        $region209: #{fwd.4} parent=191 // pred_check
          %p1869 = pneg %p315
        $region210: #{fwd.4} parent=191 // pred_check_branch
          %1871 = sbr.rel (%p1869) target = $region212
        $region211: #{fwd.4} parent=191 // pred_region
          %1873 = dma.done [#allocation9], 16
        $region212: #{fwd.4} parent=191 // pred_fallthru
          _
        // Predicated region
        $region213: #{fwd.4} parent=191 // pred_check
          %p1874 = pneg %p336
        $region214: #{fwd.4} parent=191 // pred_check_branch
          %1876 = sbr.rel (%p1874) target = $region216
        $region215: #{fwd.4} parent=191 // pred_region
          %1878 = dma.done [#allocation12], 2048
        $region216: #{fwd.4} parent=191 // pred_fallthru
          _
        // Predicated region
        $region217: #{fwd.4} parent=191 // pred_check
          %p1879 = pneg %p378
        $region218: #{fwd.4} parent=191 // pred_check_branch
          %1881 = sbr.rel (%p1879) target = $region220
        $region219: #{fwd.4} parent=191 // pred_region
          %1883 = dma.done [#allocation12], 1024
        $region220: #{fwd.4} parent=191 // pred_fallthru
          _
        // Predicated region
        $region221: #{fwd.4} parent=191 // pred_check
          %p1884 = pneg %p399
        $region222: #{fwd.4} parent=191 // pred_check_branch
          %1886 = sbr.rel (%p1884) target = $region224
        $region223: #{fwd.4} parent=191 // pred_region
          %1888 = dma.done [#allocation15], 16
        $region224: #{fwd.4} parent=191 // pred_fallthru
          _
        // Predicated region
        $region225: #{fwd.4} parent=191 // pred_check
          %p1889 = pneg %p420
        $region226: #{fwd.4} parent=191 // pred_check_branch
          %1891 = sbr.rel (%p1889) target = $region228
        $region227: #{fwd.4} parent=191 // pred_region
          %1893 = dma.done [#allocation15], 16
        $region228: #{fwd.4} parent=191 // pred_fallthru
          _
        // Predicated region
        $region229: #{fwd.4} parent=191 // pred_check
          %p1894 = pneg %p441
        $region230: #{fwd.4} parent=191 // pred_check_branch
          %1896 = sbr.rel (%p1894) target = $region232
        $region231: #{fwd.4} parent=191 // pred_region
          %1898 = dma.done [#allocation18], 16
        $region232: #{fwd.4} parent=191 // pred_fallthru
          _
        // Predicated region
        $region233: #{fwd.4} parent=191 // pred_check
          %p1899 = pneg %p462
        $region234: #{fwd.4} parent=191 // pred_check_branch
          %1901 = sbr.rel (%p1899) target = $region236
        $region235: #{fwd.4} parent=191 // pred_region
          %1903 = dma.done [#allocation18], 1024
        $region236: #{fwd.4} parent=191 // pred_fallthru
          _
        // Predicated region
        $region237: #{fwd.4} parent=191 // pred_check
          %p1904 = pneg %p483
        $region238: #{fwd.4} parent=191 // pred_check_branch
          %1906 = sbr.rel (%p1904) target = $region240
        $region239: #{fwd.4} parent=191 // pred_region
          %1908 = dma.done [#allocation21], 16
        $region240: #{fwd.4} parent=191 // pred_fallthru
          _
        // Predicated region
        $region241: #{fwd.4} parent=191 // pred_check
          %p1909 = pneg %p504
        $region242: #{fwd.4} parent=191 // pred_check_branch
          %1911 = sbr.rel (%p1909) target = $region244
        $region243: #{fwd.4} parent=191 // pred_region
          %1913 = dma.done [#allocation21], 1024
        $region244: #{fwd.4} parent=191 // pred_fallthru
          _
        // Predicated region
        $region245: #{fwd.4} parent=191 // pred_check
          %p1914 = pneg %p525
        $region246: #{fwd.4} parent=191 // pred_check_branch
          %1916 = sbr.rel (%p1914) target = $region248
        $region247: #{fwd.4} parent=191 // pred_region
          %1918 = dma.done [#allocation24], 16
        $region248: #{fwd.4} parent=191 // pred_fallthru
          _
        %s1919 = sand.u32 %s109, 1
        %s1920 = scalar_lea.sflag [#allocation4], %s1919
        %s1921 = sand.u32 %s620, 1
        %s1922 = smul.addr %s1921, 192
        %s1923 = scalar_lea.vmem [#allocation25], %s1922
        // Predicated region
        $region249: #{fwd.4} parent=191 // pred_check
          %p1924 = pneg %p633
        $region250: #{fwd.4} parent=191 // pred_check_branch
          %1926 = sbr.rel (%p1924) target = $region252
        $region251: #{fwd.4} parent=191 // pred_region
          %1928 = dma.done %s1920, 3072
        $region252: #{fwd.4} parent=191 // pred_fallthru
          _
        %s1929 = sand.u32 %s109, 1
        %s1930 = scalar_lea.sflag [#allocation4], %s1929
        %s1931 = sand.u32 %s692, 1
        %s1932 = smul.addr %s1931, 64
        %s1933 = scalar_lea.vmem [#allocation26], %s1932
        // Predicated region
        $region253: #{fwd.4} parent=191 // pred_check
          %p1934 = pneg %p705
        $region254: #{fwd.4} parent=191 // pred_check_branch
          %1936 = sbr.rel (%p1934) target = $region256
        $region255: #{fwd.4} parent=191 // pred_region
          %1938 = dma.done %s1930, 1024
        $region256: #{fwd.4} parent=191 // pred_fallthru
          _
        %s1939 = sand.u32 %s109, 1
        %s1940 = scalar_lea.sflag [#allocation4], %s1939
        %s1941 = sand.u32 %s836, 1
        %s1942 = smul.addr %s1941, 64
        %s1943 = scalar_lea.vmem [#allocation27], %s1942
        // Predicated region
        $region257: #{fwd.4} parent=191 // pred_check
          %p1944 = pneg %p849
        $region258: #{fwd.4} parent=191 // pred_check_branch
          %1946 = sbr.rel (%p1944) target = $region260
        $region259: #{fwd.4} parent=191 // pred_region
          %1948 = dma.done %s1940, 1024
        $region260: #{fwd.4} parent=191 // pred_fallthru
          _
        %s1949 = sand.u32 %s109, 1
        %s1950 = scalar_lea.sflag [#allocation4], %s1949
        %s1951 = sand.u32 %s908, 1
        %s1952 = smul.addr %s1951, 64
        %s1953 = scalar_lea.vmem [#allocation28], %s1952
        // Predicated region
        $region261: #{fwd.4} parent=191 // pred_check
          %p1954 = pneg %p921
        $region262: #{fwd.4} parent=191 // pred_check_branch
          %1956 = sbr.rel (%p1954) target = $region264
        $region263: #{fwd.4} parent=191 // pred_region
          %1958 = dma.done %s1950, 1024
        $region264: #{fwd.4} parent=191 // pred_fallthru
          _
        // Predicated region
        $region265: #{fwd.4} parent=191 // pred_check
          %p1959 = pneg %p978
        $region266: #{fwd.4} parent=191 // pred_check_branch
          %1961 = sbr.rel (%p1959) target = $region268
        $region267: #{fwd.4} parent=191 // pred_region
          %1963 = dma.done [#allocation6], 16
        $region268: #{fwd.4} parent=191 // pred_fallthru
          _
        // Predicated region
        $region269: #{fwd.4} parent=191 // pred_check
          %p1964 = pneg %p999
        $region270: #{fwd.4} parent=191 // pred_check_branch
          %1966 = sbr.rel (%p1964) target = $region272
        $region271: #{fwd.4} parent=191 // pred_region
          %1968 = dma.done [#allocation9], 16
        $region272: #{fwd.4} parent=191 // pred_fallthru
          _
        // Predicated region
        $region273: #{fwd.4} parent=191 // pred_check
          %p1969 = pneg %p1020
        $region274: #{fwd.4} parent=191 // pred_check_branch
          %1971 = sbr.rel (%p1969) target = $region276
        $region275: #{fwd.4} parent=191 // pred_region
          %1973 = dma.done [#allocation12], 16
        $region276: #{fwd.4} parent=191 // pred_fallthru
          _
        // Predicated region
        $region277: #{fwd.4} parent=191 // pred_check
          %p1974 = pneg %p1041
        $region278: #{fwd.4} parent=191 // pred_check_branch
          %1976 = sbr.rel (%p1974) target = $region280
        $region279: #{fwd.4} parent=191 // pred_region
          %1978 = dma.done [#allocation15], 16
        $region280: #{fwd.4} parent=191 // pred_fallthru
          _
        // Predicated region
        $region281: #{fwd.4} parent=191 // pred_check
          %p1979 = pneg %p1062
        $region282: #{fwd.4} parent=191 // pred_check_branch
          %1981 = sbr.rel (%p1979) target = $region284
        $region283: #{fwd.4} parent=191 // pred_region
          %1983 = dma.done [#allocation18], 1024
        $region284: #{fwd.4} parent=191 // pred_fallthru
          _
        // Predicated region
        $region285: #{fwd.4} parent=191 // pred_check
          %p1984 = pneg %p1083
        $region286: #{fwd.4} parent=191 // pred_check_branch
          %1986 = sbr.rel (%p1984) target = $region288
        $region287: #{fwd.4} parent=191 // pred_region
          %1988 = dma.done [#allocation21], 16
        $region288: #{fwd.4} parent=191 // pred_fallthru
          _
        // Predicated region
        $region289: #{fwd.4} parent=191 // pred_check
          %p1989 = pneg %p1104
        $region290: #{fwd.4} parent=191 // pred_check_branch
          %1991 = sbr.rel (%p1989) target = $region292
        $region291: #{fwd.4} parent=191 // pred_region
          %1993 = dma.done [#allocation24], 2048
        $region292: #{fwd.4} parent=191 // pred_fallthru
          _
        // Predicated region
        $region293: #{fwd.4} parent=191 // pred_check
          %p1994 = pneg %p1125
        $region294: #{fwd.4} parent=191 // pred_check_branch
          %1996 = sbr.rel (%p1994) target = $region296
        $region295: #{fwd.4} parent=191 // pred_region
          %1998 = dma.done [#allocation37], 32
        $region296: #{fwd.4} parent=191 // pred_fallthru
          _
        // Predicated region
        $region297: #{fwd.4} parent=191 // pred_check
          %p1999 = pneg %p1146
        $region298: #{fwd.4} parent=191 // pred_check_branch
          %2001 = sbr.rel (%p1999) target = $region300
        $region299: #{fwd.4} parent=191 // pred_region
          %2003 = dma.done [#allocation37], 1024
        $region300: #{fwd.4} parent=191 // pred_fallthru
          _
        // Predicated region
        $region301: #{fwd.4} parent=191 // pred_check
          %p2004 = pneg %p1167
        $region302: #{fwd.4} parent=191 // pred_check_branch
          %2006 = sbr.rel (%p2004) target = $region304
        $region303: #{fwd.4} parent=191 // pred_region
          %2008 = dma.done [#allocation40], 16
        $region304: #{fwd.4} parent=191 // pred_fallthru
          _
        // Predicated region
        $region305: #{fwd.4} parent=191 // pred_check
          %p2009 = pneg %p1188
        $region306: #{fwd.4} parent=191 // pred_check_branch
          %2011 = sbr.rel (%p2009) target = $region308
        $region307: #{fwd.4} parent=191 // pred_region
          %2013 = dma.done [#allocation40], 1024
        $region308: #{fwd.4} parent=191 // pred_fallthru
          _
        // Predicated region
        $region309: #{fwd.4} parent=191 // pred_check
          %p2014 = pneg %p1209
        $region310: #{fwd.4} parent=191 // pred_check_branch
          %2016 = sbr.rel (%p2014) target = $region312
        $region311: #{fwd.4} parent=191 // pred_region
          %2018 = dma.done [#allocation43], 16
        $region312: #{fwd.4} parent=191 // pred_fallthru
          _
        %p2019 = scmp.lt.s32.totalorder %s113, 1
        %s2020 = scalar_select %p2019, %s113, 1
        %s2021 = smul.addr %s2020, 2
        %s2022 = smul.addr %s2021, 8
        %s2023 = scalar_lea.vmem %s1, %s2022
        %p2024 = pneg %p142
        %p2025 = pneg %p139
        %p2026 = scmp.lt.s32.totalorder %s113, 1
        %s2027 = scalar_select %p2026, %s113, 1
        %s2028 = scalar_lea.vmem %s3, %s2027
        %p2029 = pneg %p168
        %p2030 = pneg %p165
        %p2031 = pneg %p189
        %p2032 = pneg %p186
        %p2033 = pneg %p210
        %p2034 = pneg %p207
        %p2035 = pneg %p231
        %p2036 = pneg %p228
        %p2037 = pneg %p252
        %p2038 = pneg %p249
        %p2039 = pneg %p273
        %p2040 = pneg %p270
        %p2041 = pneg %p294
        %p2042 = pneg %p291
        %p2043 = pneg %p315
        %p2044 = pneg %p312
        %p2045 = pneg %p336
        %p2046 = pneg %p333
        %p2047 = pneg %p357
        %p2048 = pneg %p354
        %p2049 = pneg %p378
        %p2050 = pneg %p375
        %p2051 = pneg %p399
        %p2052 = pneg %p396
        %p2053 = pneg %p420
        %p2054 = pneg %p417
        %p2055 = pneg %p441
        %p2056 = pneg %p438
        %p2057 = pneg %p462
        %p2058 = pneg %p459
        %p2059 = pneg %p483
        %p2060 = pneg %p480
        %p2061 = pneg %p504
        %p2062 = pneg %p501
        %p2063 = pneg %p525
        %p2064 = pneg %p522
        %s2065 = ssub.s32 %s114, 1
        %p2066 = scmp.gt.s32.totalorder %s2065, 0
        %s2067 = scalar_select %p2066, %s2065, 0
        %p2068 = scmp.lt.s32.totalorder %s2067, 1
        %s2069 = scalar_select %p2068, %s2067, 1
        %p2070 = scmp.lt.s32.totalorder %s2069, 1
        %s2071 = scalar_select %p2070, %s2069, 1
        %s2072 = scalar_lea.vmem %s39, %s2071
        %p2073 = pneg %p561
        %p2074 = pneg %p558
        %s2075 = ssub.s32 %s114, 1
        %p2076 = scmp.gt.s32.totalorder %s2075, 0
        %s2077 = scalar_select %p2076, %s2075, 0
        %p2078 = scmp.lt.s32.totalorder %s2077, 1
        %s2079 = scalar_select %p2078, %s2077, 1
        %p2080 = scmp.lt.s32.totalorder %s2079, 1
        %s2081 = scalar_select %p2080, %s2079, 1
        %s2082 = scalar_lea.vmem %s41, %s2081
        %p2083 = pneg %p597
        %p2084 = pneg %p594
        %s2085 = sand.u32 %s109, 1
        %s2086 = scalar_lea.sflag [#allocation4], %s2085
        %s2087 = sand.u32 %s620, 1
        %s2088 = smul.addr %s2087, 192
        %s2089 = scalar_lea.vmem [#allocation25], %s2088
        %p2090 = pneg %p633
        %p2091 = pneg %p630
        %s2092 = ssub.s32 %s114, 1
        %p2093 = scmp.gt.s32.totalorder %s2092, 0
        %s2094 = scalar_select %p2093, %s2092, 0
        %p2095 = scmp.lt.s32.totalorder %s2094, 1
        %s2096 = scalar_select %p2095, %s2094, 1
        %p2097 = scmp.lt.s32.totalorder %s2096, 1
        %s2098 = scalar_select %p2097, %s2096, 1
        %s2099 = smul.addr %s2098, 3
        %s2100 = scalar_lea.vmem %s45, %s2099
        %p2101 = pneg %p669
        %p2102 = pneg %p666
        %s2103 = sand.u32 %s109, 1
        %s2104 = scalar_lea.sflag [#allocation4], %s2103
        %s2105 = sand.u32 %s692, 1
        %s2106 = smul.addr %s2105, 64
        %s2107 = scalar_lea.vmem [#allocation26], %s2106
        %p2108 = pneg %p705
        %p2109 = pneg %p702
        %s2110 = ssub.s32 %s114, 1
        %p2111 = scmp.gt.s32.totalorder %s2110, 0
        %s2112 = scalar_select %p2111, %s2110, 0
        %p2113 = scmp.lt.s32.totalorder %s2112, 1
        %s2114 = scalar_select %p2113, %s2112, 1
        %p2115 = scmp.lt.s32.totalorder %s2114, 1
        %s2116 = scalar_select %p2115, %s2114, 1
        %s2117 = scalar_lea.vmem %s49, %s2116
        %p2118 = pneg %p741
        %p2119 = pneg %p738
        %s2120 = ssub.s32 %s114, 1
        %p2121 = scmp.gt.s32.totalorder %s2120, 0
        %s2122 = scalar_select %p2121, %s2120, 0
        %p2123 = scmp.lt.s32.totalorder %s2122, 1
        %s2124 = scalar_select %p2123, %s2122, 1
        %p2125 = scmp.lt.s32.totalorder %s2124, 1
        %s2126 = scalar_select %p2125, %s2124, 1
        %s2127 = scalar_lea.vmem %s51, %s2126
        %p2128 = pneg %p777
        %p2129 = pneg %p774
        %s2130 = ssub.s32 %s114, 1
        %p2131 = scmp.gt.s32.totalorder %s2130, 0
        %s2132 = scalar_select %p2131, %s2130, 0
        %p2133 = scmp.lt.s32.totalorder %s2132, 1
        %s2134 = scalar_select %p2133, %s2132, 1
        %p2135 = scmp.lt.s32.totalorder %s2134, 1
        %s2136 = scalar_select %p2135, %s2134, 1
        %s2137 = scalar_lea.vmem %s53, %s2136
        %p2138 = pneg %p813
        %p2139 = pneg %p810
        %s2140 = sand.u32 %s109, 1
        %s2141 = scalar_lea.sflag [#allocation4], %s2140
        %s2142 = sand.u32 %s836, 1
        %s2143 = smul.addr %s2142, 64
        %s2144 = scalar_lea.vmem [#allocation27], %s2143
        %p2145 = pneg %p849
        %p2146 = pneg %p846
        %s2147 = ssub.s32 %s114, 1
        %p2148 = scmp.gt.s32.totalorder %s2147, 0
        %s2149 = scalar_select %p2148, %s2147, 0
        %p2150 = scmp.lt.s32.totalorder %s2149, 1
        %s2151 = scalar_select %p2150, %s2149, 1
        %p2152 = scmp.lt.s32.totalorder %s2151, 1
        %s2153 = scalar_select %p2152, %s2151, 1
        %s2154 = scalar_lea.vmem %s57, %s2153
        %p2155 = pneg %p885
        %p2156 = pneg %p882
        %s2157 = sand.u32 %s109, 1
        %s2158 = scalar_lea.sflag [#allocation4], %s2157
        %s2159 = sand.u32 %s908, 1
        %s2160 = smul.addr %s2159, 64
        %s2161 = scalar_lea.vmem [#allocation28], %s2160
        %p2162 = pneg %p921
        %p2163 = pneg %p918
        %s2164 = ssub.s32 %s114, 1
        %p2165 = scmp.gt.s32.totalorder %s2164, 0
        %s2166 = scalar_select %p2165, %s2164, 0
        %p2167 = scmp.lt.s32.totalorder %s2166, 1
        %s2168 = scalar_select %p2167, %s2166, 1
        %p2169 = scmp.lt.s32.totalorder %s2168, 1
        %s2170 = scalar_select %p2169, %s2168, 1
        %s2171 = scalar_lea.vmem %s61, %s2170
        %p2172 = pneg %p957
        %p2173 = pneg %p954
        %p2174 = pneg %p978
        %p2175 = pneg %p975
        %p2176 = pneg %p999
        %p2177 = pneg %p996
        %p2178 = pneg %p1020
        %p2179 = pneg %p1017
        %p2180 = pneg %p1041
        %p2181 = pneg %p1038
        %p2182 = pneg %p1062
        %p2183 = pneg %p1059
        %p2184 = pneg %p1083
        %p2185 = pneg %p1080
        %p2186 = pneg %p1104
        %p2187 = pneg %p1101
        %p2188 = pneg %p1125
        %p2189 = pneg %p1122
        %p2190 = pneg %p1146
        %p2191 = pneg %p1143
        %p2192 = pneg %p1167
        %p2193 = pneg %p1164
        %p2194 = pneg %p1188
        %p2195 = pneg %p1185
        %p2196 = pneg %p1209
        %p2197 = pneg %p1206
        %p2198 = pneg %p1235
        %p2199 = pneg %p1232
        %p2200 = scmp.lt.s32.totalorder %s113, 1
        %s2201 = scalar_select %p2200, %s113, 1
        %s2202 = smul.addr %s2201, 2
        %s2203 = smul.addr %s2202, 8
        %s2204 = scalar_lea.vmem %s87, %s2203
        %p2205 = scmp.lt.s32.totalorder %s113, 1
        %s2206 = scalar_select %p2205, %s113, 1
        %s2207 = smul.addr %s2206, 2
        %s2208 = smul.addr %s2207, 8
        %s2209 = scalar_lea.vmem %s1, %s2208
        %p2210 = scmp.lt.s32.totalorder %s113, 1
        %s2211 = scalar_select %p2210, %s113, 1
        %s2212 = scalar_lea.vmem %s3, %s2211
        %s2213 = ssub.s32 %s114, 1
        %p2214 = scmp.gt.s32.totalorder %s2213, 0
        %s2215 = scalar_select %p2214, %s2213, 0
        %p2216 = scmp.lt.s32.totalorder %s2215, 1
        %s2217 = scalar_select %p2216, %s2215, 1
        %p2218 = scmp.lt.s32.totalorder %s2217, 1
        %s2219 = scalar_select %p2218, %s2217, 1
        %s2220 = scalar_lea.vmem %s39, %s2219
        %s2221 = ssub.s32 %s114, 1
        %p2222 = scmp.gt.s32.totalorder %s2221, 0
        %s2223 = scalar_select %p2222, %s2221, 0
        %p2224 = scmp.lt.s32.totalorder %s2223, 1
        %s2225 = scalar_select %p2224, %s2223, 1
        %s2226 = ssub.s32 %s114, 1
        %p2227 = scmp.gt.s32.totalorder %s2226, 0
        %s2228 = scalar_select %p2227, %s2226, 0
        %p2229 = scmp.lt.s32.totalorder %s2228, 1
        %s2230 = scalar_select %p2229, %s2228, 1
        %p2231 = scmp.lt.s32.totalorder %s2230, 1
        %s2232 = scalar_select %p2231, %s2230, 1
        %s2233 = scalar_lea.vmem %s41, %s2232
        %s2234 = ssub.s32 %s114, 1
        %p2235 = scmp.gt.s32.totalorder %s2234, 0
        %s2236 = scalar_select %p2235, %s2234, 0
        %p2237 = scmp.lt.s32.totalorder %s2236, 1
        %s2238 = scalar_select %p2237, %s2236, 1
        %s2239 = ssub.s32 %s114, 1
        %p2240 = scmp.gt.s32.totalorder %s2239, 0
        %s2241 = scalar_select %p2240, %s2239, 0
        %p2242 = scmp.lt.s32.totalorder %s2241, 1
        %s2243 = scalar_select %p2242, %s2241, 1
        %s2244 = ssub.s32 %s114, 1
        %p2245 = scmp.gt.s32.totalorder %s2244, 0
        %s2246 = scalar_select %p2245, %s2244, 0
        %p2247 = scmp.lt.s32.totalorder %s2246, 1
        %s2248 = scalar_select %p2247, %s2246, 1
        %p2249 = scmp.lt.s32.totalorder %s2248, 1
        %s2250 = scalar_select %p2249, %s2248, 1
        %s2251 = smul.addr %s2250, 3
        %s2252 = scalar_lea.vmem %s45, %s2251
        %s2253 = ssub.s32 %s114, 1
        %p2254 = scmp.gt.s32.totalorder %s2253, 0
        %s2255 = scalar_select %p2254, %s2253, 0
        %p2256 = scmp.lt.s32.totalorder %s2255, 1
        %s2257 = scalar_select %p2256, %s2255, 1
        %s2258 = ssub.s32 %s114, 1
        %p2259 = scmp.gt.s32.totalorder %s2258, 0
        %s2260 = scalar_select %p2259, %s2258, 0
        %p2261 = scmp.lt.s32.totalorder %s2260, 1
        %s2262 = scalar_select %p2261, %s2260, 1
        %s2263 = ssub.s32 %s114, 1
        %p2264 = scmp.gt.s32.totalorder %s2263, 0
        %s2265 = scalar_select %p2264, %s2263, 0
        %p2266 = scmp.lt.s32.totalorder %s2265, 1
        %s2267 = scalar_select %p2266, %s2265, 1
        %p2268 = scmp.lt.s32.totalorder %s2267, 1
        %s2269 = scalar_select %p2268, %s2267, 1
        %s2270 = scalar_lea.vmem %s49, %s2269
        %s2271 = ssub.s32 %s114, 1
        %p2272 = scmp.gt.s32.totalorder %s2271, 0
        %s2273 = scalar_select %p2272, %s2271, 0
        %p2274 = scmp.lt.s32.totalorder %s2273, 1
        %s2275 = scalar_select %p2274, %s2273, 1
        %s2276 = ssub.s32 %s114, 1
        %p2277 = scmp.gt.s32.totalorder %s2276, 0
        %s2278 = scalar_select %p2277, %s2276, 0
        %p2279 = scmp.lt.s32.totalorder %s2278, 1
        %s2280 = scalar_select %p2279, %s2278, 1
        %p2281 = scmp.lt.s32.totalorder %s2280, 1
        %s2282 = scalar_select %p2281, %s2280, 1
        %s2283 = scalar_lea.vmem %s51, %s2282
        %s2284 = ssub.s32 %s114, 1
        %p2285 = scmp.gt.s32.totalorder %s2284, 0
        %s2286 = scalar_select %p2285, %s2284, 0
        %p2287 = scmp.lt.s32.totalorder %s2286, 1
        %s2288 = scalar_select %p2287, %s2286, 1
        %s2289 = ssub.s32 %s114, 1
        %p2290 = scmp.gt.s32.totalorder %s2289, 0
        %s2291 = scalar_select %p2290, %s2289, 0
        %p2292 = scmp.lt.s32.totalorder %s2291, 1
        %s2293 = scalar_select %p2292, %s2291, 1
        %p2294 = scmp.lt.s32.totalorder %s2293, 1
        %s2295 = scalar_select %p2294, %s2293, 1
        %s2296 = scalar_lea.vmem %s53, %s2295
        %s2297 = ssub.s32 %s114, 1
        %p2298 = scmp.gt.s32.totalorder %s2297, 0
        %s2299 = scalar_select %p2298, %s2297, 0
        %p2300 = scmp.lt.s32.totalorder %s2299, 1
        %s2301 = scalar_select %p2300, %s2299, 1
        %s2302 = ssub.s32 %s114, 1
        %p2303 = scmp.gt.s32.totalorder %s2302, 0
        %s2304 = scalar_select %p2303, %s2302, 0
        %p2305 = scmp.lt.s32.totalorder %s2304, 1
        %s2306 = scalar_select %p2305, %s2304, 1
        %s2307 = ssub.s32 %s114, 1
        %p2308 = scmp.gt.s32.totalorder %s2307, 0
        %s2309 = scalar_select %p2308, %s2307, 0
        %p2310 = scmp.lt.s32.totalorder %s2309, 1
        %s2311 = scalar_select %p2310, %s2309, 1
        %p2312 = scmp.lt.s32.totalorder %s2311, 1
        %s2313 = scalar_select %p2312, %s2311, 1
        %s2314 = scalar_lea.vmem %s57, %s2313
        %s2315 = ssub.s32 %s114, 1
        %p2316 = scmp.gt.s32.totalorder %s2315, 0
        %s2317 = scalar_select %p2316, %s2315, 0
        %p2318 = scmp.lt.s32.totalorder %s2317, 1
        %s2319 = scalar_select %p2318, %s2317, 1
        %s2320 = ssub.s32 %s114, 1
        %p2321 = scmp.gt.s32.totalorder %s2320, 0
        %s2322 = scalar_select %p2321, %s2320, 0
        %p2323 = scmp.lt.s32.totalorder %s2322, 1
        %s2324 = scalar_select %p2323, %s2322, 1
        %s2325 = ssub.s32 %s114, 1
        %p2326 = scmp.gt.s32.totalorder %s2325, 0
        %s2327 = scalar_select %p2326, %s2325, 0
        %p2328 = scmp.lt.s32.totalorder %s2327, 1
        %s2329 = scalar_select %p2328, %s2327, 1
        %p2330 = scmp.lt.s32.totalorder %s2329, 1
        %s2331 = scalar_select %p2330, %s2329, 1
        %s2332 = scalar_lea.vmem %s61, %s2331
        %s2333 = ssub.s32 %s114, 1
        %p2334 = scmp.gt.s32.totalorder %s2333, 0
        %s2335 = scalar_select %p2334, %s2333, 0
        %p2336 = scmp.lt.s32.totalorder %s2335, 1
        %s2337 = scalar_select %p2336, %s2335, 1
        %p2338 = scmp.lt.s32.totalorder %s113, 1
        %s2339 = scalar_select %p2338, %s113, 1
        %s2340 = smul.addr %s2339, 2
        %s2341 = smul.addr %s2340, 8
        %s2342 = scalar_lea.vmem %s87, %s2341
        %p2344 = scmp.eq.s32.totalorder %s114, 0
        // Predicated region
        $region313: #{fwd.4} parent=191 // pred_check
          %p2345 = pneg %p2344
        $region314: #{fwd.4} parent=191 // pred_check_branch
          %2347 = sbr.rel (%p2345) target = $region316
        $region315: #{fwd.4} parent=191 // pred_region
          %v2348 = vld [vmem:[%s2209] sm:$0xff]
          %v2349 = vld [vmem:[%s2209 + $0x8] sm:$0xff]
          %v2350 = vld [vmem:[%s2212] sm:$0x1]
          %v2351 = vld [vmem:[%s5] sm:$0xff]
          %v2352 = vld [vmem:[#allocation3] sm:$0x1]
          %v2353 = vld [vmem:[#allocation5] sm:$0x1]
          %2354 = vadd.xlane.f32.xlu0 %v2348
          %v2355 = vpop.xlane.xlu0 %2354
          %2356 = vadd.xlane.f32.xlu0 %v2349
          %v2357 = vpop.xlane.xlu0 %2356
          %v2358 = vrcp.pop 32.0
          %v2359 = vmul.f32 32.0, %v2358
          %v2360 = vsub.f32 1.0, %v2359
          %v2361 = vmul.f32 %v2358, %v2360
          %v2362 = vadd.f32 %v2358, %v2361
          %vm2363 = vweird.f32 %v2358
          %v2364 = vsel %vm2363, %v2358, %v2362
          %v2365 = vmul.f32 %v2355, %v2364
          %v2366 = vmul.f32 %v2357, %v2364
          %v2367 = vsub.f32 %v2348, %v2365
          %v2368 = vsub.f32 %v2349, %v2366
          %v2369 = vmul.f32 %v2367, %v2367
          %v2370 = vmul.f32 %v2368, %v2368
          %2371 = vadd.xlane.f32.xlu0 %v2369
          %v2372 = vpop.xlane.xlu0 %2371
          %2373 = vadd.xlane.f32.xlu0 %v2370
          %v2374 = vpop.xlane.xlu0 %2373
          %v2375 = vmul.f32 %v2365, 96.0
          %v2376 = vmul.f32 %v2366, 96.0
          %v2377 = vmul.f32 %v2375, %v2365
          %v2378 = vmul.f32 %v2376, %v2366
          %v2379 = vsub.f32 %v2372, %v2377
          %v2380 = vsub.f32 %v2374, %v2378
          %v2381 = vmul.f32 %v2379, %v2364
          %v2382 = vmul.f32 %v2380, %v2364
          %v2383 = vadd.f32 %v2381, 1e-05
          %v2384 = vadd.f32 %v2382, 1e-05
          %v2385 = vrsqrt.pop %v2383
          %v2386 = vmul.f32 %v2385, %v2383
          %v2387 = vmul.f32 %v2386, %v2385
          %v2388 = vmul.f32 0.5, %v2387
          %v2389 = vsub.f32 1.5, %v2388
          %v2390 = vmul.f32 %v2385, %v2389
          %vm2391 = vweird.f32 %v2383
          %vm2392 = vweird.f32 %v2385
          %vm2393 = vmor %vm2391, %vm2392
          %v2394 = vsel %vm2393, %v2385, %v2390
          %v2395 = vrsqrt.pop %v2384
          %v2396 = vmul.f32 %v2395, %v2384
          %v2397 = vmul.f32 %v2396, %v2395
          %v2398 = vmul.f32 0.5, %v2397
          %v2399 = vsub.f32 1.5, %v2398
          %v2400 = vmul.f32 %v2395, %v2399
          %vm2401 = vweird.f32 %v2384
          %vm2402 = vweird.f32 %v2395
          %vm2403 = vmor %vm2401, %vm2402
          %v2404 = vsel %vm2403, %v2395, %v2400
          %v2405 = vmul.f32 %v2367, %v2394
          %v2406 = vmul.f32 %v2368, %v2404
          %v2408 = vperm.slane %v2352, 0
          %v2410 = vmul.f32 %v2405, %v2408
          %v2411 = vmul.f32 %v2406, %v2408
          %v2413 = vperm.slane %v2353, 0
          %v2415 = vadd.f32 %v2410, %v2413
          %v2416 = vadd.f32 %v2411, %v2413
          %v2417 = vld [vmem:[#allocation7] sm:$0x1]
          %v2418 = vld [vmem:[#allocation8] sm:$0x1]
          %2419 = vadd.xlane.f32.xlu0 %v2351
          %v2420 = vpop.xlane.xlu0 %2419
          %v2421 = vmul.f32 %v2420, %v2364
          %v2422 = vsub.f32 %v2351, %v2421
          %v2423 = vmul.f32 %v2422, %v2422
          %2424 = vadd.xlane.f32.xlu0 %v2423
          %v2425 = vpop.xlane.xlu0 %2424
          %v2426 = vmul.f32 %v2421, 96.0
          %v2427 = vmul.f32 %v2426, %v2421
          %v2428 = vsub.f32 %v2425, %v2427
          %v2429 = vmul.f32 %v2428, %v2364
          %v2430 = vadd.f32 %v2429, 1e-05
          %v2431 = vrsqrt.pop %v2430
          %v2432 = vmul.f32 %v2431, %v2430
          %v2433 = vmul.f32 %v2432, %v2431
          %v2434 = vmul.f32 0.5, %v2433
          %v2435 = vsub.f32 1.5, %v2434
          %v2436 = vmul.f32 %v2431, %v2435
          %vm2437 = vweird.f32 %v2430
          %vm2438 = vweird.f32 %v2431
          %vm2439 = vmor %vm2437, %vm2438
          %v2440 = vsel %vm2439, %v2431, %v2436
          %v2441 = vmul.f32 %v2422, %v2440
          %v2443 = vperm.slane %v2417, 0
          %v2445 = vmul.f32 %v2441, %v2443
          %v2447 = vperm.slane %v2418, 0
          %v2449 = vadd.f32 %v2445, %v2447
          %v2450 = vld [vmem:[%s15] sm:$0xf]
          %v2451 = vld [vmem:[%s15 + $0x4] sm:$0xf]
          %v2452 = vld [vmem:[%s15 + $0x8] sm:$0xf]
          %v2453 = vld [vmem:[%s15 + $0xc] sm:$0xf]
          %v2454 = vld [vmem:[%s15 + $0x10] sm:$0xf]
          %v2455 = vld [vmem:[%s15 + $0x14] sm:$0xf]
          %v2456 = vld [vmem:[%s15 + $0x18] sm:$0xf]
          %v2457 = vld [vmem:[%s15 + $0x1c] sm:$0xf]
          %v2458 = vld [vmem:[%s15 + $0x20] sm:$0xf]
          %v2459 = vld [vmem:[%s15 + $0x24] sm:$0xf]
          %v2460 = vld [vmem:[%s15 + $0x28] sm:$0xf]
          %v2461 = vld [vmem:[%s15 + $0x2c] sm:$0xf]
          %v2462 = vld [vmem:[%s15 + $0x30] sm:$0xf]
          %v2463 = vld [vmem:[%s15 + $0x34] sm:$0xf]
          %v2464 = vld [vmem:[%s15 + $0x38] sm:$0xf]
          %v2465 = vld [vmem:[%s15 + $0x3c] sm:$0xf]
          %v2466 = vpack.c.bf16 %v2449, %v2449
          %v2467 = vld [vmem:[#allocation10] sm:$0x1]
          %v2469 = vperm.slane %v2467, 0
          %v2487 = vunpack.c.l.b16 %v2450
          %v2488 = vunpack.c.l.b16 %v2451
          %v2489 = vunpack.c.l.b16 %v2452
          %v2490 = vunpack.c.l.b16 %v2453
          %v2491 = vunpack.c.l.b16 %v2454
          %v2492 = vunpack.c.l.b16 %v2455
          %v2493 = vunpack.c.l.b16 %v2456
          %v2494 = vunpack.c.l.b16 %v2457
          %v2495 = vunpack.c.l.b16 %v2458
          %v2496 = vunpack.c.l.b16 %v2459
          %v2497 = vunpack.c.l.b16 %v2460
          %v2498 = vunpack.c.l.b16 %v2461
          %v2499 = vunpack.c.l.b16 %v2462
          %v2500 = vunpack.c.l.b16 %v2463
          %v2501 = vunpack.c.l.b16 %v2464
          %v2502 = vunpack.c.l.b16 %v2465
          %v2503 = vpack.c.b16 %v2488, %v2487
          %v2504 = vpack.c.b16 %v2490, %v2489
          %v2505 = vpack.c.b16 %v2492, %v2491
          %v2506 = vpack.c.b16 %v2494, %v2493
          %v2507 = vpack.c.b16 %v2496, %v2495
          %v2508 = vpack.c.b16 %v2498, %v2497
          %v2509 = vpack.c.b16 %v2500, %v2499
          %v2510 = vpack.c.b16 %v2502, %v2501
          %2519 = vmatpush.bf16.msra.mxu0 %v2510
          %2520 = vmatpush.bf16.msra.mxu0 %v2509
          %2521 = vmatpush.bf16.msra.mxu0 %v2508
          %2522 = vmatpush.bf16.msra.mxu0 %v2507
          %2523 = vmatpush.bf16.msra.mxu0 %v2506
          %2524 = vmatpush.bf16.msra.mxu0 %v2505
          %2525 = vmatpush.bf16.msra.mxu0 %v2504
          %2526 = vmatpush.bf16.msra.mxu0 %v2503
          %2527 = vmatmul.bf16.gmra.mxu0 %v2466
          %v2528 = vpop.f32.mrf.mxu0
          %v2529 = vadd.f32 %v2469, %v2528
          %v2530 = vpop.f32.mrf.mxu0
          %2531 = vdwg.mxu0
          %v2532 = vld [vmem:[#allocation11] sm:$0xff]
          %v2533 = vld [vmem:[#allocation11 + $0x8] sm:$0xff]
          %v2534 = vld [vmem:[#allocation11 + $0x10] sm:$0xff]
          %v2535 = vld [vmem:[#allocation11 + $0x18] sm:$0xff]
          %v2536 = vld [vmem:[#allocation11 + $0x20] sm:$0xff]
          %v2537 = vld [vmem:[#allocation11 + $0x28] sm:$0xff]
          %v2538 = vld [vmem:[#allocation11 + $0x30] sm:$0xff]
          %v2539 = vld [vmem:[#allocation11 + $0x38] sm:$0xff]
          %v2540 = vld [vmem:[#allocation11 + $0x40] sm:$0xff]
          %v2541 = vld [vmem:[#allocation11 + $0x48] sm:$0xff]
          %v2542 = vld [vmem:[#allocation11 + $0x50] sm:$0xff]
          %v2543 = vld [vmem:[#allocation11 + $0x58] sm:$0xff]
          %v2544 = vld [vmem:[#allocation11 + $0x60] sm:$0xff]
          %v2545 = vld [vmem:[#allocation11 + $0x68] sm:$0xff]
          %v2546 = vld [vmem:[#allocation11 + $0x70] sm:$0xff]
          %v2547 = vld [vmem:[#allocation11 + $0x78] sm:$0xff]
          %v2548 = vpack.c.bf16 %v2416, %v2415
          %v2549 = vld [vmem:[%s21] sm:$0x3]
          %v2551 = vperm.slane %v2549, 0
          %v2552 = vperm.slane %v2549, 1
          %v2571 = vunpack.c.l.b16 %v2532
          %v2572 = vunpack.c.h.b16 %v2532
          %v2573 = vunpack.c.l.b16 %v2533
          %v2574 = vunpack.c.h.b16 %v2533
          %v2575 = vunpack.c.l.b16 %v2534
          %v2576 = vunpack.c.h.b16 %v2534
          %v2577 = vunpack.c.l.b16 %v2535
          %v2578 = vunpack.c.h.b16 %v2535
          %v2579 = vunpack.c.l.b16 %v2536
          %v2580 = vunpack.c.h.b16 %v2536
          %v2581 = vunpack.c.l.b16 %v2537
          %v2582 = vunpack.c.h.b16 %v2537
          %v2583 = vunpack.c.l.b16 %v2538
          %v2584 = vunpack.c.h.b16 %v2538
          %v2585 = vunpack.c.l.b16 %v2539
          %v2586 = vunpack.c.h.b16 %v2539
          %v2587 = vunpack.c.l.b16 %v2540
          %v2588 = vunpack.c.h.b16 %v2540
          %v2589 = vunpack.c.l.b16 %v2541
          %v2590 = vunpack.c.h.b16 %v2541
          %v2591 = vunpack.c.l.b16 %v2542
          %v2592 = vunpack.c.h.b16 %v2542
          %v2593 = vunpack.c.l.b16 %v2543
          %v2594 = vunpack.c.h.b16 %v2543
          %v2595 = vunpack.c.l.b16 %v2544
          %v2596 = vunpack.c.h.b16 %v2544
          %v2597 = vunpack.c.l.b16 %v2545
          %v2598 = vunpack.c.h.b16 %v2545
          %v2599 = vunpack.c.l.b16 %v2546
          %v2600 = vunpack.c.h.b16 %v2546
          %v2601 = vunpack.c.l.b16 %v2547
          %v2602 = vunpack.c.h.b16 %v2547
          %v2603 = vpack.c.b16 %v2573, %v2571
          %v2604 = vpack.c.b16 %v2574, %v2572
          %v2605 = vpack.c.b16 %v2577, %v2575
          %v2606 = vpack.c.b16 %v2578, %v2576
          %v2607 = vpack.c.b16 %v2581, %v2579
          %v2608 = vpack.c.b16 %v2582, %v2580
          %v2609 = vpack.c.b16 %v2585, %v2583
          %v2610 = vpack.c.b16 %v2586, %v2584
          %v2611 = vpack.c.b16 %v2589, %v2587
          %v2612 = vpack.c.b16 %v2590, %v2588
          %v2613 = vpack.c.b16 %v2593, %v2591
          %v2614 = vpack.c.b16 %v2594, %v2592
          %v2615 = vpack.c.b16 %v2597, %v2595
          %v2616 = vpack.c.b16 %v2598, %v2596
          %v2617 = vpack.c.b16 %v2601, %v2599
          %v2618 = vpack.c.b16 %v2602, %v2600
          %2635 = vmatpush.bf16.msra.mxu0 %v2617
          %2636 = vmatpush.bf16.msra.mxu0 %v2615
          %2637 = vmatpush.bf16.msra.mxu0 %v2613
          %2638 = vmatpush.bf16.msra.mxu0 %v2611
          %2639 = vmatpush.bf16.msra.mxu0 %v2609
          %2640 = vmatpush.bf16.msra.mxu0 %v2607
          %2641 = vmatpush.bf16.msra.mxu0 %v2605
          %2642 = vmatpush.bf16.msra.mxu0 %v2603
          %2643 = vmatmul.bf16.gmra.mxu0 %v2548
          %v2644 = vpop.f32.mrf.mxu0
          %v2645 = vadd.f32 %v2551, %v2644
          %v2646 = vpop.f32.mrf.mxu0
          %v2647 = vadd.f32 %v2551, %v2646
          %2648 = vdwg.mxu0
          %2649 = vmatpush.bf16.msra.mxu0 %v2618
          %2650 = vmatpush.bf16.msra.mxu0 %v2616
          %2651 = vmatpush.bf16.msra.mxu0 %v2614
          %2652 = vmatpush.bf16.msra.mxu0 %v2612
          %2653 = vmatpush.bf16.msra.mxu0 %v2610
          %2654 = vmatpush.bf16.msra.mxu0 %v2608
          %2655 = vmatpush.bf16.msra.mxu0 %v2606
          %2656 = vmatpush.bf16.msra.mxu0 %v2604
          %2657 = vmatmul.bf16.gmra.mxu0 %v2548
          %v2658 = vpop.f32.mrf.mxu0
          %v2659 = vadd.f32 %v2552, %v2658
          %v2660 = vpop.f32.mrf.mxu0
          %v2661 = vadd.f32 %v2552, %v2660
          %2662 = vdwg.mxu0
          %v2663 = vpack.c.bf16 %v2529, %v2529
          %v2664 = vpack.c.bf16 %v2647, %v2645
          %2665 = vmatpush.bf16.xpose.msra.mxu0 0
          %2666 = vmatpush.bf16.xpose.msra.mxu0 0
          %2667 = vmatpush.bf16.xpose.msra.mxu0 0
          %2668 = vmatpush.bf16.xpose.msra.mxu0 0
          %2669 = vmatpush.bf16.xpose.msra.mxu0 0
          %2670 = vmatpush.bf16.xpose.msra.mxu0 0
          %2671 = vmatpush.bf16.xpose.msra.mxu0 0
          %2672 = vmatpush.bf16.xpose.msra.mxu0 %v2664
          %2673 = vmatmul.bf16.gmra.mxu0 %v2663
          %v2674 = vpop.f32.mrf.mxu0
          %v2675 = vadd.f32 0.0, %v2674
          %v2676 = vpop.f32.mrf.mxu0
          %2677 = vdwg.mxu0
          %vm2678 = vcmp.gt.f32.partialorder %v2350, 0.5
          %v2679 = vsel %vm2678, 1, 0
          %v2680 = vperm.slane %v2679, 0
          %vm2681 = vcmp.eq.s32.totalorder %v2680, 1
          %v2682 = vsel %vm2681, %v2675, -1e+30
          %vm2683 = vcmask 130048
          %v2684 = vsel %vm2683, %v2682, -inf
          %2685 = vmax.xlane.f32.xlu0 %v2684
          %v2686 = vpop.xlane.xlu0 %2685
          %v2687 = vsub.f32 %v2682, %v2686
          %v2688 = vmul.f32 %v2687, 1.442695
          %v2689 = vpow.pop %v2688
          %v2690 = vsel %vm2683, %v2689, 0.0
          %2691 = vadd.xlane.f32.xlu0 %v2690
          %v2692 = vpop.xlane.xlu0 %2691
          %v2693 = vrcp.pop %v2692
          %v2694 = vmul.f32 %v2689, %v2693
          %v2695 = vpack.c.bf16 %v2694, %v2694
          %v2696 = vpack.c.bf16 %v2661, %v2659
          %v2698 = vsel %vm2683, %v2695, 0
          %2700 = vmatpush.bf16.msra.mxu0 0
          %2701 = vmatpush.bf16.msra.mxu0 0
          %2702 = vmatpush.bf16.msra.mxu0 0
          %2703 = vmatpush.bf16.msra.mxu0 0
          %2704 = vmatpush.bf16.msra.mxu0 0
          %2705 = vmatpush.bf16.msra.mxu0 0
          %2706 = vmatpush.bf16.msra.mxu0 0
          %2707 = vmatpush.bf16.msra.mxu0 %v2696
          %2708 = vmatmul.bf16.gmra.mxu0 %v2698
          %v2709 = vpop.f32.mrf.mxu0
          %v2710 = vadd.f32 0.0, %v2709
          %v2711 = vpop.f32.mrf.mxu0
          %2712 = vdwg.mxu0
          %v2713 = vld [vmem:[#allocation13] sm:$0xf]
          %v2714 = vld [vmem:[#allocation13 + $0x4] sm:$0xf]
          %v2715 = vld [vmem:[#allocation13 + $0x8] sm:$0xf]
          %v2716 = vld [vmem:[#allocation13 + $0xc] sm:$0xf]
          %v2717 = vld [vmem:[#allocation13 + $0x10] sm:$0xf]
          %v2718 = vld [vmem:[#allocation13 + $0x14] sm:$0xf]
          %v2719 = vld [vmem:[#allocation13 + $0x18] sm:$0xf]
          %v2720 = vld [vmem:[#allocation13 + $0x1c] sm:$0xf]
          %v2721 = vld [vmem:[#allocation13 + $0x20] sm:$0xf]
          %v2722 = vld [vmem:[#allocation13 + $0x24] sm:$0xf]
          %v2723 = vld [vmem:[#allocation13 + $0x28] sm:$0xf]
          %v2724 = vld [vmem:[#allocation13 + $0x2c] sm:$0xf]
          %v2725 = vld [vmem:[#allocation13 + $0x30] sm:$0xf]
          %v2726 = vld [vmem:[#allocation13 + $0x34] sm:$0xf]
          %v2727 = vld [vmem:[#allocation13 + $0x38] sm:$0xf]
          %v2728 = vld [vmem:[#allocation13 + $0x3c] sm:$0xf]
          %v2729 = vpack.c.bf16 %v2710, %v2710
          %v2746 = vunpack.c.l.b16 %v2713
          %v2747 = vunpack.c.l.b16 %v2714
          %v2748 = vunpack.c.l.b16 %v2715
          %v2749 = vunpack.c.l.b16 %v2716
          %v2750 = vunpack.c.l.b16 %v2717
          %v2751 = vunpack.c.l.b16 %v2718
          %v2752 = vunpack.c.l.b16 %v2719
          %v2753 = vunpack.c.l.b16 %v2720
          %v2754 = vunpack.c.l.b16 %v2721
          %v2755 = vunpack.c.l.b16 %v2722
          %v2756 = vunpack.c.l.b16 %v2723
          %v2757 = vunpack.c.l.b16 %v2724
          %v2758 = vunpack.c.l.b16 %v2725
          %v2759 = vunpack.c.l.b16 %v2726
          %v2760 = vunpack.c.l.b16 %v2727
          %v2761 = vunpack.c.l.b16 %v2728
          %v2762 = vpack.c.b16 %v2747, %v2746
          %v2763 = vpack.c.b16 %v2749, %v2748
          %v2764 = vpack.c.b16 %v2751, %v2750
          %v2765 = vpack.c.b16 %v2753, %v2752
          %v2766 = vpack.c.b16 %v2755, %v2754
          %v2767 = vpack.c.b16 %v2757, %v2756
          %v2768 = vpack.c.b16 %v2759, %v2758
          %v2769 = vpack.c.b16 %v2761, %v2760
          %2778 = vmatpush.bf16.msra.mxu0 %v2769
          %2779 = vmatpush.bf16.msra.mxu0 %v2768
          %2780 = vmatpush.bf16.msra.mxu0 %v2767
          %2781 = vmatpush.bf16.msra.mxu0 %v2766
          %2782 = vmatpush.bf16.msra.mxu0 %v2765
          %2783 = vmatpush.bf16.msra.mxu0 %v2764
          %2784 = vmatpush.bf16.msra.mxu0 %v2763
          %2785 = vmatpush.bf16.msra.mxu0 %v2762
          %2786 = vmatmul.bf16.gmra.mxu0 %v2729
          %v2787 = vpop.f32.mrf.mxu0
          %v2788 = vadd.f32 0.0, %v2787
          %v2789 = vpop.f32.mrf.mxu0
          %2790 = vdwg.mxu0
          %v2791 = vadd.f32 %v2351, %v2788
          %v2792 = vld [vmem:[#allocation14] sm:$0x1]
          %v2794 = vperm.slane %v2792, 0
          %v2796 = vadd.f32 %v2791, %v2794
          %v2797 = vld [vmem:[#allocation16] sm:$0x1]
          %v2798 = vld [vmem:[#allocation17] sm:$0x1]
          %2799 = vadd.xlane.f32.xlu0 %v2796
          %v2800 = vpop.xlane.xlu0 %2799
          %v2801 = vmul.f32 %v2800, %v2364
          %v2802 = vsub.f32 %v2796, %v2801
          %v2803 = vmul.f32 %v2802, %v2802
          %2804 = vadd.xlane.f32.xlu0 %v2803
          %v2805 = vpop.xlane.xlu0 %2804
          %v2806 = vmul.f32 %v2801, 96.0
          %v2807 = vmul.f32 %v2806, %v2801
          %v2808 = vsub.f32 %v2805, %v2807
          %v2809 = vmul.f32 %v2808, %v2364
          %v2810 = vadd.f32 %v2809, 1e-05
          %v2811 = vrsqrt.pop %v2810
          %v2812 = vmul.f32 %v2811, %v2810
          %v2813 = vmul.f32 %v2812, %v2811
          %v2814 = vmul.f32 0.5, %v2813
          %v2815 = vsub.f32 1.5, %v2814
          %v2816 = vmul.f32 %v2811, %v2815
          %vm2817 = vweird.f32 %v2810
          %vm2818 = vweird.f32 %v2811
          %vm2819 = vmor %vm2817, %vm2818
          %v2820 = vsel %vm2819, %v2811, %v2816
          %v2821 = vmul.f32 %v2802, %v2820
          %v2823 = vperm.slane %v2797, 0
          %v2825 = vmul.f32 %v2821, %v2823
          %v2827 = vperm.slane %v2798, 0
          %v2829 = vadd.f32 %v2825, %v2827
          %v2830 = vld [vmem:[#allocation19] sm:$0xf]
          %v2831 = vld [vmem:[#allocation19 + $0x4] sm:$0xf]
          %v2832 = vld [vmem:[#allocation19 + $0x8] sm:$0xf]
          %v2833 = vld [vmem:[#allocation19 + $0xc] sm:$0xf]
          %v2834 = vld [vmem:[#allocation19 + $0x10] sm:$0xf]
          %v2835 = vld [vmem:[#allocation19 + $0x14] sm:$0xf]
          %v2836 = vld [vmem:[#allocation19 + $0x18] sm:$0xf]
          %v2837 = vld [vmem:[#allocation19 + $0x1c] sm:$0xf]
          %v2838 = vld [vmem:[#allocation19 + $0x20] sm:$0xf]
          %v2839 = vld [vmem:[#allocation19 + $0x24] sm:$0xf]
          %v2840 = vld [vmem:[#allocation19 + $0x28] sm:$0xf]
          %v2841 = vld [vmem:[#allocation19 + $0x2c] sm:$0xf]
          %v2842 = vld [vmem:[#allocation19 + $0x30] sm:$0xf]
          %v2843 = vld [vmem:[#allocation19 + $0x34] sm:$0xf]
          %v2844 = vld [vmem:[#allocation19 + $0x38] sm:$0xf]
          %v2845 = vld [vmem:[#allocation19 + $0x3c] sm:$0xf]
          %v2846 = vpack.c.bf16 %v2829, %v2829
          %v2847 = vld [vmem:[#allocation20] sm:$0x1]
          %v2849 = vperm.slane %v2847, 0
          %v2867 = vunpack.c.l.b16 %v2830
          %v2868 = vunpack.c.l.b16 %v2831
          %v2869 = vunpack.c.l.b16 %v2832
          %v2870 = vunpack.c.l.b16 %v2833
          %v2871 = vunpack.c.l.b16 %v2834
          %v2872 = vunpack.c.l.b16 %v2835
          %v2873 = vunpack.c.l.b16 %v2836
          %v2874 = vunpack.c.l.b16 %v2837
          %v2875 = vunpack.c.l.b16 %v2838
          %v2876 = vunpack.c.l.b16 %v2839
          %v2877 = vunpack.c.l.b16 %v2840
          %v2878 = vunpack.c.l.b16 %v2841
          %v2879 = vunpack.c.l.b16 %v2842
          %v2880 = vunpack.c.l.b16 %v2843
          %v2881 = vunpack.c.l.b16 %v2844
          %v2882 = vunpack.c.l.b16 %v2845
          %v2883 = vpack.c.b16 %v2868, %v2867
          %v2884 = vpack.c.b16 %v2870, %v2869
          %v2885 = vpack.c.b16 %v2872, %v2871
          %v2886 = vpack.c.b16 %v2874, %v2873
          %v2887 = vpack.c.b16 %v2876, %v2875
          %v2888 = vpack.c.b16 %v2878, %v2877
          %v2889 = vpack.c.b16 %v2880, %v2879
          %v2890 = vpack.c.b16 %v2882, %v2881
          %2899 = vmatpush.bf16.msra.mxu0 %v2890
          %2900 = vmatpush.bf16.msra.mxu0 %v2889
          %2901 = vmatpush.bf16.msra.mxu0 %v2888
          %2902 = vmatpush.bf16.msra.mxu0 %v2887
          %2903 = vmatpush.bf16.msra.mxu0 %v2886
          %2904 = vmatpush.bf16.msra.mxu0 %v2885
          %2905 = vmatpush.bf16.msra.mxu0 %v2884
          %2906 = vmatpush.bf16.msra.mxu0 %v2883
          %2907 = vmatmul.bf16.gmra.mxu0 %v2846
          %v2908 = vpop.f32.mrf.mxu0
          %v2909 = vadd.f32 %v2849, %v2908
          %v2910 = vpop.f32.mrf.mxu0
          %2911 = vdwg.mxu0
          %v2912 = vmul.f32 %v2909, %v2909
          %v2913 = vmul.f32 %v2909, %v2912
          %v2914 = vmul.f32 %v2913, 0.044715
          %v2915 = vadd.f32 %v2909, %v2914
          %v2916 = vmul.f32 %v2915, 0.7978846
          %v2917 = vtanh.pop %v2916
          %v2918 = vadd.f32 %v2917, 1.0
          %v2919 = vmul.f32 %v2918, 0.5
          %v2920 = vmul.f32 %v2909, %v2919
          %v2921 = vld [vmem:[#allocation22] sm:$0xf]
          %v2922 = vld [vmem:[#allocation22 + $0x4] sm:$0xf]
          %v2923 = vld [vmem:[#allocation22 + $0x8] sm:$0xf]
          %v2924 = vld [vmem:[#allocation22 + $0xc] sm:$0xf]
          %v2925 = vld [vmem:[#allocation22 + $0x10] sm:$0xf]
          %v2926 = vld [vmem:[#allocation22 + $0x14] sm:$0xf]
          %v2927 = vld [vmem:[#allocation22 + $0x18] sm:$0xf]
          %v2928 = vld [vmem:[#allocation22 + $0x1c] sm:$0xf]
          %v2929 = vld [vmem:[#allocation22 + $0x20] sm:$0xf]
          %v2930 = vld [vmem:[#allocation22 + $0x24] sm:$0xf]
          %v2931 = vld [vmem:[#allocation22 + $0x28] sm:$0xf]
          %v2932 = vld [vmem:[#allocation22 + $0x2c] sm:$0xf]
          %v2933 = vld [vmem:[#allocation22 + $0x30] sm:$0xf]
          %v2934 = vld [vmem:[#allocation22 + $0x34] sm:$0xf]
          %v2935 = vld [vmem:[#allocation22 + $0x38] sm:$0xf]
          %v2936 = vld [vmem:[#allocation22 + $0x3c] sm:$0xf]
          %v2937 = vpack.c.bf16 %v2920, %v2920
          %v2954 = vunpack.c.l.b16 %v2921
          %v2955 = vunpack.c.l.b16 %v2922
          %v2956 = vunpack.c.l.b16 %v2923
          %v2957 = vunpack.c.l.b16 %v2924
          %v2958 = vunpack.c.l.b16 %v2925
          %v2959 = vunpack.c.l.b16 %v2926
          %v2960 = vunpack.c.l.b16 %v2927
          %v2961 = vunpack.c.l.b16 %v2928
          %v2962 = vunpack.c.l.b16 %v2929
          %v2963 = vunpack.c.l.b16 %v2930
          %v2964 = vunpack.c.l.b16 %v2931
          %v2965 = vunpack.c.l.b16 %v2932
          %v2966 = vunpack.c.l.b16 %v2933
          %v2967 = vunpack.c.l.b16 %v2934
          %v2968 = vunpack.c.l.b16 %v2935
          %v2969 = vunpack.c.l.b16 %v2936
          %v2970 = vpack.c.b16 %v2955, %v2954
          %v2971 = vpack.c.b16 %v2957, %v2956
          %v2972 = vpack.c.b16 %v2959, %v2958
          %v2973 = vpack.c.b16 %v2961, %v2960
          %v2974 = vpack.c.b16 %v2963, %v2962
          %v2975 = vpack.c.b16 %v2965, %v2964
          %v2976 = vpack.c.b16 %v2967, %v2966
          %v2977 = vpack.c.b16 %v2969, %v2968
          %2986 = vmatpush.bf16.msra.mxu0 %v2977
          %2987 = vmatpush.bf16.msra.mxu0 %v2976
          %2988 = vmatpush.bf16.msra.mxu0 %v2975
          %2989 = vmatpush.bf16.msra.mxu0 %v2974
          %2990 = vmatpush.bf16.msra.mxu0 %v2973
          %2991 = vmatpush.bf16.msra.mxu0 %v2972
          %2992 = vmatpush.bf16.msra.mxu0 %v2971
          %2993 = vmatpush.bf16.msra.mxu0 %v2970
          %2994 = vmatmul.bf16.gmra.mxu0 %v2937
          %v2995 = vpop.f32.mrf.mxu0
          %v2996 = vadd.f32 0.0, %v2995
          %v2997 = vpop.f32.mrf.mxu0
          %2998 = vdwg.mxu0
          %v2999 = vadd.f32 %v2796, %v2996
          %v3000 = vld [vmem:[#allocation23] sm:$0x1]
          %v3002 = vperm.slane %v3000, 0
          %v3004 = vadd.f32 %v2999, %v3002
          %3005 = vst [vmem:[#allocation2] sm:$0xff] %v3004
        $region316: #{fwd.4} parent=191 // pred_fallthru
          _
        %p3006 = scmp.ge.s32.totalorder %s114, 1
        %p3007 = scmp.le.s32.totalorder %s114, 2
        %p3008 = pnand %p3006, %p3007
        %p3009 = pneg %p3008
        // Predicated region
        $region317: #{fwd.4} parent=191 // pred_check
          _
        $region318: #{fwd.4} parent=191 // pred_check_branch
          %3011 = sbr.rel (%p3008) target = $region320
        $region319: #{fwd.4} parent=191 // pred_region
          %v3012 = vld [vmem:[#allocation2] sm:$0xff]
          %v3013 = vld [vmem:[%s2220] sm:$0x1]
          %v3014 = vld [vmem:[%s2233] sm:$0x1]
          %3015 = vadd.xlane.f32.xlu0 %v3012
          %v3016 = vpop.xlane.xlu0 %3015
          %v3017 = vrcp.pop 32.0
          %v3018 = vmul.f32 32.0, %v3017
          %v3019 = vsub.f32 1.0, %v3018
          %v3020 = vmul.f32 %v3017, %v3019
          %v3021 = vadd.f32 %v3017, %v3020
          %vm3022 = vweird.f32 %v3017
          %v3023 = vsel %vm3022, %v3017, %v3021
          %v3024 = vmul.f32 %v3016, %v3023
          %v3025 = vsub.f32 %v3012, %v3024
          %v3026 = vmul.f32 %v3025, %v3025
          %3027 = vadd.xlane.f32.xlu0 %v3026
          %v3028 = vpop.xlane.xlu0 %3027
          %v3029 = vmul.f32 %v3024, 96.0
          %v3030 = vmul.f32 %v3029, %v3024
          %v3031 = vsub.f32 %v3028, %v3030
          %v3032 = vmul.f32 %v3031, %v3023
          %v3033 = vadd.f32 %v3032, 1e-05
          %v3034 = vrsqrt.pop %v3033
          %v3035 = vmul.f32 %v3034, %v3033
          %v3036 = vmul.f32 %v3035, %v3034
          %v3037 = vmul.f32 0.5, %v3036
          %v3038 = vsub.f32 1.5, %v3037
          %v3039 = vmul.f32 %v3034, %v3038
          %vm3040 = vweird.f32 %v3033
          %vm3041 = vweird.f32 %v3034
          %vm3042 = vmor %vm3040, %vm3041
          %v3043 = vsel %vm3042, %v3034, %v3039
          %v3044 = vmul.f32 %v3025, %v3043
          %v3046 = vperm.slane %v3013, 0
          %v3048 = vmul.f32 %v3044, %v3046
          %v3050 = vperm.slane %v3014, 0
          %v3052 = vadd.f32 %v3048, %v3050
          %v3053 = vld [vmem:[%s1923] sm:$0xff]
          %v3054 = vld [vmem:[%s1923 + $0x8] sm:$0xf]
          %v3055 = vld [vmem:[%s1923 + $0xc] sm:$0xff]
          %v3056 = vld [vmem:[%s1923 + $0x14] sm:$0xf]
          %v3057 = vld [vmem:[%s1923 + $0x18] sm:$0xff]
          %v3058 = vld [vmem:[%s1923 + $0x20] sm:$0xf]
          %v3059 = vld [vmem:[%s1923 + $0x24] sm:$0xff]
          %v3060 = vld [vmem:[%s1923 + $0x2c] sm:$0xf]
          %v3061 = vld [vmem:[%s1923 + $0x30] sm:$0xff]
          %v3062 = vld [vmem:[%s1923 + $0x38] sm:$0xf]
          %v3063 = vld [vmem:[%s1923 + $0x3c] sm:$0xff]
          %v3064 = vld [vmem:[%s1923 + $0x44] sm:$0xf]
          %v3065 = vld [vmem:[%s1923 + $0x48] sm:$0xff]
          %v3066 = vld [vmem:[%s1923 + $0x50] sm:$0xf]
          %v3067 = vld [vmem:[%s1923 + $0x54] sm:$0xff]
          %v3068 = vld [vmem:[%s1923 + $0x5c] sm:$0xf]
          %v3069 = vld [vmem:[%s1923 + $0x60] sm:$0xff]
          %v3070 = vld [vmem:[%s1923 + $0x68] sm:$0xf]
          %v3071 = vld [vmem:[%s1923 + $0x6c] sm:$0xff]
          %v3072 = vld [vmem:[%s1923 + $0x74] sm:$0xf]
          %v3073 = vld [vmem:[%s1923 + $0x78] sm:$0xff]
          %v3074 = vld [vmem:[%s1923 + $0x80] sm:$0xf]
          %v3075 = vld [vmem:[%s1923 + $0x84] sm:$0xff]
          %v3076 = vld [vmem:[%s1923 + $0x8c] sm:$0xf]
          %v3077 = vld [vmem:[%s1923 + $0x90] sm:$0xff]
          %v3078 = vld [vmem:[%s1923 + $0x98] sm:$0xf]
          %v3079 = vld [vmem:[%s1923 + $0x9c] sm:$0xff]
          %v3080 = vld [vmem:[%s1923 + $0xa4] sm:$0xf]
          %v3081 = vld [vmem:[%s1923 + $0xa8] sm:$0xff]
          %v3082 = vld [vmem:[%s1923 + $0xb0] sm:$0xf]
          %v3083 = vld [vmem:[%s1923 + $0xb4] sm:$0xff]
          %v3084 = vld [vmem:[%s1923 + $0xbc] sm:$0xf]
          %v3085 = vpack.c.bf16 %v3052, %v3052
          %v3086 = vld [vmem:[%s2252] sm:$0x7]
          %v3088 = vperm.slane %v3086, 0
          %v3089 = vperm.slane %v3086, 1
          %v3090 = vperm.slane %v3086, 2
          %v3126 = vunpack.c.l.b16 %v3053
          %v3127 = vunpack.c.h.b16 %v3053
          %v3128 = vunpack.c.l.b16 %v3054
          %v3129 = vunpack.c.l.b16 %v3055
          %v3130 = vunpack.c.h.b16 %v3055
          %v3131 = vunpack.c.l.b16 %v3056
          %v3132 = vunpack.c.l.b16 %v3057
          %v3133 = vunpack.c.h.b16 %v3057
          %v3134 = vunpack.c.l.b16 %v3058
          %v3135 = vunpack.c.l.b16 %v3059
          %v3136 = vunpack.c.h.b16 %v3059
          %v3137 = vunpack.c.l.b16 %v3060
          %v3138 = vunpack.c.l.b16 %v3061
          %v3139 = vunpack.c.h.b16 %v3061
          %v3140 = vunpack.c.l.b16 %v3062
          %v3141 = vunpack.c.l.b16 %v3063
          %v3142 = vunpack.c.h.b16 %v3063
          %v3143 = vunpack.c.l.b16 %v3064
          %v3144 = vunpack.c.l.b16 %v3065
          %v3145 = vunpack.c.h.b16 %v3065
          %v3146 = vunpack.c.l.b16 %v3066
          %v3147 = vunpack.c.l.b16 %v3067
          %v3148 = vunpack.c.h.b16 %v3067
          %v3149 = vunpack.c.l.b16 %v3068
          %v3150 = vunpack.c.l.b16 %v3069
          %v3151 = vunpack.c.h.b16 %v3069
          %v3152 = vunpack.c.l.b16 %v3070
          %v3153 = vunpack.c.l.b16 %v3071
          %v3154 = vunpack.c.h.b16 %v3071
          %v3155 = vunpack.c.l.b16 %v3072
          %v3156 = vunpack.c.l.b16 %v3073
          %v3157 = vunpack.c.h.b16 %v3073
          %v3158 = vunpack.c.l.b16 %v3074
          %v3159 = vunpack.c.l.b16 %v3075
          %v3160 = vunpack.c.h.b16 %v3075
          %v3161 = vunpack.c.l.b16 %v3076
          %v3162 = vunpack.c.l.b16 %v3077
          %v3163 = vunpack.c.h.b16 %v3077
          %v3164 = vunpack.c.l.b16 %v3078
          %v3165 = vunpack.c.l.b16 %v3079
          %v3166 = vunpack.c.h.b16 %v3079
          %v3167 = vunpack.c.l.b16 %v3080
          %v3168 = vunpack.c.l.b16 %v3081
          %v3169 = vunpack.c.h.b16 %v3081
          %v3170 = vunpack.c.l.b16 %v3082
          %v3171 = vunpack.c.l.b16 %v3083
          %v3172 = vunpack.c.h.b16 %v3083
          %v3173 = vunpack.c.l.b16 %v3084
          %v3174 = vpack.c.b16 %v3129, %v3126
          %v3175 = vpack.c.b16 %v3130, %v3127
          %v3176 = vpack.c.b16 %v3131, %v3128
          %v3177 = vpack.c.b16 %v3135, %v3132
          %v3178 = vpack.c.b16 %v3136, %v3133
          %v3179 = vpack.c.b16 %v3137, %v3134
          %v3180 = vpack.c.b16 %v3141, %v3138
          %v3181 = vpack.c.b16 %v3142, %v3139
          %v3182 = vpack.c.b16 %v3143, %v3140
          %v3183 = vpack.c.b16 %v3147, %v3144
          %v3184 = vpack.c.b16 %v3148, %v3145
          %v3185 = vpack.c.b16 %v3149, %v3146
          %v3186 = vpack.c.b16 %v3153, %v3150
          %v3187 = vpack.c.b16 %v3154, %v3151
          %v3188 = vpack.c.b16 %v3155, %v3152
          %v3189 = vpack.c.b16 %v3159, %v3156
          %v3190 = vpack.c.b16 %v3160, %v3157
          %v3191 = vpack.c.b16 %v3161, %v3158
          %v3192 = vpack.c.b16 %v3165, %v3162
          %v3193 = vpack.c.b16 %v3166, %v3163
          %v3194 = vpack.c.b16 %v3167, %v3164
          %v3195 = vpack.c.b16 %v3171, %v3168
          %v3196 = vpack.c.b16 %v3172, %v3169
          %v3197 = vpack.c.b16 %v3173, %v3170
          %3222 = vmatpush.bf16.msra.mxu0 %v3195
          %3223 = vmatpush.bf16.msra.mxu0 %v3192
          %3224 = vmatpush.bf16.msra.mxu0 %v3189
          %3225 = vmatpush.bf16.msra.mxu0 %v3186
          %3226 = vmatpush.bf16.msra.mxu0 %v3183
          %3227 = vmatpush.bf16.msra.mxu0 %v3180
          %3228 = vmatpush.bf16.msra.mxu0 %v3177
          %3229 = vmatpush.bf16.msra.mxu0 %v3174
          %3230 = vmatmul.bf16.gmra.mxu0 %v3085
          %v3231 = vpop.f32.mrf.mxu0
          %v3232 = vadd.f32 %v3088, %v3231
          %v3233 = vpop.f32.mrf.mxu0
          %3234 = vdwg.mxu0
          %3235 = vmatpush.bf16.msra.mxu0 %v3196
          %3236 = vmatpush.bf16.msra.mxu0 %v3193
          %3237 = vmatpush.bf16.msra.mxu0 %v3190
          %3238 = vmatpush.bf16.msra.mxu0 %v3187
          %3239 = vmatpush.bf16.msra.mxu0 %v3184
          %3240 = vmatpush.bf16.msra.mxu0 %v3181
          %3241 = vmatpush.bf16.msra.mxu0 %v3178
          %3242 = vmatpush.bf16.msra.mxu0 %v3175
          %3243 = vmatmul.bf16.gmra.mxu0 %v3085
          %v3244 = vpop.f32.mrf.mxu0
          %v3245 = vadd.f32 %v3089, %v3244
          %v3246 = vpop.f32.mrf.mxu0
          %3247 = vdwg.mxu0
          %3248 = vmatpush.bf16.msra.mxu0 %v3197
          %3249 = vmatpush.bf16.msra.mxu0 %v3194
          %3250 = vmatpush.bf16.msra.mxu0 %v3191
          %3251 = vmatpush.bf16.msra.mxu0 %v3188
          %3252 = vmatpush.bf16.msra.mxu0 %v3185
          %3253 = vmatpush.bf16.msra.mxu0 %v3182
          %3254 = vmatpush.bf16.msra.mxu0 %v3179
          %3255 = vmatpush.bf16.msra.mxu0 %v3176
          %3256 = vmatmul.bf16.gmra.mxu0 %v3085
          %v3257 = vpop.f32.mrf.mxu0
          %v3258 = vadd.f32 %v3090, %v3257
          %v3259 = vpop.f32.mrf.mxu0
          %3260 = vdwg.mxu0
          %v3261 = vpack.c.bf16 %v3232, %v3232
          %v3262 = vpack.c.bf16 %v3245, %v3245
          %3263 = vmatpush.bf16.xpose.msra.mxu0 0
          %3264 = vmatpush.bf16.xpose.msra.mxu0 0
          %3265 = vmatpush.bf16.xpose.msra.mxu0 0
          %3266 = vmatpush.bf16.xpose.msra.mxu0 0
          %3267 = vmatpush.bf16.xpose.msra.mxu0 0
          %3268 = vmatpush.bf16.xpose.msra.mxu0 0
          %3269 = vmatpush.bf16.xpose.msra.mxu0 0
          %3270 = vmatpush.bf16.xpose.msra.mxu0 %v3262
          %3271 = vmatmul.bf16.gmra.mxu0 %v3261
          %v3272 = vpop.f32.mrf.mxu0
          %v3273 = vadd.f32 0.0, %v3272
          %v3274 = vpop.f32.mrf.mxu0
          %3275 = vdwg.mxu0
          %vm3276 = vcmask 64512
          %v3277 = vsel %vm3276, %v3273, -inf
          %3278 = vmax.xlane.f32.xlu0 %v3277
          %v3279 = vpop.xlane.xlu0 %3278
          %v3280 = vsub.f32 %v3273, %v3279
          %v3281 = vmul.f32 %v3280, 1.442695
          %v3282 = vpow.pop %v3281
          %v3283 = vsel %vm3276, %v3282, 0.0
          %3284 = vadd.xlane.f32.xlu0 %v3283
          %v3285 = vpop.xlane.xlu0 %3284
          %v3286 = vrcp.pop %v3285
          %v3287 = vmul.f32 %v3282, %v3286
          %v3288 = vpack.c.bf16 %v3287, %v3287
          %v3289 = vpack.c.bf16 %v3258, %v3258
          %v3291 = vsel %vm3276, %v3288, 0
          %vm3293 = vcmask 1043456
          %v3295 = vsel %vm3293, %v3289, 0
          %3297 = vmatpush.bf16.msra.mxu0 0
          %3298 = vmatpush.bf16.msra.mxu0 0
          %3299 = vmatpush.bf16.msra.mxu0 0
          %3300 = vmatpush.bf16.msra.mxu0 0
          %3301 = vmatpush.bf16.msra.mxu0 0
          %3302 = vmatpush.bf16.msra.mxu0 0
          %3303 = vmatpush.bf16.msra.mxu0 0
          %3304 = vmatpush.bf16.msra.mxu0 %v3295
          %3305 = vmatmul.bf16.gmra.mxu0 %v3291
          %v3306 = vpop.f32.mrf.mxu0
          %v3307 = vadd.f32 0.0, %v3306
          %v3308 = vpop.f32.mrf.mxu0
          %3309 = vdwg.mxu0
          %v3310 = vld [vmem:[%s1933] sm:$0xf]
          %v3311 = vld [vmem:[%s1933 + $0x4] sm:$0xf]
          %v3312 = vld [vmem:[%s1933 + $0x8] sm:$0xf]
          %v3313 = vld [vmem:[%s1933 + $0xc] sm:$0xf]
          %v3314 = vld [vmem:[%s1933 + $0x10] sm:$0xf]
          %v3315 = vld [vmem:[%s1933 + $0x14] sm:$0xf]
          %v3316 = vld [vmem:[%s1933 + $0x18] sm:$0xf]
          %v3317 = vld [vmem:[%s1933 + $0x1c] sm:$0xf]
          %v3318 = vld [vmem:[%s1933 + $0x20] sm:$0xf]
          %v3319 = vld [vmem:[%s1933 + $0x24] sm:$0xf]
          %v3320 = vld [vmem:[%s1933 + $0x28] sm:$0xf]
          %v3321 = vld [vmem:[%s1933 + $0x2c] sm:$0xf]
          %v3322 = vld [vmem:[%s1933 + $0x30] sm:$0xf]
          %v3323 = vld [vmem:[%s1933 + $0x34] sm:$0xf]
          %v3324 = vld [vmem:[%s1933 + $0x38] sm:$0xf]
          %v3325 = vld [vmem:[%s1933 + $0x3c] sm:$0xf]
          %v3326 = vpack.c.bf16 %v3307, %v3307
          %v3343 = vunpack.c.l.b16 %v3310
          %v3344 = vunpack.c.l.b16 %v3311
          %v3345 = vunpack.c.l.b16 %v3312
          %v3346 = vunpack.c.l.b16 %v3313
          %v3347 = vunpack.c.l.b16 %v3314
          %v3348 = vunpack.c.l.b16 %v3315
          %v3349 = vunpack.c.l.b16 %v3316
          %v3350 = vunpack.c.l.b16 %v3317
          %v3351 = vunpack.c.l.b16 %v3318
          %v3352 = vunpack.c.l.b16 %v3319
          %v3353 = vunpack.c.l.b16 %v3320
          %v3354 = vunpack.c.l.b16 %v3321
          %v3355 = vunpack.c.l.b16 %v3322
          %v3356 = vunpack.c.l.b16 %v3323
          %v3357 = vunpack.c.l.b16 %v3324
          %v3358 = vunpack.c.l.b16 %v3325
          %v3359 = vpack.c.b16 %v3344, %v3343
          %v3360 = vpack.c.b16 %v3346, %v3345
          %v3361 = vpack.c.b16 %v3348, %v3347
          %v3362 = vpack.c.b16 %v3350, %v3349
          %v3363 = vpack.c.b16 %v3352, %v3351
          %v3364 = vpack.c.b16 %v3354, %v3353
          %v3365 = vpack.c.b16 %v3356, %v3355
          %v3366 = vpack.c.b16 %v3358, %v3357
          %3375 = vmatpush.bf16.msra.mxu0 %v3366
          %3376 = vmatpush.bf16.msra.mxu0 %v3365
          %3377 = vmatpush.bf16.msra.mxu0 %v3364
          %3378 = vmatpush.bf16.msra.mxu0 %v3363
          %3379 = vmatpush.bf16.msra.mxu0 %v3362
          %3380 = vmatpush.bf16.msra.mxu0 %v3361
          %3381 = vmatpush.bf16.msra.mxu0 %v3360
          %3382 = vmatpush.bf16.msra.mxu0 %v3359
          %3383 = vmatmul.bf16.gmra.mxu0 %v3326
          %v3384 = vpop.f32.mrf.mxu0
          %v3385 = vadd.f32 0.0, %v3384
          %v3386 = vpop.f32.mrf.mxu0
          %3387 = vdwg.mxu0
          %v3388 = vadd.f32 %v3012, %v3385
          %v3389 = vld [vmem:[%s2270] sm:$0x1]
          %v3391 = vperm.slane %v3389, 0
          %v3393 = vadd.f32 %v3388, %v3391
          %v3394 = vld [vmem:[%s2283] sm:$0x1]
          %v3395 = vld [vmem:[%s2296] sm:$0x1]
          %3396 = vadd.xlane.f32.xlu0 %v3393
          %v3397 = vpop.xlane.xlu0 %3396
          %v3398 = vmul.f32 %v3397, %v3023
          %v3399 = vsub.f32 %v3393, %v3398
          %v3400 = vmul.f32 %v3399, %v3399
          %3401 = vadd.xlane.f32.xlu0 %v3400
          %v3402 = vpop.xlane.xlu0 %3401
          %v3403 = vmul.f32 %v3398, 96.0
          %v3404 = vmul.f32 %v3403, %v3398
          %v3405 = vsub.f32 %v3402, %v3404
          %v3406 = vmul.f32 %v3405, %v3023
          %v3407 = vadd.f32 %v3406, 1e-05
          %v3408 = vrsqrt.pop %v3407
          %v3409 = vmul.f32 %v3408, %v3407
          %v3410 = vmul.f32 %v3409, %v3408
          %v3411 = vmul.f32 0.5, %v3410
          %v3412 = vsub.f32 1.5, %v3411
          %v3413 = vmul.f32 %v3408, %v3412
          %vm3414 = vweird.f32 %v3407
          %vm3415 = vweird.f32 %v3408
          %vm3416 = vmor %vm3414, %vm3415
          %v3417 = vsel %vm3416, %v3408, %v3413
          %v3418 = vmul.f32 %v3399, %v3417
          %v3420 = vperm.slane %v3394, 0
          %v3422 = vmul.f32 %v3418, %v3420
          %v3424 = vperm.slane %v3395, 0
          %v3426 = vadd.f32 %v3422, %v3424
          %v3427 = vld [vmem:[%s1943] sm:$0xf]
          %v3428 = vld [vmem:[%s1943 + $0x4] sm:$0xf]
          %v3429 = vld [vmem:[%s1943 + $0x8] sm:$0xf]
          %v3430 = vld [vmem:[%s1943 + $0xc] sm:$0xf]
          %v3431 = vld [vmem:[%s1943 + $0x10] sm:$0xf]
          %v3432 = vld [vmem:[%s1943 + $0x14] sm:$0xf]
          %v3433 = vld [vmem:[%s1943 + $0x18] sm:$0xf]
          %v3434 = vld [vmem:[%s1943 + $0x1c] sm:$0xf]
          %v3435 = vld [vmem:[%s1943 + $0x20] sm:$0xf]
          %v3436 = vld [vmem:[%s1943 + $0x24] sm:$0xf]
          %v3437 = vld [vmem:[%s1943 + $0x28] sm:$0xf]
          %v3438 = vld [vmem:[%s1943 + $0x2c] sm:$0xf]
          %v3439 = vld [vmem:[%s1943 + $0x30] sm:$0xf]
          %v3440 = vld [vmem:[%s1943 + $0x34] sm:$0xf]
          %v3441 = vld [vmem:[%s1943 + $0x38] sm:$0xf]
          %v3442 = vld [vmem:[%s1943 + $0x3c] sm:$0xf]
          %v3443 = vpack.c.bf16 %v3426, %v3426
          %v3444 = vld [vmem:[%s2314] sm:$0x1]
          %v3446 = vperm.slane %v3444, 0
          %v3464 = vunpack.c.l.b16 %v3427
          %v3465 = vunpack.c.l.b16 %v3428
          %v3466 = vunpack.c.l.b16 %v3429
          %v3467 = vunpack.c.l.b16 %v3430
          %v3468 = vunpack.c.l.b16 %v3431
          %v3469 = vunpack.c.l.b16 %v3432
          %v3470 = vunpack.c.l.b16 %v3433
          %v3471 = vunpack.c.l.b16 %v3434
          %v3472 = vunpack.c.l.b16 %v3435
          %v3473 = vunpack.c.l.b16 %v3436
          %v3474 = vunpack.c.l.b16 %v3437
          %v3475 = vunpack.c.l.b16 %v3438
          %v3476 = vunpack.c.l.b16 %v3439
          %v3477 = vunpack.c.l.b16 %v3440
          %v3478 = vunpack.c.l.b16 %v3441
          %v3479 = vunpack.c.l.b16 %v3442
          %v3480 = vpack.c.b16 %v3465, %v3464
          %v3481 = vpack.c.b16 %v3467, %v3466
          %v3482 = vpack.c.b16 %v3469, %v3468
          %v3483 = vpack.c.b16 %v3471, %v3470
          %v3484 = vpack.c.b16 %v3473, %v3472
          %v3485 = vpack.c.b16 %v3475, %v3474
          %v3486 = vpack.c.b16 %v3477, %v3476
          %v3487 = vpack.c.b16 %v3479, %v3478
          %3496 = vmatpush.bf16.msra.mxu0 %v3487
          %3497 = vmatpush.bf16.msra.mxu0 %v3486
          %3498 = vmatpush.bf16.msra.mxu0 %v3485
          %3499 = vmatpush.bf16.msra.mxu0 %v3484
          %3500 = vmatpush.bf16.msra.mxu0 %v3483
          %3501 = vmatpush.bf16.msra.mxu0 %v3482
          %3502 = vmatpush.bf16.msra.mxu0 %v3481
          %3503 = vmatpush.bf16.msra.mxu0 %v3480
          %3504 = vmatmul.bf16.gmra.mxu0 %v3443
          %v3505 = vpop.f32.mrf.mxu0
          %v3506 = vadd.f32 %v3446, %v3505
          %v3507 = vpop.f32.mrf.mxu0
          %3508 = vdwg.mxu0
          %v3509 = vmul.f32 %v3506, %v3506
          %v3510 = vmul.f32 %v3506, %v3509
          %v3511 = vmul.f32 %v3510, 0.044715
          %v3512 = vadd.f32 %v3506, %v3511
          %v3513 = vmul.f32 %v3512, 0.7978846
          %v3514 = vtanh.pop %v3513
          %v3515 = vadd.f32 %v3514, 1.0
          %v3516 = vmul.f32 %v3515, 0.5
          %v3517 = vmul.f32 %v3506, %v3516
          %v3518 = vld [vmem:[%s1953] sm:$0xf]
          %v3519 = vld [vmem:[%s1953 + $0x4] sm:$0xf]
          %v3520 = vld [vmem:[%s1953 + $0x8] sm:$0xf]
          %v3521 = vld [vmem:[%s1953 + $0xc] sm:$0xf]
          %v3522 = vld [vmem:[%s1953 + $0x10] sm:$0xf]
          %v3523 = vld [vmem:[%s1953 + $0x14] sm:$0xf]
          %v3524 = vld [vmem:[%s1953 + $0x18] sm:$0xf]
          %v3525 = vld [vmem:[%s1953 + $0x1c] sm:$0xf]
          %v3526 = vld [vmem:[%s1953 + $0x20] sm:$0xf]
          %v3527 = vld [vmem:[%s1953 + $0x24] sm:$0xf]
          %v3528 = vld [vmem:[%s1953 + $0x28] sm:$0xf]
          %v3529 = vld [vmem:[%s1953 + $0x2c] sm:$0xf]
          %v3530 = vld [vmem:[%s1953 + $0x30] sm:$0xf]
          %v3531 = vld [vmem:[%s1953 + $0x34] sm:$0xf]
          %v3532 = vld [vmem:[%s1953 + $0x38] sm:$0xf]
          %v3533 = vld [vmem:[%s1953 + $0x3c] sm:$0xf]
          %v3534 = vpack.c.bf16 %v3517, %v3517
          %v3551 = vunpack.c.l.b16 %v3518
          %v3552 = vunpack.c.l.b16 %v3519
          %v3553 = vunpack.c.l.b16 %v3520
          %v3554 = vunpack.c.l.b16 %v3521
          %v3555 = vunpack.c.l.b16 %v3522
          %v3556 = vunpack.c.l.b16 %v3523
          %v3557 = vunpack.c.l.b16 %v3524
          %v3558 = vunpack.c.l.b16 %v3525
          %v3559 = vunpack.c.l.b16 %v3526
          %v3560 = vunpack.c.l.b16 %v3527
          %v3561 = vunpack.c.l.b16 %v3528
          %v3562 = vunpack.c.l.b16 %v3529
          %v3563 = vunpack.c.l.b16 %v3530
          %v3564 = vunpack.c.l.b16 %v3531
          %v3565 = vunpack.c.l.b16 %v3532
          %v3566 = vunpack.c.l.b16 %v3533
          %v3567 = vpack.c.b16 %v3552, %v3551
          %v3568 = vpack.c.b16 %v3554, %v3553
          %v3569 = vpack.c.b16 %v3556, %v3555
          %v3570 = vpack.c.b16 %v3558, %v3557
          %v3571 = vpack.c.b16 %v3560, %v3559
          %v3572 = vpack.c.b16 %v3562, %v3561
          %v3573 = vpack.c.b16 %v3564, %v3563
          %v3574 = vpack.c.b16 %v3566, %v3565
          %3583 = vmatpush.bf16.msra.mxu0 %v3574
          %3584 = vmatpush.bf16.msra.mxu0 %v3573
          %3585 = vmatpush.bf16.msra.mxu0 %v3572
          %3586 = vmatpush.bf16.msra.mxu0 %v3571
          %3587 = vmatpush.bf16.msra.mxu0 %v3570
          %3588 = vmatpush.bf16.msra.mxu0 %v3569
          %3589 = vmatpush.bf16.msra.mxu0 %v3568
          %3590 = vmatpush.bf16.msra.mxu0 %v3567
          %3591 = vmatmul.bf16.gmra.mxu0 %v3534
          %v3592 = vpop.f32.mrf.mxu0
          %v3593 = vadd.f32 0.0, %v3592
          %v3594 = vpop.f32.mrf.mxu0
          %3595 = vdwg.mxu0
          %v3596 = vadd.f32 %v3393, %v3593
          %v3597 = vld [vmem:[%s2332] sm:$0x1]
          %v3599 = vperm.slane %v3597, 0
          %v3601 = vadd.f32 %v3596, %v3599
          %3602 = vst [vmem:[#allocation2] sm:$0xff] %v3601
        $region320: #{fwd.4} parent=191 // pred_fallthru
          _
        %p3603 = scmp.eq.s32.totalorder %s114, 3
        // Predicated region
        $region321: #{fwd.4} parent=191 // pred_check
          %p3604 = pneg %p3603
        $region322: #{fwd.4} parent=191 // pred_check_branch
          %3606 = sbr.rel (%p3604) target = $region324
        $region323: #{fwd.4} parent=191 // pred_region
          %v3607 = vld [vmem:[%s2209] sm:$0xff]
          %v3608 = vld [vmem:[%s2209 + $0x8] sm:$0xff]
          %v3609 = vld [vmem:[#allocation2] sm:$0xff]
          %v3610 = vld [vmem:[#allocation29] sm:$0x1]
          %v3611 = vld [vmem:[#allocation30] sm:$0x1]
          %3612 = vadd.xlane.f32.xlu0 %v3607
          %v3613 = vpop.xlane.xlu0 %3612
          %3614 = vadd.xlane.f32.xlu0 %v3608
          %v3615 = vpop.xlane.xlu0 %3614
          %v3616 = vrcp.pop 32.0
          %v3617 = vmul.f32 32.0, %v3616
          %v3618 = vsub.f32 1.0, %v3617
          %v3619 = vmul.f32 %v3616, %v3618
          %v3620 = vadd.f32 %v3616, %v3619
          %vm3621 = vweird.f32 %v3616
          %v3622 = vsel %vm3621, %v3616, %v3620
          %v3623 = vmul.f32 %v3613, %v3622
          %v3624 = vmul.f32 %v3615, %v3622
          %v3625 = vsub.f32 %v3607, %v3623
          %v3626 = vsub.f32 %v3608, %v3624
          %v3627 = vmul.f32 %v3625, %v3625
          %v3628 = vmul.f32 %v3626, %v3626
          %3629 = vadd.xlane.f32.xlu0 %v3627
          %v3630 = vpop.xlane.xlu0 %3629
          %3631 = vadd.xlane.f32.xlu0 %v3628
          %v3632 = vpop.xlane.xlu0 %3631
          %v3633 = vmul.f32 %v3623, 96.0
          %v3634 = vmul.f32 %v3624, 96.0
          %v3635 = vmul.f32 %v3633, %v3623
          %v3636 = vmul.f32 %v3634, %v3624
          %v3637 = vsub.f32 %v3630, %v3635
          %v3638 = vsub.f32 %v3632, %v3636
          %v3639 = vmul.f32 %v3637, %v3622
          %v3640 = vmul.f32 %v3638, %v3622
          %v3641 = vadd.f32 %v3639, 1e-05
          %v3642 = vadd.f32 %v3640, 1e-05
          %v3643 = vrsqrt.pop %v3641
          %v3644 = vmul.f32 %v3643, %v3641
          %v3645 = vmul.f32 %v3644, %v3643
          %v3646 = vmul.f32 0.5, %v3645
          %v3647 = vsub.f32 1.5, %v3646
          %v3648 = vmul.f32 %v3643, %v3647
          %vm3649 = vweird.f32 %v3641
          %vm3650 = vweird.f32 %v3643
          %vm3651 = vmor %vm3649, %vm3650
          %v3652 = vsel %vm3651, %v3643, %v3648
          %v3653 = vrsqrt.pop %v3642
          %v3654 = vmul.f32 %v3653, %v3642
          %v3655 = vmul.f32 %v3654, %v3653
          %v3656 = vmul.f32 0.5, %v3655
          %v3657 = vsub.f32 1.5, %v3656
          %v3658 = vmul.f32 %v3653, %v3657
          %vm3659 = vweird.f32 %v3642
          %vm3660 = vweird.f32 %v3653
          %vm3661 = vmor %vm3659, %vm3660
          %v3662 = vsel %vm3661, %v3653, %v3658
          %v3663 = vmul.f32 %v3625, %v3652
          %v3664 = vmul.f32 %v3626, %v3662
          %v3666 = vperm.slane %v3610, 0
          %v3668 = vmul.f32 %v3663, %v3666
          %v3669 = vmul.f32 %v3664, %v3666
          %v3671 = vperm.slane %v3611, 0
          %v3673 = vadd.f32 %v3668, %v3671
          %v3674 = vadd.f32 %v3669, %v3671
          %v3675 = vld [vmem:[#allocation31] sm:$0x1]
          %v3676 = vld [vmem:[#allocation32] sm:$0x1]
          %3677 = vadd.xlane.f32.xlu0 %v3609
          %v3678 = vpop.xlane.xlu0 %3677
          %v3679 = vmul.f32 %v3678, %v3622
          %v3680 = vsub.f32 %v3609, %v3679
          %v3681 = vmul.f32 %v3680, %v3680
          %3682 = vadd.xlane.f32.xlu0 %v3681
          %v3683 = vpop.xlane.xlu0 %3682
          %v3684 = vmul.f32 %v3679, 96.0
          %v3685 = vmul.f32 %v3684, %v3679
          %v3686 = vsub.f32 %v3683, %v3685
          %v3687 = vmul.f32 %v3686, %v3622
          %v3688 = vadd.f32 %v3687, 1e-05
          %v3689 = vrsqrt.pop %v3688
          %v3690 = vmul.f32 %v3689, %v3688
          %v3691 = vmul.f32 %v3690, %v3689
          %v3692 = vmul.f32 0.5, %v3691
          %v3693 = vsub.f32 1.5, %v3692
          %v3694 = vmul.f32 %v3689, %v3693
          %vm3695 = vweird.f32 %v3688
          %vm3696 = vweird.f32 %v3689
          %vm3697 = vmor %vm3695, %vm3696
          %v3698 = vsel %vm3697, %v3689, %v3694
          %v3699 = vmul.f32 %v3680, %v3698
          %v3701 = vperm.slane %v3675, 0
          %v3703 = vmul.f32 %v3699, %v3701
          %v3705 = vperm.slane %v3676, 0
          %v3707 = vadd.f32 %v3703, %v3705
          %v3708 = vld [vmem:[#allocation33] sm:$0xf]
          %v3709 = vld [vmem:[#allocation33 + $0x4] sm:$0xf]
          %v3710 = vld [vmem:[#allocation33 + $0x8] sm:$0xf]
          %v3711 = vld [vmem:[#allocation33 + $0xc] sm:$0xf]
          %v3712 = vld [vmem:[#allocation33 + $0x10] sm:$0xf]
          %v3713 = vld [vmem:[#allocation33 + $0x14] sm:$0xf]
          %v3714 = vld [vmem:[#allocation33 + $0x18] sm:$0xf]
          %v3715 = vld [vmem:[#allocation33 + $0x1c] sm:$0xf]
          %v3716 = vld [vmem:[#allocation33 + $0x20] sm:$0xf]
          %v3717 = vld [vmem:[#allocation33 + $0x24] sm:$0xf]
          %v3718 = vld [vmem:[#allocation33 + $0x28] sm:$0xf]
          %v3719 = vld [vmem:[#allocation33 + $0x2c] sm:$0xf]
          %v3720 = vld [vmem:[#allocation33 + $0x30] sm:$0xf]
          %v3721 = vld [vmem:[#allocation33 + $0x34] sm:$0xf]
          %v3722 = vld [vmem:[#allocation33 + $0x38] sm:$0xf]
          %v3723 = vld [vmem:[#allocation33 + $0x3c] sm:$0xf]
          %v3724 = vpack.c.bf16 %v3674, %v3673
          %v3725 = vld [vmem:[#allocation34] sm:$0x1]
          %v3727 = vperm.slane %v3725, 0
          %v3745 = vunpack.c.l.b16 %v3708
          %v3746 = vunpack.c.l.b16 %v3709
          %v3747 = vunpack.c.l.b16 %v3710
          %v3748 = vunpack.c.l.b16 %v3711
          %v3749 = vunpack.c.l.b16 %v3712
          %v3750 = vunpack.c.l.b16 %v3713
          %v3751 = vunpack.c.l.b16 %v3714
          %v3752 = vunpack.c.l.b16 %v3715
          %v3753 = vunpack.c.l.b16 %v3716
          %v3754 = vunpack.c.l.b16 %v3717
          %v3755 = vunpack.c.l.b16 %v3718
          %v3756 = vunpack.c.l.b16 %v3719
          %v3757 = vunpack.c.l.b16 %v3720
          %v3758 = vunpack.c.l.b16 %v3721
          %v3759 = vunpack.c.l.b16 %v3722
          %v3760 = vunpack.c.l.b16 %v3723
          %v3761 = vpack.c.b16 %v3746, %v3745
          %v3762 = vpack.c.b16 %v3748, %v3747
          %v3763 = vpack.c.b16 %v3750, %v3749
          %v3764 = vpack.c.b16 %v3752, %v3751
          %v3765 = vpack.c.b16 %v3754, %v3753
          %v3766 = vpack.c.b16 %v3756, %v3755
          %v3767 = vpack.c.b16 %v3758, %v3757
          %v3768 = vpack.c.b16 %v3760, %v3759
          %3777 = vmatpush.bf16.msra.mxu0 %v3768
          %3778 = vmatpush.bf16.msra.mxu0 %v3767
          %3779 = vmatpush.bf16.msra.mxu0 %v3766
          %3780 = vmatpush.bf16.msra.mxu0 %v3765
          %3781 = vmatpush.bf16.msra.mxu0 %v3764
          %3782 = vmatpush.bf16.msra.mxu0 %v3763
          %3783 = vmatpush.bf16.msra.mxu0 %v3762
          %3784 = vmatpush.bf16.msra.mxu0 %v3761
          %3785 = vmatmul.bf16.gmra.mxu0 %v3724
          %v3786 = vpop.f32.mrf.mxu0
          %v3787 = vadd.f32 %v3727, %v3786
          %v3788 = vpop.f32.mrf.mxu0
          %v3789 = vadd.f32 %v3727, %v3788
          %3790 = vdwg.mxu0
          %v3791 = vld [vmem:[#allocation35] sm:$0xff]
          %v3792 = vld [vmem:[#allocation35 + $0x8] sm:$0xff]
          %v3793 = vld [vmem:[#allocation35 + $0x10] sm:$0xff]
          %v3794 = vld [vmem:[#allocation35 + $0x18] sm:$0xff]
          %v3795 = vld [vmem:[#allocation35 + $0x20] sm:$0xff]
          %v3796 = vld [vmem:[#allocation35 + $0x28] sm:$0xff]
          %v3797 = vld [vmem:[#allocation35 + $0x30] sm:$0xff]
          %v3798 = vld [vmem:[#allocation35 + $0x38] sm:$0xff]
          %v3799 = vld [vmem:[#allocation35 + $0x40] sm:$0xff]
          %v3800 = vld [vmem:[#allocation35 + $0x48] sm:$0xff]
          %v3801 = vld [vmem:[#allocation35 + $0x50] sm:$0xff]
          %v3802 = vld [vmem:[#allocation35 + $0x58] sm:$0xff]
          %v3803 = vld [vmem:[#allocation35 + $0x60] sm:$0xff]
          %v3804 = vld [vmem:[#allocation35 + $0x68] sm:$0xff]
          %v3805 = vld [vmem:[#allocation35 + $0x70] sm:$0xff]
          %v3806 = vld [vmem:[#allocation35 + $0x78] sm:$0xff]
          %v3807 = vpack.c.bf16 %v3707, %v3707
          %v3808 = vld [vmem:[#allocation36] sm:$0x3]
          %v3810 = vperm.slane %v3808, 0
          %v3811 = vperm.slane %v3808, 1
          %v3830 = vunpack.c.l.b16 %v3791
          %v3831 = vunpack.c.h.b16 %v3791
          %v3832 = vunpack.c.l.b16 %v3792
          %v3833 = vunpack.c.h.b16 %v3792
          %v3834 = vunpack.c.l.b16 %v3793
          %v3835 = vunpack.c.h.b16 %v3793
          %v3836 = vunpack.c.l.b16 %v3794
          %v3837 = vunpack.c.h.b16 %v3794
          %v3838 = vunpack.c.l.b16 %v3795
          %v3839 = vunpack.c.h.b16 %v3795
          %v3840 = vunpack.c.l.b16 %v3796
          %v3841 = vunpack.c.h.b16 %v3796
          %v3842 = vunpack.c.l.b16 %v3797
          %v3843 = vunpack.c.h.b16 %v3797
          %v3844 = vunpack.c.l.b16 %v3798
          %v3845 = vunpack.c.h.b16 %v3798
          %v3846 = vunpack.c.l.b16 %v3799
          %v3847 = vunpack.c.h.b16 %v3799
          %v3848 = vunpack.c.l.b16 %v3800
          %v3849 = vunpack.c.h.b16 %v3800
          %v3850 = vunpack.c.l.b16 %v3801
          %v3851 = vunpack.c.h.b16 %v3801
          %v3852 = vunpack.c.l.b16 %v3802
          %v3853 = vunpack.c.h.b16 %v3802
          %v3854 = vunpack.c.l.b16 %v3803
          %v3855 = vunpack.c.h.b16 %v3803
          %v3856 = vunpack.c.l.b16 %v3804
          %v3857 = vunpack.c.h.b16 %v3804
          %v3858 = vunpack.c.l.b16 %v3805
          %v3859 = vunpack.c.h.b16 %v3805
          %v3860 = vunpack.c.l.b16 %v3806
          %v3861 = vunpack.c.h.b16 %v3806
          %v3862 = vpack.c.b16 %v3832, %v3830
          %v3863 = vpack.c.b16 %v3833, %v3831
          %v3864 = vpack.c.b16 %v3836, %v3834
          %v3865 = vpack.c.b16 %v3837, %v3835
          %v3866 = vpack.c.b16 %v3840, %v3838
          %v3867 = vpack.c.b16 %v3841, %v3839
          %v3868 = vpack.c.b16 %v3844, %v3842
          %v3869 = vpack.c.b16 %v3845, %v3843
          %v3870 = vpack.c.b16 %v3848, %v3846
          %v3871 = vpack.c.b16 %v3849, %v3847
          %v3872 = vpack.c.b16 %v3852, %v3850
          %v3873 = vpack.c.b16 %v3853, %v3851
          %v3874 = vpack.c.b16 %v3856, %v3854
          %v3875 = vpack.c.b16 %v3857, %v3855
          %v3876 = vpack.c.b16 %v3860, %v3858
          %v3877 = vpack.c.b16 %v3861, %v3859
          %3894 = vmatpush.bf16.msra.mxu0 %v3876
          %3895 = vmatpush.bf16.msra.mxu0 %v3874
          %3896 = vmatpush.bf16.msra.mxu0 %v3872
          %3897 = vmatpush.bf16.msra.mxu0 %v3870
          %3898 = vmatpush.bf16.msra.mxu0 %v3868
          %3899 = vmatpush.bf16.msra.mxu0 %v3866
          %3900 = vmatpush.bf16.msra.mxu0 %v3864
          %3901 = vmatpush.bf16.msra.mxu0 %v3862
          %3902 = vmatmul.bf16.gmra.mxu0 %v3807
          %v3903 = vpop.f32.mrf.mxu0
          %v3904 = vadd.f32 %v3810, %v3903
          %v3905 = vpop.f32.mrf.mxu0
          %3906 = vdwg.mxu0
          %3907 = vmatpush.bf16.msra.mxu0 %v3877
          %3908 = vmatpush.bf16.msra.mxu0 %v3875
          %3909 = vmatpush.bf16.msra.mxu0 %v3873
          %3910 = vmatpush.bf16.msra.mxu0 %v3871
          %3911 = vmatpush.bf16.msra.mxu0 %v3869
          %3912 = vmatpush.bf16.msra.mxu0 %v3867
          %3913 = vmatpush.bf16.msra.mxu0 %v3865
          %3914 = vmatpush.bf16.msra.mxu0 %v3863
          %3915 = vmatmul.bf16.gmra.mxu0 %v3807
          %v3916 = vpop.f32.mrf.mxu0
          %v3917 = vadd.f32 %v3811, %v3916
          %v3918 = vpop.f32.mrf.mxu0
          %3919 = vdwg.mxu0
          %v3920 = vpack.c.bf16 %v3789, %v3787
          %v3921 = vpack.c.bf16 %v3904, %v3904
          %3922 = vmatpush.bf16.xpose.msra.mxu0 0
          %3923 = vmatpush.bf16.xpose.msra.mxu0 0
          %3924 = vmatpush.bf16.xpose.msra.mxu0 0
          %3925 = vmatpush.bf16.xpose.msra.mxu0 0
          %3926 = vmatpush.bf16.xpose.msra.mxu0 0
          %3927 = vmatpush.bf16.xpose.msra.mxu0 0
          %3928 = vmatpush.bf16.xpose.msra.mxu0 0
          %3929 = vmatpush.bf16.xpose.msra.mxu0 %v3921
          %3930 = vmatmul.bf16.gmra.mxu0 %v3920
          %v3931 = vpop.f32.mrf.mxu0
          %v3932 = vadd.f32 0.0, %v3931
          %v3933 = vpop.f32.mrf.mxu0
          %v3934 = vadd.f32 0.0, %v3933
          %3935 = vdwg.mxu0
          %vm3936 = vcmask 64512
          %v3937 = vsel %vm3936, %v3932, -inf
          %3938 = vmax.xlane.f32.xlu0 %v3937
          %v3939 = vpop.xlane.xlu0 %3938
          %v3940 = vsel %vm3936, %v3934, -inf
          %3941 = vmax.xlane.f32.xlu0 %v3940
          %v3942 = vpop.xlane.xlu0 %3941
          %v3943 = vsub.f32 %v3932, %v3939
          %v3944 = vsub.f32 %v3934, %v3942
          %v3945 = vmul.f32 %v3943, 1.442695
          %v3946 = vpow.pop %v3945
          %v3947 = vmul.f32 %v3944, 1.442695
          %v3948 = vpow.pop %v3947
          %v3949 = vsel %vm3936, %v3946, 0.0
          %3950 = vadd.xlane.f32.xlu0 %v3949
          %v3951 = vpop.xlane.xlu0 %3950
          %v3952 = vsel %vm3936, %v3948, 0.0
          %3953 = vadd.xlane.f32.xlu0 %v3952
          %v3954 = vpop.xlane.xlu0 %3953
          %v3955 = vrcp.pop %v3951
          %v3956 = vrcp.pop %v3954
          %v3957 = vmul.f32 %v3946, %v3955
          %v3958 = vmul.f32 %v3948, %v3956
          %v3959 = vpack.c.bf16 %v3958, %v3957
          %v3960 = vpack.c.bf16 %v3917, %v3917
          %v3962 = vsel %vm3936, %v3959, 0
          %vm3964 = vcmask 1043456
          %v3966 = vsel %vm3964, %v3960, 0
          %3968 = vmatpush.bf16.msra.mxu0 0
          %3969 = vmatpush.bf16.msra.mxu0 0
          %3970 = vmatpush.bf16.msra.mxu0 0
          %3971 = vmatpush.bf16.msra.mxu0 0
          %3972 = vmatpush.bf16.msra.mxu0 0
          %3973 = vmatpush.bf16.msra.mxu0 0
          %3974 = vmatpush.bf16.msra.mxu0 0
          %3975 = vmatpush.bf16.msra.mxu0 %v3966
          %3976 = vmatmul.bf16.gmra.mxu0 %v3962
          %v3977 = vpop.f32.mrf.mxu0
          %v3978 = vadd.f32 0.0, %v3977
          %v3979 = vpop.f32.mrf.mxu0
          %v3980 = vadd.f32 0.0, %v3979
          %3981 = vdwg.mxu0
          %v3982 = vld [vmem:[#allocation38] sm:$0xf]
          %v3983 = vld [vmem:[#allocation38 + $0x4] sm:$0xf]
          %v3984 = vld [vmem:[#allocation38 + $0x8] sm:$0xf]
          %v3985 = vld [vmem:[#allocation38 + $0xc] sm:$0xf]
          %v3986 = vld [vmem:[#allocation38 + $0x10] sm:$0xf]
          %v3987 = vld [vmem:[#allocation38 + $0x14] sm:$0xf]
          %v3988 = vld [vmem:[#allocation38 + $0x18] sm:$0xf]
          %v3989 = vld [vmem:[#allocation38 + $0x1c] sm:$0xf]
          %v3990 = vld [vmem:[#allocation38 + $0x20] sm:$0xf]
          %v3991 = vld [vmem:[#allocation38 + $0x24] sm:$0xf]
          %v3992 = vld [vmem:[#allocation38 + $0x28] sm:$0xf]
          %v3993 = vld [vmem:[#allocation38 + $0x2c] sm:$0xf]
          %v3994 = vld [vmem:[#allocation38 + $0x30] sm:$0xf]
          %v3995 = vld [vmem:[#allocation38 + $0x34] sm:$0xf]
          %v3996 = vld [vmem:[#allocation38 + $0x38] sm:$0xf]
          %v3997 = vld [vmem:[#allocation38 + $0x3c] sm:$0xf]
          %v3998 = vpack.c.bf16 %v3980, %v3978
          %v3999 = vld [vmem:[#allocation39] sm:$0x1]
          %v4001 = vperm.slane %v3999, 0
          %v4019 = vunpack.c.l.b16 %v3982
          %v4020 = vunpack.c.l.b16 %v3983
          %v4021 = vunpack.c.l.b16 %v3984
          %v4022 = vunpack.c.l.b16 %v3985
          %v4023 = vunpack.c.l.b16 %v3986
          %v4024 = vunpack.c.l.b16 %v3987
          %v4025 = vunpack.c.l.b16 %v3988
          %v4026 = vunpack.c.l.b16 %v3989
          %v4027 = vunpack.c.l.b16 %v3990
          %v4028 = vunpack.c.l.b16 %v3991
          %v4029 = vunpack.c.l.b16 %v3992
          %v4030 = vunpack.c.l.b16 %v3993
          %v4031 = vunpack.c.l.b16 %v3994
          %v4032 = vunpack.c.l.b16 %v3995
          %v4033 = vunpack.c.l.b16 %v3996
          %v4034 = vunpack.c.l.b16 %v3997
          %v4035 = vpack.c.b16 %v4020, %v4019
          %v4036 = vpack.c.b16 %v4022, %v4021
          %v4037 = vpack.c.b16 %v4024, %v4023
          %v4038 = vpack.c.b16 %v4026, %v4025
          %v4039 = vpack.c.b16 %v4028, %v4027
          %v4040 = vpack.c.b16 %v4030, %v4029
          %v4041 = vpack.c.b16 %v4032, %v4031
          %v4042 = vpack.c.b16 %v4034, %v4033
          %4051 = vmatpush.bf16.msra.mxu0 %v4042
          %4052 = vmatpush.bf16.msra.mxu0 %v4041
          %4053 = vmatpush.bf16.msra.mxu0 %v4040
          %4054 = vmatpush.bf16.msra.mxu0 %v4039
          %4055 = vmatpush.bf16.msra.mxu0 %v4038
          %4056 = vmatpush.bf16.msra.mxu0 %v4037
          %4057 = vmatpush.bf16.msra.mxu0 %v4036
          %4058 = vmatpush.bf16.msra.mxu0 %v4035
          %4059 = vmatmul.bf16.gmra.mxu0 %v3998
          %v4060 = vpop.f32.mrf.mxu0
          %v4061 = vadd.f32 %v4001, %v4060
          %v4062 = vpop.f32.mrf.mxu0
          %v4063 = vadd.f32 %v4001, %v4062
          %4064 = vdwg.mxu0
          %v4065 = vld [vmem:[#allocation41] sm:$0xf]
          %v4066 = vld [vmem:[#allocation41 + $0x4] sm:$0xf]
          %v4067 = vld [vmem:[#allocation41 + $0x8] sm:$0xf]
          %v4068 = vld [vmem:[#allocation41 + $0xc] sm:$0xf]
          %v4069 = vld [vmem:[#allocation41 + $0x10] sm:$0xf]
          %v4070 = vld [vmem:[#allocation41 + $0x14] sm:$0xf]
          %v4071 = vld [vmem:[#allocation41 + $0x18] sm:$0xf]
          %v4072 = vld [vmem:[#allocation41 + $0x1c] sm:$0xf]
          %v4073 = vld [vmem:[#allocation41 + $0x20] sm:$0xf]
          %v4074 = vld [vmem:[#allocation41 + $0x24] sm:$0xf]
          %v4075 = vld [vmem:[#allocation41 + $0x28] sm:$0xf]
          %v4076 = vld [vmem:[#allocation41 + $0x2c] sm:$0xf]
          %v4077 = vld [vmem:[#allocation41 + $0x30] sm:$0xf]
          %v4078 = vld [vmem:[#allocation41 + $0x34] sm:$0xf]
          %v4079 = vld [vmem:[#allocation41 + $0x38] sm:$0xf]
          %v4080 = vld [vmem:[#allocation41 + $0x3c] sm:$0xf]
          %v4081 = vpack.c.bf16 %v4063, %v4061
          %v4082 = vld [vmem:[#allocation42] sm:$0x1]
          %v4084 = vperm.slane %v4082, 0
          %v4102 = vunpack.c.l.b16 %v4065
          %v4103 = vunpack.c.l.b16 %v4066
          %v4104 = vunpack.c.l.b16 %v4067
          %v4105 = vunpack.c.l.b16 %v4068
          %v4106 = vunpack.c.l.b16 %v4069
          %v4107 = vunpack.c.l.b16 %v4070
          %v4108 = vunpack.c.l.b16 %v4071
          %v4109 = vunpack.c.l.b16 %v4072
          %v4110 = vunpack.c.l.b16 %v4073
          %v4111 = vunpack.c.l.b16 %v4074
          %v4112 = vunpack.c.l.b16 %v4075
          %v4113 = vunpack.c.l.b16 %v4076
          %v4114 = vunpack.c.l.b16 %v4077
          %v4115 = vunpack.c.l.b16 %v4078
          %v4116 = vunpack.c.l.b16 %v4079
          %v4117 = vunpack.c.l.b16 %v4080
          %v4118 = vpack.c.b16 %v4103, %v4102
          %v4119 = vpack.c.b16 %v4105, %v4104
          %v4120 = vpack.c.b16 %v4107, %v4106
          %v4121 = vpack.c.b16 %v4109, %v4108
          %v4122 = vpack.c.b16 %v4111, %v4110
          %v4123 = vpack.c.b16 %v4113, %v4112
          %v4124 = vpack.c.b16 %v4115, %v4114
          %v4125 = vpack.c.b16 %v4117, %v4116
          %4134 = vmatpush.bf16.msra.mxu0 %v4125
          %4135 = vmatpush.bf16.msra.mxu0 %v4124
          %4136 = vmatpush.bf16.msra.mxu0 %v4123
          %4137 = vmatpush.bf16.msra.mxu0 %v4122
          %4138 = vmatpush.bf16.msra.mxu0 %v4121
          %4139 = vmatpush.bf16.msra.mxu0 %v4120
          %4140 = vmatpush.bf16.msra.mxu0 %v4119
          %4141 = vmatpush.bf16.msra.mxu0 %v4118
          %4142 = vmatmul.bf16.gmra.mxu0 %v4081
          %v4143 = vpop.f32.mrf.mxu0
          %v4144 = vadd.f32 %v4084, %v4143
          %v4145 = vpop.f32.mrf.mxu0
          %v4146 = vadd.f32 %v4084, %v4145
          %4147 = vdwg.mxu0
          %4148 = vst [vmem:[%s2342] sm:$0xff] %v4144
          %4149 = vst [vmem:[%s2342 + $0x8] sm:$0xff] %v4146
        $region324: #{fwd.4} parent=191 // pred_fallthru
          _
        %p4150 = scmp.lt.s32.totalorder %s113, 1
        %s4151 = scalar_select %p4150, %s113, 1
        %s4152 = smul.addr %s4151, 2
        %s4153 = smul.addr %s4152, 8
        %s4154 = scalar_lea.vmem %s87, %s4153
        // Predicated region
        $region325: #{fwd.4} parent=191 // pred_check
          %p4155 = pneg %p1232
        $region326: #{fwd.4} parent=191 // pred_check_branch
          %4157 = sbr.rel (%p4155) target = $region328
        $region327: #{fwd.4} parent=191 // pred_region
          _
        $region328: #{fwd.4} parent=191 // pred_fallthru
          _
      $region192: #{fwd.4} parent=5 // pred_fallthru
        _
      %p4158 = scmp.le.s32.totalorder 2, %s104
      // Predicated region
      $region329: #{fwd.4} parent=5 // pred_check
        %p4159 = pneg %p4158
      $region330: #{fwd.4} parent=5 // pred_check_branch
        %4161 = sbr.rel (%p4159) target = $region332
      $region331: #{fwd.4} parent=5 // pred_region
        %s4162 = ssub.s32 %s104, 2
        // Predicated region
        $region333: #{fwd.4} parent=331 // pred_check
          %p4163 = pneg %p1238
        $region334: #{fwd.4} parent=331 // pred_check_branch
          %4165 = sbr.rel (%p4163) target = $region336
        $region335: #{fwd.4} parent=331 // pred_region
          %p4166 = scmp.lt.s32.totalorder %s115, 1
          %s4167 = scalar_select %p4166, %s115, 1
          %s4168 = smul.addr %s4167, 2
          %s4169 = smul.addr %s4168, 8
          %s4170 = scalar_lea.vmem %s87, %s4169
        $region336: #{fwd.4} parent=331 // pred_fallthru
          _
      $region332: #{fwd.4} parent=5 // pred_fallthru
        _
    $region6: #{fwd.4} parent=1 // loop_footer
      %s108 = sadd.s32 1, %s104
    $region7: #{fwd.4} parent=1 // loop_footer_branch
      %103 = sbr.rel target = $region3
    $region8: #{fwd.4} parent=1 // loop_exit
      _
    %4171 = vsyncpa [#allocation4], 1
    %s4172 = scalar_lea.sflag [#allocation4], 1
    %4173 = vsyncpa %s4172, 1
    %4174 = vsyncpa [#allocation6], 1
    %4175 = vsyncpa [#allocation9], 1
    %4176 = vsyncpa [#allocation12], 1
    %4177 = vsyncpa [#allocation15], 1
    %4178 = vsyncpa [#allocation18], 1
    %4179 = vsyncpa [#allocation21], 1
    %4180 = vsyncpa [#allocation24], 1
    %4181 = vsyncpa [#allocation37], 1
    %4182 = vsyncpa [#allocation40], 1
    %4183 = vsyncpa [#allocation43], 1

</llo_original>
